<compile_context>
chip_gen: v7x
topology: tpu7x:2x2x1
jax: 0.10.0
libtpu: 0.0.40
codegen_flags: <defaults>
</compile_context>

<pallas_src>
import jax
import jax.numpy as jnp
import numpy as np
from jax import lax
from jax.experimental import pallas as pl
from jax.experimental.pallas import tpu as pltpu


# ----------------------------- Pallas kernels -----------------------------

def fused_conv_kernel(m1_ref, w1_ref, b1_ref, w2_ref, b2_ref, o_ref):
    # m1_ref: (1600, 9) bf16  conv1 im2col patches; row = slot*400 + slab*100
    #         + i*10 + j, where slot = conv1 2x2-pool window position,
    #         slab = parity (p,q) of the pooled position (space-to-depth),
    #         (i,j) = coordinates inside the slab.
    # w1_ref: (9, 16)   bf16  conv1 weight, k = dy*3+dx
    # b1_ref: (1, 16)   f32
    # w2_ref: (144, 32) bf16  conv2 weight, k = (dy*3+dx)*16 + cin
    # b2_ref: (1, 32)   f32
    # o_ref : (100, 32) bf16  pooled conv2 activation, row = h*10 + w (NHWC)
    f32 = jnp.float32

    # ---- conv1: one MXU matmul for all 4 pool slots, then pool-max (VPU),
    #      bias, ReLU.  (bias is pool-invariant, ReLU monotone => commutes.)
    r1 = jnp.dot(m1_ref[...], w1_ref[...], preferred_element_type=f32)  # (1600,16)
    a1 = jnp.maximum(jnp.maximum(r1[0:400], r1[400:800]),
                     jnp.maximum(r1[800:1200], r1[1200:1600]))          # (400,16)
    a1 = jnp.maximum(a1 + b1_ref[...], 0.0)                             # f32

    # a1 rows are slab-major: slab t = p*2+q holds a1_full[2i+p, 2j+q] at
    # flat row i*10+j.  Zero-pad each flat slab with 11 rows top/bottom so any
    # spatial shift (fu,fv) in {-1,0,1}^2 is a contiguous row window.
    zpad = jnp.zeros((11, 16), f32)
    slabs = [jnp.concatenate([zpad, a1[t * 100:(t + 1) * 100, :], zpad], axis=0)
             for t in range(4)]                                         # (122,16) each

    # masks that zero rows whose width index wrapped across a row boundary
    jidx = lax.broadcasted_iota(jnp.int32, (100, 1), 0) % 10
    mask_l = (jidx != 0).astype(f32)    # width shift -1
    mask_r = (jidx != 9).astype(f32)    # width shift +1

    # ---- conv2 (+ fused 2x2 pool): 9 tap matmuls, all 4 pool slots share the
    #      same (400,16)x(16,32) dot via row concatenation.
    acc = jnp.zeros((400, 32), f32)
    for dy in range(3):
        for dx in range(3):
            blocks = []
            for a in range(2):          # conv2-pool window row offset
                for b in range(2):      # conv2-pool window col offset
                    u, v = a + dy - 1, b + dx - 1
                    pu, fu = u % 2, u // 2
                    pv, fv = v % 2, v // 2
                    delta = 10 * fu + fv
                    t = slabs[pu * 2 + pv][11 + delta:111 + delta, :]   # (100,16)
                    if fv == -1:
                        t = t * mask_l
                    elif fv == 1:
                        t = t * mask_r
                    blocks.append(t)
            lhs = jnp.concatenate(blocks, axis=0).astype(jnp.bfloat16)  # (400,16)
            k = dy * 3 + dx
            acc = acc + jnp.dot(lhs, w2_ref[k * 16:(k + 1) * 16, :],
                                preferred_element_type=f32)             # (400,32)

    # pool-max over the 4 conv2-pool slots, bias, ReLU
    a2 = jnp.maximum(jnp.maximum(acc[0:100], acc[100:200]),
                     jnp.maximum(acc[200:300], acc[300:400]))           # (100,32)
    a2 = jnp.maximum(a2 + b2_ref[...], 0.0)
    o_ref[...] = a2.astype(o_ref.dtype)


def mlp_kernel(x_ref, w1_ref, b1_ref, w2_ref, b2_ref, o_ref):
    # x_ref: (Bt, 3200) bf16   w1_ref: (3200, 64) bf16   b1_ref: (1, 64) f32
    # w2_ref: (64, 8) bf16     b2_ref: (1, 8) f32         o_ref: (Bt, 8) f32
    h = jnp.dot(x_ref[...], w1_ref[...], preferred_element_type=jnp.float32)
    h = jnp.maximum(h + b1_ref[...], 0.0).astype(jnp.bfloat16)
    o = jnp.dot(h, w2_ref[...], preferred_element_type=jnp.float32)
    o_ref[...] = jnp.maximum(o + b2_ref[...], 0.0).astype(o_ref.dtype)


# ------------------------------- JAX glue ---------------------------------

def build_conv1_patches(x2d):
    """(B,40,40) -> (B,1600,9) bf16 conv1 im2col patches, rows in
    (pool-slot, slab-parity, i, j) order so the kernel's conv2 stage needs only
    contiguous row shifts."""
    B = x2d.shape[0]
    xp = jnp.pad(x2d, ((0, 0), (1, 1), (1, 1)))               # (B,42,42)
    pieces = []
    for s_h in range(2):
        for s_w in range(2):
            for p in range(2):
                for q in range(2):
                    taps = []
                    for dy in range(3):
                        for dx in range(3):
                            r0 = 2 * p + s_h + dy
                            c0 = 2 * q + s_w + dx
                            sl = xp[:, r0:r0 + 37:4, c0:c0 + 37:4]   # (B,10,10)
                            taps.append(sl.reshape(B, 100))
                    pieces.append(jnp.stack(taps, axis=-1))          # (B,100,9)
    return jnp.concatenate(pieces, axis=1).astype(jnp.bfloat16)      # (B,1600,9)


def conv_stage(m1, w1m, b1, w2m, b2):
    B = m1.shape[0]
    return pl.pallas_call(
        fused_conv_kernel,
        out_shape=jax.ShapeDtypeStruct((B, 100, 32), jnp.bfloat16),
        grid=(B,),
        in_specs=[
            pl.BlockSpec((None, 1600, 9), lambda b: (b, 0, 0)),
            pl.BlockSpec((9, 16), lambda b: (0, 0)),
            pl.BlockSpec((1, 16), lambda b: (0, 0)),
            pl.BlockSpec((144, 32), lambda b: (0, 0)),
            pl.BlockSpec((1, 32), lambda b: (0, 0)),
        ],
        out_specs=pl.BlockSpec((None, 100, 32), lambda b: (b, 0, 0)),
        compiler_params=pltpu.CompilerParams(dimension_semantics=("parallel",)),
    )(m1, w1m, b1, w2m, b2)


def mlp(x, w1, b1, w2, b2):
    B = x.shape[0]
    bt = 128 if B % 128 == 0 else B        # row tile; weights stay resident
    return pl.pallas_call(
        mlp_kernel,
        out_shape=jax.ShapeDtypeStruct((B, 8), jnp.float32),
        grid=(B // bt,),
        in_specs=[
            pl.BlockSpec((bt, 3200), lambda i: (i, 0)),
            pl.BlockSpec((3200, 64), lambda i: (0, 0)),
            pl.BlockSpec((1, 64), lambda i: (0, 0)),
            pl.BlockSpec((64, 8), lambda i: (0, 0)),
            pl.BlockSpec((1, 8), lambda i: (0, 0)),
        ],
        out_specs=pl.BlockSpec((bt, 8), lambda i: (i, 0)),
        compiler_params=pltpu.CompilerParams(dimension_semantics=("parallel",)),
    )(x, w1, b1, w2, b2)


def preprocess_params(params):
    """One-time weight layout + bf16 cast (hoisted out of the forward path)."""
    bf, f = jnp.bfloat16, jnp.float32
    return {
        "w1m": jnp.transpose(params["conv1_w"], (2, 3, 1, 0)).reshape(9, 16).astype(bf),
        "b1": params["conv1_b"].reshape(1, 16).astype(f),
        "w2m": jnp.transpose(params["conv2_w"], (2, 3, 1, 0)).reshape(144, 32).astype(bf),
        "b2": params["conv2_b"].reshape(1, 32).astype(f),
        # fc1 weight is PyTorch NCHW-flatten (c*100+h*10+w); permute to match the
        # kernel's NHWC-flatten ((h*10+w)*32+c).
        "w1fc": (params["fc1_w"].reshape(64, 32, 10, 10).transpose(0, 2, 3, 1)
                 .reshape(64, 3200).T).astype(bf),
        "b1fc": params["fc1_b"].reshape(1, 64).astype(f),
        "w2fc": params["fc2_w"].T.astype(bf),
        "b2fc": params["fc2_b"].reshape(1, 8).astype(f),
    }


def sub_char_cnn_forward(x_nchw, pp):
    B = x_nchw.shape[0]
    x2d = x_nchw[:, 0, :, :]                                   # Cin = 1
    m1 = build_conv1_patches(x2d)                              # (B,1600,9) bf16
    a2 = conv_stage(m1, pp["w1m"], pp["b1"], pp["w2m"], pp["b2"])  # (B,100,32)
    flat = a2.reshape(B, 3200)                                 # (h*10+w)*32 + c
    return mlp(flat, pp["w1fc"], pp["b1fc"], pp["w2fc"], pp["b2fc"])


# --------------------------- Pure-JAX reference ----------------------------

def reference_forward(x_nchw, params):
    dn = ("NCHW", "OIHW", "NCHW")
    y = lax.conv_general_dilated(x_nchw, params["conv1_w"], (1, 1), "SAME",
                                 dimension_numbers=dn)
    y = jnp.maximum(y + params["conv1_b"][None, :, None, None], 0.0)
    y = lax.reduce_window(y, -jnp.inf, lax.max, (1, 1, 2, 2), (1, 1, 2, 2), "VALID")
    y = lax.conv_general_dilated(y, params["conv2_w"], (1, 1), "SAME",
                                 dimension_numbers=dn)
    y = jnp.maximum(y + params["conv2_b"][None, :, None, None], 0.0)
    y = lax.reduce_window(y, -jnp.inf, lax.max, (1, 1, 2, 2), (1, 1, 2, 2), "VALID")
    flat = y.reshape(y.shape[0], -1)                           # NCHW flatten
    h = jnp.maximum(flat @ params["fc1_w"].T + params["fc1_b"], 0.0)
    return jnp.maximum(h @ params["fc2_w"].T + params["fc2_b"], 0.0)


# ---------------------------------- main -----------------------------------

if __name__ == "__main__":
    key = jax.random.PRNGKey(0)
    ks = jax.random.split(key, 9)
    params = {
        "conv1_w": 0.2 * jax.random.normal(ks[0], (16, 1, 3, 3), jnp.float32),
        "conv1_b": 0.1 * jax.random.normal(ks[1], (16,), jnp.float32),
        "conv2_w": 0.05 * jax.random.normal(ks[2], (32, 16, 3, 3), jnp.float32),
        "conv2_b": 0.1 * jax.random.normal(ks[3], (32,), jnp.float32),
        "fc1_w": 0.02 * jax.random.normal(ks[4], (64, 32 * 10 * 10), jnp.float32),
        "fc1_b": 0.1 * jax.random.normal(ks[5], (64,), jnp.float32),
        "fc2_w": 0.1 * jax.random.normal(ks[6], (8, 64), jnp.float32),
        "fc2_b": 0.1 * jax.random.normal(ks[7], (8,), jnp.float32),
    }
    # fc1 expects 32*10*10 features => input spatial must be 40x40 (40->20->10).
    x = jax.random.normal(ks[8], (2, 1, 40, 40), jnp.float32)  # NCHW

    pp = preprocess_params(params)                 # one-time, outside forward
    fwd = jax.jit(sub_char_cnn_forward)

    out = jax.block_until_ready(fwd(x, pp))
    ref = jax.block_until_ready(reference_forward(x, params))
    assert out.shape == (2, 8)
    # bf16 matmul operands with f32 accumulation => slightly looser tolerance.
    np.testing.assert_allclose(np.asarray(out), np.asarray(ref), rtol=3e-2, atol=3e-2)
    print("KERNEL_OK")
</pallas_src>

<mosaic_0001>
module attributes {stable_mosaic.version = 11 : i64} {
  func.func @fused_conv_kernel(%arg0: i32, %arg1: memref<1x1600x9xbf16, #tpu.memory_space<vmem>>, %arg2: memref<9x16xbf16, #tpu.memory_space<vmem>>, %arg3: memref<1x16xf32, #tpu.memory_space<vmem>>, %arg4: memref<144x32xbf16, #tpu.memory_space<vmem>>, %arg5: memref<1x32xf32, #tpu.memory_space<vmem>>, %arg6: memref<1x100x32xbf16, #tpu.memory_space<vmem>>) attributes {dimension_semantics = [#tpu.dimension_semantics<parallel>], iteration_bounds = array<i64: 2>, scalar_prefetch = 0 : i64, scratch_operands = 0 : i64, tpu.core_type = #tpu.core_type<tc>, window_params = [{transform_indices = @transform_0, window_bounds = array<i64: 1, 1600, 9>}, {pipeline_mode = #tpu.pipeline_mode<synchronous>, transform_indices = @transform_1, window_bounds = array<i64: 9, 16>}, {pipeline_mode = #tpu.pipeline_mode<synchronous>, transform_indices = @transform_2, window_bounds = array<i64: 1, 16>}, {pipeline_mode = #tpu.pipeline_mode<synchronous>, transform_indices = @transform_3, window_bounds = array<i64: 144, 32>}, {pipeline_mode = #tpu.pipeline_mode<synchronous>, transform_indices = @transform_4, window_bounds = array<i64: 1, 32>}, {transform_indices = @transform_5, window_bounds = array<i64: 1, 100, 32>}]} {
    %c0 = arith.constant 0 : index
    %c0_0 = arith.constant 0 : index
    %c0_1 = arith.constant 0 : index
    %0 = vector.load %arg1[%c0, %c0_0, %c0_1] : memref<1x1600x9xbf16, #tpu.memory_space<vmem>>, vector<1x1600x9xbf16>
    %1 = vector.shape_cast %0 : vector<1x1600x9xbf16> to vector<1600x9xbf16>
    %c0_2 = arith.constant 0 : index
    %c0_3 = arith.constant 0 : index
    %2 = vector.load %arg2[%c0_2, %c0_3] : memref<9x16xbf16, #tpu.memory_space<vmem>>, vector<9x16xbf16>
    %cst = arith.constant dense<0.000000e+00> : vector<1600x16xf32>
    %3 = tpu.matmul %1, %2, %cst {dimension_numbers = #tpu.dot_dimension_numbers<[1], [0], [0], [1], [0, 0, 1, 1], [], []>} : vector<1600x9xbf16>, vector<9x16xbf16>, vector<1600x16xf32> -> vector<1600x16xf32>
    %4 = vector.extract_strided_slice %3 {offsets = [0, 0], sizes = [400, 16], strides = [1, 1]} : vector<1600x16xf32> to vector<400x16xf32>
    %5 = vector.extract_strided_slice %3 {offsets = [400, 0], sizes = [400, 16], strides = [1, 1]} : vector<1600x16xf32> to vector<400x16xf32>
    %6 = arith.maximumf %4, %5 : vector<400x16xf32>
    %7 = vector.extract_strided_slice %3 {offsets = [800, 0], sizes = [400, 16], strides = [1, 1]} : vector<1600x16xf32> to vector<400x16xf32>
    %8 = vector.extract_strided_slice %3 {offsets = [1200, 0], sizes = [400, 16], strides = [1, 1]} : vector<1600x16xf32> to vector<400x16xf32>
    %9 = arith.maximumf %7, %8 : vector<400x16xf32>
    %10 = arith.maximumf %6, %9 : vector<400x16xf32>
    %c0_4 = arith.constant 0 : index
    %c0_5 = arith.constant 0 : index
    %11 = vector.load %arg3[%c0_4, %c0_5] : memref<1x16xf32, #tpu.memory_space<vmem>>, vector<1x16xf32>
    %12 = vector.broadcast %11 : vector<1x16xf32> to vector<400x16xf32>
    %13 = arith.addf %10, %12 : vector<400x16xf32>
    %cst_6 = arith.constant 0.000000e+00 : f32
    %14 = vector.broadcast %cst_6 : f32 to vector<400x16xf32>
    %15 = arith.maximumf %13, %14 : vector<400x16xf32>
    %cst_7 = arith.constant 0.000000e+00 : f32
    %16 = vector.broadcast %cst_7 : f32 to vector<11x16xf32>
    %17 = vector.extract_strided_slice %15 {offsets = [0, 0], sizes = [100, 16], strides = [1, 1]} : vector<400x16xf32> to vector<100x16xf32>
    %18 = tpu.concatenate %16, %17, %16 in 0 : vector<11x16xf32>, vector<100x16xf32>, vector<11x16xf32> -> vector<122x16xf32>
    %19 = vector.extract_strided_slice %15 {offsets = [100, 0], sizes = [100, 16], strides = [1, 1]} : vector<400x16xf32> to vector<100x16xf32>
    %20 = tpu.concatenate %16, %19, %16 in 0 : vector<11x16xf32>, vector<100x16xf32>, vector<11x16xf32> -> vector<122x16xf32>
    %21 = vector.extract_strided_slice %15 {offsets = [200, 0], sizes = [100, 16], strides = [1, 1]} : vector<400x16xf32> to vector<100x16xf32>
    %22 = tpu.concatenate %16, %21, %16 in 0 : vector<11x16xf32>, vector<100x16xf32>, vector<11x16xf32> -> vector<122x16xf32>
    %23 = vector.extract_strided_slice %15 {offsets = [300, 0], sizes = [100, 16], strides = [1, 1]} : vector<400x16xf32> to vector<100x16xf32>
    %24 = tpu.concatenate %16, %23, %16 in 0 : vector<11x16xf32>, vector<100x16xf32>, vector<11x16xf32> -> vector<122x16xf32>
    %25 = tpu.iota {dimensions = array<i32: 0>} : vector<100x1xi32>
    %c10_i32 = arith.constant 10 : i32
    %c0_i32 = arith.constant 0 : i32
    %26 = arith.cmpi eq, %c10_i32, %c0_i32 : i32
    %c1_i32 = arith.constant 1 : i32
    %27 = arith.select %26, %c1_i32, %c10_i32 : i32
    %28 = vector.broadcast %27 : i32 to vector<100x1xi32>
    %29 = arith.remsi %25, %28 : vector<100x1xi32>
    %c0_i32_8 = arith.constant 0 : i32
    %30 = vector.broadcast %c0_i32_8 : i32 to vector<100x1xi32>
    %31 = arith.cmpi ne, %29, %30 : vector<100x1xi32>
    %c0_i32_9 = arith.constant 0 : i32
    %32 = vector.broadcast %c0_i32_9 : i32 to vector<100x1xi32>
    %33 = arith.cmpi slt, %29, %32 : vector<100x1xi32>
    %c0_i32_10 = arith.constant 0 : i32
    %34 = arith.cmpi slt, %27, %c0_i32_10 : i32
    %35 = vector.broadcast %34 : i1 to vector<100x1xi1>
    %36 = vector.broadcast %35 : vector<100x1xi1> to vector<100x1xi1>
    %37 = arith.xori %33, %36 : vector<100x1xi1>
    %38 = arith.andi %37, %31 : vector<100x1xi1>
    %39 = vector.broadcast %27 : i32 to vector<100x1xi32>
    %40 = arith.addi %29, %39 : vector<100x1xi32>
    %41 = arith.select %38, %40, %29 : vector<100x1xi1>, vector<100x1xi32>
    %c0_i32_11 = arith.constant 0 : i32
    %42 = vector.broadcast %c0_i32_11 : i32 to vector<100x1xi32>
    %43 = arith.cmpi ne, %41, %42 : vector<100x1xi32>
    %44 = arith.extui %43 : vector<100x1xi1> to vector<100x1xi32>
    %45 = arith.sitofp %44 : vector<100x1xi32> to vector<100x1xf32>
    %c9_i32 = arith.constant 9 : i32
    %46 = vector.broadcast %c9_i32 : i32 to vector<100x1xi32>
    %47 = arith.cmpi ne, %41, %46 : vector<100x1xi32>
    %48 = arith.extui %47 : vector<100x1xi1> to vector<100x1xi32>
    %49 = arith.sitofp %48 : vector<100x1xi32> to vector<100x1xf32>
    %cst_12 = arith.constant 0.000000e+00 : f32
    %50 = vector.broadcast %cst_12 : f32 to vector<400x32xf32>
    %51 = vector.extract_strided_slice %24 {offsets = [0, 0], sizes = [100, 16], strides = [1, 1]} : vector<122x16xf32> to vector<100x16xf32>
    %52 = vector.broadcast %45 : vector<100x1xf32> to vector<100x16xf32>
    %53 = arith.mulf %51, %52 : vector<100x16xf32>
    %54 = vector.extract_strided_slice %22 {offsets = [1, 0], sizes = [100, 16], strides = [1, 1]} : vector<122x16xf32> to vector<100x16xf32>
    %55 = vector.extract_strided_slice %20 {offsets = [10, 0], sizes = [100, 16], strides = [1, 1]} : vector<122x16xf32> to vector<100x16xf32>
    %56 = vector.broadcast %45 : vector<100x1xf32> to vector<100x16xf32>
    %57 = arith.mulf %55, %56 : vector<100x16xf32>
    %58 = vector.extract_strided_slice %18 {offsets = [11, 0], sizes = [100, 16], strides = [1, 1]} : vector<122x16xf32> to vector<100x16xf32>
    %59 = tpu.concatenate %53, %54, %57, %58 in 0 : vector<100x16xf32>, vector<100x16xf32>, vector<100x16xf32>, vector<100x16xf32> -> vector<400x16xf32>
    %60 = arith.truncf %59 : vector<400x16xf32> to vector<400x16xbf16>
    %c0_13 = arith.constant 0 : index
    %c0_14 = arith.constant 0 : index
    %61 = vector.load %arg4[%c0_13, %c0_14] : memref<144x32xbf16, #tpu.memory_space<vmem>>, vector<16x32xbf16>
    %cst_15 = arith.constant dense<0.000000e+00> : vector<400x32xf32>
    %62 = tpu.matmul %60, %61, %cst_15 {dimension_numbers = #tpu.dot_dimension_numbers<[1], [0], [0], [1], [0, 0, 1, 1], [], []>} : vector<400x16xbf16>, vector<16x32xbf16>, vector<400x32xf32> -> vector<400x32xf32>
    %63 = arith.addf %50, %62 : vector<400x32xf32>
    %64 = vector.extract_strided_slice %22 {offsets = [1, 0], sizes = [100, 16], strides = [1, 1]} : vector<122x16xf32> to vector<100x16xf32>
    %65 = vector.extract_strided_slice %24 {offsets = [1, 0], sizes = [100, 16], strides = [1, 1]} : vector<122x16xf32> to vector<100x16xf32>
    %66 = vector.extract_strided_slice %18 {offsets = [11, 0], sizes = [100, 16], strides = [1, 1]} : vector<122x16xf32> to vector<100x16xf32>
    %67 = vector.extract_strided_slice %20 {offsets = [11, 0], sizes = [100, 16], strides = [1, 1]} : vector<122x16xf32> to vector<100x16xf32>
    %68 = tpu.concatenate %64, %65, %66, %67 in 0 : vector<100x16xf32>, vector<100x16xf32>, vector<100x16xf32>, vector<100x16xf32> -> vector<400x16xf32>
    %69 = arith.truncf %68 : vector<400x16xf32> to vector<400x16xbf16>
    %c16 = arith.constant 16 : index
    %c0_16 = arith.constant 0 : index
    %70 = vector.load %arg4[%c16, %c0_16] : memref<144x32xbf16, #tpu.memory_space<vmem>>, vector<16x32xbf16>
    %cst_17 = arith.constant dense<0.000000e+00> : vector<400x32xf32>
    %71 = tpu.matmul %69, %70, %cst_17 {dimension_numbers = #tpu.dot_dimension_numbers<[1], [0], [0], [1], [0, 0, 1, 1], [], []>} : vector<400x16xbf16>, vector<16x32xbf16>, vector<400x32xf32> -> vector<400x32xf32>
    %72 = arith.addf %63, %71 : vector<400x32xf32>
    %73 = vector.extract_strided_slice %24 {offsets = [1, 0], sizes = [100, 16], strides = [1, 1]} : vector<122x16xf32> to vector<100x16xf32>
    %74 = vector.extract_strided_slice %22 {offsets = [2, 0], sizes = [100, 16], strides = [1, 1]} : vector<122x16xf32> to vector<100x16xf32>
    %75 = vector.broadcast %49 : vector<100x1xf32> to vector<100x16xf32>
    %76 = arith.mulf %74, %75 : vector<100x16xf32>
    %77 = vector.extract_strided_slice %20 {offsets = [11, 0], sizes = [100, 16], strides = [1, 1]} : vector<122x16xf32> to vector<100x16xf32>
    %78 = vector.extract_strided_slice %18 {offsets = [12, 0], sizes = [100, 16], strides = [1, 1]} : vector<122x16xf32> to vector<100x16xf32>
    %79 = vector.broadcast %49 : vector<100x1xf32> to vector<100x16xf32>
    %80 = arith.mulf %78, %79 : vector<100x16xf32>
    %81 = tpu.concatenate %73, %76, %77, %80 in 0 : vector<100x16xf32>, vector<100x16xf32>, vector<100x16xf32>, vector<100x16xf32> -> vector<400x16xf32>
    %82 = arith.truncf %81 : vector<400x16xf32> to vector<400x16xbf16>
    %c32 = arith.constant 32 : index
    %c0_18 = arith.constant 0 : index
    %83 = vector.load %arg4[%c32, %c0_18] : memref<144x32xbf16, #tpu.memory_space<vmem>>, vector<16x32xbf16>
    %cst_19 = arith.constant dense<0.000000e+00> : vector<400x32xf32>
    %84 = tpu.matmul %82, %83, %cst_19 {dimension_numbers = #tpu.dot_dimension_numbers<[1], [0], [0], [1], [0, 0, 1, 1], [], []>} : vector<400x16xbf16>, vector<16x32xbf16>, vector<400x32xf32> -> vector<400x32xf32>
    %85 = arith.addf %72, %84 : vector<400x32xf32>
    %86 = vector.extract_strided_slice %20 {offsets = [10, 0], sizes = [100, 16], strides = [1, 1]} : vector<122x16xf32> to vector<100x16xf32>
    %87 = vector.broadcast %45 : vector<100x1xf32> to vector<100x16xf32>
    %88 = arith.mulf %86, %87 : vector<100x16xf32>
    %89 = vector.extract_strided_slice %18 {offsets = [11, 0], sizes = [100, 16], strides = [1, 1]} : vector<122x16xf32> to vector<100x16xf32>
    %90 = vector.extract_strided_slice %24 {offsets = [10, 0], sizes = [100, 16], strides = [1, 1]} : vector<122x16xf32> to vector<100x16xf32>
    %91 = vector.broadcast %45 : vector<100x1xf32> to vector<100x16xf32>
    %92 = arith.mulf %90, %91 : vector<100x16xf32>
    %93 = vector.extract_strided_slice %22 {offsets = [11, 0], sizes = [100, 16], strides = [1, 1]} : vector<122x16xf32> to vector<100x16xf32>
    %94 = tpu.concatenate %88, %89, %92, %93 in 0 : vector<100x16xf32>, vector<100x16xf32>, vector<100x16xf32>, vector<100x16xf32> -> vector<400x16xf32>
    %95 = arith.truncf %94 : vector<400x16xf32> to vector<400x16xbf16>
    %c48 = arith.constant 48 : index
    %c0_20 = arith.constant 0 : index
    %96 = vector.load %arg4[%c48, %c0_20] : memref<144x32xbf16, #tpu.memory_space<vmem>>, vector<16x32xbf16>
    %cst_21 = arith.constant dense<0.000000e+00> : vector<400x32xf32>
    %97 = tpu.matmul %95, %96, %cst_21 {dimension_numbers = #tpu.dot_dimension_numbers<[1], [0], [0], [1], [0, 0, 1, 1], [], []>} : vector<400x16xbf16>, vector<16x32xbf16>, vector<400x32xf32> -> vector<400x32xf32>
    %98 = arith.addf %85, %97 : vector<400x32xf32>
    %99 = vector.extract_strided_slice %18 {offsets = [11, 0], sizes = [100, 16], strides = [1, 1]} : vector<122x16xf32> to vector<100x16xf32>
    %100 = vector.extract_strided_slice %20 {offsets = [11, 0], sizes = [100, 16], strides = [1, 1]} : vector<122x16xf32> to vector<100x16xf32>
    %101 = vector.extract_strided_slice %22 {offsets = [11, 0], sizes = [100, 16], strides = [1, 1]} : vector<122x16xf32> to vector<100x16xf32>
    %102 = vector.extract_strided_slice %24 {offsets = [11, 0], sizes = [100, 16], strides = [1, 1]} : vector<122x16xf32> to vector<100x16xf32>
    %103 = tpu.concatenate %99, %100, %101, %102 in 0 : vector<100x16xf32>, vector<100x16xf32>, vector<100x16xf32>, vector<100x16xf32> -> vector<400x16xf32>
    %104 = arith.truncf %103 : vector<400x16xf32> to vector<400x16xbf16>
    %c64 = arith.constant 64 : index
    %c0_22 = arith.constant 0 : index
    %105 = vector.load %arg4[%c64, %c0_22] : memref<144x32xbf16, #tpu.memory_space<vmem>>, vector<16x32xbf16>
    %cst_23 = arith.constant dense<0.000000e+00> : vector<400x32xf32>
    %106 = tpu.matmul %104, %105, %cst_23 {dimension_numbers = #tpu.dot_dimension_numbers<[1], [0], [0], [1], [0, 0, 1, 1], [], []>} : vector<400x16xbf16>, vector<16x32xbf16>, vector<400x32xf32> -> vector<400x32xf32>
    %107 = arith.addf %98, %106 : vector<400x32xf32>
    %108 = vector.extract_strided_slice %20 {offsets = [11, 0], sizes = [100, 16], strides = [1, 1]} : vector<122x16xf32> to vector<100x16xf32>
    %109 = vector.extract_strided_slice %18 {offsets = [12, 0], sizes = [100, 16], strides = [1, 1]} : vector<122x16xf32> to vector<100x16xf32>
    %110 = vector.broadcast %49 : vector<100x1xf32> to vector<100x16xf32>
    %111 = arith.mulf %109, %110 : vector<100x16xf32>
    %112 = vector.extract_strided_slice %24 {offsets = [11, 0], sizes = [100, 16], strides = [1, 1]} : vector<122x16xf32> to vector<100x16xf32>
    %113 = vector.extract_strided_slice %22 {offsets = [12, 0], sizes = [100, 16], strides = [1, 1]} : vector<122x16xf32> to vector<100x16xf32>
    %114 = vector.broadcast %49 : vector<100x1xf32> to vector<100x16xf32>
    %115 = arith.mulf %113, %114 : vector<100x16xf32>
    %116 = tpu.concatenate %108, %111, %112, %115 in 0 : vector<100x16xf32>, vector<100x16xf32>, vector<100x16xf32>, vector<100x16xf32> -> vector<400x16xf32>
    %117 = arith.truncf %116 : vector<400x16xf32> to vector<400x16xbf16>
    %c80 = arith.constant 80 : index
    %c0_24 = arith.constant 0 : index
    %118 = vector.load %arg4[%c80, %c0_24] : memref<144x32xbf16, #tpu.memory_space<vmem>>, vector<16x32xbf16>
    %cst_25 = arith.constant dense<0.000000e+00> : vector<400x32xf32>
    %119 = tpu.matmul %117, %118, %cst_25 {dimension_numbers = #tpu.dot_dimension_numbers<[1], [0], [0], [1], [0, 0, 1, 1], [], []>} : vector<400x16xbf16>, vector<16x32xbf16>, vector<400x32xf32> -> vector<400x32xf32>
    %120 = arith.addf %107, %119 : vector<400x32xf32>
    %121 = vector.extract_strided_slice %24 {offsets = [10, 0], sizes = [100, 16], strides = [1, 1]} : vector<122x16xf32> to vector<100x16xf32>
    %122 = vector.broadcast %45 : vector<100x1xf32> to vector<100x16xf32>
    %123 = arith.mulf %121, %122 : vector<100x16xf32>
    %124 = vector.extract_strided_slice %22 {offsets = [11, 0], sizes = [100, 16], strides = [1, 1]} : vector<122x16xf32> to vector<100x16xf32>
    %125 = vector.extract_strided_slice %20 {offsets = [20, 0], sizes = [100, 16], strides = [1, 1]} : vector<122x16xf32> to vector<100x16xf32>
    %126 = vector.broadcast %45 : vector<100x1xf32> to vector<100x16xf32>
    %127 = arith.mulf %125, %126 : vector<100x16xf32>
    %128 = vector.extract_strided_slice %18 {offsets = [21, 0], sizes = [100, 16], strides = [1, 1]} : vector<122x16xf32> to vector<100x16xf32>
    %129 = tpu.concatenate %123, %124, %127, %128 in 0 : vector<100x16xf32>, vector<100x16xf32>, vector<100x16xf32>, vector<100x16xf32> -> vector<400x16xf32>
    %130 = arith.truncf %129 : vector<400x16xf32> to vector<400x16xbf16>
    %c96 = arith.constant 96 : index
    %c0_26 = arith.constant 0 : index
    %131 = vector.load %arg4[%c96, %c0_26] : memref<144x32xbf16, #tpu.memory_space<vmem>>, vector<16x32xbf16>
    %cst_27 = arith.constant dense<0.000000e+00> : vector<400x32xf32>
    %132 = tpu.matmul %130, %131, %cst_27 {dimension_numbers = #tpu.dot_dimension_numbers<[1], [0], [0], [1], [0, 0, 1, 1], [], []>} : vector<400x16xbf16>, vector<16x32xbf16>, vector<400x32xf32> -> vector<400x32xf32>
    %133 = arith.addf %120, %132 : vector<400x32xf32>
    %134 = vector.extract_strided_slice %22 {offsets = [11, 0], sizes = [100, 16], strides = [1, 1]} : vector<122x16xf32> to vector<100x16xf32>
    %135 = vector.extract_strided_slice %24 {offsets = [11, 0], sizes = [100, 16], strides = [1, 1]} : vector<122x16xf32> to vector<100x16xf32>
    %136 = vector.extract_strided_slice %18 {offsets = [21, 0], sizes = [100, 16], strides = [1, 1]} : vector<122x16xf32> to vector<100x16xf32>
    %137 = vector.extract_strided_slice %20 {offsets = [21, 0], sizes = [100, 16], strides = [1, 1]} : vector<122x16xf32> to vector<100x16xf32>
    %138 = tpu.concatenate %134, %135, %136, %137 in 0 : vector<100x16xf32>, vector<100x16xf32>, vector<100x16xf32>, vector<100x16xf32> -> vector<400x16xf32>
    %139 = arith.truncf %138 : vector<400x16xf32> to vector<400x16xbf16>
    %c112 = arith.constant 112 : index
    %c0_28 = arith.constant 0 : index
    %140 = vector.load %arg4[%c112, %c0_28] : memref<144x32xbf16, #tpu.memory_space<vmem>>, vector<16x32xbf16>
    %cst_29 = arith.constant dense<0.000000e+00> : vector<400x32xf32>
    %141 = tpu.matmul %139, %140, %cst_29 {dimension_numbers = #tpu.dot_dimension_numbers<[1], [0], [0], [1], [0, 0, 1, 1], [], []>} : vector<400x16xbf16>, vector<16x32xbf16>, vector<400x32xf32> -> vector<400x32xf32>
    %142 = arith.addf %133, %141 : vector<400x32xf32>
    %143 = vector.extract_strided_slice %24 {offsets = [11, 0], sizes = [100, 16], strides = [1, 1]} : vector<122x16xf32> to vector<100x16xf32>
    %144 = vector.extract_strided_slice %22 {offsets = [12, 0], sizes = [100, 16], strides = [1, 1]} : vector<122x16xf32> to vector<100x16xf32>
    %145 = vector.broadcast %49 : vector<100x1xf32> to vector<100x16xf32>
    %146 = arith.mulf %144, %145 : vector<100x16xf32>
    %147 = vector.extract_strided_slice %20 {offsets = [21, 0], sizes = [100, 16], strides = [1, 1]} : vector<122x16xf32> to vector<100x16xf32>
    %148 = vector.extract_strided_slice %18 {offsets = [22, 0], sizes = [100, 16], strides = [1, 1]} : vector<122x16xf32> to vector<100x16xf32>
    %149 = vector.broadcast %49 : vector<100x1xf32> to vector<100x16xf32>
    %150 = arith.mulf %148, %149 : vector<100x16xf32>
    %151 = tpu.concatenate %143, %146, %147, %150 in 0 : vector<100x16xf32>, vector<100x16xf32>, vector<100x16xf32>, vector<100x16xf32> -> vector<400x16xf32>
    %152 = arith.truncf %151 : vector<400x16xf32> to vector<400x16xbf16>
    %c128 = arith.constant 128 : index
    %c0_30 = arith.constant 0 : index
    %153 = vector.load %arg4[%c128, %c0_30] : memref<144x32xbf16, #tpu.memory_space<vmem>>, vector<16x32xbf16>
    %cst_31 = arith.constant dense<0.000000e+00> : vector<400x32xf32>
    %154 = tpu.matmul %152, %153, %cst_31 {dimension_numbers = #tpu.dot_dimension_numbers<[1], [0], [0], [1], [0, 0, 1, 1], [], []>} : vector<400x16xbf16>, vector<16x32xbf16>, vector<400x32xf32> -> vector<400x32xf32>
    %155 = arith.addf %142, %154 : vector<400x32xf32>
    %156 = vector.extract_strided_slice %155 {offsets = [0, 0], sizes = [100, 32], strides = [1, 1]} : vector<400x32xf32> to vector<100x32xf32>
    %157 = vector.extract_strided_slice %155 {offsets = [100, 0], sizes = [100, 32], strides = [1, 1]} : vector<400x32xf32> to vector<100x32xf32>
    %158 = arith.maximumf %156, %157 : vector<100x32xf32>
    %159 = vector.extract_strided_slice %155 {offsets = [200, 0], sizes = [100, 32], strides = [1, 1]} : vector<400x32xf32> to vector<100x32xf32>
    %160 = vector.extract_strided_slice %155 {offsets = [300, 0], sizes = [100, 32], strides = [1, 1]} : vector<400x32xf32> to vector<100x32xf32>
    %161 = arith.maximumf %159, %160 : vector<100x32xf32>
    %162 = arith.maximumf %158, %161 : vector<100x32xf32>
    %c0_32 = arith.constant 0 : index
    %c0_33 = arith.constant 0 : index
    %163 = vector.load %arg5[%c0_32, %c0_33] : memref<1x32xf32, #tpu.memory_space<vmem>>, vector<1x32xf32>
    %164 = vector.broadcast %163 : vector<1x32xf32> to vector<100x32xf32>
    %165 = arith.addf %162, %164 : vector<100x32xf32>
    %cst_34 = arith.constant 0.000000e+00 : f32
    %166 = vector.broadcast %cst_34 : f32 to vector<100x32xf32>
    %167 = arith.maximumf %165, %166 : vector<100x32xf32>
    %168 = arith.truncf %167 : vector<100x32xf32> to vector<100x32xbf16>
    %c0_35 = arith.constant 0 : index
    %c0_36 = arith.constant 0 : index
    %c0_37 = arith.constant 0 : index
    %169 = vector.load %arg6[%c0_35, %c0_36, %c0_37] : memref<1x100x32xbf16, #tpu.memory_space<vmem>>, vector<1x100x32xbf16>
    %170 = vector.shape_cast %169 : vector<1x100x32xbf16> to vector<100x32xbf16>
    %171 = vector.shape_cast %168 : vector<100x32xbf16> to vector<1x100x32xbf16>
    tpu.vector_store %arg6[%c0_35, %c0_36, %c0_37], %171 {strides = array<i32>} : memref<1x100x32xbf16, #tpu.memory_space<vmem>>, vector<1x100x32xbf16>,
    return
  }
  func.func @transform_0(%arg0: i32) -> (i32, i32, i32) {
    %c0_i32 = arith.constant 0 : i32
    %c0_i32_0 = arith.constant 0 : i32
    %c0_i32_1 = arith.constant 0 : i32
    return %arg0, %c0_i32, %c0_i32_0 : i32, i32, i32
  }
  func.func @transform_1(%arg0: i32) -> (i32, i32) {
    %c0_i32 = arith.constant 0 : i32
    %c0_i32_0 = arith.constant 0 : i32
    %c0_i32_1 = arith.constant 0 : i32
    return %c0_i32, %c0_i32_0 : i32, i32
  }
  func.func @transform_2(%arg0: i32) -> (i32, i32) {
    %c0_i32 = arith.constant 0 : i32
    %c0_i32_0 = arith.constant 0 : i32
    %c0_i32_1 = arith.constant 0 : i32
    return %c0_i32, %c0_i32_0 : i32, i32
  }
  func.func @transform_3(%arg0: i32) -> (i32, i32) {
    %c0_i32 = arith.constant 0 : i32
    %c0_i32_0 = arith.constant 0 : i32
    %c0_i32_1 = arith.constant 0 : i32
    return %c0_i32, %c0_i32_0 : i32, i32
  }
  func.func @transform_4(%arg0: i32) -> (i32, i32) {
    %c0_i32 = arith.constant 0 : i32
    %c0_i32_0 = arith.constant 0 : i32
    %c0_i32_1 = arith.constant 0 : i32
    return %c0_i32, %c0_i32_0 : i32, i32
  }
  func.func @transform_5(%arg0: i32) -> (i32, i32, i32) {
    %c0_i32 = arith.constant 0 : i32
    %c0_i32_0 = arith.constant 0 : i32
    %c0_i32_1 = arith.constant 0 : i32
    return %arg0, %c0_i32, %c0_i32_0 : i32, i32, i32
  }
}

module attributes {stable_mosaic.version = 11 : i64} {
  func.func @mlp_kernel(%arg0: i32, %arg1: memref<2x3200xbf16, #tpu.memory_space<vmem>>, %arg2: memref<3200x64xbf16, #tpu.memory_space<vmem>>, %arg3: memref<1x64xf32, #tpu.memory_space<vmem>>, %arg4: memref<64x8xbf16, #tpu.memory_space<vmem>>, %arg5: memref<1x8xf32, #tpu.memory_space<vmem>>, %arg6: memref<2x8xf32, #tpu.memory_space<vmem>>) attributes {dimension_semantics = [#tpu.dimension_semantics<parallel>], iteration_bounds = array<i64: 1>, scalar_prefetch = 0 : i64, scratch_operands = 0 : i64, tpu.core_type = #tpu.core_type<tc>, window_params = [{transform_indices = @transform_0, window_bounds = array<i64: 2, 3200>}, {pipeline_mode = #tpu.pipeline_mode<synchronous>, transform_indices = @transform_1, window_bounds = array<i64: 3200, 64>}, {pipeline_mode = #tpu.pipeline_mode<synchronous>, transform_indices = @transform_2, window_bounds = array<i64: 1, 64>}, {pipeline_mode = #tpu.pipeline_mode<synchronous>, transform_indices = @transform_3, window_bounds = array<i64: 64, 8>}, {pipeline_mode = #tpu.pipeline_mode<synchronous>, transform_indices = @transform_4, window_bounds = array<i64: 1, 8>}, {transform_indices = @transform_5, window_bounds = array<i64: 2, 8>}]} {
    %c0 = arith.constant 0 : index
    %c0_0 = arith.constant 0 : index
    %0 = vector.load %arg1[%c0, %c0_0] : memref<2x3200xbf16, #tpu.memory_space<vmem>>, vector<2x3200xbf16>
    %c0_1 = arith.constant 0 : index
    %c0_2 = arith.constant 0 : index
    %1 = vector.load %arg2[%c0_1, %c0_2] : memref<3200x64xbf16, #tpu.memory_space<vmem>>, vector<3200x64xbf16>
    %cst = arith.constant dense<0.000000e+00> : vector<2x64xf32>
    %2 = tpu.matmul %0, %1, %cst {dimension_numbers = #tpu.dot_dimension_numbers<[1], [0], [0], [1], [0, 0, 1, 1], [], []>} : vector<2x3200xbf16>, vector<3200x64xbf16>, vector<2x64xf32> -> vector<2x64xf32>
    %c0_3 = arith.constant 0 : index
    %c0_4 = arith.constant 0 : index
    %3 = vector.load %arg3[%c0_3, %c0_4] : memref<1x64xf32, #tpu.memory_space<vmem>>, vector<1x64xf32>
    %4 = vector.broadcast %3 : vector<1x64xf32> to vector<2x64xf32>
    %5 = arith.addf %2, %4 : vector<2x64xf32>
    %cst_5 = arith.constant 0.000000e+00 : f32
    %6 = vector.broadcast %cst_5 : f32 to vector<2x64xf32>
    %7 = arith.maximumf %5, %6 : vector<2x64xf32>
    %8 = arith.truncf %7 : vector<2x64xf32> to vector<2x64xbf16>
    %c0_6 = arith.constant 0 : index
    %c0_7 = arith.constant 0 : index
    %9 = vector.load %arg4[%c0_6, %c0_7] : memref<64x8xbf16, #tpu.memory_space<vmem>>, vector<64x8xbf16>
    %cst_8 = arith.constant dense<0.000000e+00> : vector<2x8xf32>
    %10 = tpu.matmul %8, %9, %cst_8 {dimension_numbers = #tpu.dot_dimension_numbers<[1], [0], [0], [1], [0, 0, 1, 1], [], []>} : vector<2x64xbf16>, vector<64x8xbf16>, vector<2x8xf32> -> vector<2x8xf32>
    %c0_9 = arith.constant 0 : index
    %c0_10 = arith.constant 0 : index
    %11 = vector.load %arg5[%c0_9, %c0_10] : memref<1x8xf32, #tpu.memory_space<vmem>>, vector<1x8xf32>
    %12 = vector.broadcast %11 : vector<1x8xf32> to vector<2x8xf32>
    %13 = arith.addf %10, %12 : vector<2x8xf32>
    %cst_11 = arith.constant 0.000000e+00 : f32
    %14 = vector.broadcast %cst_11 : f32 to vector<2x8xf32>
    %15 = arith.maximumf %13, %14 : vector<2x8xf32>
    %c0_12 = arith.constant 0 : index
    %c0_13 = arith.constant 0 : index
    %16 = vector.load %arg6[%c0_12, %c0_13] : memref<2x8xf32, #tpu.memory_space<vmem>>, vector<2x8xf32>
    tpu.vector_store %arg6[%c0_12, %c0_13], %15 {strides = array<i32>} : memref<2x8xf32, #tpu.memory_space<vmem>>, vector<2x8xf32>,
    return
  }
  func.func @transform_0(%arg0: i32) -> (i32, i32) {
    %c0_i32 = arith.constant 0 : i32
    %c0_i32_0 = arith.constant 0 : i32
    return %arg0, %c0_i32 : i32, i32
  }
  func.func @transform_1(%arg0: i32) -> (i32, i32) {
    %c0_i32 = arith.constant 0 : i32
    %c0_i32_0 = arith.constant 0 : i32
    %c0_i32_1 = arith.constant 0 : i32
    return %c0_i32, %c0_i32_0 : i32, i32
  }
  func.func @transform_2(%arg0: i32) -> (i32, i32) {
    %c0_i32 = arith.constant 0 : i32
    %c0_i32_0 = arith.constant 0 : i32
    %c0_i32_1 = arith.constant 0 : i32
    return %c0_i32, %c0_i32_0 : i32, i32
  }
  func.func @transform_3(%arg0: i32) -> (i32, i32) {
    %c0_i32 = arith.constant 0 : i32
    %c0_i32_0 = arith.constant 0 : i32
    %c0_i32_1 = arith.constant 0 : i32
    return %c0_i32, %c0_i32_0 : i32, i32
  }
  func.func @transform_4(%arg0: i32) -> (i32, i32) {
    %c0_i32 = arith.constant 0 : i32
    %c0_i32_0 = arith.constant 0 : i32
    %c0_i32_1 = arith.constant 0 : i32
    return %c0_i32, %c0_i32_0 : i32, i32
  }
  func.func @transform_5(%arg0: i32) -> (i32, i32) {
    %c0_i32 = arith.constant 0 : i32
    %c0_i32_0 = arith.constant 0 : i32
    return %arg0, %c0_i32 : i32, i32
  }
}

</mosaic_0001>

<llo_original>
// kernel: sub_char_cnn_forward.3
$region0: #{sub_char_cnn_forward.3}
  #allocation0 [shape = 'u32[]', space=smem, size = 0x4, offset = 0x4, fixed_abs, tag = 'smem constant byte address 0x4 - core index']
  #allocation1 [shape = 'u32[144,128]{1,0:T(1,128)}', space=vmem, size = 0x12000, scoped, tag = 'internal scratch']
  %s0 = inlined_call_operand.vmem [shape: bf16[2,3200], index: 0, kind: input, shape index: {}]
  %s1 = inlined_call_operand.vmem [shape: bf16[3200,64], index: 1, kind: input, shape index: {}]
  %s2 = inlined_call_operand.vmem [shape: f32[1,64], index: 2, kind: input, shape index: {}]
  %s3 = inlined_call_operand.vmem [shape: bf16[64,8], index: 3, kind: input, shape index: {}]
  %s4 = inlined_call_operand.vmem [shape: f32[1,8], index: 4, kind: input, shape index: {}]
  %s5 = inlined_call_operand.hbm [shape: f32[2,8], index: 5, kind: output, shape index: {}]
  %s6 = sld [smem:[#allocation0]]
  $region30: #{sub_char_cnn_forward.3} parent=0
    _
  %s8 = ssub.s32 1, %s6
  %s9 = scalar_select 0, %s8, %s6
  $region1: #{sub_char_cnn_forward.3} parent=0
    #allocation2 [shape = 'u8[1024]{0}', space=vmem, size = 0x400, scoped, tag = 'output window, operand 0, single buffered']
    #allocation3 [shape = 's32[1]{0}', space=sflag, size = 0x4, scoped, tag = 'scoped memory for sub_char_cnn_forward.3']
    %10 = vsyncpa [#allocation3], 0
    // Predicated region
    $region2: #{sub_char_cnn_forward.3} parent=1 // pred_check
      _
    $region3: #{sub_char_cnn_forward.3} parent=1 // pred_check_branch
      %12 = sbr.rel (0) target = $region5
    $region4: #{sub_char_cnn_forward.3} parent=1 // pred_region
      _
    $region5: #{sub_char_cnn_forward.3} parent=1 // pred_fallthru
      _
    // Predicated region
    $region6: #{sub_char_cnn_forward.3} parent=1 // pred_check
      _
    $region7: #{sub_char_cnn_forward.3} parent=1 // pred_check_branch
      %14 = sbr.rel (0) target = $region9
    $region8: #{sub_char_cnn_forward.3} parent=1 // pred_region
      _
    $region9: #{sub_char_cnn_forward.3} parent=1 // pred_fallthru
      _
    // Predicated region
    $region10: #{sub_char_cnn_forward.3} parent=1 // pred_check
      _
    $region11: #{sub_char_cnn_forward.3} parent=1 // pred_check_branch
      %16 = sbr.rel (0) target = $region13
    $region12: #{sub_char_cnn_forward.3} parent=1 // pred_region
      _
    $region13: #{sub_char_cnn_forward.3} parent=1 // pred_fallthru
      _
    // Predicated region
    $region14: #{sub_char_cnn_forward.3} parent=1 // pred_check
      _
    $region15: #{sub_char_cnn_forward.3} parent=1 // pred_check_branch
      %18 = sbr.rel (0) target = $region17
    $region16: #{sub_char_cnn_forward.3} parent=1 // pred_region
      _
    $region17: #{sub_char_cnn_forward.3} parent=1 // pred_fallthru
      _
    // Predicated region
    $region18: #{sub_char_cnn_forward.3} parent=1 // pred_check
      _
    $region19: #{sub_char_cnn_forward.3} parent=1 // pred_check_branch
      %20 = sbr.rel (0) target = $region21
    $region20: #{sub_char_cnn_forward.3} parent=1 // pred_region
      _
    $region21: #{sub_char_cnn_forward.3} parent=1 // pred_fallthru
      _
    %v22 = vld [vmem:[%s0] sm:$0xff]
    %v23 = vld [vmem:[%s0 + $0x8] sm:$0xff]
    %v24 = vld [vmem:[%s0 + $0x10] sm:$0xff]
    %v25 = vld [vmem:[%s0 + $0x18] sm:$0x1]
    %v26 = vld [vmem:[%s1] sm:$0xf]
    %v27 = vld [vmem:[%s1 + $0x4] sm:$0xf]
    %v28 = vld [vmem:[%s1 + $0x8] sm:$0xf]
    %v29 = vld [vmem:[%s1 + $0xc] sm:$0xf]
    %v30 = vld [vmem:[%s1 + $0x10] sm:$0xf]
    %v31 = vld [vmem:[%s1 + $0x14] sm:$0xf]
    %v32 = vld [vmem:[%s1 + $0x18] sm:$0xf]
    %v33 = vld [vmem:[%s1 + $0x1c] sm:$0xf]
    %v34 = vld [vmem:[%s1 + $0x20] sm:$0xf]
    %v35 = vld [vmem:[%s1 + $0x24] sm:$0xf]
    %v36 = vld [vmem:[%s1 + $0x28] sm:$0xf]
    %v37 = vld [vmem:[%s1 + $0x2c] sm:$0xf]
    %v38 = vld [vmem:[%s1 + $0x30] sm:$0xf]
    %v39 = vld [vmem:[%s1 + $0x34] sm:$0xf]
    %v40 = vld [vmem:[%s1 + $0x38] sm:$0xf]
    %v41 = vld [vmem:[%s1 + $0x3c] sm:$0xf]
    %v42 = vld [vmem:[%s1 + $0x40] sm:$0xf]
    %v43 = vld [vmem:[%s1 + $0x44] sm:$0xf]
    %v44 = vld [vmem:[%s1 + $0x48] sm:$0xf]
    %v45 = vld [vmem:[%s1 + $0x4c] sm:$0xf]
    %v46 = vld [vmem:[%s1 + $0x50] sm:$0xf]
    %v47 = vld [vmem:[%s1 + $0x54] sm:$0xf]
    %v48 = vld [vmem:[%s1 + $0x58] sm:$0xf]
    %v49 = vld [vmem:[%s1 + $0x5c] sm:$0xf]
    %v50 = vld [vmem:[%s1 + $0x60] sm:$0xf]
    %v51 = vld [vmem:[%s1 + $0x64] sm:$0xf]
    %v52 = vld [vmem:[%s1 + $0x68] sm:$0xf]
    %v53 = vld [vmem:[%s1 + $0x6c] sm:$0xf]
    %v54 = vld [vmem:[%s1 + $0x70] sm:$0xf]
    %v55 = vld [vmem:[%s1 + $0x74] sm:$0xf]
    %v56 = vld [vmem:[%s1 + $0x78] sm:$0xf]
    %v57 = vld [vmem:[%s1 + $0x7c] sm:$0xf]
    %v58 = vld [vmem:[%s1 + $0x80] sm:$0xf]
    %v59 = vld [vmem:[%s1 + $0x84] sm:$0xf]
    %v60 = vld [vmem:[%s1 + $0x88] sm:$0xf]
    %v61 = vld [vmem:[%s1 + $0x8c] sm:$0xf]
    %v62 = vld [vmem:[%s1 + $0x90] sm:$0xf]
    %v63 = vld [vmem:[%s1 + $0x94] sm:$0xf]
    %v64 = vld [vmem:[%s1 + $0x98] sm:$0xf]
    %v65 = vld [vmem:[%s1 + $0x9c] sm:$0xf]
    %v66 = vld [vmem:[%s1 + $0xa0] sm:$0xf]
    %v67 = vld [vmem:[%s1 + $0xa4] sm:$0xf]
    %v68 = vld [vmem:[%s1 + $0xa8] sm:$0xf]
    %v69 = vld [vmem:[%s1 + $0xac] sm:$0xf]
    %v70 = vld [vmem:[%s1 + $0xb0] sm:$0xf]
    %v71 = vld [vmem:[%s1 + $0xb4] sm:$0xf]
    %v72 = vld [vmem:[%s1 + $0xb8] sm:$0xf]
    %v73 = vld [vmem:[%s1 + $0xbc] sm:$0xf]
    %v74 = vld [vmem:[%s1 + $0xc0] sm:$0xf]
    %v75 = vld [vmem:[%s1 + $0xc4] sm:$0xf]
    %v76 = vld [vmem:[%s1 + $0xc8] sm:$0xf]
    %v77 = vld [vmem:[%s1 + $0xcc] sm:$0xf]
    %v78 = vld [vmem:[%s1 + $0xd0] sm:$0xf]
    %v79 = vld [vmem:[%s1 + $0xd4] sm:$0xf]
    %v80 = vld [vmem:[%s1 + $0xd8] sm:$0xf]
    %v81 = vld [vmem:[%s1 + $0xdc] sm:$0xf]
    %v82 = vld [vmem:[%s1 + $0xe0] sm:$0xf]
    %v83 = vld [vmem:[%s1 + $0xe4] sm:$0xf]
    %v84 = vld [vmem:[%s1 + $0xe8] sm:$0xf]
    %v85 = vld [vmem:[%s1 + $0xec] sm:$0xf]
    %v86 = vld [vmem:[%s1 + $0xf0] sm:$0xf]
    %v87 = vld [vmem:[%s1 + $0xf4] sm:$0xf]
    %v88 = vld [vmem:[%s1 + $0xf8] sm:$0xf]
    %v89 = vld [vmem:[%s1 + $0xfc] sm:$0xf]
    %v90 = vld [vmem:[%s1 + $0x100] sm:$0xf]
    %v91 = vld [vmem:[%s1 + $0x104] sm:$0xf]
    %v92 = vld [vmem:[%s1 + $0x108] sm:$0xf]
    %v93 = vld [vmem:[%s1 + $0x10c] sm:$0xf]
    %v94 = vld [vmem:[%s1 + $0x110] sm:$0xf]
    %v95 = vld [vmem:[%s1 + $0x114] sm:$0xf]
    %v96 = vld [vmem:[%s1 + $0x118] sm:$0xf]
    %v97 = vld [vmem:[%s1 + $0x11c] sm:$0xf]
    %v98 = vld [vmem:[%s1 + $0x120] sm:$0xf]
    %v99 = vld [vmem:[%s1 + $0x124] sm:$0xf]
    %v100 = vld [vmem:[%s1 + $0x128] sm:$0xf]
    %v101 = vld [vmem:[%s1 + $0x12c] sm:$0xf]
    %v102 = vld [vmem:[%s1 + $0x130] sm:$0xf]
    %v103 = vld [vmem:[%s1 + $0x134] sm:$0xf]
    %v104 = vld [vmem:[%s1 + $0x138] sm:$0xf]
    %v105 = vld [vmem:[%s1 + $0x13c] sm:$0xf]
    %v106 = vld [vmem:[%s1 + $0x140] sm:$0xf]
    %v107 = vld [vmem:[%s1 + $0x144] sm:$0xf]
    %v108 = vld [vmem:[%s1 + $0x148] sm:$0xf]
    %v109 = vld [vmem:[%s1 + $0x14c] sm:$0xf]
    %v110 = vld [vmem:[%s1 + $0x150] sm:$0xf]
    %v111 = vld [vmem:[%s1 + $0x154] sm:$0xf]
    %v112 = vld [vmem:[%s1 + $0x158] sm:$0xf]
    %v113 = vld [vmem:[%s1 + $0x15c] sm:$0xf]
    %v114 = vld [vmem:[%s1 + $0x160] sm:$0xf]
    %v115 = vld [vmem:[%s1 + $0x164] sm:$0xf]
    %v116 = vld [vmem:[%s1 + $0x168] sm:$0xf]
    %v117 = vld [vmem:[%s1 + $0x16c] sm:$0xf]
    %v118 = vld [vmem:[%s1 + $0x170] sm:$0xf]
    %v119 = vld [vmem:[%s1 + $0x174] sm:$0xf]
    %v120 = vld [vmem:[%s1 + $0x178] sm:$0xf]
    %v121 = vld [vmem:[%s1 + $0x17c] sm:$0xf]
    %v122 = vld [vmem:[%s1 + $0x180] sm:$0xf]
    %v123 = vld [vmem:[%s1 + $0x184] sm:$0xf]
    %v124 = vld [vmem:[%s1 + $0x188] sm:$0xf]
    %v125 = vld [vmem:[%s1 + $0x18c] sm:$0xf]
    %v126 = vld [vmem:[%s1 + $0x190] sm:$0xf]
    %v127 = vld [vmem:[%s1 + $0x194] sm:$0xf]
    %v128 = vld [vmem:[%s1 + $0x198] sm:$0xf]
    %v129 = vld [vmem:[%s1 + $0x19c] sm:$0xf]
    %v130 = vld [vmem:[%s1 + $0x1a0] sm:$0xf]
    %v131 = vld [vmem:[%s1 + $0x1a4] sm:$0xf]
    %v132 = vld [vmem:[%s1 + $0x1a8] sm:$0xf]
    %v133 = vld [vmem:[%s1 + $0x1ac] sm:$0xf]
    %v134 = vld [vmem:[%s1 + $0x1b0] sm:$0xf]
    %v135 = vld [vmem:[%s1 + $0x1b4] sm:$0xf]
    %v136 = vld [vmem:[%s1 + $0x1b8] sm:$0xf]
    %v137 = vld [vmem:[%s1 + $0x1bc] sm:$0xf]
    %v138 = vld [vmem:[%s1 + $0x1c0] sm:$0xf]
    %v139 = vld [vmem:[%s1 + $0x1c4] sm:$0xf]
    %v140 = vld [vmem:[%s1 + $0x1c8] sm:$0xf]
    %v141 = vld [vmem:[%s1 + $0x1cc] sm:$0xf]
    %v142 = vld [vmem:[%s1 + $0x1d0] sm:$0xf]
    %v143 = vld [vmem:[%s1 + $0x1d4] sm:$0xf]
    %v144 = vld [vmem:[%s1 + $0x1d8] sm:$0xf]
    %v145 = vld [vmem:[%s1 + $0x1dc] sm:$0xf]
    %v146 = vld [vmem:[%s1 + $0x1e0] sm:$0xf]
    %v147 = vld [vmem:[%s1 + $0x1e4] sm:$0xf]
    %v148 = vld [vmem:[%s1 + $0x1e8] sm:$0xf]
    %v149 = vld [vmem:[%s1 + $0x1ec] sm:$0xf]
    %v150 = vld [vmem:[%s1 + $0x1f0] sm:$0xf]
    %v151 = vld [vmem:[%s1 + $0x1f4] sm:$0xf]
    %v152 = vld [vmem:[%s1 + $0x1f8] sm:$0xf]
    %v153 = vld [vmem:[%s1 + $0x1fc] sm:$0xf]
    %v154 = vld [vmem:[%s1 + $0x200] sm:$0xf]
    %v155 = vld [vmem:[%s1 + $0x204] sm:$0xf]
    %v156 = vld [vmem:[%s1 + $0x208] sm:$0xf]
    %v157 = vld [vmem:[%s1 + $0x20c] sm:$0xf]
    %v158 = vld [vmem:[%s1 + $0x210] sm:$0xf]
    %v159 = vld [vmem:[%s1 + $0x214] sm:$0xf]
    %v160 = vld [vmem:[%s1 + $0x218] sm:$0xf]
    %v161 = vld [vmem:[%s1 + $0x21c] sm:$0xf]
    %v162 = vld [vmem:[%s1 + $0x220] sm:$0xf]
    %v163 = vld [vmem:[%s1 + $0x224] sm:$0xf]
    %v164 = vld [vmem:[%s1 + $0x228] sm:$0xf]
    %v165 = vld [vmem:[%s1 + $0x22c] sm:$0xf]
    %v166 = vld [vmem:[%s1 + $0x230] sm:$0xf]
    %v167 = vld [vmem:[%s1 + $0x234] sm:$0xf]
    %v168 = vld [vmem:[%s1 + $0x238] sm:$0xf]
    %v169 = vld [vmem:[%s1 + $0x23c] sm:$0xf]
    %v170 = vld [vmem:[%s1 + $0x240] sm:$0xf]
    %v171 = vld [vmem:[%s1 + $0x244] sm:$0xf]
    %v172 = vld [vmem:[%s1 + $0x248] sm:$0xf]
    %v173 = vld [vmem:[%s1 + $0x24c] sm:$0xf]
    %v174 = vld [vmem:[%s1 + $0x250] sm:$0xf]
    %v175 = vld [vmem:[%s1 + $0x254] sm:$0xf]
    %v176 = vld [vmem:[%s1 + $0x258] sm:$0xf]
    %v177 = vld [vmem:[%s1 + $0x25c] sm:$0xf]
    %v178 = vld [vmem:[%s1 + $0x260] sm:$0xf]
    %v179 = vld [vmem:[%s1 + $0x264] sm:$0xf]
    %v180 = vld [vmem:[%s1 + $0x268] sm:$0xf]
    %v181 = vld [vmem:[%s1 + $0x26c] sm:$0xf]
    %v182 = vld [vmem:[%s1 + $0x270] sm:$0xf]
    %v183 = vld [vmem:[%s1 + $0x274] sm:$0xf]
    %v184 = vld [vmem:[%s1 + $0x278] sm:$0xf]
    %v185 = vld [vmem:[%s1 + $0x27c] sm:$0xf]
    %v186 = vld [vmem:[%s1 + $0x280] sm:$0xf]
    %v187 = vld [vmem:[%s1 + $0x284] sm:$0xf]
    %v188 = vld [vmem:[%s1 + $0x288] sm:$0xf]
    %v189 = vld [vmem:[%s1 + $0x28c] sm:$0xf]
    %v190 = vld [vmem:[%s1 + $0x290] sm:$0xf]
    %v191 = vld [vmem:[%s1 + $0x294] sm:$0xf]
    %v192 = vld [vmem:[%s1 + $0x298] sm:$0xf]
    %v193 = vld [vmem:[%s1 + $0x29c] sm:$0xf]
    %v194 = vld [vmem:[%s1 + $0x2a0] sm:$0xf]
    %v195 = vld [vmem:[%s1 + $0x2a4] sm:$0xf]
    %v196 = vld [vmem:[%s1 + $0x2a8] sm:$0xf]
    %v197 = vld [vmem:[%s1 + $0x2ac] sm:$0xf]
    %v198 = vld [vmem:[%s1 + $0x2b0] sm:$0xf]
    %v199 = vld [vmem:[%s1 + $0x2b4] sm:$0xf]
    %v200 = vld [vmem:[%s1 + $0x2b8] sm:$0xf]
    %v201 = vld [vmem:[%s1 + $0x2bc] sm:$0xf]
    %v202 = vld [vmem:[%s1 + $0x2c0] sm:$0xf]
    %v203 = vld [vmem:[%s1 + $0x2c4] sm:$0xf]
    %v204 = vld [vmem:[%s1 + $0x2c8] sm:$0xf]
    %v205 = vld [vmem:[%s1 + $0x2cc] sm:$0xf]
    %v206 = vld [vmem:[%s1 + $0x2d0] sm:$0xf]
    %v207 = vld [vmem:[%s1 + $0x2d4] sm:$0xf]
    %v208 = vld [vmem:[%s1 + $0x2d8] sm:$0xf]
    %v209 = vld [vmem:[%s1 + $0x2dc] sm:$0xf]
    %v210 = vld [vmem:[%s1 + $0x2e0] sm:$0xf]
    %v211 = vld [vmem:[%s1 + $0x2e4] sm:$0xf]
    %v212 = vld [vmem:[%s1 + $0x2e8] sm:$0xf]
    %v213 = vld [vmem:[%s1 + $0x2ec] sm:$0xf]
    %v214 = vld [vmem:[%s1 + $0x2f0] sm:$0xf]
    %v215 = vld [vmem:[%s1 + $0x2f4] sm:$0xf]
    %v216 = vld [vmem:[%s1 + $0x2f8] sm:$0xf]
    %v217 = vld [vmem:[%s1 + $0x2fc] sm:$0xf]
    %v218 = vld [vmem:[%s1 + $0x300] sm:$0xf]
    %v219 = vld [vmem:[%s1 + $0x304] sm:$0xf]
    %v220 = vld [vmem:[%s1 + $0x308] sm:$0xf]
    %v221 = vld [vmem:[%s1 + $0x30c] sm:$0xf]
    %v222 = vld [vmem:[%s1 + $0x310] sm:$0xf]
    %v223 = vld [vmem:[%s1 + $0x314] sm:$0xf]
    %v224 = vld [vmem:[%s1 + $0x318] sm:$0xf]
    %v225 = vld [vmem:[%s1 + $0x31c] sm:$0xf]
    %v226 = vld [vmem:[%s1 + $0x320] sm:$0xf]
    %v227 = vld [vmem:[%s1 + $0x324] sm:$0xf]
    %v228 = vld [vmem:[%s1 + $0x328] sm:$0xf]
    %v229 = vld [vmem:[%s1 + $0x32c] sm:$0xf]
    %v230 = vld [vmem:[%s1 + $0x330] sm:$0xf]
    %v231 = vld [vmem:[%s1 + $0x334] sm:$0xf]
    %v232 = vld [vmem:[%s1 + $0x338] sm:$0xf]
    %v233 = vld [vmem:[%s1 + $0x33c] sm:$0xf]
    %v234 = vld [vmem:[%s1 + $0x340] sm:$0xf]
    %v235 = vld [vmem:[%s1 + $0x344] sm:$0xf]
    %v236 = vld [vmem:[%s1 + $0x348] sm:$0xf]
    %v237 = vld [vmem:[%s1 + $0x34c] sm:$0xf]
    %v238 = vld [vmem:[%s1 + $0x350] sm:$0xf]
    %v239 = vld [vmem:[%s1 + $0x354] sm:$0xf]
    %v240 = vld [vmem:[%s1 + $0x358] sm:$0xf]
    %v241 = vld [vmem:[%s1 + $0x35c] sm:$0xf]
    %v242 = vld [vmem:[%s1 + $0x360] sm:$0xf]
    %v243 = vld [vmem:[%s1 + $0x364] sm:$0xf]
    %v244 = vld [vmem:[%s1 + $0x368] sm:$0xf]
    %v245 = vld [vmem:[%s1 + $0x36c] sm:$0xf]
    %v246 = vld [vmem:[%s1 + $0x370] sm:$0xf]
    %v247 = vld [vmem:[%s1 + $0x374] sm:$0xf]
    %v248 = vld [vmem:[%s1 + $0x378] sm:$0xf]
    %v249 = vld [vmem:[%s1 + $0x37c] sm:$0xf]
    %v250 = vld [vmem:[%s1 + $0x380] sm:$0xf]
    %v251 = vld [vmem:[%s1 + $0x384] sm:$0xf]
    %v252 = vld [vmem:[%s1 + $0x388] sm:$0xf]
    %v253 = vld [vmem:[%s1 + $0x38c] sm:$0xf]
    %v254 = vld [vmem:[%s1 + $0x390] sm:$0xf]
    %v255 = vld [vmem:[%s1 + $0x394] sm:$0xf]
    %v256 = vld [vmem:[%s1 + $0x398] sm:$0xf]
    %v257 = vld [vmem:[%s1 + $0x39c] sm:$0xf]
    %v258 = vld [vmem:[%s1 + $0x3a0] sm:$0xf]
    %v259 = vld [vmem:[%s1 + $0x3a4] sm:$0xf]
    %v260 = vld [vmem:[%s1 + $0x3a8] sm:$0xf]
    %v261 = vld [vmem:[%s1 + $0x3ac] sm:$0xf]
    %v262 = vld [vmem:[%s1 + $0x3b0] sm:$0xf]
    %v263 = vld [vmem:[%s1 + $0x3b4] sm:$0xf]
    %v264 = vld [vmem:[%s1 + $0x3b8] sm:$0xf]
    %v265 = vld [vmem:[%s1 + $0x3bc] sm:$0xf]
    %v266 = vld [vmem:[%s1 + $0x3c0] sm:$0xf]
    %v267 = vld [vmem:[%s1 + $0x3c4] sm:$0xf]
    %v268 = vld [vmem:[%s1 + $0x3c8] sm:$0xf]
    %v269 = vld [vmem:[%s1 + $0x3cc] sm:$0xf]
    %v270 = vld [vmem:[%s1 + $0x3d0] sm:$0xf]
    %v271 = vld [vmem:[%s1 + $0x3d4] sm:$0xf]
    %v272 = vld [vmem:[%s1 + $0x3d8] sm:$0xf]
    %v273 = vld [vmem:[%s1 + $0x3dc] sm:$0xf]
    %v274 = vld [vmem:[%s1 + $0x3e0] sm:$0xf]
    %v275 = vld [vmem:[%s1 + $0x3e4] sm:$0xf]
    %v276 = vld [vmem:[%s1 + $0x3e8] sm:$0xf]
    %v277 = vld [vmem:[%s1 + $0x3ec] sm:$0xf]
    %v278 = vld [vmem:[%s1 + $0x3f0] sm:$0xf]
    %v279 = vld [vmem:[%s1 + $0x3f4] sm:$0xf]
    %v280 = vld [vmem:[%s1 + $0x3f8] sm:$0xf]
    %v281 = vld [vmem:[%s1 + $0x3fc] sm:$0xf]
    %v282 = vld [vmem:[%s1 + $0x400] sm:$0xf]
    %v283 = vld [vmem:[%s1 + $0x404] sm:$0xf]
    %v284 = vld [vmem:[%s1 + $0x408] sm:$0xf]
    %v285 = vld [vmem:[%s1 + $0x40c] sm:$0xf]
    %v286 = vld [vmem:[%s1 + $0x410] sm:$0xf]
    %v287 = vld [vmem:[%s1 + $0x414] sm:$0xf]
    %v288 = vld [vmem:[%s1 + $0x418] sm:$0xf]
    %v289 = vld [vmem:[%s1 + $0x41c] sm:$0xf]
    %v290 = vld [vmem:[%s1 + $0x420] sm:$0xf]
    %v291 = vld [vmem:[%s1 + $0x424] sm:$0xf]
    %v292 = vld [vmem:[%s1 + $0x428] sm:$0xf]
    %v293 = vld [vmem:[%s1 + $0x42c] sm:$0xf]
    %v294 = vld [vmem:[%s1 + $0x430] sm:$0xf]
    %v295 = vld [vmem:[%s1 + $0x434] sm:$0xf]
    %v296 = vld [vmem:[%s1 + $0x438] sm:$0xf]
    %v297 = vld [vmem:[%s1 + $0x43c] sm:$0xf]
    %v298 = vld [vmem:[%s1 + $0x440] sm:$0xf]
    %v299 = vld [vmem:[%s1 + $0x444] sm:$0xf]
    %v300 = vld [vmem:[%s1 + $0x448] sm:$0xf]
    %v301 = vld [vmem:[%s1 + $0x44c] sm:$0xf]
    %v302 = vld [vmem:[%s1 + $0x450] sm:$0xf]
    %v303 = vld [vmem:[%s1 + $0x454] sm:$0xf]
    %v304 = vld [vmem:[%s1 + $0x458] sm:$0xf]
    %v305 = vld [vmem:[%s1 + $0x45c] sm:$0xf]
    %v306 = vld [vmem:[%s1 + $0x460] sm:$0xf]
    %v307 = vld [vmem:[%s1 + $0x464] sm:$0xf]
    %v308 = vld [vmem:[%s1 + $0x468] sm:$0xf]
    %v309 = vld [vmem:[%s1 + $0x46c] sm:$0xf]
    %v310 = vld [vmem:[%s1 + $0x470] sm:$0xf]
    %v311 = vld [vmem:[%s1 + $0x474] sm:$0xf]
    %v312 = vld [vmem:[%s1 + $0x478] sm:$0xf]
    %v313 = vld [vmem:[%s1 + $0x47c] sm:$0xf]
    %v314 = vld [vmem:[%s1 + $0x480] sm:$0xf]
    %v315 = vld [vmem:[%s1 + $0x484] sm:$0xf]
    %v316 = vld [vmem:[%s1 + $0x488] sm:$0xf]
    %v317 = vld [vmem:[%s1 + $0x48c] sm:$0xf]
    %v318 = vld [vmem:[%s1 + $0x490] sm:$0xf]
    %v319 = vld [vmem:[%s1 + $0x494] sm:$0xf]
    %v320 = vld [vmem:[%s1 + $0x498] sm:$0xf]
    %v321 = vld [vmem:[%s1 + $0x49c] sm:$0xf]
    %v322 = vld [vmem:[%s1 + $0x4a0] sm:$0xf]
    %v323 = vld [vmem:[%s1 + $0x4a4] sm:$0xf]
    %v324 = vld [vmem:[%s1 + $0x4a8] sm:$0xf]
    %v325 = vld [vmem:[%s1 + $0x4ac] sm:$0xf]
    %v326 = vld [vmem:[%s1 + $0x4b0] sm:$0xf]
    %v327 = vld [vmem:[%s1 + $0x4b4] sm:$0xf]
    %v328 = vld [vmem:[%s1 + $0x4b8] sm:$0xf]
    %v329 = vld [vmem:[%s1 + $0x4bc] sm:$0xf]
    %v330 = vld [vmem:[%s1 + $0x4c0] sm:$0xf]
    %v331 = vld [vmem:[%s1 + $0x4c4] sm:$0xf]
    %v332 = vld [vmem:[%s1 + $0x4c8] sm:$0xf]
    %v333 = vld [vmem:[%s1 + $0x4cc] sm:$0xf]
    %v334 = vld [vmem:[%s1 + $0x4d0] sm:$0xf]
    %v335 = vld [vmem:[%s1 + $0x4d4] sm:$0xf]
    %v336 = vld [vmem:[%s1 + $0x4d8] sm:$0xf]
    %v337 = vld [vmem:[%s1 + $0x4dc] sm:$0xf]
    %v338 = vld [vmem:[%s1 + $0x4e0] sm:$0xf]
    %v339 = vld [vmem:[%s1 + $0x4e4] sm:$0xf]
    %v340 = vld [vmem:[%s1 + $0x4e8] sm:$0xf]
    %v341 = vld [vmem:[%s1 + $0x4ec] sm:$0xf]
    %v342 = vld [vmem:[%s1 + $0x4f0] sm:$0xf]
    %v343 = vld [vmem:[%s1 + $0x4f4] sm:$0xf]
    %v344 = vld [vmem:[%s1 + $0x4f8] sm:$0xf]
    %v345 = vld [vmem:[%s1 + $0x4fc] sm:$0xf]
    %v346 = vld [vmem:[%s1 + $0x500] sm:$0xf]
    %v347 = vld [vmem:[%s1 + $0x504] sm:$0xf]
    %v348 = vld [vmem:[%s1 + $0x508] sm:$0xf]
    %v349 = vld [vmem:[%s1 + $0x50c] sm:$0xf]
    %v350 = vld [vmem:[%s1 + $0x510] sm:$0xf]
    %v351 = vld [vmem:[%s1 + $0x514] sm:$0xf]
    %v352 = vld [vmem:[%s1 + $0x518] sm:$0xf]
    %v353 = vld [vmem:[%s1 + $0x51c] sm:$0xf]
    %v354 = vld [vmem:[%s1 + $0x520] sm:$0xf]
    %v355 = vld [vmem:[%s1 + $0x524] sm:$0xf]
    %v356 = vld [vmem:[%s1 + $0x528] sm:$0xf]
    %v357 = vld [vmem:[%s1 + $0x52c] sm:$0xf]
    %v358 = vld [vmem:[%s1 + $0x530] sm:$0xf]
    %v359 = vld [vmem:[%s1 + $0x534] sm:$0xf]
    %v360 = vld [vmem:[%s1 + $0x538] sm:$0xf]
    %v361 = vld [vmem:[%s1 + $0x53c] sm:$0xf]
    %v362 = vld [vmem:[%s1 + $0x540] sm:$0xf]
    %v363 = vld [vmem:[%s1 + $0x544] sm:$0xf]
    %v364 = vld [vmem:[%s1 + $0x548] sm:$0xf]
    %v365 = vld [vmem:[%s1 + $0x54c] sm:$0xf]
    %v366 = vld [vmem:[%s1 + $0x550] sm:$0xf]
    %v367 = vld [vmem:[%s1 + $0x554] sm:$0xf]
    %v368 = vld [vmem:[%s1 + $0x558] sm:$0xf]
    %v369 = vld [vmem:[%s1 + $0x55c] sm:$0xf]
    %v370 = vld [vmem:[%s1 + $0x560] sm:$0xf]
    %v371 = vld [vmem:[%s1 + $0x564] sm:$0xf]
    %v372 = vld [vmem:[%s1 + $0x568] sm:$0xf]
    %v373 = vld [vmem:[%s1 + $0x56c] sm:$0xf]
    %v374 = vld [vmem:[%s1 + $0x570] sm:$0xf]
    %v375 = vld [vmem:[%s1 + $0x574] sm:$0xf]
    %v376 = vld [vmem:[%s1 + $0x578] sm:$0xf]
    %v377 = vld [vmem:[%s1 + $0x57c] sm:$0xf]
    %v378 = vld [vmem:[%s1 + $0x580] sm:$0xf]
    %v379 = vld [vmem:[%s1 + $0x584] sm:$0xf]
    %v380 = vld [vmem:[%s1 + $0x588] sm:$0xf]
    %v381 = vld [vmem:[%s1 + $0x58c] sm:$0xf]
    %v382 = vld [vmem:[%s1 + $0x590] sm:$0xf]
    %v383 = vld [vmem:[%s1 + $0x594] sm:$0xf]
    %v384 = vld [vmem:[%s1 + $0x598] sm:$0xf]
    %v385 = vld [vmem:[%s1 + $0x59c] sm:$0xf]
    %v386 = vld [vmem:[%s1 + $0x5a0] sm:$0xf]
    %v387 = vld [vmem:[%s1 + $0x5a4] sm:$0xf]
    %v388 = vld [vmem:[%s1 + $0x5a8] sm:$0xf]
    %v389 = vld [vmem:[%s1 + $0x5ac] sm:$0xf]
    %v390 = vld [vmem:[%s1 + $0x5b0] sm:$0xf]
    %v391 = vld [vmem:[%s1 + $0x5b4] sm:$0xf]
    %v392 = vld [vmem:[%s1 + $0x5b8] sm:$0xf]
    %v393 = vld [vmem:[%s1 + $0x5bc] sm:$0xf]
    %v394 = vld [vmem:[%s1 + $0x5c0] sm:$0xf]
    %v395 = vld [vmem:[%s1 + $0x5c4] sm:$0xf]
    %v396 = vld [vmem:[%s1 + $0x5c8] sm:$0xf]
    %v397 = vld [vmem:[%s1 + $0x5cc] sm:$0xf]
    %v398 = vld [vmem:[%s1 + $0x5d0] sm:$0xf]
    %v399 = vld [vmem:[%s1 + $0x5d4] sm:$0xf]
    %v400 = vld [vmem:[%s1 + $0x5d8] sm:$0xf]
    %v401 = vld [vmem:[%s1 + $0x5dc] sm:$0xf]
    %v402 = vld [vmem:[%s1 + $0x5e0] sm:$0xf]
    %v403 = vld [vmem:[%s1 + $0x5e4] sm:$0xf]
    %v404 = vld [vmem:[%s1 + $0x5e8] sm:$0xf]
    %v405 = vld [vmem:[%s1 + $0x5ec] sm:$0xf]
    %v406 = vld [vmem:[%s1 + $0x5f0] sm:$0xf]
    %v407 = vld [vmem:[%s1 + $0x5f4] sm:$0xf]
    %v408 = vld [vmem:[%s1 + $0x5f8] sm:$0xf]
    %v409 = vld [vmem:[%s1 + $0x5fc] sm:$0xf]
    %v410 = vld [vmem:[%s1 + $0x600] sm:$0xf]
    %v411 = vld [vmem:[%s1 + $0x604] sm:$0xf]
    %v412 = vld [vmem:[%s1 + $0x608] sm:$0xf]
    %v413 = vld [vmem:[%s1 + $0x60c] sm:$0xf]
    %v414 = vld [vmem:[%s1 + $0x610] sm:$0xf]
    %v415 = vld [vmem:[%s1 + $0x614] sm:$0xf]
    %v416 = vld [vmem:[%s1 + $0x618] sm:$0xf]
    %v417 = vld [vmem:[%s1 + $0x61c] sm:$0xf]
    %v418 = vld [vmem:[%s1 + $0x620] sm:$0xf]
    %v419 = vld [vmem:[%s1 + $0x624] sm:$0xf]
    %v420 = vld [vmem:[%s1 + $0x628] sm:$0xf]
    %v421 = vld [vmem:[%s1 + $0x62c] sm:$0xf]
    %v422 = vld [vmem:[%s1 + $0x630] sm:$0xf]
    %v423 = vld [vmem:[%s1 + $0x634] sm:$0xf]
    %v424 = vld [vmem:[%s1 + $0x638] sm:$0xf]
    %v425 = vld [vmem:[%s1 + $0x63c] sm:$0xf]
    %v426 = vld [vmem:[%s2] sm:$0x1]
    %v428 = vlaneseq
    %v429 = vshrl.u32 %v428, 7
    %v430 = vsub.s32 0, %v429
    %v431 = vrot.slane %v426, %v430
    %v437 = vcombine.high %v22, %v22
    %v439 = vunpack.c.l.s4 1966171168
    %v440 = vunpack.c.0.s8 %v439
    %v441 = vlaneseq
    %v442 = vshrl.u32 %v441, 7
    %v443 = vsub.s32 %v440, %v442
    %v444 = vrot.slane %v22, %v443
    %v446 = vunpack.c.l.s4 1966171168
    %v447 = vunpack.c.0.s8 %v446
    %v448 = vlaneseq
    %v449 = vshrl.u32 %v448, 7
    %v450 = vsub.s32 %v447, %v449
    %v451 = vrot.slane %v437, %v450
    %v452 = vcombine.high %v444, %v444
    %v453 = vcombine.high %v451, %v451
    %v455 = vunpack.c.l.s4 1966171168
    %v456 = vunpack.c.0.s8 %v455
    %v457 = vlaneseq
    %v458 = vshrl.u32 %v457, 7
    %v459 = vsub.s32 %v456, %v458
    %v460 = vrot.slane %v444, %v459
    %v462 = vunpack.c.l.s4 1966171168
    %v463 = vunpack.c.0.s8 %v462
    %v464 = vlaneseq
    %v465 = vshrl.u32 %v464, 7
    %v466 = vsub.s32 %v463, %v465
    %v467 = vrot.slane %v451, %v466
    %v469 = vunpack.c.l.s4 1966171168
    %v470 = vunpack.c.0.s8 %v469
    %v471 = vlaneseq
    %v472 = vshrl.u32 %v471, 7
    %v473 = vsub.s32 %v470, %v472
    %v474 = vrot.slane %v452, %v473
    %v476 = vunpack.c.l.s4 1966171168
    %v477 = vunpack.c.0.s8 %v476
    %v478 = vlaneseq
    %v479 = vshrl.u32 %v478, 7
    %v480 = vsub.s32 %v477, %v479
    %v481 = vrot.slane %v453, %v480
    %v482 = vcombine.high %v460, %v460
    %v483 = vcombine.high %v467, %v467
    %v484 = vcombine.high %v474, %v474
    %v485 = vcombine.high %v481, %v481
    %v486 = vcombine.high %v23, %v23
    %v488 = vunpack.c.l.s4 1966171168
    %v489 = vunpack.c.0.s8 %v488
    %v490 = vlaneseq
    %v491 = vshrl.u32 %v490, 7
    %v492 = vsub.s32 %v489, %v491
    %v493 = vrot.slane %v23, %v492
    %v495 = vunpack.c.l.s4 1966171168
    %v496 = vunpack.c.0.s8 %v495
    %v497 = vlaneseq
    %v498 = vshrl.u32 %v497, 7
    %v499 = vsub.s32 %v496, %v498
    %v500 = vrot.slane %v486, %v499
    %v501 = vcombine.high %v493, %v493
    %v502 = vcombine.high %v500, %v500
    %v504 = vunpack.c.l.s4 1966171168
    %v505 = vunpack.c.0.s8 %v504
    %v506 = vlaneseq
    %v507 = vshrl.u32 %v506, 7
    %v508 = vsub.s32 %v505, %v507
    %v509 = vrot.slane %v493, %v508
    %v511 = vunpack.c.l.s4 1966171168
    %v512 = vunpack.c.0.s8 %v511
    %v513 = vlaneseq
    %v514 = vshrl.u32 %v513, 7
    %v515 = vsub.s32 %v512, %v514
    %v516 = vrot.slane %v500, %v515
    %v518 = vunpack.c.l.s4 1966171168
    %v519 = vunpack.c.0.s8 %v518
    %v520 = vlaneseq
    %v521 = vshrl.u32 %v520, 7
    %v522 = vsub.s32 %v519, %v521
    %v523 = vrot.slane %v501, %v522
    %v525 = vunpack.c.l.s4 1966171168
    %v526 = vunpack.c.0.s8 %v525
    %v527 = vlaneseq
    %v528 = vshrl.u32 %v527, 7
    %v529 = vsub.s32 %v526, %v528
    %v530 = vrot.slane %v502, %v529
    %v531 = vcombine.high %v509, %v509
    %v532 = vcombine.high %v516, %v516
    %v533 = vcombine.high %v523, %v523
    %v534 = vcombine.high %v530, %v530
    %v535 = vcombine.high %v24, %v24
    %v537 = vunpack.c.l.s4 1966171168
    %v538 = vunpack.c.0.s8 %v537
    %v539 = vlaneseq
    %v540 = vshrl.u32 %v539, 7
    %v541 = vsub.s32 %v538, %v540
    %v542 = vrot.slane %v24, %v541
    %v544 = vunpack.c.l.s4 1966171168
    %v545 = vunpack.c.0.s8 %v544
    %v546 = vlaneseq
    %v547 = vshrl.u32 %v546, 7
    %v548 = vsub.s32 %v545, %v547
    %v549 = vrot.slane %v535, %v548
    %v550 = vcombine.high %v542, %v542
    %v551 = vcombine.high %v549, %v549
    %v553 = vunpack.c.l.s4 1966171168
    %v554 = vunpack.c.0.s8 %v553
    %v555 = vlaneseq
    %v556 = vshrl.u32 %v555, 7
    %v557 = vsub.s32 %v554, %v556
    %v558 = vrot.slane %v542, %v557
    %v560 = vunpack.c.l.s4 1966171168
    %v561 = vunpack.c.0.s8 %v560
    %v562 = vlaneseq
    %v563 = vshrl.u32 %v562, 7
    %v564 = vsub.s32 %v561, %v563
    %v565 = vrot.slane %v549, %v564
    %v567 = vunpack.c.l.s4 1966171168
    %v568 = vunpack.c.0.s8 %v567
    %v569 = vlaneseq
    %v570 = vshrl.u32 %v569, 7
    %v571 = vsub.s32 %v568, %v570
    %v572 = vrot.slane %v550, %v571
    %v574 = vunpack.c.l.s4 1966171168
    %v575 = vunpack.c.0.s8 %v574
    %v576 = vlaneseq
    %v577 = vshrl.u32 %v576, 7
    %v578 = vsub.s32 %v575, %v577
    %v579 = vrot.slane %v551, %v578
    %v580 = vcombine.high %v558, %v558
    %v581 = vcombine.high %v565, %v565
    %v582 = vcombine.high %v572, %v572
    %v583 = vcombine.high %v579, %v579
    %v585 = vunpack.c.l.s4 1966171168
    %v586 = vunpack.c.0.s8 %v585
    %v587 = vlaneseq
    %v588 = vshrl.u32 %v587, 7
    %v589 = vsub.s32 %v586, %v588
    %v590 = vrot.slane %v25, %v589
    %v592 = vunpack.c.l.s4 1966171168
    %v593 = vunpack.c.0.s8 %v592
    %v594 = vlaneseq
    %v595 = vshrl.u32 %v594, 7
    %v596 = vsub.s32 %v593, %v595
    %v597 = vrot.slane %v590, %v596
    %v1023 = vunpack.c.l.b16 %v26
    %v1024 = vunpack.c.l.b16 %v27
    %v1025 = vunpack.c.l.b16 %v28
    %v1026 = vunpack.c.l.b16 %v29
    %v1027 = vunpack.c.l.b16 %v30
    %v1028 = vunpack.c.l.b16 %v31
    %v1029 = vunpack.c.l.b16 %v32
    %v1030 = vunpack.c.l.b16 %v33
    %v1031 = vunpack.c.l.b16 %v34
    %v1032 = vunpack.c.l.b16 %v35
    %v1033 = vunpack.c.l.b16 %v36
    %v1034 = vunpack.c.l.b16 %v37
    %v1035 = vunpack.c.l.b16 %v38
    %v1036 = vunpack.c.l.b16 %v39
    %v1037 = vunpack.c.l.b16 %v40
    %v1038 = vunpack.c.l.b16 %v41
    %v1039 = vunpack.c.l.b16 %v42
    %v1040 = vunpack.c.l.b16 %v43
    %v1041 = vunpack.c.l.b16 %v44
    %v1042 = vunpack.c.l.b16 %v45
    %v1043 = vunpack.c.l.b16 %v46
    %v1044 = vunpack.c.l.b16 %v47
    %v1045 = vunpack.c.l.b16 %v48
    %v1046 = vunpack.c.l.b16 %v49
    %v1047 = vunpack.c.l.b16 %v50
    %v1048 = vunpack.c.l.b16 %v51
    %v1049 = vunpack.c.l.b16 %v52
    %v1050 = vunpack.c.l.b16 %v53
    %v1051 = vunpack.c.l.b16 %v54
    %v1052 = vunpack.c.l.b16 %v55
    %v1053 = vunpack.c.l.b16 %v56
    %v1054 = vunpack.c.l.b16 %v57
    %v1055 = vunpack.c.l.b16 %v58
    %v1056 = vunpack.c.l.b16 %v59
    %v1057 = vunpack.c.l.b16 %v60
    %v1058 = vunpack.c.l.b16 %v61
    %v1059 = vunpack.c.l.b16 %v62
    %v1060 = vunpack.c.l.b16 %v63
    %v1061 = vunpack.c.l.b16 %v64
    %v1062 = vunpack.c.l.b16 %v65
    %v1063 = vunpack.c.l.b16 %v66
    %v1064 = vunpack.c.l.b16 %v67
    %v1065 = vunpack.c.l.b16 %v68
    %v1066 = vunpack.c.l.b16 %v69
    %v1067 = vunpack.c.l.b16 %v70
    %v1068 = vunpack.c.l.b16 %v71
    %v1069 = vunpack.c.l.b16 %v72
    %v1070 = vunpack.c.l.b16 %v73
    %v1071 = vunpack.c.l.b16 %v74
    %v1072 = vunpack.c.l.b16 %v75
    %v1073 = vunpack.c.l.b16 %v76
    %v1074 = vunpack.c.l.b16 %v77
    %v1075 = vunpack.c.l.b16 %v78
    %v1076 = vunpack.c.l.b16 %v79
    %v1077 = vunpack.c.l.b16 %v80
    %v1078 = vunpack.c.l.b16 %v81
    %v1079 = vunpack.c.l.b16 %v82
    %v1080 = vunpack.c.l.b16 %v83
    %v1081 = vunpack.c.l.b16 %v84
    %v1082 = vunpack.c.l.b16 %v85
    %v1083 = vunpack.c.l.b16 %v86
    %v1084 = vunpack.c.l.b16 %v87
    %v1085 = vunpack.c.l.b16 %v88
    %v1086 = vunpack.c.l.b16 %v89
    %v1087 = vunpack.c.l.b16 %v90
    %v1088 = vunpack.c.l.b16 %v91
    %v1089 = vunpack.c.l.b16 %v92
    %v1090 = vunpack.c.l.b16 %v93
    %v1091 = vunpack.c.l.b16 %v94
    %v1092 = vunpack.c.l.b16 %v95
    %v1093 = vunpack.c.l.b16 %v96
    %v1094 = vunpack.c.l.b16 %v97
    %v1095 = vunpack.c.l.b16 %v98
    %v1096 = vunpack.c.l.b16 %v99
    %v1097 = vunpack.c.l.b16 %v100
    %v1098 = vunpack.c.l.b16 %v101
    %v1099 = vunpack.c.l.b16 %v102
    %v1100 = vunpack.c.l.b16 %v103
    %v1101 = vunpack.c.l.b16 %v104
    %v1102 = vunpack.c.l.b16 %v105
    %v1103 = vunpack.c.l.b16 %v106
    %v1104 = vunpack.c.l.b16 %v107
    %v1105 = vunpack.c.l.b16 %v108
    %v1106 = vunpack.c.l.b16 %v109
    %v1107 = vunpack.c.l.b16 %v110
    %v1108 = vunpack.c.l.b16 %v111
    %v1109 = vunpack.c.l.b16 %v112
    %v1110 = vunpack.c.l.b16 %v113
    %v1111 = vunpack.c.l.b16 %v114
    %v1112 = vunpack.c.l.b16 %v115
    %v1113 = vunpack.c.l.b16 %v116
    %v1114 = vunpack.c.l.b16 %v117
    %v1115 = vunpack.c.l.b16 %v118
    %v1116 = vunpack.c.l.b16 %v119
    %v1117 = vunpack.c.l.b16 %v120
    %v1118 = vunpack.c.l.b16 %v121
    %v1119 = vunpack.c.l.b16 %v122
    %v1120 = vunpack.c.l.b16 %v123
    %v1121 = vunpack.c.l.b16 %v124
    %v1122 = vunpack.c.l.b16 %v125
    %v1123 = vunpack.c.l.b16 %v126
    %v1124 = vunpack.c.l.b16 %v127
    %v1125 = vunpack.c.l.b16 %v128
    %v1126 = vunpack.c.l.b16 %v129
    %v1127 = vunpack.c.l.b16 %v130
    %v1128 = vunpack.c.l.b16 %v131
    %v1129 = vunpack.c.l.b16 %v132
    %v1130 = vunpack.c.l.b16 %v133
    %v1131 = vunpack.c.l.b16 %v134
    %v1132 = vunpack.c.l.b16 %v135
    %v1133 = vunpack.c.l.b16 %v136
    %v1134 = vunpack.c.l.b16 %v137
    %v1135 = vunpack.c.l.b16 %v138
    %v1136 = vunpack.c.l.b16 %v139
    %v1137 = vunpack.c.l.b16 %v140
    %v1138 = vunpack.c.l.b16 %v141
    %v1139 = vunpack.c.l.b16 %v142
    %v1140 = vunpack.c.l.b16 %v143
    %v1141 = vunpack.c.l.b16 %v144
    %v1142 = vunpack.c.l.b16 %v145
    %v1143 = vunpack.c.l.b16 %v146
    %v1144 = vunpack.c.l.b16 %v147
    %v1145 = vunpack.c.l.b16 %v148
    %v1146 = vunpack.c.l.b16 %v149
    %v1147 = vunpack.c.l.b16 %v150
    %v1148 = vunpack.c.l.b16 %v151
    %v1149 = vunpack.c.l.b16 %v152
    %v1150 = vunpack.c.l.b16 %v153
    %v1151 = vunpack.c.l.b16 %v154
    %v1152 = vunpack.c.l.b16 %v155
    %v1153 = vunpack.c.l.b16 %v156
    %v1154 = vunpack.c.l.b16 %v157
    %v1155 = vunpack.c.l.b16 %v158
    %v1156 = vunpack.c.l.b16 %v159
    %v1157 = vunpack.c.l.b16 %v160
    %v1158 = vunpack.c.l.b16 %v161
    %v1159 = vunpack.c.l.b16 %v162
    %v1160 = vunpack.c.l.b16 %v163
    %v1161 = vunpack.c.l.b16 %v164
    %v1162 = vunpack.c.l.b16 %v165
    %v1163 = vunpack.c.l.b16 %v166
    %v1164 = vunpack.c.l.b16 %v167
    %v1165 = vunpack.c.l.b16 %v168
    %v1166 = vunpack.c.l.b16 %v169
    %v1167 = vunpack.c.l.b16 %v170
    %v1168 = vunpack.c.l.b16 %v171
    %v1169 = vunpack.c.l.b16 %v172
    %v1170 = vunpack.c.l.b16 %v173
    %v1171 = vunpack.c.l.b16 %v174
    %v1172 = vunpack.c.l.b16 %v175
    %v1173 = vunpack.c.l.b16 %v176
    %v1174 = vunpack.c.l.b16 %v177
    %v1175 = vunpack.c.l.b16 %v178
    %v1176 = vunpack.c.l.b16 %v179
    %v1177 = vunpack.c.l.b16 %v180
    %v1178 = vunpack.c.l.b16 %v181
    %v1179 = vunpack.c.l.b16 %v182
    %v1180 = vunpack.c.l.b16 %v183
    %v1181 = vunpack.c.l.b16 %v184
    %v1182 = vunpack.c.l.b16 %v185
    %v1183 = vunpack.c.l.b16 %v186
    %v1184 = vunpack.c.l.b16 %v187
    %v1185 = vunpack.c.l.b16 %v188
    %v1186 = vunpack.c.l.b16 %v189
    %v1187 = vunpack.c.l.b16 %v190
    %v1188 = vunpack.c.l.b16 %v191
    %v1189 = vunpack.c.l.b16 %v192
    %v1190 = vunpack.c.l.b16 %v193
    %v1191 = vunpack.c.l.b16 %v194
    %v1192 = vunpack.c.l.b16 %v195
    %v1193 = vunpack.c.l.b16 %v196
    %v1194 = vunpack.c.l.b16 %v197
    %v1195 = vunpack.c.l.b16 %v198
    %v1196 = vunpack.c.l.b16 %v199
    %v1197 = vunpack.c.l.b16 %v200
    %v1198 = vunpack.c.l.b16 %v201
    %v1199 = vunpack.c.l.b16 %v202
    %v1200 = vunpack.c.l.b16 %v203
    %v1201 = vunpack.c.l.b16 %v204
    %v1202 = vunpack.c.l.b16 %v205
    %v1203 = vunpack.c.l.b16 %v206
    %v1204 = vunpack.c.l.b16 %v207
    %v1205 = vunpack.c.l.b16 %v208
    %v1206 = vunpack.c.l.b16 %v209
    %v1207 = vunpack.c.l.b16 %v210
    %v1208 = vunpack.c.l.b16 %v211
    %v1209 = vunpack.c.l.b16 %v212
    %v1210 = vunpack.c.l.b16 %v213
    %v1211 = vunpack.c.l.b16 %v214
    %v1212 = vunpack.c.l.b16 %v215
    %v1213 = vunpack.c.l.b16 %v216
    %v1214 = vunpack.c.l.b16 %v217
    %v1215 = vunpack.c.l.b16 %v218
    %v1216 = vunpack.c.l.b16 %v219
    %v1217 = vunpack.c.l.b16 %v220
    %v1218 = vunpack.c.l.b16 %v221
    %v1219 = vunpack.c.l.b16 %v222
    %v1220 = vunpack.c.l.b16 %v223
    %v1221 = vunpack.c.l.b16 %v224
    %v1222 = vunpack.c.l.b16 %v225
    %v1223 = vunpack.c.l.b16 %v226
    %v1224 = vunpack.c.l.b16 %v227
    %v1225 = vunpack.c.l.b16 %v228
    %v1226 = vunpack.c.l.b16 %v229
    %v1227 = vunpack.c.l.b16 %v230
    %v1228 = vunpack.c.l.b16 %v231
    %v1229 = vunpack.c.l.b16 %v232
    %v1230 = vunpack.c.l.b16 %v233
    %v1231 = vunpack.c.l.b16 %v234
    %v1232 = vunpack.c.l.b16 %v235
    %v1233 = vunpack.c.l.b16 %v236
    %v1234 = vunpack.c.l.b16 %v237
    %v1235 = vunpack.c.l.b16 %v238
    %v1236 = vunpack.c.l.b16 %v239
    %v1237 = vunpack.c.l.b16 %v240
    %v1238 = vunpack.c.l.b16 %v241
    %v1239 = vunpack.c.l.b16 %v242
    %v1240 = vunpack.c.l.b16 %v243
    %v1241 = vunpack.c.l.b16 %v244
    %v1242 = vunpack.c.l.b16 %v245
    %v1243 = vunpack.c.l.b16 %v246
    %v1244 = vunpack.c.l.b16 %v247
    %v1245 = vunpack.c.l.b16 %v248
    %v1246 = vunpack.c.l.b16 %v249
    %v1247 = vunpack.c.l.b16 %v250
    %v1248 = vunpack.c.l.b16 %v251
    %v1249 = vunpack.c.l.b16 %v252
    %v1250 = vunpack.c.l.b16 %v253
    %v1251 = vunpack.c.l.b16 %v254
    %v1252 = vunpack.c.l.b16 %v255
    %v1253 = vunpack.c.l.b16 %v256
    %v1254 = vunpack.c.l.b16 %v257
    %v1255 = vunpack.c.l.b16 %v258
    %v1256 = vunpack.c.l.b16 %v259
    %v1257 = vunpack.c.l.b16 %v260
    %v1258 = vunpack.c.l.b16 %v261
    %v1259 = vunpack.c.l.b16 %v262
    %v1260 = vunpack.c.l.b16 %v263
    %v1261 = vunpack.c.l.b16 %v264
    %v1262 = vunpack.c.l.b16 %v265
    %v1263 = vunpack.c.l.b16 %v266
    %v1264 = vunpack.c.l.b16 %v267
    %v1265 = vunpack.c.l.b16 %v268
    %v1266 = vunpack.c.l.b16 %v269
    %v1267 = vunpack.c.l.b16 %v270
    %v1268 = vunpack.c.l.b16 %v271
    %v1269 = vunpack.c.l.b16 %v272
    %v1270 = vunpack.c.l.b16 %v273
    %v1271 = vunpack.c.l.b16 %v274
    %v1272 = vunpack.c.l.b16 %v275
    %v1273 = vunpack.c.l.b16 %v276
    %v1274 = vunpack.c.l.b16 %v277
    %v1275 = vunpack.c.l.b16 %v278
    %v1276 = vunpack.c.l.b16 %v279
    %v1277 = vunpack.c.l.b16 %v280
    %v1278 = vunpack.c.l.b16 %v281
    %v1279 = vunpack.c.l.b16 %v282
    %v1280 = vunpack.c.l.b16 %v283
    %v1281 = vunpack.c.l.b16 %v284
    %v1282 = vunpack.c.l.b16 %v285
    %v1283 = vunpack.c.l.b16 %v286
    %v1284 = vunpack.c.l.b16 %v287
    %v1285 = vunpack.c.l.b16 %v288
    %v1286 = vunpack.c.l.b16 %v289
    %v1287 = vunpack.c.l.b16 %v290
    %v1288 = vunpack.c.l.b16 %v291
    %v1289 = vunpack.c.l.b16 %v292
    %v1290 = vunpack.c.l.b16 %v293
    %v1291 = vunpack.c.l.b16 %v294
    %v1292 = vunpack.c.l.b16 %v295
    %v1293 = vunpack.c.l.b16 %v296
    %v1294 = vunpack.c.l.b16 %v297
    %v1295 = vunpack.c.l.b16 %v298
    %v1296 = vunpack.c.l.b16 %v299
    %v1297 = vunpack.c.l.b16 %v300
    %v1298 = vunpack.c.l.b16 %v301
    %v1299 = vunpack.c.l.b16 %v302
    %v1300 = vunpack.c.l.b16 %v303
    %v1301 = vunpack.c.l.b16 %v304
    %v1302 = vunpack.c.l.b16 %v305
    %v1303 = vunpack.c.l.b16 %v306
    %v1304 = vunpack.c.l.b16 %v307
    %v1305 = vunpack.c.l.b16 %v308
    %v1306 = vunpack.c.l.b16 %v309
    %v1307 = vunpack.c.l.b16 %v310
    %v1308 = vunpack.c.l.b16 %v311
    %v1309 = vunpack.c.l.b16 %v312
    %v1310 = vunpack.c.l.b16 %v313
    %v1311 = vunpack.c.l.b16 %v314
    %v1312 = vunpack.c.l.b16 %v315
    %v1313 = vunpack.c.l.b16 %v316
    %v1314 = vunpack.c.l.b16 %v317
    %v1315 = vunpack.c.l.b16 %v318
    %v1316 = vunpack.c.l.b16 %v319
    %v1317 = vunpack.c.l.b16 %v320
    %v1318 = vunpack.c.l.b16 %v321
    %v1319 = vunpack.c.l.b16 %v322
    %v1320 = vunpack.c.l.b16 %v323
    %v1321 = vunpack.c.l.b16 %v324
    %v1322 = vunpack.c.l.b16 %v325
    %v1323 = vunpack.c.l.b16 %v326
    %v1324 = vunpack.c.l.b16 %v327
    %v1325 = vunpack.c.l.b16 %v328
    %v1326 = vunpack.c.l.b16 %v329
    %v1327 = vunpack.c.l.b16 %v330
    %v1328 = vunpack.c.l.b16 %v331
    %v1329 = vunpack.c.l.b16 %v332
    %v1330 = vunpack.c.l.b16 %v333
    %v1331 = vunpack.c.l.b16 %v334
    %v1332 = vunpack.c.l.b16 %v335
    %v1333 = vunpack.c.l.b16 %v336
    %v1334 = vunpack.c.l.b16 %v337
    %v1335 = vunpack.c.l.b16 %v338
    %v1336 = vunpack.c.l.b16 %v339
    %v1337 = vunpack.c.l.b16 %v340
    %v1338 = vunpack.c.l.b16 %v341
    %v1339 = vunpack.c.l.b16 %v342
    %v1340 = vunpack.c.l.b16 %v343
    %v1341 = vunpack.c.l.b16 %v344
    %v1342 = vunpack.c.l.b16 %v345
    %v1343 = vunpack.c.l.b16 %v346
    %v1344 = vunpack.c.l.b16 %v347
    %v1345 = vunpack.c.l.b16 %v348
    %v1346 = vunpack.c.l.b16 %v349
    %v1347 = vunpack.c.l.b16 %v350
    %v1348 = vunpack.c.l.b16 %v351
    %v1349 = vunpack.c.l.b16 %v352
    %v1350 = vunpack.c.l.b16 %v353
    %v1351 = vunpack.c.l.b16 %v354
    %v1352 = vunpack.c.l.b16 %v355
    %v1353 = vunpack.c.l.b16 %v356
    %v1354 = vunpack.c.l.b16 %v357
    %v1355 = vunpack.c.l.b16 %v358
    %v1356 = vunpack.c.l.b16 %v359
    %v1357 = vunpack.c.l.b16 %v360
    %v1358 = vunpack.c.l.b16 %v361
    %v1359 = vunpack.c.l.b16 %v362
    %v1360 = vunpack.c.l.b16 %v363
    %v1361 = vunpack.c.l.b16 %v364
    %v1362 = vunpack.c.l.b16 %v365
    %v1363 = vunpack.c.l.b16 %v366
    %v1364 = vunpack.c.l.b16 %v367
    %v1365 = vunpack.c.l.b16 %v368
    %v1366 = vunpack.c.l.b16 %v369
    %v1367 = vunpack.c.l.b16 %v370
    %v1368 = vunpack.c.l.b16 %v371
    %v1369 = vunpack.c.l.b16 %v372
    %v1370 = vunpack.c.l.b16 %v373
    %v1371 = vunpack.c.l.b16 %v374
    %v1372 = vunpack.c.l.b16 %v375
    %v1373 = vunpack.c.l.b16 %v376
    %v1374 = vunpack.c.l.b16 %v377
    %v1375 = vunpack.c.l.b16 %v378
    %v1376 = vunpack.c.l.b16 %v379
    %v1377 = vunpack.c.l.b16 %v380
    %v1378 = vunpack.c.l.b16 %v381
    %v1379 = vunpack.c.l.b16 %v382
    %v1380 = vunpack.c.l.b16 %v383
    %v1381 = vunpack.c.l.b16 %v384
    %v1382 = vunpack.c.l.b16 %v385
    %v1383 = vunpack.c.l.b16 %v386
    %v1384 = vunpack.c.l.b16 %v387
    %v1385 = vunpack.c.l.b16 %v388
    %v1386 = vunpack.c.l.b16 %v389
    %v1387 = vunpack.c.l.b16 %v390
    %v1388 = vunpack.c.l.b16 %v391
    %v1389 = vunpack.c.l.b16 %v392
    %v1390 = vunpack.c.l.b16 %v393
    %v1391 = vunpack.c.l.b16 %v394
    %v1392 = vunpack.c.l.b16 %v395
    %v1393 = vunpack.c.l.b16 %v396
    %v1394 = vunpack.c.l.b16 %v397
    %v1395 = vunpack.c.l.b16 %v398
    %v1396 = vunpack.c.l.b16 %v399
    %v1397 = vunpack.c.l.b16 %v400
    %v1398 = vunpack.c.l.b16 %v401
    %v1399 = vunpack.c.l.b16 %v402
    %v1400 = vunpack.c.l.b16 %v403
    %v1401 = vunpack.c.l.b16 %v404
    %v1402 = vunpack.c.l.b16 %v405
    %v1403 = vunpack.c.l.b16 %v406
    %v1404 = vunpack.c.l.b16 %v407
    %v1405 = vunpack.c.l.b16 %v408
    %v1406 = vunpack.c.l.b16 %v409
    %v1407 = vunpack.c.l.b16 %v410
    %v1408 = vunpack.c.l.b16 %v411
    %v1409 = vunpack.c.l.b16 %v412
    %v1410 = vunpack.c.l.b16 %v413
    %v1411 = vunpack.c.l.b16 %v414
    %v1412 = vunpack.c.l.b16 %v415
    %v1413 = vunpack.c.l.b16 %v416
    %v1414 = vunpack.c.l.b16 %v417
    %v1415 = vunpack.c.l.b16 %v418
    %v1416 = vunpack.c.l.b16 %v419
    %v1417 = vunpack.c.l.b16 %v420
    %v1418 = vunpack.c.l.b16 %v421
    %v1419 = vunpack.c.l.b16 %v422
    %v1420 = vunpack.c.l.b16 %v423
    %v1421 = vunpack.c.l.b16 %v424
    %v1422 = vunpack.c.l.b16 %v425
    %v1423 = vpack.c.b16 %v1024, %v1023
    %v1424 = vpack.c.b16 %v1026, %v1025
    %v1425 = vpack.c.b16 %v1028, %v1027
    %v1426 = vpack.c.b16 %v1030, %v1029
    %v1427 = vpack.c.b16 %v1032, %v1031
    %v1428 = vpack.c.b16 %v1034, %v1033
    %v1429 = vpack.c.b16 %v1036, %v1035
    %v1430 = vpack.c.b16 %v1038, %v1037
    %v1431 = vpack.c.b16 %v1040, %v1039
    %v1432 = vpack.c.b16 %v1042, %v1041
    %v1433 = vpack.c.b16 %v1044, %v1043
    %v1434 = vpack.c.b16 %v1046, %v1045
    %v1435 = vpack.c.b16 %v1048, %v1047
    %v1436 = vpack.c.b16 %v1050, %v1049
    %v1437 = vpack.c.b16 %v1052, %v1051
    %v1438 = vpack.c.b16 %v1054, %v1053
    %v1439 = vpack.c.b16 %v1056, %v1055
    %v1440 = vpack.c.b16 %v1058, %v1057
    %v1441 = vpack.c.b16 %v1060, %v1059
    %v1442 = vpack.c.b16 %v1062, %v1061
    %v1443 = vpack.c.b16 %v1064, %v1063
    %v1444 = vpack.c.b16 %v1066, %v1065
    %v1445 = vpack.c.b16 %v1068, %v1067
    %v1446 = vpack.c.b16 %v1070, %v1069
    %v1447 = vpack.c.b16 %v1072, %v1071
    %v1448 = vpack.c.b16 %v1074, %v1073
    %v1449 = vpack.c.b16 %v1076, %v1075
    %v1450 = vpack.c.b16 %v1078, %v1077
    %v1451 = vpack.c.b16 %v1080, %v1079
    %v1452 = vpack.c.b16 %v1082, %v1081
    %v1453 = vpack.c.b16 %v1084, %v1083
    %v1454 = vpack.c.b16 %v1086, %v1085
    %v1455 = vpack.c.b16 %v1088, %v1087
    %v1456 = vpack.c.b16 %v1090, %v1089
    %v1457 = vpack.c.b16 %v1092, %v1091
    %v1458 = vpack.c.b16 %v1094, %v1093
    %v1459 = vpack.c.b16 %v1096, %v1095
    %v1460 = vpack.c.b16 %v1098, %v1097
    %v1461 = vpack.c.b16 %v1100, %v1099
    %v1462 = vpack.c.b16 %v1102, %v1101
    %v1463 = vpack.c.b16 %v1104, %v1103
    %v1464 = vpack.c.b16 %v1106, %v1105
    %v1465 = vpack.c.b16 %v1108, %v1107
    %v1466 = vpack.c.b16 %v1110, %v1109
    %v1467 = vpack.c.b16 %v1112, %v1111
    %v1468 = vpack.c.b16 %v1114, %v1113
    %v1469 = vpack.c.b16 %v1116, %v1115
    %v1470 = vpack.c.b16 %v1118, %v1117
    %v1471 = vpack.c.b16 %v1120, %v1119
    %v1472 = vpack.c.b16 %v1122, %v1121
    %v1473 = vpack.c.b16 %v1124, %v1123
    %v1474 = vpack.c.b16 %v1126, %v1125
    %v1475 = vpack.c.b16 %v1128, %v1127
    %v1476 = vpack.c.b16 %v1130, %v1129
    %v1477 = vpack.c.b16 %v1132, %v1131
    %v1478 = vpack.c.b16 %v1134, %v1133
    %v1479 = vpack.c.b16 %v1136, %v1135
    %v1480 = vpack.c.b16 %v1138, %v1137
    %v1481 = vpack.c.b16 %v1140, %v1139
    %v1482 = vpack.c.b16 %v1142, %v1141
    %v1483 = vpack.c.b16 %v1144, %v1143
    %v1484 = vpack.c.b16 %v1146, %v1145
    %v1485 = vpack.c.b16 %v1148, %v1147
    %v1486 = vpack.c.b16 %v1150, %v1149
    %v1487 = vpack.c.b16 %v1152, %v1151
    %v1488 = vpack.c.b16 %v1154, %v1153
    %v1489 = vpack.c.b16 %v1156, %v1155
    %v1490 = vpack.c.b16 %v1158, %v1157
    %v1491 = vpack.c.b16 %v1160, %v1159
    %v1492 = vpack.c.b16 %v1162, %v1161
    %v1493 = vpack.c.b16 %v1164, %v1163
    %v1494 = vpack.c.b16 %v1166, %v1165
    %v1495 = vpack.c.b16 %v1168, %v1167
    %v1496 = vpack.c.b16 %v1170, %v1169
    %v1497 = vpack.c.b16 %v1172, %v1171
    %v1498 = vpack.c.b16 %v1174, %v1173
    %v1499 = vpack.c.b16 %v1176, %v1175
    %v1500 = vpack.c.b16 %v1178, %v1177
    %v1501 = vpack.c.b16 %v1180, %v1179
    %v1502 = vpack.c.b16 %v1182, %v1181
    %v1503 = vpack.c.b16 %v1184, %v1183
    %v1504 = vpack.c.b16 %v1186, %v1185
    %v1505 = vpack.c.b16 %v1188, %v1187
    %v1506 = vpack.c.b16 %v1190, %v1189
    %v1507 = vpack.c.b16 %v1192, %v1191
    %v1508 = vpack.c.b16 %v1194, %v1193
    %v1509 = vpack.c.b16 %v1196, %v1195
    %v1510 = vpack.c.b16 %v1198, %v1197
    %v1511 = vpack.c.b16 %v1200, %v1199
    %v1512 = vpack.c.b16 %v1202, %v1201
    %v1513 = vpack.c.b16 %v1204, %v1203
    %v1514 = vpack.c.b16 %v1206, %v1205
    %v1515 = vpack.c.b16 %v1208, %v1207
    %v1516 = vpack.c.b16 %v1210, %v1209
    %v1517 = vpack.c.b16 %v1212, %v1211
    %v1518 = vpack.c.b16 %v1214, %v1213
    %v1519 = vpack.c.b16 %v1216, %v1215
    %v1520 = vpack.c.b16 %v1218, %v1217
    %v1521 = vpack.c.b16 %v1220, %v1219
    %v1522 = vpack.c.b16 %v1222, %v1221
    %v1523 = vpack.c.b16 %v1224, %v1223
    %v1524 = vpack.c.b16 %v1226, %v1225
    %v1525 = vpack.c.b16 %v1228, %v1227
    %v1526 = vpack.c.b16 %v1230, %v1229
    %v1527 = vpack.c.b16 %v1232, %v1231
    %v1528 = vpack.c.b16 %v1234, %v1233
    %v1529 = vpack.c.b16 %v1236, %v1235
    %v1530 = vpack.c.b16 %v1238, %v1237
    %v1531 = vpack.c.b16 %v1240, %v1239
    %v1532 = vpack.c.b16 %v1242, %v1241
    %v1533 = vpack.c.b16 %v1244, %v1243
    %v1534 = vpack.c.b16 %v1246, %v1245
    %v1535 = vpack.c.b16 %v1248, %v1247
    %v1536 = vpack.c.b16 %v1250, %v1249
    %v1537 = vpack.c.b16 %v1252, %v1251
    %v1538 = vpack.c.b16 %v1254, %v1253
    %v1539 = vpack.c.b16 %v1256, %v1255
    %v1540 = vpack.c.b16 %v1258, %v1257
    %v1541 = vpack.c.b16 %v1260, %v1259
    %v1542 = vpack.c.b16 %v1262, %v1261
    %v1543 = vpack.c.b16 %v1264, %v1263
    %v1544 = vpack.c.b16 %v1266, %v1265
    %v1545 = vpack.c.b16 %v1268, %v1267
    %v1546 = vpack.c.b16 %v1270, %v1269
    %v1547 = vpack.c.b16 %v1272, %v1271
    %v1548 = vpack.c.b16 %v1274, %v1273
    %v1549 = vpack.c.b16 %v1276, %v1275
    %v1550 = vpack.c.b16 %v1278, %v1277
    %v1551 = vpack.c.b16 %v1280, %v1279
    %v1552 = vpack.c.b16 %v1282, %v1281
    %v1553 = vpack.c.b16 %v1284, %v1283
    %v1554 = vpack.c.b16 %v1286, %v1285
    %v1555 = vpack.c.b16 %v1288, %v1287
    %v1556 = vpack.c.b16 %v1290, %v1289
    %v1557 = vpack.c.b16 %v1292, %v1291
    %v1558 = vpack.c.b16 %v1294, %v1293
    %v1559 = vpack.c.b16 %v1296, %v1295
    %v1560 = vpack.c.b16 %v1298, %v1297
    %v1561 = vpack.c.b16 %v1300, %v1299
    %v1562 = vpack.c.b16 %v1302, %v1301
    %v1563 = vpack.c.b16 %v1304, %v1303
    %v1564 = vpack.c.b16 %v1306, %v1305
    %v1565 = vpack.c.b16 %v1308, %v1307
    %v1566 = vpack.c.b16 %v1310, %v1309
    %v1567 = vpack.c.b16 %v1312, %v1311
    %v1568 = vpack.c.b16 %v1314, %v1313
    %v1569 = vpack.c.b16 %v1316, %v1315
    %v1570 = vpack.c.b16 %v1318, %v1317
    %v1571 = vpack.c.b16 %v1320, %v1319
    %v1572 = vpack.c.b16 %v1322, %v1321
    %v1573 = vpack.c.b16 %v1324, %v1323
    %v1574 = vpack.c.b16 %v1326, %v1325
    %v1575 = vpack.c.b16 %v1328, %v1327
    %v1576 = vpack.c.b16 %v1330, %v1329
    %v1577 = vpack.c.b16 %v1332, %v1331
    %v1578 = vpack.c.b16 %v1334, %v1333
    %v1579 = vpack.c.b16 %v1336, %v1335
    %v1580 = vpack.c.b16 %v1338, %v1337
    %v1581 = vpack.c.b16 %v1340, %v1339
    %v1582 = vpack.c.b16 %v1342, %v1341
    %v1583 = vpack.c.b16 %v1344, %v1343
    %v1584 = vpack.c.b16 %v1346, %v1345
    %v1585 = vpack.c.b16 %v1348, %v1347
    %v1586 = vpack.c.b16 %v1350, %v1349
    %v1587 = vpack.c.b16 %v1352, %v1351
    %v1588 = vpack.c.b16 %v1354, %v1353
    %v1589 = vpack.c.b16 %v1356, %v1355
    %v1590 = vpack.c.b16 %v1358, %v1357
    %v1591 = vpack.c.b16 %v1360, %v1359
    %v1592 = vpack.c.b16 %v1362, %v1361
    %v1593 = vpack.c.b16 %v1364, %v1363
    %v1594 = vpack.c.b16 %v1366, %v1365
    %v1595 = vpack.c.b16 %v1368, %v1367
    %v1596 = vpack.c.b16 %v1370, %v1369
    %v1597 = vpack.c.b16 %v1372, %v1371
    %v1598 = vpack.c.b16 %v1374, %v1373
    %v1599 = vpack.c.b16 %v1376, %v1375
    %v1600 = vpack.c.b16 %v1378, %v1377
    %v1601 = vpack.c.b16 %v1380, %v1379
    %v1602 = vpack.c.b16 %v1382, %v1381
    %v1603 = vpack.c.b16 %v1384, %v1383
    %v1604 = vpack.c.b16 %v1386, %v1385
    %v1605 = vpack.c.b16 %v1388, %v1387
    %v1606 = vpack.c.b16 %v1390, %v1389
    %v1607 = vpack.c.b16 %v1392, %v1391
    %v1608 = vpack.c.b16 %v1394, %v1393
    %v1609 = vpack.c.b16 %v1396, %v1395
    %v1610 = vpack.c.b16 %v1398, %v1397
    %v1611 = vpack.c.b16 %v1400, %v1399
    %v1612 = vpack.c.b16 %v1402, %v1401
    %v1613 = vpack.c.b16 %v1404, %v1403
    %v1614 = vpack.c.b16 %v1406, %v1405
    %v1615 = vpack.c.b16 %v1408, %v1407
    %v1616 = vpack.c.b16 %v1410, %v1409
    %v1617 = vpack.c.b16 %v1412, %v1411
    %v1618 = vpack.c.b16 %v1414, %v1413
    %v1619 = vpack.c.b16 %v1416, %v1415
    %v1620 = vpack.c.b16 %v1418, %v1417
    %v1621 = vpack.c.b16 %v1420, %v1419
    %v1622 = vpack.c.b16 %v1422, %v1421
    %1823 = vmatprep.subr.bf16.mxu0 0
    %1824 = vmatpush1.bf16.msra.mxu0 %v1423
    %1825 = vmatprep.subr.bf16.mxu0 0
    %1826 = vmatpush1.bf16.msra.mxu0 %v1424
    %1827 = vmatprep.subr.bf16.mxu0 0
    %1828 = vmatpush1.bf16.msra.mxu0 %v1425
    %1829 = vmatprep.subr.bf16.mxu0 0
    %1830 = vmatpush1.bf16.msra.mxu0 %v1426
    %1831 = vmatprep.subr.bf16.mxu0 0
    %1832 = vmatpush1.bf16.msra.mxu0 %v1427
    %1833 = vmatprep.subr.bf16.mxu0 0
    %1834 = vmatpush1.bf16.msra.mxu0 %v1428
    %1835 = vmatprep.subr.bf16.mxu0 0
    %1836 = vmatpush1.bf16.msra.mxu0 %v1429
    %1837 = vmatprep.subr.bf16.mxu0 0
    %1838 = vmatpush1.bf16.msra.mxu0 %v1430
    %1839 = vmatprep.subr.bf16.mxu0 0
    %1840 = vmatpush1.bf16.msra.mxu0 %v1431
    %1841 = vmatprep.subr.bf16.mxu0 0
    %1842 = vmatpush1.bf16.msra.mxu0 %v1432
    %1843 = vmatprep.subr.bf16.mxu0 0
    %1844 = vmatpush1.bf16.msra.mxu0 %v1433
    %1845 = vmatprep.subr.bf16.mxu0 0
    %1846 = vmatpush1.bf16.msra.mxu0 %v1434
    %1847 = vmatprep.subr.bf16.mxu0 0
    %1848 = vmatpush1.bf16.msra.mxu0 %v1435
    %1849 = vmatprep.subr.bf16.mxu0 0
    %1850 = vmatpush1.bf16.msra.mxu0 %v1436
    %1851 = vmatprep.subr.bf16.mxu0 0
    %1852 = vmatpush1.bf16.msra.mxu0 %v1437
    %1853 = vmatprep.subr.bf16.mxu0 0
    %1854 = vmatpush1.bf16.msra.mxu0 %v1438
    %1855 = vmatprep.mubr.bf16.mxu0 %v474
    %1856 = vmatmul.mubr.bf16.gmra.mrb[0].mxu0 %v460
    %v1857 = vpop.f32.mrb[0].mxu0
    %v1858 = vadd.f32 %v431, %v1857
    %v1859 = vpop.f32.mrb[0].mxu0
    %v1860 = vpop.f32.mrb[0].mxu0
    %v1861 = vpop.f32.mrb[0].mxu0
    %1862 = vdwg.mxu0
    %1863 = vmatprep.subr.bf16.mxu0 0
    %1864 = vmatpush1.bf16.msra.mxu0 %v1439
    %1865 = vmatprep.subr.bf16.mxu0 0
    %1866 = vmatpush1.bf16.msra.mxu0 %v1440
    %1867 = vmatprep.subr.bf16.mxu0 0
    %1868 = vmatpush1.bf16.msra.mxu0 %v1441
    %1869 = vmatprep.subr.bf16.mxu0 0
    %1870 = vmatpush1.bf16.msra.mxu0 %v1442
    %1871 = vmatprep.subr.bf16.mxu0 0
    %1872 = vmatpush1.bf16.msra.mxu0 %v1443
    %1873 = vmatprep.subr.bf16.mxu0 0
    %1874 = vmatpush1.bf16.msra.mxu0 %v1444
    %1875 = vmatprep.subr.bf16.mxu0 0
    %1876 = vmatpush1.bf16.msra.mxu0 %v1445
    %1877 = vmatprep.subr.bf16.mxu0 0
    %1878 = vmatpush1.bf16.msra.mxu0 %v1446
    %1879 = vmatprep.subr.bf16.mxu0 0
    %1880 = vmatpush1.bf16.msra.mxu0 %v1447
    %1881 = vmatprep.subr.bf16.mxu0 0
    %1882 = vmatpush1.bf16.msra.mxu0 %v1448
    %1883 = vmatprep.subr.bf16.mxu0 0
    %1884 = vmatpush1.bf16.msra.mxu0 %v1449
    %1885 = vmatprep.subr.bf16.mxu0 0
    %1886 = vmatpush1.bf16.msra.mxu0 %v1450
    %1887 = vmatprep.subr.bf16.mxu0 0
    %1888 = vmatpush1.bf16.msra.mxu0 %v1451
    %1889 = vmatprep.subr.bf16.mxu0 0
    %1890 = vmatpush1.bf16.msra.mxu0 %v1452
    %1891 = vmatprep.subr.bf16.mxu0 0
    %1892 = vmatpush1.bf16.msra.mxu0 %v1453
    %1893 = vmatprep.subr.bf16.mxu0 0
    %1894 = vmatpush1.bf16.msra.mxu0 %v1454
    %1895 = vmatprep.mubr.bf16.mxu0 %v484
    %1896 = vmatmul.mubr.bf16.gmra.mrb[0].mxu0 %v482
    %v1897 = vpop.f32.mrb[0].mxu0
    %v1898 = vadd.f32 %v1858, %v1897
    %v1899 = vpop.f32.mrb[0].mxu0
    %v1900 = vpop.f32.mrb[0].mxu0
    %v1901 = vpop.f32.mrb[0].mxu0
    %1902 = vdwg.mxu0
    %1903 = vmatprep.subr.bf16.mxu0 0
    %1904 = vmatpush1.bf16.msra.mxu0 %v1455
    %1905 = vmatprep.subr.bf16.mxu0 0
    %1906 = vmatpush1.bf16.msra.mxu0 %v1456
    %1907 = vmatprep.subr.bf16.mxu0 0
    %1908 = vmatpush1.bf16.msra.mxu0 %v1457
    %1909 = vmatprep.subr.bf16.mxu0 0
    %1910 = vmatpush1.bf16.msra.mxu0 %v1458
    %1911 = vmatprep.subr.bf16.mxu0 0
    %1912 = vmatpush1.bf16.msra.mxu0 %v1459
    %1913 = vmatprep.subr.bf16.mxu0 0
    %1914 = vmatpush1.bf16.msra.mxu0 %v1460
    %1915 = vmatprep.subr.bf16.mxu0 0
    %1916 = vmatpush1.bf16.msra.mxu0 %v1461
    %1917 = vmatprep.subr.bf16.mxu0 0
    %1918 = vmatpush1.bf16.msra.mxu0 %v1462
    %1919 = vmatprep.subr.bf16.mxu0 0
    %1920 = vmatpush1.bf16.msra.mxu0 %v1463
    %1921 = vmatprep.subr.bf16.mxu0 0
    %1922 = vmatpush1.bf16.msra.mxu0 %v1464
    %1923 = vmatprep.subr.bf16.mxu0 0
    %1924 = vmatpush1.bf16.msra.mxu0 %v1465
    %1925 = vmatprep.subr.bf16.mxu0 0
    %1926 = vmatpush1.bf16.msra.mxu0 %v1466
    %1927 = vmatprep.subr.bf16.mxu0 0
    %1928 = vmatpush1.bf16.msra.mxu0 %v1467
    %1929 = vmatprep.subr.bf16.mxu0 0
    %1930 = vmatpush1.bf16.msra.mxu0 %v1468
    %1931 = vmatprep.subr.bf16.mxu0 0
    %1932 = vmatpush1.bf16.msra.mxu0 %v1469
    %1933 = vmatprep.subr.bf16.mxu0 0
    %1934 = vmatpush1.bf16.msra.mxu0 %v1470
    %1935 = vmatprep.mubr.bf16.mxu0 %v481
    %1936 = vmatmul.mubr.bf16.gmra.mrb[0].mxu0 %v467
    %v1937 = vpop.f32.mrb[0].mxu0
    %v1938 = vadd.f32 %v1898, %v1937
    %v1939 = vpop.f32.mrb[0].mxu0
    %v1940 = vpop.f32.mrb[0].mxu0
    %v1941 = vpop.f32.mrb[0].mxu0
    %1942 = vdwg.mxu0
    %1943 = vmatprep.subr.bf16.mxu0 0
    %1944 = vmatpush1.bf16.msra.mxu0 %v1471
    %1945 = vmatprep.subr.bf16.mxu0 0
    %1946 = vmatpush1.bf16.msra.mxu0 %v1472
    %1947 = vmatprep.subr.bf16.mxu0 0
    %1948 = vmatpush1.bf16.msra.mxu0 %v1473
    %1949 = vmatprep.subr.bf16.mxu0 0
    %1950 = vmatpush1.bf16.msra.mxu0 %v1474
    %1951 = vmatprep.subr.bf16.mxu0 0
    %1952 = vmatpush1.bf16.msra.mxu0 %v1475
    %1953 = vmatprep.subr.bf16.mxu0 0
    %1954 = vmatpush1.bf16.msra.mxu0 %v1476
    %1955 = vmatprep.subr.bf16.mxu0 0
    %1956 = vmatpush1.bf16.msra.mxu0 %v1477
    %1957 = vmatprep.subr.bf16.mxu0 0
    %1958 = vmatpush1.bf16.msra.mxu0 %v1478
    %1959 = vmatprep.subr.bf16.mxu0 0
    %1960 = vmatpush1.bf16.msra.mxu0 %v1479
    %1961 = vmatprep.subr.bf16.mxu0 0
    %1962 = vmatpush1.bf16.msra.mxu0 %v1480
    %1963 = vmatprep.subr.bf16.mxu0 0
    %1964 = vmatpush1.bf16.msra.mxu0 %v1481
    %1965 = vmatprep.subr.bf16.mxu0 0
    %1966 = vmatpush1.bf16.msra.mxu0 %v1482
    %1967 = vmatprep.subr.bf16.mxu0 0
    %1968 = vmatpush1.bf16.msra.mxu0 %v1483
    %1969 = vmatprep.subr.bf16.mxu0 0
    %1970 = vmatpush1.bf16.msra.mxu0 %v1484
    %1971 = vmatprep.subr.bf16.mxu0 0
    %1972 = vmatpush1.bf16.msra.mxu0 %v1485
    %1973 = vmatprep.subr.bf16.mxu0 0
    %1974 = vmatpush1.bf16.msra.mxu0 %v1486
    %1975 = vmatprep.mubr.bf16.mxu0 %v485
    %1976 = vmatmul.mubr.bf16.gmra.mrb[0].mxu0 %v483
    %v1977 = vpop.f32.mrb[0].mxu0
    %v1978 = vadd.f32 %v1938, %v1977
    %v1979 = vpop.f32.mrb[0].mxu0
    %v1980 = vpop.f32.mrb[0].mxu0
    %v1981 = vpop.f32.mrb[0].mxu0
    %1982 = vdwg.mxu0
    %1983 = vmatprep.subr.bf16.mxu0 0
    %1984 = vmatpush1.bf16.msra.mxu0 %v1487
    %1985 = vmatprep.subr.bf16.mxu0 0
    %1986 = vmatpush1.bf16.msra.mxu0 %v1488
    %1987 = vmatprep.subr.bf16.mxu0 0
    %1988 = vmatpush1.bf16.msra.mxu0 %v1489
    %1989 = vmatprep.subr.bf16.mxu0 0
    %1990 = vmatpush1.bf16.msra.mxu0 %v1490
    %1991 = vmatprep.subr.bf16.mxu0 0
    %1992 = vmatpush1.bf16.msra.mxu0 %v1491
    %1993 = vmatprep.subr.bf16.mxu0 0
    %1994 = vmatpush1.bf16.msra.mxu0 %v1492
    %1995 = vmatprep.subr.bf16.mxu0 0
    %1996 = vmatpush1.bf16.msra.mxu0 %v1493
    %1997 = vmatprep.subr.bf16.mxu0 0
    %1998 = vmatpush1.bf16.msra.mxu0 %v1494
    %1999 = vmatprep.subr.bf16.mxu0 0
    %2000 = vmatpush1.bf16.msra.mxu0 %v1495
    %2001 = vmatprep.subr.bf16.mxu0 0
    %2002 = vmatpush1.bf16.msra.mxu0 %v1496
    %2003 = vmatprep.subr.bf16.mxu0 0
    %2004 = vmatpush1.bf16.msra.mxu0 %v1497
    %2005 = vmatprep.subr.bf16.mxu0 0
    %2006 = vmatpush1.bf16.msra.mxu0 %v1498
    %2007 = vmatprep.subr.bf16.mxu0 0
    %2008 = vmatpush1.bf16.msra.mxu0 %v1499
    %2009 = vmatprep.subr.bf16.mxu0 0
    %2010 = vmatpush1.bf16.msra.mxu0 %v1500
    %2011 = vmatprep.subr.bf16.mxu0 0
    %2012 = vmatpush1.bf16.msra.mxu0 %v1501
    %2013 = vmatprep.subr.bf16.mxu0 0
    %2014 = vmatpush1.bf16.msra.mxu0 %v1502
    %2015 = vmatprep.mubr.bf16.mxu0 %v523
    %2016 = vmatmul.mubr.bf16.gmra.mrb[0].mxu0 %v509
    %v2017 = vpop.f32.mrb[0].mxu0
    %v2018 = vadd.f32 %v1978, %v2017
    %v2019 = vpop.f32.mrb[0].mxu0
    %v2020 = vpop.f32.mrb[0].mxu0
    %v2021 = vpop.f32.mrb[0].mxu0
    %2022 = vdwg.mxu0
    %2023 = vmatprep.subr.bf16.mxu0 0
    %2024 = vmatpush1.bf16.msra.mxu0 %v1503
    %2025 = vmatprep.subr.bf16.mxu0 0
    %2026 = vmatpush1.bf16.msra.mxu0 %v1504
    %2027 = vmatprep.subr.bf16.mxu0 0
    %2028 = vmatpush1.bf16.msra.mxu0 %v1505
    %2029 = vmatprep.subr.bf16.mxu0 0
    %2030 = vmatpush1.bf16.msra.mxu0 %v1506
    %2031 = vmatprep.subr.bf16.mxu0 0
    %2032 = vmatpush1.bf16.msra.mxu0 %v1507
    %2033 = vmatprep.subr.bf16.mxu0 0
    %2034 = vmatpush1.bf16.msra.mxu0 %v1508
    %2035 = vmatprep.subr.bf16.mxu0 0
    %2036 = vmatpush1.bf16.msra.mxu0 %v1509
    %2037 = vmatprep.subr.bf16.mxu0 0
    %2038 = vmatpush1.bf16.msra.mxu0 %v1510
    %2039 = vmatprep.subr.bf16.mxu0 0
    %2040 = vmatpush1.bf16.msra.mxu0 %v1511
    %2041 = vmatprep.subr.bf16.mxu0 0
    %2042 = vmatpush1.bf16.msra.mxu0 %v1512
    %2043 = vmatprep.subr.bf16.mxu0 0
    %2044 = vmatpush1.bf16.msra.mxu0 %v1513
    %2045 = vmatprep.subr.bf16.mxu0 0
    %2046 = vmatpush1.bf16.msra.mxu0 %v1514
    %2047 = vmatprep.subr.bf16.mxu0 0
    %2048 = vmatpush1.bf16.msra.mxu0 %v1515
    %2049 = vmatprep.subr.bf16.mxu0 0
    %2050 = vmatpush1.bf16.msra.mxu0 %v1516
    %2051 = vmatprep.subr.bf16.mxu0 0
    %2052 = vmatpush1.bf16.msra.mxu0 %v1517
    %2053 = vmatprep.subr.bf16.mxu0 0
    %2054 = vmatpush1.bf16.msra.mxu0 %v1518
    %2055 = vmatprep.mubr.bf16.mxu0 %v533
    %2056 = vmatmul.mubr.bf16.gmra.mrb[0].mxu0 %v531
    %v2057 = vpop.f32.mrb[0].mxu0
    %v2058 = vadd.f32 %v2018, %v2057
    %v2059 = vpop.f32.mrb[0].mxu0
    %v2060 = vpop.f32.mrb[0].mxu0
    %v2061 = vpop.f32.mrb[0].mxu0
    %2062 = vdwg.mxu0
    %2063 = vmatprep.subr.bf16.mxu0 0
    %2064 = vmatpush1.bf16.msra.mxu0 %v1519
    %2065 = vmatprep.subr.bf16.mxu0 0
    %2066 = vmatpush1.bf16.msra.mxu0 %v1520
    %2067 = vmatprep.subr.bf16.mxu0 0
    %2068 = vmatpush1.bf16.msra.mxu0 %v1521
    %2069 = vmatprep.subr.bf16.mxu0 0
    %2070 = vmatpush1.bf16.msra.mxu0 %v1522
    %2071 = vmatprep.subr.bf16.mxu0 0
    %2072 = vmatpush1.bf16.msra.mxu0 %v1523
    %2073 = vmatprep.subr.bf16.mxu0 0
    %2074 = vmatpush1.bf16.msra.mxu0 %v1524
    %2075 = vmatprep.subr.bf16.mxu0 0
    %2076 = vmatpush1.bf16.msra.mxu0 %v1525
    %2077 = vmatprep.subr.bf16.mxu0 0
    %2078 = vmatpush1.bf16.msra.mxu0 %v1526
    %2079 = vmatprep.subr.bf16.mxu0 0
    %2080 = vmatpush1.bf16.msra.mxu0 %v1527
    %2081 = vmatprep.subr.bf16.mxu0 0
    %2082 = vmatpush1.bf16.msra.mxu0 %v1528
    %2083 = vmatprep.subr.bf16.mxu0 0
    %2084 = vmatpush1.bf16.msra.mxu0 %v1529
    %2085 = vmatprep.subr.bf16.mxu0 0
    %2086 = vmatpush1.bf16.msra.mxu0 %v1530
    %2087 = vmatprep.subr.bf16.mxu0 0
    %2088 = vmatpush1.bf16.msra.mxu0 %v1531
    %2089 = vmatprep.subr.bf16.mxu0 0
    %2090 = vmatpush1.bf16.msra.mxu0 %v1532
    %2091 = vmatprep.subr.bf16.mxu0 0
    %2092 = vmatpush1.bf16.msra.mxu0 %v1533
    %2093 = vmatprep.subr.bf16.mxu0 0
    %2094 = vmatpush1.bf16.msra.mxu0 %v1534
    %2095 = vmatprep.mubr.bf16.mxu0 %v530
    %2096 = vmatmul.mubr.bf16.gmra.mrb[0].mxu0 %v516
    %v2097 = vpop.f32.mrb[0].mxu0
    %v2098 = vadd.f32 %v2058, %v2097
    %v2099 = vpop.f32.mrb[0].mxu0
    %v2100 = vpop.f32.mrb[0].mxu0
    %v2101 = vpop.f32.mrb[0].mxu0
    %2102 = vdwg.mxu0
    %2103 = vmatprep.subr.bf16.mxu0 0
    %2104 = vmatpush1.bf16.msra.mxu0 %v1535
    %2105 = vmatprep.subr.bf16.mxu0 0
    %2106 = vmatpush1.bf16.msra.mxu0 %v1536
    %2107 = vmatprep.subr.bf16.mxu0 0
    %2108 = vmatpush1.bf16.msra.mxu0 %v1537
    %2109 = vmatprep.subr.bf16.mxu0 0
    %2110 = vmatpush1.bf16.msra.mxu0 %v1538
    %2111 = vmatprep.subr.bf16.mxu0 0
    %2112 = vmatpush1.bf16.msra.mxu0 %v1539
    %2113 = vmatprep.subr.bf16.mxu0 0
    %2114 = vmatpush1.bf16.msra.mxu0 %v1540
    %2115 = vmatprep.subr.bf16.mxu0 0
    %2116 = vmatpush1.bf16.msra.mxu0 %v1541
    %2117 = vmatprep.subr.bf16.mxu0 0
    %2118 = vmatpush1.bf16.msra.mxu0 %v1542
    %2119 = vmatprep.subr.bf16.mxu0 0
    %2120 = vmatpush1.bf16.msra.mxu0 %v1543
    %2121 = vmatprep.subr.bf16.mxu0 0
    %2122 = vmatpush1.bf16.msra.mxu0 %v1544
    %2123 = vmatprep.subr.bf16.mxu0 0
    %2124 = vmatpush1.bf16.msra.mxu0 %v1545
    %2125 = vmatprep.subr.bf16.mxu0 0
    %2126 = vmatpush1.bf16.msra.mxu0 %v1546
    %2127 = vmatprep.subr.bf16.mxu0 0
    %2128 = vmatpush1.bf16.msra.mxu0 %v1547
    %2129 = vmatprep.subr.bf16.mxu0 0
    %2130 = vmatpush1.bf16.msra.mxu0 %v1548
    %2131 = vmatprep.subr.bf16.mxu0 0
    %2132 = vmatpush1.bf16.msra.mxu0 %v1549
    %2133 = vmatprep.subr.bf16.mxu0 0
    %2134 = vmatpush1.bf16.msra.mxu0 %v1550
    %2135 = vmatprep.mubr.bf16.mxu0 %v534
    %2136 = vmatmul.mubr.bf16.gmra.mrb[0].mxu0 %v532
    %v2137 = vpop.f32.mrb[0].mxu0
    %v2138 = vadd.f32 %v2098, %v2137
    %v2139 = vpop.f32.mrb[0].mxu0
    %v2140 = vpop.f32.mrb[0].mxu0
    %v2141 = vpop.f32.mrb[0].mxu0
    %2142 = vdwg.mxu0
    %2143 = vmatprep.subr.bf16.mxu0 0
    %2144 = vmatpush1.bf16.msra.mxu0 %v1551
    %2145 = vmatprep.subr.bf16.mxu0 0
    %2146 = vmatpush1.bf16.msra.mxu0 %v1552
    %2147 = vmatprep.subr.bf16.mxu0 0
    %2148 = vmatpush1.bf16.msra.mxu0 %v1553
    %2149 = vmatprep.subr.bf16.mxu0 0
    %2150 = vmatpush1.bf16.msra.mxu0 %v1554
    %2151 = vmatprep.subr.bf16.mxu0 0
    %2152 = vmatpush1.bf16.msra.mxu0 %v1555
    %2153 = vmatprep.subr.bf16.mxu0 0
    %2154 = vmatpush1.bf16.msra.mxu0 %v1556
    %2155 = vmatprep.subr.bf16.mxu0 0
    %2156 = vmatpush1.bf16.msra.mxu0 %v1557
    %2157 = vmatprep.subr.bf16.mxu0 0
    %2158 = vmatpush1.bf16.msra.mxu0 %v1558
    %2159 = vmatprep.subr.bf16.mxu0 0
    %2160 = vmatpush1.bf16.msra.mxu0 %v1559
    %2161 = vmatprep.subr.bf16.mxu0 0
    %2162 = vmatpush1.bf16.msra.mxu0 %v1560
    %2163 = vmatprep.subr.bf16.mxu0 0
    %2164 = vmatpush1.bf16.msra.mxu0 %v1561
    %2165 = vmatprep.subr.bf16.mxu0 0
    %2166 = vmatpush1.bf16.msra.mxu0 %v1562
    %2167 = vmatprep.subr.bf16.mxu0 0
    %2168 = vmatpush1.bf16.msra.mxu0 %v1563
    %2169 = vmatprep.subr.bf16.mxu0 0
    %2170 = vmatpush1.bf16.msra.mxu0 %v1564
    %2171 = vmatprep.subr.bf16.mxu0 0
    %2172 = vmatpush1.bf16.msra.mxu0 %v1565
    %2173 = vmatprep.subr.bf16.mxu0 0
    %2174 = vmatpush1.bf16.msra.mxu0 %v1566
    %2175 = vmatprep.mubr.bf16.mxu0 %v572
    %2176 = vmatmul.mubr.bf16.gmra.mrb[0].mxu0 %v558
    %v2177 = vpop.f32.mrb[0].mxu0
    %v2178 = vadd.f32 %v2138, %v2177
    %v2179 = vpop.f32.mrb[0].mxu0
    %v2180 = vpop.f32.mrb[0].mxu0
    %v2181 = vpop.f32.mrb[0].mxu0
    %2182 = vdwg.mxu0
    %2183 = vmatprep.subr.bf16.mxu0 0
    %2184 = vmatpush1.bf16.msra.mxu0 %v1567
    %2185 = vmatprep.subr.bf16.mxu0 0
    %2186 = vmatpush1.bf16.msra.mxu0 %v1568
    %2187 = vmatprep.subr.bf16.mxu0 0
    %2188 = vmatpush1.bf16.msra.mxu0 %v1569
    %2189 = vmatprep.subr.bf16.mxu0 0
    %2190 = vmatpush1.bf16.msra.mxu0 %v1570
    %2191 = vmatprep.subr.bf16.mxu0 0
    %2192 = vmatpush1.bf16.msra.mxu0 %v1571
    %2193 = vmatprep.subr.bf16.mxu0 0
    %2194 = vmatpush1.bf16.msra.mxu0 %v1572
    %2195 = vmatprep.subr.bf16.mxu0 0
    %2196 = vmatpush1.bf16.msra.mxu0 %v1573
    %2197 = vmatprep.subr.bf16.mxu0 0
    %2198 = vmatpush1.bf16.msra.mxu0 %v1574
    %2199 = vmatprep.subr.bf16.mxu0 0
    %2200 = vmatpush1.bf16.msra.mxu0 %v1575
    %2201 = vmatprep.subr.bf16.mxu0 0
    %2202 = vmatpush1.bf16.msra.mxu0 %v1576
    %2203 = vmatprep.subr.bf16.mxu0 0
    %2204 = vmatpush1.bf16.msra.mxu0 %v1577
    %2205 = vmatprep.subr.bf16.mxu0 0
    %2206 = vmatpush1.bf16.msra.mxu0 %v1578
    %2207 = vmatprep.subr.bf16.mxu0 0
    %2208 = vmatpush1.bf16.msra.mxu0 %v1579
    %2209 = vmatprep.subr.bf16.mxu0 0
    %2210 = vmatpush1.bf16.msra.mxu0 %v1580
    %2211 = vmatprep.subr.bf16.mxu0 0
    %2212 = vmatpush1.bf16.msra.mxu0 %v1581
    %2213 = vmatprep.subr.bf16.mxu0 0
    %2214 = vmatpush1.bf16.msra.mxu0 %v1582
    %2215 = vmatprep.mubr.bf16.mxu0 %v582
    %2216 = vmatmul.mubr.bf16.gmra.mrb[0].mxu0 %v580
    %v2217 = vpop.f32.mrb[0].mxu0
    %v2218 = vadd.f32 %v2178, %v2217
    %v2219 = vpop.f32.mrb[0].mxu0
    %v2220 = vpop.f32.mrb[0].mxu0
    %v2221 = vpop.f32.mrb[0].mxu0
    %2222 = vdwg.mxu0
    %2223 = vmatprep.subr.bf16.mxu0 0
    %2224 = vmatpush1.bf16.msra.mxu0 %v1583
    %2225 = vmatprep.subr.bf16.mxu0 0
    %2226 = vmatpush1.bf16.msra.mxu0 %v1584
    %2227 = vmatprep.subr.bf16.mxu0 0
    %2228 = vmatpush1.bf16.msra.mxu0 %v1585
    %2229 = vmatprep.subr.bf16.mxu0 0
    %2230 = vmatpush1.bf16.msra.mxu0 %v1586
    %2231 = vmatprep.subr.bf16.mxu0 0
    %2232 = vmatpush1.bf16.msra.mxu0 %v1587
    %2233 = vmatprep.subr.bf16.mxu0 0
    %2234 = vmatpush1.bf16.msra.mxu0 %v1588
    %2235 = vmatprep.subr.bf16.mxu0 0
    %2236 = vmatpush1.bf16.msra.mxu0 %v1589
    %2237 = vmatprep.subr.bf16.mxu0 0
    %2238 = vmatpush1.bf16.msra.mxu0 %v1590
    %2239 = vmatprep.subr.bf16.mxu0 0
    %2240 = vmatpush1.bf16.msra.mxu0 %v1591
    %2241 = vmatprep.subr.bf16.mxu0 0
    %2242 = vmatpush1.bf16.msra.mxu0 %v1592
    %2243 = vmatprep.subr.bf16.mxu0 0
    %2244 = vmatpush1.bf16.msra.mxu0 %v1593
    %2245 = vmatprep.subr.bf16.mxu0 0
    %2246 = vmatpush1.bf16.msra.mxu0 %v1594
    %2247 = vmatprep.subr.bf16.mxu0 0
    %2248 = vmatpush1.bf16.msra.mxu0 %v1595
    %2249 = vmatprep.subr.bf16.mxu0 0
    %2250 = vmatpush1.bf16.msra.mxu0 %v1596
    %2251 = vmatprep.subr.bf16.mxu0 0
    %2252 = vmatpush1.bf16.msra.mxu0 %v1597
    %2253 = vmatprep.subr.bf16.mxu0 0
    %2254 = vmatpush1.bf16.msra.mxu0 %v1598
    %2255 = vmatprep.mubr.bf16.mxu0 %v579
    %2256 = vmatmul.mubr.bf16.gmra.mrb[0].mxu0 %v565
    %v2257 = vpop.f32.mrb[0].mxu0
    %v2258 = vadd.f32 %v2218, %v2257
    %v2259 = vpop.f32.mrb[0].mxu0
    %v2260 = vpop.f32.mrb[0].mxu0
    %v2261 = vpop.f32.mrb[0].mxu0
    %2262 = vdwg.mxu0
    %2263 = vmatprep.subr.bf16.mxu0 0
    %2264 = vmatpush1.bf16.msra.mxu0 %v1599
    %2265 = vmatprep.subr.bf16.mxu0 0
    %2266 = vmatpush1.bf16.msra.mxu0 %v1600
    %2267 = vmatprep.subr.bf16.mxu0 0
    %2268 = vmatpush1.bf16.msra.mxu0 %v1601
    %2269 = vmatprep.subr.bf16.mxu0 0
    %2270 = vmatpush1.bf16.msra.mxu0 %v1602
    %2271 = vmatprep.subr.bf16.mxu0 0
    %2272 = vmatpush1.bf16.msra.mxu0 %v1603
    %2273 = vmatprep.subr.bf16.mxu0 0
    %2274 = vmatpush1.bf16.msra.mxu0 %v1604
    %2275 = vmatprep.subr.bf16.mxu0 0
    %2276 = vmatpush1.bf16.msra.mxu0 %v1605
    %2277 = vmatprep.subr.bf16.mxu0 0
    %2278 = vmatpush1.bf16.msra.mxu0 %v1606
    %2279 = vmatprep.subr.bf16.mxu0 0
    %2280 = vmatpush1.bf16.msra.mxu0 %v1607
    %2281 = vmatprep.subr.bf16.mxu0 0
    %2282 = vmatpush1.bf16.msra.mxu0 %v1608
    %2283 = vmatprep.subr.bf16.mxu0 0
    %2284 = vmatpush1.bf16.msra.mxu0 %v1609
    %2285 = vmatprep.subr.bf16.mxu0 0
    %2286 = vmatpush1.bf16.msra.mxu0 %v1610
    %2287 = vmatprep.subr.bf16.mxu0 0
    %2288 = vmatpush1.bf16.msra.mxu0 %v1611
    %2289 = vmatprep.subr.bf16.mxu0 0
    %2290 = vmatpush1.bf16.msra.mxu0 %v1612
    %2291 = vmatprep.subr.bf16.mxu0 0
    %2292 = vmatpush1.bf16.msra.mxu0 %v1613
    %2293 = vmatprep.subr.bf16.mxu0 0
    %2294 = vmatpush1.bf16.msra.mxu0 %v1614
    %2295 = vmatprep.mubr.bf16.mxu0 %v583
    %2296 = vmatmul.mubr.bf16.gmra.mrb[0].mxu0 %v581
    %v2297 = vpop.f32.mrb[0].mxu0
    %v2298 = vadd.f32 %v2258, %v2297
    %v2299 = vpop.f32.mrb[0].mxu0
    %v2300 = vpop.f32.mrb[0].mxu0
    %v2301 = vpop.f32.mrb[0].mxu0
    %2302 = vdwg.mxu0
    %2303 = vmatprep.subr.bf16.mxu0 0
    %2304 = vmatpush1.bf16.msra.mxu0 %v1615
    %2305 = vmatprep.subr.bf16.mxu0 0
    %2306 = vmatpush1.bf16.msra.mxu0 %v1616
    %2307 = vmatprep.subr.bf16.mxu0 0
    %2308 = vmatpush1.bf16.msra.mxu0 %v1617
    %2309 = vmatprep.subr.bf16.mxu0 0
    %2310 = vmatpush1.bf16.msra.mxu0 %v1618
    %2311 = vmatprep.subr.bf16.mxu0 0
    %2312 = vmatpush1.bf16.msra.mxu0 %v1619
    %2313 = vmatprep.subr.bf16.mxu0 0
    %2314 = vmatpush1.bf16.msra.mxu0 %v1620
    %2315 = vmatprep.subr.bf16.mxu0 0
    %2316 = vmatpush1.bf16.msra.mxu0 %v1621
    %2317 = vmatprep.subr.bf16.mxu0 0
    %2318 = vmatpush1.bf16.msra.mxu0 %v1622
    %2319 = vmatprep.subr.bf16.mxu0 0
    %2320 = vmatpush1.bf16.msra.mxu0 0
    %2321 = vmatprep.subr.bf16.mxu0 0
    %2322 = vmatpush1.bf16.msra.mxu0 0
    %2323 = vmatprep.subr.bf16.mxu0 0
    %2324 = vmatpush1.bf16.msra.mxu0 0
    %2325 = vmatprep.subr.bf16.mxu0 0
    %2326 = vmatpush1.bf16.msra.mxu0 0
    %2327 = vmatprep.subr.bf16.mxu0 0
    %2328 = vmatpush1.bf16.msra.mxu0 0
    %2329 = vmatprep.subr.bf16.mxu0 0
    %2330 = vmatpush1.bf16.msra.mxu0 0
    %2331 = vmatprep.subr.bf16.mxu0 0
    %2332 = vmatpush1.bf16.msra.mxu0 0
    %2333 = vmatprep.subr.bf16.mxu0 0
    %2334 = vmatpush1.bf16.msra.mxu0 0
    %2335 = vmatprep.mubr.bf16.mxu0 0
    %2336 = vmatmul.mubr.bf16.gmra.mrb[0].mxu0 %v597
    %v2337 = vpop.f32.mrb[0].mxu0
    %v2338 = vadd.f32 %v2298, %v2337
    %v2339 = vpop.f32.mrb[0].mxu0
    %v2340 = vpop.f32.mrb[0].mxu0
    %v2341 = vpop.f32.mrb[0].mxu0
    %2342 = vdwg.mxu0
    %v2343 = vmax.f32 %v2338, 0.0
    %v2344 = vpack.c.bf16 %v2343, %v2343
    %v2345 = vld [vmem:[%s3] sm:$0xf]
    %v2346 = vld [vmem:[%s3 + $0x4] sm:$0xf]
    %v2347 = vld [vmem:[%s3 + $0x8] sm:$0xf]
    %v2348 = vld [vmem:[%s3 + $0xc] sm:$0xf]
    %v2349 = vld [vmem:[%s3 + $0x10] sm:$0xf]
    %v2350 = vld [vmem:[%s3 + $0x14] sm:$0xf]
    %v2351 = vld [vmem:[%s3 + $0x18] sm:$0xf]
    %v2352 = vld [vmem:[%s3 + $0x1c] sm:$0xf]
    %v2353 = vld [vmem:[%s4] sm:$0x1]
    %v2355 = vlaneseq
    %v2356 = vshrl.u32 %v2355, 7
    %v2357 = vsub.s32 0, %v2356
    %v2358 = vrot.slane %v2353, %v2357
    %v2368 = vunpack.c.l.b16 %v2345
    %v2369 = vunpack.c.l.b16 %v2346
    %v2370 = vunpack.c.l.b16 %v2347
    %v2371 = vunpack.c.l.b16 %v2348
    %v2372 = vunpack.c.l.b16 %v2349
    %v2373 = vunpack.c.l.b16 %v2350
    %v2374 = vunpack.c.l.b16 %v2351
    %v2375 = vunpack.c.l.b16 %v2352
    %v2376 = vpack.c.b16 %v2369, %v2368
    %v2377 = vpack.c.b16 %v2371, %v2370
    %v2378 = vpack.c.b16 %v2373, %v2372
    %v2379 = vpack.c.b16 %v2375, %v2374
    %vm2384 = vcmask 523264
    %v2386 = vsel %vm2384, %v2344, 0
    %2388 = vmatprep.subr.bf16.mxu0 0
    %2389 = vmatpush1.bf16.msra.mxu0 %v2376
    %2390 = vmatprep.subr.bf16.mxu0 0
    %2391 = vmatpush1.bf16.msra.mxu0 %v2377
    %2392 = vmatprep.subr.bf16.mxu0 0
    %2393 = vmatpush1.bf16.msra.mxu0 %v2378
    %2394 = vmatprep.subr.bf16.mxu0 0
    %2395 = vmatpush1.bf16.msra.mxu0 %v2379
    %2396 = vmatprep.subr.bf16.mxu0 0
    %2397 = vmatpush1.bf16.msra.mxu0 0
    %2398 = vmatprep.subr.bf16.mxu0 0
    %2399 = vmatpush1.bf16.msra.mxu0 0
    %2400 = vmatprep.subr.bf16.mxu0 0
    %2401 = vmatpush1.bf16.msra.mxu0 0
    %2402 = vmatprep.subr.bf16.mxu0 0
    %2403 = vmatpush1.bf16.msra.mxu0 0
    %2404 = vmatprep.subr.bf16.mxu0 0
    %2405 = vmatpush1.bf16.msra.mxu0 0
    %2406 = vmatprep.subr.bf16.mxu0 0
    %2407 = vmatpush1.bf16.msra.mxu0 0
    %2408 = vmatprep.subr.bf16.mxu0 0
    %2409 = vmatpush1.bf16.msra.mxu0 0
    %2410 = vmatprep.subr.bf16.mxu0 0
    %2411 = vmatpush1.bf16.msra.mxu0 0
    %2412 = vmatprep.subr.bf16.mxu0 0
    %2413 = vmatpush1.bf16.msra.mxu0 0
    %2414 = vmatprep.subr.bf16.mxu0 0
    %2415 = vmatpush1.bf16.msra.mxu0 0
    %2416 = vmatprep.subr.bf16.mxu0 0
    %2417 = vmatpush1.bf16.msra.mxu0 0
    %2418 = vmatprep.subr.bf16.mxu0 0
    %2419 = vmatpush1.bf16.msra.mxu0 0
    %2420 = vmatprep.mubr.bf16.mxu0 0
    %2421 = vmatmul.mubr.bf16.gmra.mrb[0].mxu0 %v2386
    %v2422 = vpop.f32.mrb[0].mxu0
    %v2423 = vadd.f32 %v2358, %v2422
    %v2424 = vpop.f32.mrb[0].mxu0
    %v2425 = vpop.f32.mrb[0].mxu0
    %v2426 = vpop.f32.mrb[0].mxu0
    %2427 = vdwg.mxu0
    %v2428 = vmax.f32 %v2423, 0.0
    %vm2429 = vcmask 58368
    %2430 = vst.msk [vmem:[#allocation2] sm:$0x3] %vm2429, %v2428
    // Predicated region
    $region22: #{sub_char_cnn_forward.3} parent=1 // pred_check
      _
    $region23: #{sub_char_cnn_forward.3} parent=1 // pred_check_branch
      %2432 = sbr.rel (0) target = $region25
    $region24: #{sub_char_cnn_forward.3} parent=1 // pred_region
      %s2434 = ssub.s32 32, 32
      %2435 = vsyncadd [#allocation3], %s2434
      %s2437 = sshll.u32 [#allocation2], 4
      %s2438 = int_to_ptr.vmem [resolvable:$true] %s2437
      %2440 = dma.vmem_to_hbm [thread:$0]  %s2438, 32, %s5, [#allocation3]
    $region25: #{sub_char_cnn_forward.3} parent=1 // pred_fallthru
      _
    // Predicated region
    $region26: #{sub_char_cnn_forward.3} parent=1 // pred_check
      _
    $region27: #{sub_char_cnn_forward.3} parent=1 // pred_check_branch
      %2442 = sbr.rel (0) target = $region29
    $region28: #{sub_char_cnn_forward.3} parent=1 // pred_region
      %2443 = dma.done [#allocation3], 32
    $region29: #{sub_char_cnn_forward.3} parent=1 // pred_fallthru
      _
    %2444 = vsyncpa [#allocation3], 1

// kernel: sub_char_cnn_forward.2
$region0: #{sub_char_cnn_forward.2}
  #allocation0 [shape = 'u32[]', space=smem, size = 0x4, offset = 0x4, fixed_abs, tag = 'smem constant byte address 0x4 - core index']
  #allocation1 [shape = 'u32[144,128]{1,0:T(1,128)}', space=vmem, size = 0x12000, scoped, tag = 'internal scratch']
  %s0 = inlined_call_operand.vmem [shape: bf16[2,1600,9], index: 0, kind: input, shape index: {}]
  %s1 = inlined_call_operand.vmem [shape: bf16[9,16], index: 1, kind: input, shape index: {}]
  %s2 = inlined_call_operand.vmem [shape: f32[1,16], index: 2, kind: input, shape index: {}]
  %s3 = inlined_call_operand.vmem [shape: bf16[144,32], index: 3, kind: input, shape index: {}]
  %s4 = inlined_call_operand.vmem [shape: f32[1,32], index: 4, kind: input, shape index: {}]
  %s5 = inlined_call_operand.vmem [shape: bf16[2,100,32], index: 5, kind: output, shape index: {}]
  %s6 = sld [smem:[#allocation0]]
  $region53: #{sub_char_cnn_forward.2} parent=0
    _
  %s8 = ssub.s32 1, %s6
  %s9 = scalar_select 0, %s8, %s6
  loop: start=0, step=1, limit=4
  $region2: #{sub_char_cnn_forward.2} parent=0 // loop_pre_header
    _
  $region3: #{sub_char_cnn_forward.2} parent=0 // loop_header
    %s11 = sphi 0, %s15
    %p12 = scmp.ge.s32.totalorder %s11, 4
    %s21 = sphi 0, %s23
    %s24 = sphi 0, %s21
    %s25 = sphi 0, %s24
    %s41 = sphi 0, %s25
    %s45 = sphi 0, %s45
    %s47 = sphi 0, %s45
    %s48 = sphi 0, %s47
    %s62 = sphi 0, %s48
    %s66 = sphi 0, %s66
    %s68 = sphi 0, %s66
    %s69 = sphi 0, %s68
    %s83 = sphi 0, %s69
    %s87 = sphi 0, %s87
    %s89 = sphi 0, %s87
    %s90 = sphi 0, %s89
    %s104 = sphi 0, %s90
    %s108 = sphi 0, %s108
    %s110 = sphi 0, %s108
    %s111 = sphi 0, %s110
    %s125 = sphi 0, %s111
    %s131 = sphi 0, %s133
    %s134 = sphi 0, %s131
    %s135 = sphi 0, %s134
    %s151 = sphi 0, %s135
  $region4: #{sub_char_cnn_forward.2} parent=0 // loop_header_branch
    %14 = sbr.rel (%p12) target = $region8
  $region5: #{sub_char_cnn_forward.2} parent=0 // loop_body
    %s16 = ssub.s32 %s11, 1
    %s17 = ssub.s32 %s11, 2
    %s18 = sadd.s32 %s11, 1
    %s19 = ssub.s32 %s11, %s18
    %p20 = scmp.eq.s32.totalorder %s19, 0
    %s22 = sadd.s32 %s21, 1
    %s23 = scalar_select %p20, %s21, %s22
    %p26 = pneg %p20
    %p27 = scmp.eq.s32.totalorder %s11, 1
    %p28 = por %p26, %p27
    %p29 = scmp.ne.s32.totalorder %s21, %s24
    %p30 = scmp.eq.s32.totalorder %s11, 0
    %p31 = por %p29, %p30
    %p32 = scmp.ne.s32.totalorder %s21, %s24
    %p33 = scmp.eq.s32.totalorder %s16, 1
    %p34 = por %p32, %p33
    %p35 = scmp.ne.s32.totalorder %s24, %s25
    %p36 = scmp.eq.s32.totalorder %s16, 0
    %p37 = por %p35, %p36
    %p38 = scmp.ne.s32.totalorder %s24, %s25
    %p39 = scmp.eq.s32.totalorder %s17, 1
    %p40 = por %p38, %p39
    %p42 = scmp.ne.s32.totalorder %s25, %s41
    %p43 = scmp.eq.s32.totalorder %s17, 0
    %p44 = por %p42, %p43
    %s46 = sadd.s32 %s45, 1
    %p49 = scmp.eq.s32.totalorder %s11, 1
    %p50 = scmp.ne.s32.totalorder %s45, %s47
    %p51 = scmp.eq.s32.totalorder %s11, 0
    %p52 = por %p50, %p51
    %p53 = scmp.ne.s32.totalorder %s45, %s47
    %p54 = scmp.eq.s32.totalorder %s16, 1
    %p55 = por %p53, %p54
    %p56 = scmp.ne.s32.totalorder %s47, %s48
    %p57 = scmp.eq.s32.totalorder %s16, 0
    %p58 = por %p56, %p57
    %p59 = scmp.ne.s32.totalorder %s47, %s48
    %p60 = scmp.eq.s32.totalorder %s17, 1
    %p61 = por %p59, %p60
    %p63 = scmp.ne.s32.totalorder %s48, %s62
    %p64 = scmp.eq.s32.totalorder %s17, 0
    %p65 = por %p63, %p64
    %s67 = sadd.s32 %s66, 1
    %p70 = scmp.eq.s32.totalorder %s11, 1
    %p71 = scmp.ne.s32.totalorder %s66, %s68
    %p72 = scmp.eq.s32.totalorder %s11, 0
    %p73 = por %p71, %p72
    %p74 = scmp.ne.s32.totalorder %s66, %s68
    %p75 = scmp.eq.s32.totalorder %s16, 1
    %p76 = por %p74, %p75
    %p77 = scmp.ne.s32.totalorder %s68, %s69
    %p78 = scmp.eq.s32.totalorder %s16, 0
    %p79 = por %p77, %p78
    %p80 = scmp.ne.s32.totalorder %s68, %s69
    %p81 = scmp.eq.s32.totalorder %s17, 1
    %p82 = por %p80, %p81
    %p84 = scmp.ne.s32.totalorder %s69, %s83
    %p85 = scmp.eq.s32.totalorder %s17, 0
    %p86 = por %p84, %p85
    %s88 = sadd.s32 %s87, 1
    %p91 = scmp.eq.s32.totalorder %s11, 1
    %p92 = scmp.ne.s32.totalorder %s87, %s89
    %p93 = scmp.eq.s32.totalorder %s11, 0
    %p94 = por %p92, %p93
    %p95 = scmp.ne.s32.totalorder %s87, %s89
    %p96 = scmp.eq.s32.totalorder %s16, 1
    %p97 = por %p95, %p96
    %p98 = scmp.ne.s32.totalorder %s89, %s90
    %p99 = scmp.eq.s32.totalorder %s16, 0
    %p100 = por %p98, %p99
    %p101 = scmp.ne.s32.totalorder %s89, %s90
    %p102 = scmp.eq.s32.totalorder %s17, 1
    %p103 = por %p101, %p102
    %p105 = scmp.ne.s32.totalorder %s90, %s104
    %p106 = scmp.eq.s32.totalorder %s17, 0
    %p107 = por %p105, %p106
    %s109 = sadd.s32 %s108, 1
    %p112 = scmp.eq.s32.totalorder %s11, 1
    %p113 = scmp.ne.s32.totalorder %s108, %s110
    %p114 = scmp.eq.s32.totalorder %s11, 0
    %p115 = por %p113, %p114
    %p116 = scmp.ne.s32.totalorder %s108, %s110
    %p117 = scmp.eq.s32.totalorder %s16, 1
    %p118 = por %p116, %p117
    %p119 = scmp.ne.s32.totalorder %s110, %s111
    %p120 = scmp.eq.s32.totalorder %s16, 0
    %p121 = por %p119, %p120
    %p122 = scmp.ne.s32.totalorder %s110, %s111
    %p123 = scmp.eq.s32.totalorder %s17, 1
    %p124 = por %p122, %p123
    %p126 = scmp.ne.s32.totalorder %s111, %s125
    %p127 = scmp.eq.s32.totalorder %s17, 0
    %p128 = por %p126, %p127
    %s129 = ssub.s32 %s11, %s18
    %p130 = scmp.eq.s32.totalorder %s129, 0
    %s132 = sadd.s32 %s131, 1
    %s133 = scalar_select %p130, %s131, %s132
    %p136 = pneg %p130
    %p137 = scmp.eq.s32.totalorder %s11, 1
    %p138 = por %p136, %p137
    %p139 = scmp.ne.s32.totalorder %s131, %s134
    %p140 = scmp.eq.s32.totalorder %s11, 0
    %p141 = por %p139, %p140
    %p142 = scmp.ne.s32.totalorder %s131, %s134
    %p143 = scmp.eq.s32.totalorder %s16, 1
    %p144 = por %p142, %p143
    %p145 = scmp.ne.s32.totalorder %s134, %s135
    %p146 = scmp.eq.s32.totalorder %s16, 0
    %p147 = por %p145, %p146
    %p148 = scmp.ne.s32.totalorder %s134, %s135
    %p149 = scmp.eq.s32.totalorder %s17, 1
    %p150 = por %p148, %p149
    %p152 = scmp.ne.s32.totalorder %s135, %s151
    %p153 = scmp.eq.s32.totalorder %s17, 0
    %p154 = por %p152, %p153
    %p155 = scmp.le.s32.totalorder 1, %s11
    %p156 = scmp.lt.s32.totalorder %s11, 3
    %p157 = pnand %p155, %p156
    %p158 = pneg %p157
    // Predicated region
    $region9: #{sub_char_cnn_forward.2} parent=5 // pred_check
      _
    $region10: #{sub_char_cnn_forward.2} parent=5 // pred_check_branch
      %160 = sbr.rel (%p157) target = $region12
    $region11: #{sub_char_cnn_forward.2} parent=5 // pred_region
      %s161 = ssub.s32 %s11, 1
      // Predicated region
      $region13: #{sub_char_cnn_forward.2} parent=11 // pred_check
        %p162 = pneg %p58
      $region14: #{sub_char_cnn_forward.2} parent=11 // pred_check_branch
        %164 = sbr.rel (%p162) target = $region16
      $region15: #{sub_char_cnn_forward.2} parent=11 // pred_region
        _
      $region16: #{sub_char_cnn_forward.2} parent=11 // pred_fallthru
        _
      // Predicated region
      $region17: #{sub_char_cnn_forward.2} parent=11 // pred_check
        %p165 = pneg %p79
      $region18: #{sub_char_cnn_forward.2} parent=11 // pred_check_branch
        %167 = sbr.rel (%p165) target = $region20
      $region19: #{sub_char_cnn_forward.2} parent=11 // pred_region
        _
      $region20: #{sub_char_cnn_forward.2} parent=11 // pred_fallthru
        _
      // Predicated region
      $region21: #{sub_char_cnn_forward.2} parent=11 // pred_check
        %p168 = pneg %p100
      $region22: #{sub_char_cnn_forward.2} parent=11 // pred_check_branch
        %170 = sbr.rel (%p168) target = $region24
      $region23: #{sub_char_cnn_forward.2} parent=11 // pred_region
        _
      $region24: #{sub_char_cnn_forward.2} parent=11 // pred_fallthru
        _
      // Predicated region
      $region25: #{sub_char_cnn_forward.2} parent=11 // pred_check
        %p171 = pneg %p121
      $region26: #{sub_char_cnn_forward.2} parent=11 // pred_check_branch
        %173 = sbr.rel (%p171) target = $region28
      $region27: #{sub_char_cnn_forward.2} parent=11 // pred_region
        _
      $region28: #{sub_char_cnn_forward.2} parent=11 // pred_fallthru
        _
    $region12: #{sub_char_cnn_forward.2} parent=5 // pred_fallthru
      _
    %p174 = scmp.lt.s32.totalorder %s11, 2
    // Predicated region
    $region29: #{sub_char_cnn_forward.2} parent=5 // pred_check
      %p175 = pneg %p174
    $region30: #{sub_char_cnn_forward.2} parent=5 // pred_check_branch
      %177 = sbr.rel (%p175) target = $region32
    $region31: #{sub_char_cnn_forward.2} parent=5 // pred_region
      // Predicated region
      $region33: #{sub_char_cnn_forward.2} parent=31 // pred_check
        %p178 = pneg %p31
      $region34: #{sub_char_cnn_forward.2} parent=31 // pred_check_branch
        %180 = sbr.rel (%p178) target = $region36
      $region35: #{sub_char_cnn_forward.2} parent=31 // pred_region
        %p181 = scmp.lt.s32.totalorder %s11, 1
        %s182 = scalar_select %p181, %s11, 1
        %s183 = smul.addr %s182, 200
        %s184 = smul.addr %s183, 4
        %s185 = scalar_lea.vmem %s0, %s184
      $region36: #{sub_char_cnn_forward.2} parent=31 // pred_fallthru
        _
    $region32: #{sub_char_cnn_forward.2} parent=5 // pred_fallthru
      _
    %p186 = scmp.le.s32.totalorder 1, %s11
    %p187 = scmp.lt.s32.totalorder %s11, 3
    %p188 = pnand %p186, %p187
    %p189 = pneg %p188
    // Predicated region
    $region37: #{sub_char_cnn_forward.2} parent=5 // pred_check
      _
    $region38: #{sub_char_cnn_forward.2} parent=5 // pred_check_branch
      %191 = sbr.rel (%p188) target = $region40
    $region39: #{sub_char_cnn_forward.2} parent=5 // pred_region
      %s192 = ssub.s32 %s11, 1
      %p193 = scmp.lt.s32.totalorder %s16, 1
      %s194 = scalar_select %p193, %s16, 1
      %s195 = smul.addr %s194, 200
      %s196 = smul.addr %s195, 4
      %s197 = scalar_lea.vmem %s0, %s196
      %p198 = pneg %p37
      %p199 = pneg %p34
      %p200 = pneg %p58
      %p201 = pneg %p55
      %p202 = pneg %p79
      %p203 = pneg %p76
      %p204 = pneg %p100
      %p205 = pneg %p97
      %p206 = pneg %p121
      %p207 = pneg %p118
      %p208 = pneg %p147
      %p209 = pneg %p144
      %p210 = scmp.lt.s32.totalorder %s16, 1
      %s211 = scalar_select %p210, %s16, 1
      %s212 = smul.addr %s211, 13
      %s213 = smul.addr %s212, 4
      %s214 = scalar_lea.vmem %s5, %s213
      %p215 = scmp.lt.s32.totalorder %s16, 1
      %s216 = scalar_select %p215, %s16, 1
      %s217 = smul.addr %s216, 200
      %s218 = smul.addr %s217, 4
      %s219 = scalar_lea.vmem %s0, %s218
      %p220 = scmp.lt.s32.totalorder %s16, 1
      %s221 = scalar_select %p220, %s16, 1
      %s222 = smul.addr %s221, 13
      %s223 = smul.addr %s222, 4
      %s224 = scalar_lea.vmem %s5, %s223
      %v226 = vld [vmem:[%s219] sm:$0xf]
      %v227 = vld [vmem:[%s219 + $0x4] sm:$0xf]
      %v228 = vld [vmem:[%s219 + $0x8] sm:$0xf]
      %v229 = vld [vmem:[%s219 + $0xc] sm:$0xf]
      %v230 = vld [vmem:[%s219 + $0x10] sm:$0xf]
      %v231 = vld [vmem:[%s219 + $0x14] sm:$0xf]
      %v232 = vld [vmem:[%s219 + $0x18] sm:$0xf]
      %v233 = vld [vmem:[%s219 + $0x1c] sm:$0xf]
      %v234 = vld [vmem:[%s219 + $0x20] sm:$0xf]
      %v235 = vld [vmem:[%s219 + $0x24] sm:$0xf]
      %v236 = vld [vmem:[%s219 + $0x28] sm:$0xf]
      %v237 = vld [vmem:[%s219 + $0x2c] sm:$0xf]
      %v238 = vld [vmem:[%s219 + $0x30] sm:$0xf]
      %v239 = vld [vmem:[%s219 + $0x34] sm:$0xf]
      %v240 = vld [vmem:[%s219 + $0x38] sm:$0xf]
      %v241 = vld [vmem:[%s219 + $0x3c] sm:$0xf]
      %v242 = vld [vmem:[%s219 + $0x40] sm:$0xf]
      %v243 = vld [vmem:[%s219 + $0x44] sm:$0xf]
      %v244 = vld [vmem:[%s219 + $0x48] sm:$0xf]
      %v245 = vld [vmem:[%s219 + $0x4c] sm:$0xf]
      %v246 = vld [vmem:[%s219 + $0x50] sm:$0xf]
      %v247 = vld [vmem:[%s219 + $0x54] sm:$0xf]
      %v248 = vld [vmem:[%s219 + $0x58] sm:$0xf]
      %v249 = vld [vmem:[%s219 + $0x5c] sm:$0xf]
      %v250 = vld [vmem:[%s219 + $0x60] sm:$0xf]
      %v251 = vld [vmem:[%s219 + $0x64] sm:$0xf]
      %v252 = vld [vmem:[%s219 + $0x68] sm:$0xf]
      %v253 = vld [vmem:[%s219 + $0x6c] sm:$0xf]
      %v254 = vld [vmem:[%s219 + $0x70] sm:$0xf]
      %v255 = vld [vmem:[%s219 + $0x74] sm:$0xf]
      %v256 = vld [vmem:[%s219 + $0x78] sm:$0xf]
      %v257 = vld [vmem:[%s219 + $0x7c] sm:$0xf]
      %v258 = vld [vmem:[%s219 + $0x80] sm:$0xf]
      %v259 = vld [vmem:[%s219 + $0x84] sm:$0xf]
      %v260 = vld [vmem:[%s219 + $0x88] sm:$0xf]
      %v261 = vld [vmem:[%s219 + $0x8c] sm:$0xf]
      %v262 = vld [vmem:[%s219 + $0x90] sm:$0xf]
      %v263 = vld [vmem:[%s219 + $0x94] sm:$0xf]
      %v264 = vld [vmem:[%s219 + $0x98] sm:$0xf]
      %v265 = vld [vmem:[%s219 + $0x9c] sm:$0xf]
      %v266 = vld [vmem:[%s219 + $0xa0] sm:$0xf]
      %v267 = vld [vmem:[%s219 + $0xa4] sm:$0xf]
      %v268 = vld [vmem:[%s219 + $0xa8] sm:$0xf]
      %v269 = vld [vmem:[%s219 + $0xac] sm:$0xf]
      %v270 = vld [vmem:[%s219 + $0xb0] sm:$0xf]
      %v271 = vld [vmem:[%s219 + $0xb4] sm:$0xf]
      %v272 = vld [vmem:[%s219 + $0xb8] sm:$0xf]
      %v273 = vld [vmem:[%s219 + $0xbc] sm:$0xf]
      %v274 = vld [vmem:[%s219 + $0xc0] sm:$0xf]
      %v275 = vld [vmem:[%s219 + $0xc4] sm:$0xf]
      %v276 = vld [vmem:[%s219 + $0xc8] sm:$0xf]
      %v277 = vld [vmem:[%s219 + $0xcc] sm:$0xf]
      %v278 = vld [vmem:[%s219 + $0xd0] sm:$0xf]
      %v279 = vld [vmem:[%s219 + $0xd4] sm:$0xf]
      %v280 = vld [vmem:[%s219 + $0xd8] sm:$0xf]
      %v281 = vld [vmem:[%s219 + $0xdc] sm:$0xf]
      %v282 = vld [vmem:[%s219 + $0xe0] sm:$0xf]
      %v283 = vld [vmem:[%s219 + $0xe4] sm:$0xf]
      %v284 = vld [vmem:[%s219 + $0xe8] sm:$0xf]
      %v285 = vld [vmem:[%s219 + $0xec] sm:$0xf]
      %v286 = vld [vmem:[%s219 + $0xf0] sm:$0xf]
      %v287 = vld [vmem:[%s219 + $0xf4] sm:$0xf]
      %v288 = vld [vmem:[%s219 + $0xf8] sm:$0xf]
      %v289 = vld [vmem:[%s219 + $0xfc] sm:$0xf]
      %v290 = vld [vmem:[%s219 + $0x100] sm:$0xf]
      %v291 = vld [vmem:[%s219 + $0x104] sm:$0xf]
      %v292 = vld [vmem:[%s219 + $0x108] sm:$0xf]
      %v293 = vld [vmem:[%s219 + $0x10c] sm:$0xf]
      %v294 = vld [vmem:[%s219 + $0x110] sm:$0xf]
      %v295 = vld [vmem:[%s219 + $0x114] sm:$0xf]
      %v296 = vld [vmem:[%s219 + $0x118] sm:$0xf]
      %v297 = vld [vmem:[%s219 + $0x11c] sm:$0xf]
      %v298 = vld [vmem:[%s219 + $0x120] sm:$0xf]
      %v299 = vld [vmem:[%s219 + $0x124] sm:$0xf]
      %v300 = vld [vmem:[%s219 + $0x128] sm:$0xf]
      %v301 = vld [vmem:[%s219 + $0x12c] sm:$0xf]
      %v302 = vld [vmem:[%s219 + $0x130] sm:$0xf]
      %v303 = vld [vmem:[%s219 + $0x134] sm:$0xf]
      %v304 = vld [vmem:[%s219 + $0x138] sm:$0xf]
      %v305 = vld [vmem:[%s219 + $0x13c] sm:$0xf]
      %v306 = vld [vmem:[%s219 + $0x140] sm:$0xf]
      %v307 = vld [vmem:[%s219 + $0x144] sm:$0xf]
      %v308 = vld [vmem:[%s219 + $0x148] sm:$0xf]
      %v309 = vld [vmem:[%s219 + $0x14c] sm:$0xf]
      %v310 = vld [vmem:[%s219 + $0x150] sm:$0xf]
      %v311 = vld [vmem:[%s219 + $0x154] sm:$0xf]
      %v312 = vld [vmem:[%s219 + $0x158] sm:$0xf]
      %v313 = vld [vmem:[%s219 + $0x15c] sm:$0xf]
      %v314 = vld [vmem:[%s219 + $0x160] sm:$0xf]
      %v315 = vld [vmem:[%s219 + $0x164] sm:$0xf]
      %v316 = vld [vmem:[%s219 + $0x168] sm:$0xf]
      %v317 = vld [vmem:[%s219 + $0x16c] sm:$0xf]
      %v318 = vld [vmem:[%s219 + $0x170] sm:$0xf]
      %v319 = vld [vmem:[%s219 + $0x174] sm:$0xf]
      %v320 = vld [vmem:[%s219 + $0x178] sm:$0xf]
      %v321 = vld [vmem:[%s219 + $0x17c] sm:$0xf]
      %v322 = vld [vmem:[%s219 + $0x180] sm:$0xf]
      %v323 = vld [vmem:[%s219 + $0x184] sm:$0xf]
      %v324 = vld [vmem:[%s219 + $0x188] sm:$0xf]
      %v325 = vld [vmem:[%s219 + $0x18c] sm:$0xf]
      %v326 = vld [vmem:[%s219 + $0x190] sm:$0xf]
      %v327 = vld [vmem:[%s219 + $0x194] sm:$0xf]
      %v328 = vld [vmem:[%s219 + $0x198] sm:$0xf]
      %v329 = vld [vmem:[%s219 + $0x19c] sm:$0xf]
      %v330 = vld [vmem:[%s219 + $0x1a0] sm:$0xf]
      %v331 = vld [vmem:[%s219 + $0x1a4] sm:$0xf]
      %v332 = vld [vmem:[%s219 + $0x1a8] sm:$0xf]
      %v333 = vld [vmem:[%s219 + $0x1ac] sm:$0xf]
      %v334 = vld [vmem:[%s219 + $0x1b0] sm:$0xf]
      %v335 = vld [vmem:[%s219 + $0x1b4] sm:$0xf]
      %v336 = vld [vmem:[%s219 + $0x1b8] sm:$0xf]
      %v337 = vld [vmem:[%s219 + $0x1bc] sm:$0xf]
      %v338 = vld [vmem:[%s219 + $0x1c0] sm:$0xf]
      %v339 = vld [vmem:[%s219 + $0x1c4] sm:$0xf]
      %v340 = vld [vmem:[%s219 + $0x1c8] sm:$0xf]
      %v341 = vld [vmem:[%s219 + $0x1cc] sm:$0xf]
      %v342 = vld [vmem:[%s219 + $0x1d0] sm:$0xf]
      %v343 = vld [vmem:[%s219 + $0x1d4] sm:$0xf]
      %v344 = vld [vmem:[%s219 + $0x1d8] sm:$0xf]
      %v345 = vld [vmem:[%s219 + $0x1dc] sm:$0xf]
      %v346 = vld [vmem:[%s219 + $0x1e0] sm:$0xf]
      %v347 = vld [vmem:[%s219 + $0x1e4] sm:$0xf]
      %v348 = vld [vmem:[%s219 + $0x1e8] sm:$0xf]
      %v349 = vld [vmem:[%s219 + $0x1ec] sm:$0xf]
      %v350 = vld [vmem:[%s219 + $0x1f0] sm:$0xf]
      %v351 = vld [vmem:[%s219 + $0x1f4] sm:$0xf]
      %v352 = vld [vmem:[%s219 + $0x1f8] sm:$0xf]
      %v353 = vld [vmem:[%s219 + $0x1fc] sm:$0xf]
      %v354 = vld [vmem:[%s219 + $0x200] sm:$0xf]
      %v355 = vld [vmem:[%s219 + $0x204] sm:$0xf]
      %v356 = vld [vmem:[%s219 + $0x208] sm:$0xf]
      %v357 = vld [vmem:[%s219 + $0x20c] sm:$0xf]
      %v358 = vld [vmem:[%s219 + $0x210] sm:$0xf]
      %v359 = vld [vmem:[%s219 + $0x214] sm:$0xf]
      %v360 = vld [vmem:[%s219 + $0x218] sm:$0xf]
      %v361 = vld [vmem:[%s219 + $0x21c] sm:$0xf]
      %v362 = vld [vmem:[%s219 + $0x220] sm:$0xf]
      %v363 = vld [vmem:[%s219 + $0x224] sm:$0xf]
      %v364 = vld [vmem:[%s219 + $0x228] sm:$0xf]
      %v365 = vld [vmem:[%s219 + $0x22c] sm:$0xf]
      %v366 = vld [vmem:[%s219 + $0x230] sm:$0xf]
      %v367 = vld [vmem:[%s219 + $0x234] sm:$0xf]
      %v368 = vld [vmem:[%s219 + $0x238] sm:$0xf]
      %v369 = vld [vmem:[%s219 + $0x23c] sm:$0xf]
      %v370 = vld [vmem:[%s219 + $0x240] sm:$0xf]
      %v371 = vld [vmem:[%s219 + $0x244] sm:$0xf]
      %v372 = vld [vmem:[%s219 + $0x248] sm:$0xf]
      %v373 = vld [vmem:[%s219 + $0x24c] sm:$0xf]
      %v374 = vld [vmem:[%s219 + $0x250] sm:$0xf]
      %v375 = vld [vmem:[%s219 + $0x254] sm:$0xf]
      %v376 = vld [vmem:[%s219 + $0x258] sm:$0xf]
      %v377 = vld [vmem:[%s219 + $0x25c] sm:$0xf]
      %v378 = vld [vmem:[%s219 + $0x260] sm:$0xf]
      %v379 = vld [vmem:[%s219 + $0x264] sm:$0xf]
      %v380 = vld [vmem:[%s219 + $0x268] sm:$0xf]
      %v381 = vld [vmem:[%s219 + $0x26c] sm:$0xf]
      %v382 = vld [vmem:[%s219 + $0x270] sm:$0xf]
      %v383 = vld [vmem:[%s219 + $0x274] sm:$0xf]
      %v384 = vld [vmem:[%s219 + $0x278] sm:$0xf]
      %v385 = vld [vmem:[%s219 + $0x27c] sm:$0xf]
      %v386 = vld [vmem:[%s219 + $0x280] sm:$0xf]
      %v387 = vld [vmem:[%s219 + $0x284] sm:$0xf]
      %v388 = vld [vmem:[%s219 + $0x288] sm:$0xf]
      %v389 = vld [vmem:[%s219 + $0x28c] sm:$0xf]
      %v390 = vld [vmem:[%s219 + $0x290] sm:$0xf]
      %v391 = vld [vmem:[%s219 + $0x294] sm:$0xf]
      %v392 = vld [vmem:[%s219 + $0x298] sm:$0xf]
      %v393 = vld [vmem:[%s219 + $0x29c] sm:$0xf]
      %v394 = vld [vmem:[%s219 + $0x2a0] sm:$0xf]
      %v395 = vld [vmem:[%s219 + $0x2a4] sm:$0xf]
      %v396 = vld [vmem:[%s219 + $0x2a8] sm:$0xf]
      %v397 = vld [vmem:[%s219 + $0x2ac] sm:$0xf]
      %v398 = vld [vmem:[%s219 + $0x2b0] sm:$0xf]
      %v399 = vld [vmem:[%s219 + $0x2b4] sm:$0xf]
      %v400 = vld [vmem:[%s219 + $0x2b8] sm:$0xf]
      %v401 = vld [vmem:[%s219 + $0x2bc] sm:$0xf]
      %v402 = vld [vmem:[%s219 + $0x2c0] sm:$0xf]
      %v403 = vld [vmem:[%s219 + $0x2c4] sm:$0xf]
      %v404 = vld [vmem:[%s219 + $0x2c8] sm:$0xf]
      %v405 = vld [vmem:[%s219 + $0x2cc] sm:$0xf]
      %v406 = vld [vmem:[%s219 + $0x2d0] sm:$0xf]
      %v407 = vld [vmem:[%s219 + $0x2d4] sm:$0xf]
      %v408 = vld [vmem:[%s219 + $0x2d8] sm:$0xf]
      %v409 = vld [vmem:[%s219 + $0x2dc] sm:$0xf]
      %v410 = vld [vmem:[%s219 + $0x2e0] sm:$0xf]
      %v411 = vld [vmem:[%s219 + $0x2e4] sm:$0xf]
      %v412 = vld [vmem:[%s219 + $0x2e8] sm:$0xf]
      %v413 = vld [vmem:[%s219 + $0x2ec] sm:$0xf]
      %v414 = vld [vmem:[%s219 + $0x2f0] sm:$0xf]
      %v415 = vld [vmem:[%s219 + $0x2f4] sm:$0xf]
      %v416 = vld [vmem:[%s219 + $0x2f8] sm:$0xf]
      %v417 = vld [vmem:[%s219 + $0x2fc] sm:$0xf]
      %v418 = vld [vmem:[%s219 + $0x300] sm:$0xf]
      %v419 = vld [vmem:[%s219 + $0x304] sm:$0xf]
      %v420 = vld [vmem:[%s219 + $0x308] sm:$0xf]
      %v421 = vld [vmem:[%s219 + $0x30c] sm:$0xf]
      %v422 = vld [vmem:[%s219 + $0x310] sm:$0xf]
      %v423 = vld [vmem:[%s219 + $0x314] sm:$0xf]
      %v424 = vld [vmem:[%s219 + $0x318] sm:$0xf]
      %v425 = vld [vmem:[%s219 + $0x31c] sm:$0xf]
      %v426 = vld [vmem:[%s1] sm:$0xf]
      %v427 = vld [vmem:[%s1 + $0x4] sm:$0x1]
      %v628 = vunpack.c.l.b16 %v226
      %v629 = vunpack.c.l.b16 %v227
      %v630 = vunpack.c.l.b16 %v228
      %v631 = vunpack.c.l.b16 %v229
      %v632 = vunpack.c.l.b16 %v230
      %v633 = vunpack.c.l.b16 %v231
      %v634 = vunpack.c.l.b16 %v232
      %v635 = vunpack.c.l.b16 %v233
      %v636 = vunpack.c.l.b16 %v234
      %v637 = vunpack.c.l.b16 %v235
      %v638 = vunpack.c.l.b16 %v236
      %v639 = vunpack.c.l.b16 %v237
      %v640 = vunpack.c.l.b16 %v238
      %v641 = vunpack.c.l.b16 %v239
      %v642 = vunpack.c.l.b16 %v240
      %v643 = vunpack.c.l.b16 %v241
      %v644 = vunpack.c.l.b16 %v242
      %v645 = vunpack.c.l.b16 %v243
      %v646 = vunpack.c.l.b16 %v244
      %v647 = vunpack.c.l.b16 %v245
      %v648 = vunpack.c.l.b16 %v246
      %v649 = vunpack.c.l.b16 %v247
      %v650 = vunpack.c.l.b16 %v248
      %v651 = vunpack.c.l.b16 %v249
      %v652 = vunpack.c.l.b16 %v250
      %v653 = vunpack.c.l.b16 %v251
      %v654 = vunpack.c.l.b16 %v252
      %v655 = vunpack.c.l.b16 %v253
      %v656 = vunpack.c.l.b16 %v254
      %v657 = vunpack.c.l.b16 %v255
      %v658 = vunpack.c.l.b16 %v256
      %v659 = vunpack.c.l.b16 %v257
      %v660 = vunpack.c.l.b16 %v258
      %v661 = vunpack.c.l.b16 %v259
      %v662 = vunpack.c.l.b16 %v260
      %v663 = vunpack.c.l.b16 %v261
      %v664 = vunpack.c.l.b16 %v262
      %v665 = vunpack.c.l.b16 %v263
      %v666 = vunpack.c.l.b16 %v264
      %v667 = vunpack.c.l.b16 %v265
      %v668 = vunpack.c.l.b16 %v266
      %v669 = vunpack.c.l.b16 %v267
      %v670 = vunpack.c.l.b16 %v268
      %v671 = vunpack.c.l.b16 %v269
      %v672 = vunpack.c.l.b16 %v270
      %v673 = vunpack.c.l.b16 %v271
      %v674 = vunpack.c.l.b16 %v272
      %v675 = vunpack.c.l.b16 %v273
      %v676 = vunpack.c.l.b16 %v274
      %v677 = vunpack.c.l.b16 %v275
      %v678 = vunpack.c.l.b16 %v276
      %v679 = vunpack.c.l.b16 %v277
      %v680 = vunpack.c.l.b16 %v278
      %v681 = vunpack.c.l.b16 %v279
      %v682 = vunpack.c.l.b16 %v280
      %v683 = vunpack.c.l.b16 %v281
      %v684 = vunpack.c.l.b16 %v282
      %v685 = vunpack.c.l.b16 %v283
      %v686 = vunpack.c.l.b16 %v284
      %v687 = vunpack.c.l.b16 %v285
      %v688 = vunpack.c.l.b16 %v286
      %v689 = vunpack.c.l.b16 %v287
      %v690 = vunpack.c.l.b16 %v288
      %v691 = vunpack.c.l.b16 %v289
      %v692 = vunpack.c.l.b16 %v290
      %v693 = vunpack.c.l.b16 %v291
      %v694 = vunpack.c.l.b16 %v292
      %v695 = vunpack.c.l.b16 %v293
      %v696 = vunpack.c.l.b16 %v294
      %v697 = vunpack.c.l.b16 %v295
      %v698 = vunpack.c.l.b16 %v296
      %v699 = vunpack.c.l.b16 %v297
      %v700 = vunpack.c.l.b16 %v298
      %v701 = vunpack.c.l.b16 %v299
      %v702 = vunpack.c.l.b16 %v300
      %v703 = vunpack.c.l.b16 %v301
      %v704 = vunpack.c.l.b16 %v302
      %v705 = vunpack.c.l.b16 %v303
      %v706 = vunpack.c.l.b16 %v304
      %v707 = vunpack.c.l.b16 %v305
      %v708 = vunpack.c.l.b16 %v306
      %v709 = vunpack.c.l.b16 %v307
      %v710 = vunpack.c.l.b16 %v308
      %v711 = vunpack.c.l.b16 %v309
      %v712 = vunpack.c.l.b16 %v310
      %v713 = vunpack.c.l.b16 %v311
      %v714 = vunpack.c.l.b16 %v312
      %v715 = vunpack.c.l.b16 %v313
      %v716 = vunpack.c.l.b16 %v314
      %v717 = vunpack.c.l.b16 %v315
      %v718 = vunpack.c.l.b16 %v316
      %v719 = vunpack.c.l.b16 %v317
      %v720 = vunpack.c.l.b16 %v318
      %v721 = vunpack.c.l.b16 %v319
      %v722 = vunpack.c.l.b16 %v320
      %v723 = vunpack.c.l.b16 %v321
      %v724 = vunpack.c.l.b16 %v322
      %v725 = vunpack.c.l.b16 %v323
      %v726 = vunpack.c.l.b16 %v324
      %v727 = vunpack.c.l.b16 %v325
      %v728 = vunpack.c.l.b16 %v326
      %v729 = vunpack.c.l.b16 %v327
      %v730 = vunpack.c.l.b16 %v328
      %v731 = vunpack.c.l.b16 %v329
      %v732 = vunpack.c.l.b16 %v330
      %v733 = vunpack.c.l.b16 %v331
      %v734 = vunpack.c.l.b16 %v332
      %v735 = vunpack.c.l.b16 %v333
      %v736 = vunpack.c.l.b16 %v334
      %v737 = vunpack.c.l.b16 %v335
      %v738 = vunpack.c.l.b16 %v336
      %v739 = vunpack.c.l.b16 %v337
      %v740 = vunpack.c.l.b16 %v338
      %v741 = vunpack.c.l.b16 %v339
      %v742 = vunpack.c.l.b16 %v340
      %v743 = vunpack.c.l.b16 %v341
      %v744 = vunpack.c.l.b16 %v342
      %v745 = vunpack.c.l.b16 %v343
      %v746 = vunpack.c.l.b16 %v344
      %v747 = vunpack.c.l.b16 %v345
      %v748 = vunpack.c.l.b16 %v346
      %v749 = vunpack.c.l.b16 %v347
      %v750 = vunpack.c.l.b16 %v348
      %v751 = vunpack.c.l.b16 %v349
      %v752 = vunpack.c.l.b16 %v350
      %v753 = vunpack.c.l.b16 %v351
      %v754 = vunpack.c.l.b16 %v352
      %v755 = vunpack.c.l.b16 %v353
      %v756 = vunpack.c.l.b16 %v354
      %v757 = vunpack.c.l.b16 %v355
      %v758 = vunpack.c.l.b16 %v356
      %v759 = vunpack.c.l.b16 %v357
      %v760 = vunpack.c.l.b16 %v358
      %v761 = vunpack.c.l.b16 %v359
      %v762 = vunpack.c.l.b16 %v360
      %v763 = vunpack.c.l.b16 %v361
      %v764 = vunpack.c.l.b16 %v362
      %v765 = vunpack.c.l.b16 %v363
      %v766 = vunpack.c.l.b16 %v364
      %v767 = vunpack.c.l.b16 %v365
      %v768 = vunpack.c.l.b16 %v366
      %v769 = vunpack.c.l.b16 %v367
      %v770 = vunpack.c.l.b16 %v368
      %v771 = vunpack.c.l.b16 %v369
      %v772 = vunpack.c.l.b16 %v370
      %v773 = vunpack.c.l.b16 %v371
      %v774 = vunpack.c.l.b16 %v372
      %v775 = vunpack.c.l.b16 %v373
      %v776 = vunpack.c.l.b16 %v374
      %v777 = vunpack.c.l.b16 %v375
      %v778 = vunpack.c.l.b16 %v376
      %v779 = vunpack.c.l.b16 %v377
      %v780 = vunpack.c.l.b16 %v378
      %v781 = vunpack.c.l.b16 %v379
      %v782 = vunpack.c.l.b16 %v380
      %v783 = vunpack.c.l.b16 %v381
      %v784 = vunpack.c.l.b16 %v382
      %v785 = vunpack.c.l.b16 %v383
      %v786 = vunpack.c.l.b16 %v384
      %v787 = vunpack.c.l.b16 %v385
      %v788 = vunpack.c.l.b16 %v386
      %v789 = vunpack.c.l.b16 %v387
      %v790 = vunpack.c.l.b16 %v388
      %v791 = vunpack.c.l.b16 %v389
      %v792 = vunpack.c.l.b16 %v390
      %v793 = vunpack.c.l.b16 %v391
      %v794 = vunpack.c.l.b16 %v392
      %v795 = vunpack.c.l.b16 %v393
      %v796 = vunpack.c.l.b16 %v394
      %v797 = vunpack.c.l.b16 %v395
      %v798 = vunpack.c.l.b16 %v396
      %v799 = vunpack.c.l.b16 %v397
      %v800 = vunpack.c.l.b16 %v398
      %v801 = vunpack.c.l.b16 %v399
      %v802 = vunpack.c.l.b16 %v400
      %v803 = vunpack.c.l.b16 %v401
      %v804 = vunpack.c.l.b16 %v402
      %v805 = vunpack.c.l.b16 %v403
      %v806 = vunpack.c.l.b16 %v404
      %v807 = vunpack.c.l.b16 %v405
      %v808 = vunpack.c.l.b16 %v406
      %v809 = vunpack.c.l.b16 %v407
      %v810 = vunpack.c.l.b16 %v408
      %v811 = vunpack.c.l.b16 %v409
      %v812 = vunpack.c.l.b16 %v410
      %v813 = vunpack.c.l.b16 %v411
      %v814 = vunpack.c.l.b16 %v412
      %v815 = vunpack.c.l.b16 %v413
      %v816 = vunpack.c.l.b16 %v414
      %v817 = vunpack.c.l.b16 %v415
      %v818 = vunpack.c.l.b16 %v416
      %v819 = vunpack.c.l.b16 %v417
      %v820 = vunpack.c.l.b16 %v418
      %v821 = vunpack.c.l.b16 %v419
      %v822 = vunpack.c.l.b16 %v420
      %v823 = vunpack.c.l.b16 %v421
      %v824 = vunpack.c.l.b16 %v422
      %v825 = vunpack.c.l.b16 %v423
      %v826 = vunpack.c.l.b16 %v424
      %v827 = vunpack.c.l.b16 %v425
      %v828 = vpack.c.b16 %v629, %v628
      %v829 = vpack.c.b16 %v631, %v630
      %v830 = vpack.c.b16 %v633, %v632
      %v831 = vpack.c.b16 %v635, %v634
      %v832 = vpack.c.b16 %v637, %v636
      %v833 = vpack.c.b16 %v639, %v638
      %v834 = vpack.c.b16 %v641, %v640
      %v835 = vpack.c.b16 %v643, %v642
      %v836 = vpack.c.b16 %v645, %v644
      %v837 = vpack.c.b16 %v647, %v646
      %v838 = vpack.c.b16 %v649, %v648
      %v839 = vpack.c.b16 %v651, %v650
      %v840 = vpack.c.b16 %v653, %v652
      %v841 = vpack.c.b16 %v655, %v654
      %v842 = vpack.c.b16 %v657, %v656
      %v843 = vpack.c.b16 %v659, %v658
      %v844 = vpack.c.b16 %v661, %v660
      %v845 = vpack.c.b16 %v663, %v662
      %v846 = vpack.c.b16 %v665, %v664
      %v847 = vpack.c.b16 %v667, %v666
      %v848 = vpack.c.b16 %v669, %v668
      %v849 = vpack.c.b16 %v671, %v670
      %v850 = vpack.c.b16 %v673, %v672
      %v851 = vpack.c.b16 %v675, %v674
      %v852 = vpack.c.b16 %v677, %v676
      %v853 = vpack.c.b16 %v679, %v678
      %v854 = vpack.c.b16 %v681, %v680
      %v855 = vpack.c.b16 %v683, %v682
      %v856 = vpack.c.b16 %v685, %v684
      %v857 = vpack.c.b16 %v687, %v686
      %v858 = vpack.c.b16 %v689, %v688
      %v859 = vpack.c.b16 %v691, %v690
      %v860 = vpack.c.b16 %v693, %v692
      %v861 = vpack.c.b16 %v695, %v694
      %v862 = vpack.c.b16 %v697, %v696
      %v863 = vpack.c.b16 %v699, %v698
      %v864 = vpack.c.b16 %v701, %v700
      %v865 = vpack.c.b16 %v703, %v702
      %v866 = vpack.c.b16 %v705, %v704
      %v867 = vpack.c.b16 %v707, %v706
      %v868 = vpack.c.b16 %v709, %v708
      %v869 = vpack.c.b16 %v711, %v710
      %v870 = vpack.c.b16 %v713, %v712
      %v871 = vpack.c.b16 %v715, %v714
      %v872 = vpack.c.b16 %v717, %v716
      %v873 = vpack.c.b16 %v719, %v718
      %v874 = vpack.c.b16 %v721, %v720
      %v875 = vpack.c.b16 %v723, %v722
      %v876 = vpack.c.b16 %v725, %v724
      %v877 = vpack.c.b16 %v727, %v726
      %v878 = vpack.c.b16 %v729, %v728
      %v879 = vpack.c.b16 %v731, %v730
      %v880 = vpack.c.b16 %v733, %v732
      %v881 = vpack.c.b16 %v735, %v734
      %v882 = vpack.c.b16 %v737, %v736
      %v883 = vpack.c.b16 %v739, %v738
      %v884 = vpack.c.b16 %v741, %v740
      %v885 = vpack.c.b16 %v743, %v742
      %v886 = vpack.c.b16 %v745, %v744
      %v887 = vpack.c.b16 %v747, %v746
      %v888 = vpack.c.b16 %v749, %v748
      %v889 = vpack.c.b16 %v751, %v750
      %v890 = vpack.c.b16 %v753, %v752
      %v891 = vpack.c.b16 %v755, %v754
      %v892 = vpack.c.b16 %v757, %v756
      %v893 = vpack.c.b16 %v759, %v758
      %v894 = vpack.c.b16 %v761, %v760
      %v895 = vpack.c.b16 %v763, %v762
      %v896 = vpack.c.b16 %v765, %v764
      %v897 = vpack.c.b16 %v767, %v766
      %v898 = vpack.c.b16 %v769, %v768
      %v899 = vpack.c.b16 %v771, %v770
      %v900 = vpack.c.b16 %v773, %v772
      %v901 = vpack.c.b16 %v775, %v774
      %v902 = vpack.c.b16 %v777, %v776
      %v903 = vpack.c.b16 %v779, %v778
      %v904 = vpack.c.b16 %v781, %v780
      %v905 = vpack.c.b16 %v783, %v782
      %v906 = vpack.c.b16 %v785, %v784
      %v907 = vpack.c.b16 %v787, %v786
      %v908 = vpack.c.b16 %v789, %v788
      %v909 = vpack.c.b16 %v791, %v790
      %v910 = vpack.c.b16 %v793, %v792
      %v911 = vpack.c.b16 %v795, %v794
      %v912 = vpack.c.b16 %v797, %v796
      %v913 = vpack.c.b16 %v799, %v798
      %v914 = vpack.c.b16 %v801, %v800
      %v915 = vpack.c.b16 %v803, %v802
      %v916 = vpack.c.b16 %v805, %v804
      %v917 = vpack.c.b16 %v807, %v806
      %v918 = vpack.c.b16 %v809, %v808
      %v919 = vpack.c.b16 %v811, %v810
      %v920 = vpack.c.b16 %v813, %v812
      %v921 = vpack.c.b16 %v815, %v814
      %v922 = vpack.c.b16 %v817, %v816
      %v923 = vpack.c.b16 %v819, %v818
      %v924 = vpack.c.b16 %v821, %v820
      %v925 = vpack.c.b16 %v823, %v822
      %v926 = vpack.c.b16 %v825, %v824
      %v927 = vpack.c.b16 %v827, %v826
      %v930 = vunpack.c.l.b16 %v426
      %v931 = vunpack.c.l.b16 %v427
      %v932 = vpack.c.b16 %v931, %v930
      %vm933 = vcmask 72704
      %v935 = vsel %vm933, %v828, 0
      %v938 = vsel %vm933, %v829, 0
      %v941 = vsel %vm933, %v830, 0
      %v944 = vsel %vm933, %v831, 0
      %v947 = vsel %vm933, %v832, 0
      %v950 = vsel %vm933, %v833, 0
      %v953 = vsel %vm933, %v834, 0
      %v956 = vsel %vm933, %v835, 0
      %v959 = vsel %vm933, %v836, 0
      %v962 = vsel %vm933, %v837, 0
      %v965 = vsel %vm933, %v838, 0
      %v968 = vsel %vm933, %v839, 0
      %v971 = vsel %vm933, %v840, 0
      %v974 = vsel %vm933, %v841, 0
      %v977 = vsel %vm933, %v842, 0
      %v980 = vsel %vm933, %v843, 0
      %v983 = vsel %vm933, %v844, 0
      %v986 = vsel %vm933, %v845, 0
      %v989 = vsel %vm933, %v846, 0
      %v992 = vsel %vm933, %v847, 0
      %v995 = vsel %vm933, %v848, 0
      %v998 = vsel %vm933, %v849, 0
      %v1001 = vsel %vm933, %v850, 0
      %v1004 = vsel %vm933, %v851, 0
      %v1007 = vsel %vm933, %v852, 0
      %v1010 = vsel %vm933, %v853, 0
      %v1013 = vsel %vm933, %v854, 0
      %v1016 = vsel %vm933, %v855, 0
      %v1019 = vsel %vm933, %v856, 0
      %v1022 = vsel %vm933, %v857, 0
      %v1025 = vsel %vm933, %v858, 0
      %v1028 = vsel %vm933, %v859, 0
      %v1031 = vsel %vm933, %v860, 0
      %v1034 = vsel %vm933, %v861, 0
      %v1037 = vsel %vm933, %v862, 0
      %v1040 = vsel %vm933, %v863, 0
      %v1043 = vsel %vm933, %v864, 0
      %v1046 = vsel %vm933, %v865, 0
      %v1049 = vsel %vm933, %v866, 0
      %v1052 = vsel %vm933, %v867, 0
      %v1055 = vsel %vm933, %v868, 0
      %v1058 = vsel %vm933, %v869, 0
      %v1061 = vsel %vm933, %v870, 0
      %v1064 = vsel %vm933, %v871, 0
      %v1067 = vsel %vm933, %v872, 0
      %v1070 = vsel %vm933, %v873, 0
      %v1073 = vsel %vm933, %v874, 0
      %v1076 = vsel %vm933, %v875, 0
      %v1079 = vsel %vm933, %v876, 0
      %v1082 = vsel %vm933, %v877, 0
      %v1085 = vsel %vm933, %v878, 0
      %v1088 = vsel %vm933, %v879, 0
      %v1091 = vsel %vm933, %v880, 0
      %v1094 = vsel %vm933, %v881, 0
      %v1097 = vsel %vm933, %v882, 0
      %v1100 = vsel %vm933, %v883, 0
      %v1103 = vsel %vm933, %v884, 0
      %v1106 = vsel %vm933, %v885, 0
      %v1109 = vsel %vm933, %v886, 0
      %v1112 = vsel %vm933, %v887, 0
      %v1115 = vsel %vm933, %v888, 0
      %v1118 = vsel %vm933, %v889, 0
      %v1121 = vsel %vm933, %v890, 0
      %v1124 = vsel %vm933, %v891, 0
      %v1127 = vsel %vm933, %v892, 0
      %v1130 = vsel %vm933, %v893, 0
      %v1133 = vsel %vm933, %v894, 0
      %v1136 = vsel %vm933, %v895, 0
      %v1139 = vsel %vm933, %v896, 0
      %v1142 = vsel %vm933, %v897, 0
      %v1145 = vsel %vm933, %v898, 0
      %v1148 = vsel %vm933, %v899, 0
      %v1151 = vsel %vm933, %v900, 0
      %v1154 = vsel %vm933, %v901, 0
      %v1157 = vsel %vm933, %v902, 0
      %v1160 = vsel %vm933, %v903, 0
      %v1163 = vsel %vm933, %v904, 0
      %v1166 = vsel %vm933, %v905, 0
      %v1169 = vsel %vm933, %v906, 0
      %v1172 = vsel %vm933, %v907, 0
      %v1175 = vsel %vm933, %v908, 0
      %v1178 = vsel %vm933, %v909, 0
      %v1181 = vsel %vm933, %v910, 0
      %v1184 = vsel %vm933, %v911, 0
      %v1187 = vsel %vm933, %v912, 0
      %v1190 = vsel %vm933, %v913, 0
      %v1193 = vsel %vm933, %v914, 0
      %v1196 = vsel %vm933, %v915, 0
      %v1199 = vsel %vm933, %v916, 0
      %v1202 = vsel %vm933, %v917, 0
      %v1205 = vsel %vm933, %v918, 0
      %v1208 = vsel %vm933, %v919, 0
      %v1211 = vsel %vm933, %v920, 0
      %v1214 = vsel %vm933, %v921, 0
      %v1217 = vsel %vm933, %v922, 0
      %v1220 = vsel %vm933, %v923, 0
      %v1223 = vsel %vm933, %v924, 0
      %v1226 = vsel %vm933, %v925, 0
      %v1229 = vsel %vm933, %v926, 0
      %v1232 = vsel %vm933, %v927, 0
      %vm1234 = vcmask 1043456
      %vm1235 = vcmask 1044480
      %v1236 = vsel %vm1234, 4294967295, 65535
      %v1237 = vsel %vm1235, %v1236, 0
      %v1239 = vand.u32 %v932, %v1237
      %1241 = vmatprep.subr.bf16.mxu0 0
      %1242 = vmatpush1.bf16.msra.mxu0 %v1239
      %1243 = vmatprep.subr.bf16.mxu0 0
      %1244 = vmatpush1.bf16.msra.mxu0 0
      %1245 = vmatprep.subr.bf16.mxu0 0
      %1246 = vmatpush1.bf16.msra.mxu0 0
      %1247 = vmatprep.subr.bf16.mxu0 0
      %1248 = vmatpush1.bf16.msra.mxu0 0
      %1249 = vmatprep.subr.bf16.mxu0 0
      %1250 = vmatpush1.bf16.msra.mxu0 0
      %1251 = vmatprep.subr.bf16.mxu0 0
      %1252 = vmatpush1.bf16.msra.mxu0 0
      %1253 = vmatprep.subr.bf16.mxu0 0
      %1254 = vmatpush1.bf16.msra.mxu0 0
      %1255 = vmatprep.subr.bf16.mxu0 0
      %1256 = vmatpush1.bf16.msra.mxu0 0
      %1257 = vmatprep.subr.bf16.mxu0 0
      %1258 = vmatpush1.bf16.msra.mxu0 0
      %1259 = vmatprep.subr.bf16.mxu0 0
      %1260 = vmatpush1.bf16.msra.mxu0 0
      %1261 = vmatprep.subr.bf16.mxu0 0
      %1262 = vmatpush1.bf16.msra.mxu0 0
      %1263 = vmatprep.subr.bf16.mxu0 0
      %1264 = vmatpush1.bf16.msra.mxu0 0
      %1265 = vmatprep.subr.bf16.mxu0 0
      %1266 = vmatpush1.bf16.msra.mxu0 0
      %1267 = vmatprep.subr.bf16.mxu0 0
      %1268 = vmatpush1.bf16.msra.mxu0 0
      %1269 = vmatprep.subr.bf16.mxu0 0
      %1270 = vmatpush1.bf16.msra.mxu0 0
      %1271 = vmatprep.subr.bf16.mxu0 0
      %1272 = vmatpush1.bf16.msra.mxu0 0
      %1273 = vmatprep.mubr.bf16.mxu0 0
      %1274 = vmatmul.mubr.bf16.gmra.mrb[0].mxu0 %v935
      %v1275 = vpop.f32.mrb[0].mxu0
      %v1276 = vadd.f32 0.0, %v1275
      %v1277 = vpop.f32.mrb[0].mxu0
      %v1278 = vpop.f32.mrb[0].mxu0
      %v1279 = vadd.f32 0.0, %v1278
      %v1280 = vpop.f32.mrb[0].mxu0
      %1281 = vmatprep.mubr.bf16.mxu0 0
      %1282 = vmatmul.mubr.bf16.gmra.mrb[0].mxu0 %v938
      %v1283 = vpop.f32.mrb[0].mxu0
      %v1284 = vadd.f32 0.0, %v1283
      %v1285 = vpop.f32.mrb[0].mxu0
      %v1286 = vpop.f32.mrb[0].mxu0
      %v1287 = vadd.f32 0.0, %v1286
      %v1288 = vpop.f32.mrb[0].mxu0
      %1289 = vmatprep.mubr.bf16.mxu0 0
      %1290 = vmatmul.mubr.bf16.gmra.mrb[0].mxu0 %v941
      %v1291 = vpop.f32.mrb[0].mxu0
      %v1292 = vadd.f32 0.0, %v1291
      %v1293 = vpop.f32.mrb[0].mxu0
      %v1294 = vpop.f32.mrb[0].mxu0
      %v1295 = vadd.f32 0.0, %v1294
      %v1296 = vpop.f32.mrb[0].mxu0
      %1297 = vmatprep.mubr.bf16.mxu0 0
      %1298 = vmatmul.mubr.bf16.gmra.mrb[0].mxu0 %v944
      %v1299 = vpop.f32.mrb[0].mxu0
      %v1300 = vadd.f32 0.0, %v1299
      %v1301 = vpop.f32.mrb[0].mxu0
      %v1302 = vpop.f32.mrb[0].mxu0
      %v1303 = vadd.f32 0.0, %v1302
      %v1304 = vpop.f32.mrb[0].mxu0
      %1305 = vmatprep.mubr.bf16.mxu0 0
      %1306 = vmatmul.mubr.bf16.gmra.mrb[0].mxu0 %v947
      %v1307 = vpop.f32.mrb[0].mxu0
      %v1308 = vadd.f32 0.0, %v1307
      %v1309 = vpop.f32.mrb[0].mxu0
      %v1310 = vpop.f32.mrb[0].mxu0
      %v1311 = vadd.f32 0.0, %v1310
      %v1312 = vpop.f32.mrb[0].mxu0
      %1313 = vmatprep.mubr.bf16.mxu0 0
      %1314 = vmatmul.mubr.bf16.gmra.mrb[0].mxu0 %v950
      %v1315 = vpop.f32.mrb[0].mxu0
      %v1316 = vadd.f32 0.0, %v1315
      %v1317 = vpop.f32.mrb[0].mxu0
      %v1318 = vpop.f32.mrb[0].mxu0
      %v1319 = vadd.f32 0.0, %v1318
      %v1320 = vpop.f32.mrb[0].mxu0
      %1321 = vmatprep.mubr.bf16.mxu0 0
      %1322 = vmatmul.mubr.bf16.gmra.mrb[0].mxu0 %v953
      %v1323 = vpop.f32.mrb[0].mxu0
      %v1324 = vadd.f32 0.0, %v1323
      %v1325 = vpop.f32.mrb[0].mxu0
      %v1326 = vpop.f32.mrb[0].mxu0
      %v1327 = vadd.f32 0.0, %v1326
      %v1328 = vpop.f32.mrb[0].mxu0
      %1329 = vmatprep.mubr.bf16.mxu0 0
      %1330 = vmatmul.mubr.bf16.gmra.mrb[0].mxu0 %v956
      %v1331 = vpop.f32.mrb[0].mxu0
      %v1332 = vadd.f32 0.0, %v1331
      %v1333 = vpop.f32.mrb[0].mxu0
      %v1334 = vpop.f32.mrb[0].mxu0
      %v1335 = vadd.f32 0.0, %v1334
      %v1336 = vpop.f32.mrb[0].mxu0
      %1337 = vmatprep.mubr.bf16.mxu0 0
      %1338 = vmatmul.mubr.bf16.gmra.mrb[0].mxu0 %v959
      %v1339 = vpop.f32.mrb[0].mxu0
      %v1340 = vadd.f32 0.0, %v1339
      %v1341 = vpop.f32.mrb[0].mxu0
      %v1342 = vpop.f32.mrb[0].mxu0
      %v1343 = vadd.f32 0.0, %v1342
      %v1344 = vpop.f32.mrb[0].mxu0
      %1345 = vmatprep.mubr.bf16.mxu0 0
      %1346 = vmatmul.mubr.bf16.gmra.mrb[0].mxu0 %v962
      %v1347 = vpop.f32.mrb[0].mxu0
      %v1348 = vadd.f32 0.0, %v1347
      %v1349 = vpop.f32.mrb[0].mxu0
      %v1350 = vpop.f32.mrb[0].mxu0
      %v1351 = vadd.f32 0.0, %v1350
      %v1352 = vpop.f32.mrb[0].mxu0
      %1353 = vmatprep.mubr.bf16.mxu0 0
      %1354 = vmatmul.mubr.bf16.gmra.mrb[0].mxu0 %v965
      %v1355 = vpop.f32.mrb[0].mxu0
      %v1356 = vadd.f32 0.0, %v1355
      %v1357 = vpop.f32.mrb[0].mxu0
      %v1358 = vpop.f32.mrb[0].mxu0
      %v1359 = vadd.f32 0.0, %v1358
      %v1360 = vpop.f32.mrb[0].mxu0
      %1361 = vmatprep.mubr.bf16.mxu0 0
      %1362 = vmatmul.mubr.bf16.gmra.mrb[0].mxu0 %v968
      %v1363 = vpop.f32.mrb[0].mxu0
      %v1364 = vadd.f32 0.0, %v1363
      %v1365 = vpop.f32.mrb[0].mxu0
      %v1366 = vpop.f32.mrb[0].mxu0
      %v1367 = vadd.f32 0.0, %v1366
      %v1368 = vpop.f32.mrb[0].mxu0
      %1369 = vmatprep.mubr.bf16.mxu0 0
      %1370 = vmatmul.mubr.bf16.gmra.mrb[0].mxu0 %v971
      %v1371 = vpop.f32.mrb[0].mxu0
      %v1372 = vadd.f32 0.0, %v1371
      %v1373 = vpop.f32.mrb[0].mxu0
      %v1374 = vpop.f32.mrb[0].mxu0
      %v1375 = vadd.f32 0.0, %v1374
      %v1376 = vpop.f32.mrb[0].mxu0
      %1377 = vmatprep.mubr.bf16.mxu0 0
      %1378 = vmatmul.mubr.bf16.gmra.mrb[0].mxu0 %v974
      %v1379 = vpop.f32.mrb[0].mxu0
      %v1380 = vadd.f32 0.0, %v1379
      %v1381 = vpop.f32.mrb[0].mxu0
      %v1382 = vpop.f32.mrb[0].mxu0
      %v1383 = vadd.f32 0.0, %v1382
      %v1384 = vpop.f32.mrb[0].mxu0
      %1385 = vmatprep.mubr.bf16.mxu0 0
      %1386 = vmatmul.mubr.bf16.gmra.mrb[0].mxu0 %v977
      %v1387 = vpop.f32.mrb[0].mxu0
      %v1388 = vadd.f32 0.0, %v1387
      %v1389 = vpop.f32.mrb[0].mxu0
      %v1390 = vpop.f32.mrb[0].mxu0
      %v1391 = vadd.f32 0.0, %v1390
      %v1392 = vpop.f32.mrb[0].mxu0
      %1393 = vmatprep.mubr.bf16.mxu0 0
      %1394 = vmatmul.mubr.bf16.gmra.mrb[0].mxu0 %v980
      %v1395 = vpop.f32.mrb[0].mxu0
      %v1396 = vadd.f32 0.0, %v1395
      %v1397 = vpop.f32.mrb[0].mxu0
      %v1398 = vpop.f32.mrb[0].mxu0
      %v1399 = vadd.f32 0.0, %v1398
      %v1400 = vpop.f32.mrb[0].mxu0
      %1401 = vmatprep.mubr.bf16.mxu0 0
      %1402 = vmatmul.mubr.bf16.gmra.mrb[0].mxu0 %v983
      %v1403 = vpop.f32.mrb[0].mxu0
      %v1404 = vadd.f32 0.0, %v1403
      %v1405 = vpop.f32.mrb[0].mxu0
      %v1406 = vpop.f32.mrb[0].mxu0
      %v1407 = vadd.f32 0.0, %v1406
      %v1408 = vpop.f32.mrb[0].mxu0
      %1409 = vmatprep.mubr.bf16.mxu0 0
      %1410 = vmatmul.mubr.bf16.gmra.mrb[0].mxu0 %v986
      %v1411 = vpop.f32.mrb[0].mxu0
      %v1412 = vadd.f32 0.0, %v1411
      %v1413 = vpop.f32.mrb[0].mxu0
      %v1414 = vpop.f32.mrb[0].mxu0
      %v1415 = vadd.f32 0.0, %v1414
      %v1416 = vpop.f32.mrb[0].mxu0
      %1417 = vmatprep.mubr.bf16.mxu0 0
      %1418 = vmatmul.mubr.bf16.gmra.mrb[0].mxu0 %v989
      %v1419 = vpop.f32.mrb[0].mxu0
      %v1420 = vadd.f32 0.0, %v1419
      %v1421 = vpop.f32.mrb[0].mxu0
      %v1422 = vpop.f32.mrb[0].mxu0
      %v1423 = vadd.f32 0.0, %v1422
      %v1424 = vpop.f32.mrb[0].mxu0
      %1425 = vmatprep.mubr.bf16.mxu0 0
      %1426 = vmatmul.mubr.bf16.gmra.mrb[0].mxu0 %v992
      %v1427 = vpop.f32.mrb[0].mxu0
      %v1428 = vadd.f32 0.0, %v1427
      %v1429 = vpop.f32.mrb[0].mxu0
      %v1430 = vpop.f32.mrb[0].mxu0
      %v1431 = vadd.f32 0.0, %v1430
      %v1432 = vpop.f32.mrb[0].mxu0
      %1433 = vmatprep.mubr.bf16.mxu0 0
      %1434 = vmatmul.mubr.bf16.gmra.mrb[0].mxu0 %v995
      %v1435 = vpop.f32.mrb[0].mxu0
      %v1436 = vadd.f32 0.0, %v1435
      %v1437 = vpop.f32.mrb[0].mxu0
      %v1438 = vpop.f32.mrb[0].mxu0
      %v1439 = vadd.f32 0.0, %v1438
      %v1440 = vpop.f32.mrb[0].mxu0
      %1441 = vmatprep.mubr.bf16.mxu0 0
      %1442 = vmatmul.mubr.bf16.gmra.mrb[0].mxu0 %v998
      %v1443 = vpop.f32.mrb[0].mxu0
      %v1444 = vadd.f32 0.0, %v1443
      %v1445 = vpop.f32.mrb[0].mxu0
      %v1446 = vpop.f32.mrb[0].mxu0
      %v1447 = vadd.f32 0.0, %v1446
      %v1448 = vpop.f32.mrb[0].mxu0
      %1449 = vmatprep.mubr.bf16.mxu0 0
      %1450 = vmatmul.mubr.bf16.gmra.mrb[0].mxu0 %v1001
      %v1451 = vpop.f32.mrb[0].mxu0
      %v1452 = vadd.f32 0.0, %v1451
      %v1453 = vpop.f32.mrb[0].mxu0
      %v1454 = vpop.f32.mrb[0].mxu0
      %v1455 = vadd.f32 0.0, %v1454
      %v1456 = vpop.f32.mrb[0].mxu0
      %1457 = vmatprep.mubr.bf16.mxu0 0
      %1458 = vmatmul.mubr.bf16.gmra.mrb[0].mxu0 %v1004
      %v1459 = vpop.f32.mrb[0].mxu0
      %v1460 = vadd.f32 0.0, %v1459
      %v1461 = vpop.f32.mrb[0].mxu0
      %v1462 = vpop.f32.mrb[0].mxu0
      %v1463 = vadd.f32 0.0, %v1462
      %v1464 = vpop.f32.mrb[0].mxu0
      %1465 = vmatprep.mubr.bf16.mxu0 0
      %1466 = vmatmul.mubr.bf16.gmra.mrb[0].mxu0 %v1007
      %v1467 = vpop.f32.mrb[0].mxu0
      %v1468 = vadd.f32 0.0, %v1467
      %v1469 = vpop.f32.mrb[0].mxu0
      %v1470 = vpop.f32.mrb[0].mxu0
      %v1471 = vadd.f32 0.0, %v1470
      %v1472 = vpop.f32.mrb[0].mxu0
      %1473 = vmatprep.mubr.bf16.mxu0 0
      %1474 = vmatmul.mubr.bf16.gmra.mrb[0].mxu0 %v1010
      %v1475 = vpop.f32.mrb[0].mxu0
      %v1476 = vadd.f32 0.0, %v1475
      %v1477 = vpop.f32.mrb[0].mxu0
      %v1478 = vpop.f32.mrb[0].mxu0
      %v1479 = vadd.f32 0.0, %v1478
      %v1480 = vpop.f32.mrb[0].mxu0
      %1481 = vmatprep.mubr.bf16.mxu0 0
      %1482 = vmatmul.mubr.bf16.gmra.mrb[0].mxu0 %v1013
      %v1483 = vpop.f32.mrb[0].mxu0
      %v1484 = vadd.f32 0.0, %v1483
      %v1485 = vpop.f32.mrb[0].mxu0
      %v1486 = vpop.f32.mrb[0].mxu0
      %v1487 = vadd.f32 0.0, %v1486
      %v1488 = vpop.f32.mrb[0].mxu0
      %1489 = vmatprep.mubr.bf16.mxu0 0
      %1490 = vmatmul.mubr.bf16.gmra.mrb[0].mxu0 %v1016
      %v1491 = vpop.f32.mrb[0].mxu0
      %v1492 = vadd.f32 0.0, %v1491
      %v1493 = vpop.f32.mrb[0].mxu0
      %v1494 = vpop.f32.mrb[0].mxu0
      %v1495 = vadd.f32 0.0, %v1494
      %v1496 = vpop.f32.mrb[0].mxu0
      %1497 = vmatprep.mubr.bf16.mxu0 0
      %1498 = vmatmul.mubr.bf16.gmra.mrb[0].mxu0 %v1019
      %v1499 = vpop.f32.mrb[0].mxu0
      %v1500 = vadd.f32 0.0, %v1499
      %v1501 = vpop.f32.mrb[0].mxu0
      %v1502 = vpop.f32.mrb[0].mxu0
      %v1503 = vadd.f32 0.0, %v1502
      %v1504 = vpop.f32.mrb[0].mxu0
      %1505 = vmatprep.mubr.bf16.mxu0 0
      %1506 = vmatmul.mubr.bf16.gmra.mrb[0].mxu0 %v1022
      %v1507 = vpop.f32.mrb[0].mxu0
      %v1508 = vadd.f32 0.0, %v1507
      %v1509 = vpop.f32.mrb[0].mxu0
      %v1510 = vpop.f32.mrb[0].mxu0
      %v1511 = vadd.f32 0.0, %v1510
      %v1512 = vpop.f32.mrb[0].mxu0
      %1513 = vmatprep.mubr.bf16.mxu0 0
      %1514 = vmatmul.mubr.bf16.gmra.mrb[0].mxu0 %v1025
      %v1515 = vpop.f32.mrb[0].mxu0
      %v1516 = vadd.f32 0.0, %v1515
      %v1517 = vpop.f32.mrb[0].mxu0
      %v1518 = vpop.f32.mrb[0].mxu0
      %v1519 = vadd.f32 0.0, %v1518
      %v1520 = vpop.f32.mrb[0].mxu0
      %1521 = vmatprep.mubr.bf16.mxu0 0
      %1522 = vmatmul.mubr.bf16.gmra.mrb[0].mxu0 %v1028
      %v1523 = vpop.f32.mrb[0].mxu0
      %v1524 = vadd.f32 0.0, %v1523
      %v1525 = vpop.f32.mrb[0].mxu0
      %v1526 = vpop.f32.mrb[0].mxu0
      %v1527 = vadd.f32 0.0, %v1526
      %v1528 = vpop.f32.mrb[0].mxu0
      %1529 = vmatprep.mubr.bf16.mxu0 0
      %1530 = vmatmul.mubr.bf16.gmra.mrb[0].mxu0 %v1031
      %v1531 = vpop.f32.mrb[0].mxu0
      %v1532 = vadd.f32 0.0, %v1531
      %v1533 = vpop.f32.mrb[0].mxu0
      %v1534 = vpop.f32.mrb[0].mxu0
      %v1535 = vadd.f32 0.0, %v1534
      %v1536 = vpop.f32.mrb[0].mxu0
      %1537 = vmatprep.mubr.bf16.mxu0 0
      %1538 = vmatmul.mubr.bf16.gmra.mrb[0].mxu0 %v1034
      %v1539 = vpop.f32.mrb[0].mxu0
      %v1540 = vadd.f32 0.0, %v1539
      %v1541 = vpop.f32.mrb[0].mxu0
      %v1542 = vpop.f32.mrb[0].mxu0
      %v1543 = vadd.f32 0.0, %v1542
      %v1544 = vpop.f32.mrb[0].mxu0
      %1545 = vmatprep.mubr.bf16.mxu0 0
      %1546 = vmatmul.mubr.bf16.gmra.mrb[0].mxu0 %v1037
      %v1547 = vpop.f32.mrb[0].mxu0
      %v1548 = vadd.f32 0.0, %v1547
      %v1549 = vpop.f32.mrb[0].mxu0
      %v1550 = vpop.f32.mrb[0].mxu0
      %v1551 = vadd.f32 0.0, %v1550
      %v1552 = vpop.f32.mrb[0].mxu0
      %1553 = vmatprep.mubr.bf16.mxu0 0
      %1554 = vmatmul.mubr.bf16.gmra.mrb[0].mxu0 %v1040
      %v1555 = vpop.f32.mrb[0].mxu0
      %v1556 = vadd.f32 0.0, %v1555
      %v1557 = vpop.f32.mrb[0].mxu0
      %v1558 = vpop.f32.mrb[0].mxu0
      %v1559 = vadd.f32 0.0, %v1558
      %v1560 = vpop.f32.mrb[0].mxu0
      %1561 = vmatprep.mubr.bf16.mxu0 0
      %1562 = vmatmul.mubr.bf16.gmra.mrb[0].mxu0 %v1043
      %v1563 = vpop.f32.mrb[0].mxu0
      %v1564 = vadd.f32 0.0, %v1563
      %v1565 = vpop.f32.mrb[0].mxu0
      %v1566 = vpop.f32.mrb[0].mxu0
      %v1567 = vadd.f32 0.0, %v1566
      %v1568 = vpop.f32.mrb[0].mxu0
      %1569 = vmatprep.mubr.bf16.mxu0 0
      %1570 = vmatmul.mubr.bf16.gmra.mrb[0].mxu0 %v1046
      %v1571 = vpop.f32.mrb[0].mxu0
      %v1572 = vadd.f32 0.0, %v1571
      %v1573 = vpop.f32.mrb[0].mxu0
      %v1574 = vpop.f32.mrb[0].mxu0
      %v1575 = vadd.f32 0.0, %v1574
      %v1576 = vpop.f32.mrb[0].mxu0
      %1577 = vmatprep.mubr.bf16.mxu0 0
      %1578 = vmatmul.mubr.bf16.gmra.mrb[0].mxu0 %v1049
      %v1579 = vpop.f32.mrb[0].mxu0
      %v1580 = vadd.f32 0.0, %v1579
      %v1581 = vpop.f32.mrb[0].mxu0
      %v1582 = vpop.f32.mrb[0].mxu0
      %v1583 = vadd.f32 0.0, %v1582
      %v1584 = vpop.f32.mrb[0].mxu0
      %1585 = vmatprep.mubr.bf16.mxu0 0
      %1586 = vmatmul.mubr.bf16.gmra.mrb[0].mxu0 %v1052
      %v1587 = vpop.f32.mrb[0].mxu0
      %v1588 = vadd.f32 0.0, %v1587
      %v1589 = vpop.f32.mrb[0].mxu0
      %v1590 = vpop.f32.mrb[0].mxu0
      %v1591 = vadd.f32 0.0, %v1590
      %v1592 = vpop.f32.mrb[0].mxu0
      %1593 = vmatprep.mubr.bf16.mxu0 0
      %1594 = vmatmul.mubr.bf16.gmra.mrb[0].mxu0 %v1055
      %v1595 = vpop.f32.mrb[0].mxu0
      %v1596 = vadd.f32 0.0, %v1595
      %v1597 = vpop.f32.mrb[0].mxu0
      %v1598 = vpop.f32.mrb[0].mxu0
      %v1599 = vadd.f32 0.0, %v1598
      %v1600 = vpop.f32.mrb[0].mxu0
      %1601 = vmatprep.mubr.bf16.mxu0 0
      %1602 = vmatmul.mubr.bf16.gmra.mrb[0].mxu0 %v1058
      %v1603 = vpop.f32.mrb[0].mxu0
      %v1604 = vadd.f32 0.0, %v1603
      %v1605 = vpop.f32.mrb[0].mxu0
      %v1606 = vpop.f32.mrb[0].mxu0
      %v1607 = vadd.f32 0.0, %v1606
      %v1608 = vpop.f32.mrb[0].mxu0
      %1609 = vmatprep.mubr.bf16.mxu0 0
      %1610 = vmatmul.mubr.bf16.gmra.mrb[0].mxu0 %v1061
      %v1611 = vpop.f32.mrb[0].mxu0
      %v1612 = vadd.f32 0.0, %v1611
      %v1613 = vpop.f32.mrb[0].mxu0
      %v1614 = vpop.f32.mrb[0].mxu0
      %v1615 = vadd.f32 0.0, %v1614
      %v1616 = vpop.f32.mrb[0].mxu0
      %1617 = vmatprep.mubr.bf16.mxu0 0
      %1618 = vmatmul.mubr.bf16.gmra.mrb[0].mxu0 %v1064
      %v1619 = vpop.f32.mrb[0].mxu0
      %v1620 = vadd.f32 0.0, %v1619
      %v1621 = vpop.f32.mrb[0].mxu0
      %v1622 = vpop.f32.mrb[0].mxu0
      %v1623 = vadd.f32 0.0, %v1622
      %v1624 = vpop.f32.mrb[0].mxu0
      %1625 = vmatprep.mubr.bf16.mxu0 0
      %1626 = vmatmul.mubr.bf16.gmra.mrb[0].mxu0 %v1067
      %v1627 = vpop.f32.mrb[0].mxu0
      %v1628 = vadd.f32 0.0, %v1627
      %v1629 = vpop.f32.mrb[0].mxu0
      %v1630 = vpop.f32.mrb[0].mxu0
      %v1631 = vadd.f32 0.0, %v1630
      %v1632 = vpop.f32.mrb[0].mxu0
      %1633 = vmatprep.mubr.bf16.mxu0 0
      %1634 = vmatmul.mubr.bf16.gmra.mrb[0].mxu0 %v1070
      %v1635 = vpop.f32.mrb[0].mxu0
      %v1636 = vadd.f32 0.0, %v1635
      %v1637 = vpop.f32.mrb[0].mxu0
      %v1638 = vpop.f32.mrb[0].mxu0
      %v1639 = vadd.f32 0.0, %v1638
      %v1640 = vpop.f32.mrb[0].mxu0
      %1641 = vmatprep.mubr.bf16.mxu0 0
      %1642 = vmatmul.mubr.bf16.gmra.mrb[0].mxu0 %v1073
      %v1643 = vpop.f32.mrb[0].mxu0
      %v1644 = vadd.f32 0.0, %v1643
      %v1645 = vpop.f32.mrb[0].mxu0
      %v1646 = vpop.f32.mrb[0].mxu0
      %v1647 = vadd.f32 0.0, %v1646
      %v1648 = vpop.f32.mrb[0].mxu0
      %1649 = vmatprep.mubr.bf16.mxu0 0
      %1650 = vmatmul.mubr.bf16.gmra.mrb[0].mxu0 %v1076
      %v1651 = vpop.f32.mrb[0].mxu0
      %v1652 = vadd.f32 0.0, %v1651
      %v1653 = vpop.f32.mrb[0].mxu0
      %v1654 = vpop.f32.mrb[0].mxu0
      %v1655 = vadd.f32 0.0, %v1654
      %v1656 = vpop.f32.mrb[0].mxu0
      %1657 = vmatprep.mubr.bf16.mxu0 0
      %1658 = vmatmul.mubr.bf16.gmra.mrb[0].mxu0 %v1079
      %v1659 = vpop.f32.mrb[0].mxu0
      %v1660 = vadd.f32 0.0, %v1659
      %v1661 = vpop.f32.mrb[0].mxu0
      %v1662 = vpop.f32.mrb[0].mxu0
      %v1663 = vadd.f32 0.0, %v1662
      %v1664 = vpop.f32.mrb[0].mxu0
      %1665 = vmatprep.mubr.bf16.mxu0 0
      %1666 = vmatmul.mubr.bf16.gmra.mrb[0].mxu0 %v1082
      %v1667 = vpop.f32.mrb[0].mxu0
      %v1668 = vadd.f32 0.0, %v1667
      %v1669 = vpop.f32.mrb[0].mxu0
      %v1670 = vpop.f32.mrb[0].mxu0
      %v1671 = vadd.f32 0.0, %v1670
      %v1672 = vpop.f32.mrb[0].mxu0
      %1673 = vmatprep.mubr.bf16.mxu0 0
      %1674 = vmatmul.mubr.bf16.gmra.mrb[0].mxu0 %v1085
      %v1675 = vpop.f32.mrb[0].mxu0
      %v1676 = vadd.f32 0.0, %v1675
      %v1677 = vpop.f32.mrb[0].mxu0
      %v1678 = vpop.f32.mrb[0].mxu0
      %v1679 = vadd.f32 0.0, %v1678
      %v1680 = vpop.f32.mrb[0].mxu0
      %1681 = vmatprep.mubr.bf16.mxu0 0
      %1682 = vmatmul.mubr.bf16.gmra.mrb[0].mxu0 %v1088
      %v1683 = vpop.f32.mrb[0].mxu0
      %v1684 = vadd.f32 0.0, %v1683
      %v1685 = vpop.f32.mrb[0].mxu0
      %v1686 = vpop.f32.mrb[0].mxu0
      %v1687 = vadd.f32 0.0, %v1686
      %v1688 = vpop.f32.mrb[0].mxu0
      %1689 = vmatprep.mubr.bf16.mxu0 0
      %1690 = vmatmul.mubr.bf16.gmra.mrb[0].mxu0 %v1091
      %v1691 = vpop.f32.mrb[0].mxu0
      %v1692 = vadd.f32 0.0, %v1691
      %v1693 = vpop.f32.mrb[0].mxu0
      %v1694 = vpop.f32.mrb[0].mxu0
      %v1695 = vadd.f32 0.0, %v1694
      %v1696 = vpop.f32.mrb[0].mxu0
      %1697 = vmatprep.mubr.bf16.mxu0 0
      %1698 = vmatmul.mubr.bf16.gmra.mrb[0].mxu0 %v1094
      %v1699 = vpop.f32.mrb[0].mxu0
      %v1700 = vadd.f32 0.0, %v1699
      %v1701 = vpop.f32.mrb[0].mxu0
      %v1702 = vpop.f32.mrb[0].mxu0
      %v1703 = vadd.f32 0.0, %v1702
      %v1704 = vpop.f32.mrb[0].mxu0
      %1705 = vmatprep.mubr.bf16.mxu0 0
      %1706 = vmatmul.mubr.bf16.gmra.mrb[0].mxu0 %v1097
      %v1707 = vpop.f32.mrb[0].mxu0
      %v1708 = vadd.f32 0.0, %v1707
      %v1709 = vpop.f32.mrb[0].mxu0
      %v1710 = vpop.f32.mrb[0].mxu0
      %v1711 = vadd.f32 0.0, %v1710
      %v1712 = vpop.f32.mrb[0].mxu0
      %1713 = vmatprep.mubr.bf16.mxu0 0
      %1714 = vmatmul.mubr.bf16.gmra.mrb[0].mxu0 %v1100
      %v1715 = vpop.f32.mrb[0].mxu0
      %v1716 = vadd.f32 0.0, %v1715
      %v1717 = vpop.f32.mrb[0].mxu0
      %v1718 = vpop.f32.mrb[0].mxu0
      %v1719 = vadd.f32 0.0, %v1718
      %v1720 = vpop.f32.mrb[0].mxu0
      %1721 = vmatprep.mubr.bf16.mxu0 0
      %1722 = vmatmul.mubr.bf16.gmra.mrb[0].mxu0 %v1103
      %v1723 = vpop.f32.mrb[0].mxu0
      %v1724 = vadd.f32 0.0, %v1723
      %v1725 = vpop.f32.mrb[0].mxu0
      %v1726 = vpop.f32.mrb[0].mxu0
      %v1727 = vadd.f32 0.0, %v1726
      %v1728 = vpop.f32.mrb[0].mxu0
      %1729 = vmatprep.mubr.bf16.mxu0 0
      %1730 = vmatmul.mubr.bf16.gmra.mrb[0].mxu0 %v1106
      %v1731 = vpop.f32.mrb[0].mxu0
      %v1732 = vadd.f32 0.0, %v1731
      %v1733 = vpop.f32.mrb[0].mxu0
      %v1734 = vpop.f32.mrb[0].mxu0
      %v1735 = vadd.f32 0.0, %v1734
      %v1736 = vpop.f32.mrb[0].mxu0
      %1737 = vmatprep.mubr.bf16.mxu0 0
      %1738 = vmatmul.mubr.bf16.gmra.mrb[0].mxu0 %v1109
      %v1739 = vpop.f32.mrb[0].mxu0
      %v1740 = vadd.f32 0.0, %v1739
      %v1741 = vpop.f32.mrb[0].mxu0
      %v1742 = vpop.f32.mrb[0].mxu0
      %v1743 = vadd.f32 0.0, %v1742
      %v1744 = vpop.f32.mrb[0].mxu0
      %1745 = vmatprep.mubr.bf16.mxu0 0
      %1746 = vmatmul.mubr.bf16.gmra.mrb[0].mxu0 %v1112
      %v1747 = vpop.f32.mrb[0].mxu0
      %v1748 = vadd.f32 0.0, %v1747
      %v1749 = vpop.f32.mrb[0].mxu0
      %v1750 = vpop.f32.mrb[0].mxu0
      %v1751 = vadd.f32 0.0, %v1750
      %v1752 = vpop.f32.mrb[0].mxu0
      %1753 = vmatprep.mubr.bf16.mxu0 0
      %1754 = vmatmul.mubr.bf16.gmra.mrb[0].mxu0 %v1115
      %v1755 = vpop.f32.mrb[0].mxu0
      %v1756 = vadd.f32 0.0, %v1755
      %v1757 = vpop.f32.mrb[0].mxu0
      %v1758 = vpop.f32.mrb[0].mxu0
      %v1759 = vadd.f32 0.0, %v1758
      %v1760 = vpop.f32.mrb[0].mxu0
      %1761 = vmatprep.mubr.bf16.mxu0 0
      %1762 = vmatmul.mubr.bf16.gmra.mrb[0].mxu0 %v1118
      %v1763 = vpop.f32.mrb[0].mxu0
      %v1764 = vadd.f32 0.0, %v1763
      %v1765 = vpop.f32.mrb[0].mxu0
      %v1766 = vpop.f32.mrb[0].mxu0
      %v1767 = vadd.f32 0.0, %v1766
      %v1768 = vpop.f32.mrb[0].mxu0
      %1769 = vmatprep.mubr.bf16.mxu0 0
      %1770 = vmatmul.mubr.bf16.gmra.mrb[0].mxu0 %v1121
      %v1771 = vpop.f32.mrb[0].mxu0
      %v1772 = vadd.f32 0.0, %v1771
      %v1773 = vpop.f32.mrb[0].mxu0
      %v1774 = vpop.f32.mrb[0].mxu0
      %v1775 = vadd.f32 0.0, %v1774
      %v1776 = vpop.f32.mrb[0].mxu0
      %1777 = vmatprep.mubr.bf16.mxu0 0
      %1778 = vmatmul.mubr.bf16.gmra.mrb[0].mxu0 %v1124
      %v1779 = vpop.f32.mrb[0].mxu0
      %v1780 = vadd.f32 0.0, %v1779
      %v1781 = vpop.f32.mrb[0].mxu0
      %v1782 = vpop.f32.mrb[0].mxu0
      %v1783 = vadd.f32 0.0, %v1782
      %v1784 = vpop.f32.mrb[0].mxu0
      %1785 = vmatprep.mubr.bf16.mxu0 0
      %1786 = vmatmul.mubr.bf16.gmra.mrb[0].mxu0 %v1127
      %v1787 = vpop.f32.mrb[0].mxu0
      %v1788 = vadd.f32 0.0, %v1787
      %v1789 = vpop.f32.mrb[0].mxu0
      %v1790 = vpop.f32.mrb[0].mxu0
      %v1791 = vadd.f32 0.0, %v1790
      %v1792 = vpop.f32.mrb[0].mxu0
      %1793 = vmatprep.mubr.bf16.mxu0 0
      %1794 = vmatmul.mubr.bf16.gmra.mrb[0].mxu0 %v1130
      %v1795 = vpop.f32.mrb[0].mxu0
      %v1796 = vadd.f32 0.0, %v1795
      %v1797 = vpop.f32.mrb[0].mxu0
      %v1798 = vpop.f32.mrb[0].mxu0
      %v1799 = vadd.f32 0.0, %v1798
      %v1800 = vpop.f32.mrb[0].mxu0
      %1801 = vmatprep.mubr.bf16.mxu0 0
      %1802 = vmatmul.mubr.bf16.gmra.mrb[0].mxu0 %v1133
      %v1803 = vpop.f32.mrb[0].mxu0
      %v1804 = vadd.f32 0.0, %v1803
      %v1805 = vpop.f32.mrb[0].mxu0
      %v1806 = vpop.f32.mrb[0].mxu0
      %v1807 = vadd.f32 0.0, %v1806
      %v1808 = vpop.f32.mrb[0].mxu0
      %1809 = vmatprep.mubr.bf16.mxu0 0
      %1810 = vmatmul.mubr.bf16.gmra.mrb[0].mxu0 %v1136
      %v1811 = vpop.f32.mrb[0].mxu0
      %v1812 = vadd.f32 0.0, %v1811
      %v1813 = vpop.f32.mrb[0].mxu0
      %v1814 = vpop.f32.mrb[0].mxu0
      %v1815 = vadd.f32 0.0, %v1814
      %v1816 = vpop.f32.mrb[0].mxu0
      %1817 = vmatprep.mubr.bf16.mxu0 0
      %1818 = vmatmul.mubr.bf16.gmra.mrb[0].mxu0 %v1139
      %v1819 = vpop.f32.mrb[0].mxu0
      %v1820 = vadd.f32 0.0, %v1819
      %v1821 = vpop.f32.mrb[0].mxu0
      %v1822 = vpop.f32.mrb[0].mxu0
      %v1823 = vadd.f32 0.0, %v1822
      %v1824 = vpop.f32.mrb[0].mxu0
      %1825 = vmatprep.mubr.bf16.mxu0 0
      %1826 = vmatmul.mubr.bf16.gmra.mrb[0].mxu0 %v1142
      %v1827 = vpop.f32.mrb[0].mxu0
      %v1828 = vadd.f32 0.0, %v1827
      %v1829 = vpop.f32.mrb[0].mxu0
      %v1830 = vpop.f32.mrb[0].mxu0
      %v1831 = vadd.f32 0.0, %v1830
      %v1832 = vpop.f32.mrb[0].mxu0
      %1833 = vmatprep.mubr.bf16.mxu0 0
      %1834 = vmatmul.mubr.bf16.gmra.mrb[0].mxu0 %v1145
      %v1835 = vpop.f32.mrb[0].mxu0
      %v1836 = vadd.f32 0.0, %v1835
      %v1837 = vpop.f32.mrb[0].mxu0
      %v1838 = vpop.f32.mrb[0].mxu0
      %v1839 = vadd.f32 0.0, %v1838
      %v1840 = vpop.f32.mrb[0].mxu0
      %1841 = vmatprep.mubr.bf16.mxu0 0
      %1842 = vmatmul.mubr.bf16.gmra.mrb[0].mxu0 %v1148
      %v1843 = vpop.f32.mrb[0].mxu0
      %v1844 = vadd.f32 0.0, %v1843
      %v1845 = vpop.f32.mrb[0].mxu0
      %v1846 = vpop.f32.mrb[0].mxu0
      %v1847 = vadd.f32 0.0, %v1846
      %v1848 = vpop.f32.mrb[0].mxu0
      %1849 = vmatprep.mubr.bf16.mxu0 0
      %1850 = vmatmul.mubr.bf16.gmra.mrb[0].mxu0 %v1151
      %v1851 = vpop.f32.mrb[0].mxu0
      %v1852 = vadd.f32 0.0, %v1851
      %v1853 = vpop.f32.mrb[0].mxu0
      %v1854 = vpop.f32.mrb[0].mxu0
      %v1855 = vadd.f32 0.0, %v1854
      %v1856 = vpop.f32.mrb[0].mxu0
      %1857 = vmatprep.mubr.bf16.mxu0 0
      %1858 = vmatmul.mubr.bf16.gmra.mrb[0].mxu0 %v1154
      %v1859 = vpop.f32.mrb[0].mxu0
      %v1860 = vadd.f32 0.0, %v1859
      %v1861 = vpop.f32.mrb[0].mxu0
      %v1862 = vpop.f32.mrb[0].mxu0
      %v1863 = vadd.f32 0.0, %v1862
      %v1864 = vpop.f32.mrb[0].mxu0
      %1865 = vmatprep.mubr.bf16.mxu0 0
      %1866 = vmatmul.mubr.bf16.gmra.mrb[0].mxu0 %v1157
      %v1867 = vpop.f32.mrb[0].mxu0
      %v1868 = vadd.f32 0.0, %v1867
      %v1869 = vpop.f32.mrb[0].mxu0
      %v1870 = vpop.f32.mrb[0].mxu0
      %v1871 = vadd.f32 0.0, %v1870
      %v1872 = vpop.f32.mrb[0].mxu0
      %1873 = vmatprep.mubr.bf16.mxu0 0
      %1874 = vmatmul.mubr.bf16.gmra.mrb[0].mxu0 %v1160
      %v1875 = vpop.f32.mrb[0].mxu0
      %v1876 = vadd.f32 0.0, %v1875
      %v1877 = vpop.f32.mrb[0].mxu0
      %v1878 = vpop.f32.mrb[0].mxu0
      %v1879 = vadd.f32 0.0, %v1878
      %v1880 = vpop.f32.mrb[0].mxu0
      %1881 = vmatprep.mubr.bf16.mxu0 0
      %1882 = vmatmul.mubr.bf16.gmra.mrb[0].mxu0 %v1163
      %v1883 = vpop.f32.mrb[0].mxu0
      %v1884 = vadd.f32 0.0, %v1883
      %v1885 = vpop.f32.mrb[0].mxu0
      %v1886 = vpop.f32.mrb[0].mxu0
      %v1887 = vadd.f32 0.0, %v1886
      %v1888 = vpop.f32.mrb[0].mxu0
      %1889 = vmatprep.mubr.bf16.mxu0 0
      %1890 = vmatmul.mubr.bf16.gmra.mrb[0].mxu0 %v1166
      %v1891 = vpop.f32.mrb[0].mxu0
      %v1892 = vadd.f32 0.0, %v1891
      %v1893 = vpop.f32.mrb[0].mxu0
      %v1894 = vpop.f32.mrb[0].mxu0
      %v1895 = vadd.f32 0.0, %v1894
      %v1896 = vpop.f32.mrb[0].mxu0
      %1897 = vmatprep.mubr.bf16.mxu0 0
      %1898 = vmatmul.mubr.bf16.gmra.mrb[0].mxu0 %v1169
      %v1899 = vpop.f32.mrb[0].mxu0
      %v1900 = vadd.f32 0.0, %v1899
      %v1901 = vpop.f32.mrb[0].mxu0
      %v1902 = vpop.f32.mrb[0].mxu0
      %v1903 = vadd.f32 0.0, %v1902
      %v1904 = vpop.f32.mrb[0].mxu0
      %1905 = vmatprep.mubr.bf16.mxu0 0
      %1906 = vmatmul.mubr.bf16.gmra.mrb[0].mxu0 %v1172
      %v1907 = vpop.f32.mrb[0].mxu0
      %v1908 = vadd.f32 0.0, %v1907
      %v1909 = vpop.f32.mrb[0].mxu0
      %v1910 = vpop.f32.mrb[0].mxu0
      %v1911 = vadd.f32 0.0, %v1910
      %v1912 = vpop.f32.mrb[0].mxu0
      %1913 = vmatprep.mubr.bf16.mxu0 0
      %1914 = vmatmul.mubr.bf16.gmra.mrb[0].mxu0 %v1175
      %v1915 = vpop.f32.mrb[0].mxu0
      %v1916 = vadd.f32 0.0, %v1915
      %v1917 = vpop.f32.mrb[0].mxu0
      %v1918 = vpop.f32.mrb[0].mxu0
      %v1919 = vadd.f32 0.0, %v1918
      %v1920 = vpop.f32.mrb[0].mxu0
      %1921 = vmatprep.mubr.bf16.mxu0 0
      %1922 = vmatmul.mubr.bf16.gmra.mrb[0].mxu0 %v1178
      %v1923 = vpop.f32.mrb[0].mxu0
      %v1924 = vadd.f32 0.0, %v1923
      %v1925 = vpop.f32.mrb[0].mxu0
      %v1926 = vpop.f32.mrb[0].mxu0
      %v1927 = vadd.f32 0.0, %v1926
      %v1928 = vpop.f32.mrb[0].mxu0
      %1929 = vmatprep.mubr.bf16.mxu0 0
      %1930 = vmatmul.mubr.bf16.gmra.mrb[0].mxu0 %v1181
      %v1931 = vpop.f32.mrb[0].mxu0
      %v1932 = vadd.f32 0.0, %v1931
      %v1933 = vpop.f32.mrb[0].mxu0
      %v1934 = vpop.f32.mrb[0].mxu0
      %v1935 = vadd.f32 0.0, %v1934
      %v1936 = vpop.f32.mrb[0].mxu0
      %1937 = vmatprep.mubr.bf16.mxu0 0
      %1938 = vmatmul.mubr.bf16.gmra.mrb[0].mxu0 %v1184
      %v1939 = vpop.f32.mrb[0].mxu0
      %v1940 = vadd.f32 0.0, %v1939
      %v1941 = vpop.f32.mrb[0].mxu0
      %v1942 = vpop.f32.mrb[0].mxu0
      %v1943 = vadd.f32 0.0, %v1942
      %v1944 = vpop.f32.mrb[0].mxu0
      %1945 = vmatprep.mubr.bf16.mxu0 0
      %1946 = vmatmul.mubr.bf16.gmra.mrb[0].mxu0 %v1187
      %v1947 = vpop.f32.mrb[0].mxu0
      %v1948 = vadd.f32 0.0, %v1947
      %v1949 = vpop.f32.mrb[0].mxu0
      %v1950 = vpop.f32.mrb[0].mxu0
      %v1951 = vadd.f32 0.0, %v1950
      %v1952 = vpop.f32.mrb[0].mxu0
      %1953 = vmatprep.mubr.bf16.mxu0 0
      %1954 = vmatmul.mubr.bf16.gmra.mrb[0].mxu0 %v1190
      %v1955 = vpop.f32.mrb[0].mxu0
      %v1956 = vadd.f32 0.0, %v1955
      %v1957 = vpop.f32.mrb[0].mxu0
      %v1958 = vpop.f32.mrb[0].mxu0
      %v1959 = vadd.f32 0.0, %v1958
      %v1960 = vpop.f32.mrb[0].mxu0
      %1961 = vmatprep.mubr.bf16.mxu0 0
      %1962 = vmatmul.mubr.bf16.gmra.mrb[0].mxu0 %v1193
      %v1963 = vpop.f32.mrb[0].mxu0
      %v1964 = vadd.f32 0.0, %v1963
      %v1965 = vpop.f32.mrb[0].mxu0
      %v1966 = vpop.f32.mrb[0].mxu0
      %v1967 = vadd.f32 0.0, %v1966
      %v1968 = vpop.f32.mrb[0].mxu0
      %1969 = vmatprep.mubr.bf16.mxu0 0
      %1970 = vmatmul.mubr.bf16.gmra.mrb[0].mxu0 %v1196
      %v1971 = vpop.f32.mrb[0].mxu0
      %v1972 = vadd.f32 0.0, %v1971
      %v1973 = vpop.f32.mrb[0].mxu0
      %v1974 = vpop.f32.mrb[0].mxu0
      %v1975 = vadd.f32 0.0, %v1974
      %v1976 = vpop.f32.mrb[0].mxu0
      %1977 = vmatprep.mubr.bf16.mxu0 0
      %1978 = vmatmul.mubr.bf16.gmra.mrb[0].mxu0 %v1199
      %v1979 = vpop.f32.mrb[0].mxu0
      %v1980 = vadd.f32 0.0, %v1979
      %v1981 = vpop.f32.mrb[0].mxu0
      %v1982 = vpop.f32.mrb[0].mxu0
      %v1983 = vadd.f32 0.0, %v1982
      %v1984 = vpop.f32.mrb[0].mxu0
      %1985 = vmatprep.mubr.bf16.mxu0 0
      %1986 = vmatmul.mubr.bf16.gmra.mrb[0].mxu0 %v1202
      %v1987 = vpop.f32.mrb[0].mxu0
      %v1988 = vadd.f32 0.0, %v1987
      %v1989 = vpop.f32.mrb[0].mxu0
      %v1990 = vpop.f32.mrb[0].mxu0
      %v1991 = vadd.f32 0.0, %v1990
      %v1992 = vpop.f32.mrb[0].mxu0
      %1993 = vmatprep.mubr.bf16.mxu0 0
      %1994 = vmatmul.mubr.bf16.gmra.mrb[0].mxu0 %v1205
      %v1995 = vpop.f32.mrb[0].mxu0
      %v1996 = vadd.f32 0.0, %v1995
      %v1997 = vpop.f32.mrb[0].mxu0
      %v1998 = vpop.f32.mrb[0].mxu0
      %v1999 = vadd.f32 0.0, %v1998
      %v2000 = vpop.f32.mrb[0].mxu0
      %2001 = vmatprep.mubr.bf16.mxu0 0
      %2002 = vmatmul.mubr.bf16.gmra.mrb[0].mxu0 %v1208
      %v2003 = vpop.f32.mrb[0].mxu0
      %v2004 = vadd.f32 0.0, %v2003
      %v2005 = vpop.f32.mrb[0].mxu0
      %v2006 = vpop.f32.mrb[0].mxu0
      %v2007 = vadd.f32 0.0, %v2006
      %v2008 = vpop.f32.mrb[0].mxu0
      %2009 = vmatprep.mubr.bf16.mxu0 0
      %2010 = vmatmul.mubr.bf16.gmra.mrb[0].mxu0 %v1211
      %v2011 = vpop.f32.mrb[0].mxu0
      %v2012 = vadd.f32 0.0, %v2011
      %v2013 = vpop.f32.mrb[0].mxu0
      %v2014 = vpop.f32.mrb[0].mxu0
      %v2015 = vadd.f32 0.0, %v2014
      %v2016 = vpop.f32.mrb[0].mxu0
      %2017 = vmatprep.mubr.bf16.mxu0 0
      %2018 = vmatmul.mubr.bf16.gmra.mrb[0].mxu0 %v1214
      %v2019 = vpop.f32.mrb[0].mxu0
      %v2020 = vadd.f32 0.0, %v2019
      %v2021 = vpop.f32.mrb[0].mxu0
      %v2022 = vpop.f32.mrb[0].mxu0
      %v2023 = vadd.f32 0.0, %v2022
      %v2024 = vpop.f32.mrb[0].mxu0
      %2025 = vmatprep.mubr.bf16.mxu0 0
      %2026 = vmatmul.mubr.bf16.gmra.mrb[0].mxu0 %v1217
      %v2027 = vpop.f32.mrb[0].mxu0
      %v2028 = vadd.f32 0.0, %v2027
      %v2029 = vpop.f32.mrb[0].mxu0
      %v2030 = vpop.f32.mrb[0].mxu0
      %v2031 = vadd.f32 0.0, %v2030
      %v2032 = vpop.f32.mrb[0].mxu0
      %2033 = vmatprep.mubr.bf16.mxu0 0
      %2034 = vmatmul.mubr.bf16.gmra.mrb[0].mxu0 %v1220
      %v2035 = vpop.f32.mrb[0].mxu0
      %v2036 = vadd.f32 0.0, %v2035
      %v2037 = vpop.f32.mrb[0].mxu0
      %v2038 = vpop.f32.mrb[0].mxu0
      %v2039 = vadd.f32 0.0, %v2038
      %v2040 = vpop.f32.mrb[0].mxu0
      %2041 = vmatprep.mubr.bf16.mxu0 0
      %2042 = vmatmul.mubr.bf16.gmra.mrb[0].mxu0 %v1223
      %v2043 = vpop.f32.mrb[0].mxu0
      %v2044 = vadd.f32 0.0, %v2043
      %v2045 = vpop.f32.mrb[0].mxu0
      %v2046 = vpop.f32.mrb[0].mxu0
      %v2047 = vadd.f32 0.0, %v2046
      %v2048 = vpop.f32.mrb[0].mxu0
      %2049 = vmatprep.mubr.bf16.mxu0 0
      %2050 = vmatmul.mubr.bf16.gmra.mrb[0].mxu0 %v1226
      %v2051 = vpop.f32.mrb[0].mxu0
      %v2052 = vadd.f32 0.0, %v2051
      %v2053 = vpop.f32.mrb[0].mxu0
      %v2054 = vpop.f32.mrb[0].mxu0
      %v2055 = vadd.f32 0.0, %v2054
      %v2056 = vpop.f32.mrb[0].mxu0
      %2057 = vmatprep.mubr.bf16.mxu0 0
      %2058 = vmatmul.mubr.bf16.gmra.mrb[0].mxu0 %v1229
      %v2059 = vpop.f32.mrb[0].mxu0
      %v2060 = vadd.f32 0.0, %v2059
      %v2061 = vpop.f32.mrb[0].mxu0
      %v2062 = vpop.f32.mrb[0].mxu0
      %v2063 = vadd.f32 0.0, %v2062
      %v2064 = vpop.f32.mrb[0].mxu0
      %2065 = vmatprep.mubr.bf16.mxu0 0
      %2066 = vmatmul.mubr.bf16.gmra.mrb[0].mxu0 %v1232
      %v2067 = vpop.f32.mrb[0].mxu0
      %v2068 = vadd.f32 0.0, %v2067
      %v2069 = vpop.f32.mrb[0].mxu0
      %v2070 = vpop.f32.mrb[0].mxu0
      %v2071 = vadd.f32 0.0, %v2070
      %v2072 = vpop.f32.mrb[0].mxu0
      %2073 = vdwg.mxu0
      %v2074 = vmax.f32 %v1276, %v1476
      %v2075 = vmax.f32 %v1279, %v1479
      %v2076 = vmax.f32 %v1284, %v1484
      %v2077 = vmax.f32 %v1287, %v1487
      %v2078 = vmax.f32 %v1292, %v1492
      %v2079 = vmax.f32 %v1295, %v1495
      %v2080 = vmax.f32 %v1300, %v1500
      %v2081 = vmax.f32 %v1303, %v1503
      %v2082 = vmax.f32 %v1308, %v1508
      %v2083 = vmax.f32 %v1311, %v1511
      %v2084 = vmax.f32 %v1316, %v1516
      %v2085 = vmax.f32 %v1319, %v1519
      %v2086 = vmax.f32 %v1324, %v1524
      %v2087 = vmax.f32 %v1327, %v1527
      %v2088 = vmax.f32 %v1332, %v1532
      %v2089 = vmax.f32 %v1335, %v1535
      %v2090 = vmax.f32 %v1340, %v1540
      %v2091 = vmax.f32 %v1343, %v1543
      %v2092 = vmax.f32 %v1348, %v1548
      %v2093 = vmax.f32 %v1351, %v1551
      %v2094 = vmax.f32 %v1356, %v1556
      %v2095 = vmax.f32 %v1359, %v1559
      %v2096 = vmax.f32 %v1364, %v1564
      %v2097 = vmax.f32 %v1367, %v1567
      %v2098 = vmax.f32 %v1372, %v1572
      %v2099 = vmax.f32 %v1375, %v1575
      %v2100 = vmax.f32 %v1380, %v1580
      %v2101 = vmax.f32 %v1383, %v1583
      %v2102 = vmax.f32 %v1388, %v1588
      %v2103 = vmax.f32 %v1391, %v1591
      %v2104 = vmax.f32 %v1396, %v1596
      %v2105 = vmax.f32 %v1399, %v1599
      %v2106 = vmax.f32 %v1404, %v1604
      %v2107 = vmax.f32 %v1407, %v1607
      %v2108 = vmax.f32 %v1412, %v1612
      %v2109 = vmax.f32 %v1415, %v1615
      %v2110 = vmax.f32 %v1420, %v1620
      %v2111 = vmax.f32 %v1423, %v1623
      %v2112 = vmax.f32 %v1428, %v1628
      %v2113 = vmax.f32 %v1431, %v1631
      %v2114 = vmax.f32 %v1436, %v1636
      %v2115 = vmax.f32 %v1439, %v1639
      %v2116 = vmax.f32 %v1444, %v1644
      %v2117 = vmax.f32 %v1447, %v1647
      %v2118 = vmax.f32 %v1452, %v1652
      %v2119 = vmax.f32 %v1455, %v1655
      %v2120 = vmax.f32 %v1460, %v1660
      %v2121 = vmax.f32 %v1463, %v1663
      %v2122 = vmax.f32 %v1468, %v1668
      %v2123 = vmax.f32 %v1471, %v1671
      %v2124 = vmax.f32 %v1676, %v1876
      %v2125 = vmax.f32 %v1679, %v1879
      %v2126 = vmax.f32 %v1684, %v1884
      %v2127 = vmax.f32 %v1687, %v1887
      %v2128 = vmax.f32 %v1692, %v1892
      %v2129 = vmax.f32 %v1695, %v1895
      %v2130 = vmax.f32 %v1700, %v1900
      %v2131 = vmax.f32 %v1703, %v1903
      %v2132 = vmax.f32 %v1708, %v1908
      %v2133 = vmax.f32 %v1711, %v1911
      %v2134 = vmax.f32 %v1716, %v1916
      %v2135 = vmax.f32 %v1719, %v1919
      %v2136 = vmax.f32 %v1724, %v1924
      %v2137 = vmax.f32 %v1727, %v1927
      %v2138 = vmax.f32 %v1732, %v1932
      %v2139 = vmax.f32 %v1735, %v1935
      %v2140 = vmax.f32 %v1740, %v1940
      %v2141 = vmax.f32 %v1743, %v1943
      %v2142 = vmax.f32 %v1748, %v1948
      %v2143 = vmax.f32 %v1751, %v1951
      %v2144 = vmax.f32 %v1756, %v1956
      %v2145 = vmax.f32 %v1759, %v1959
      %v2146 = vmax.f32 %v1764, %v1964
      %v2147 = vmax.f32 %v1767, %v1967
      %v2148 = vmax.f32 %v1772, %v1972
      %v2149 = vmax.f32 %v1775, %v1975
      %v2150 = vmax.f32 %v1780, %v1980
      %v2151 = vmax.f32 %v1783, %v1983
      %v2152 = vmax.f32 %v1788, %v1988
      %v2153 = vmax.f32 %v1791, %v1991
      %v2154 = vmax.f32 %v1796, %v1996
      %v2155 = vmax.f32 %v1799, %v1999
      %v2156 = vmax.f32 %v1804, %v2004
      %v2157 = vmax.f32 %v1807, %v2007
      %v2158 = vmax.f32 %v1812, %v2012
      %v2159 = vmax.f32 %v1815, %v2015
      %v2160 = vmax.f32 %v1820, %v2020
      %v2161 = vmax.f32 %v1823, %v2023
      %v2162 = vmax.f32 %v1828, %v2028
      %v2163 = vmax.f32 %v1831, %v2031
      %v2164 = vmax.f32 %v1836, %v2036
      %v2165 = vmax.f32 %v1839, %v2039
      %v2166 = vmax.f32 %v1844, %v2044
      %v2167 = vmax.f32 %v1847, %v2047
      %v2168 = vmax.f32 %v1852, %v2052
      %v2169 = vmax.f32 %v1855, %v2055
      %v2170 = vmax.f32 %v1860, %v2060
      %v2171 = vmax.f32 %v1863, %v2063
      %v2172 = vmax.f32 %v1868, %v2068
      %v2173 = vmax.f32 %v1871, %v2071
      %v2174 = vmax.f32 %v2074, %v2124
      %v2175 = vmax.f32 %v2075, %v2125
      %v2176 = vmax.f32 %v2076, %v2126
      %v2177 = vmax.f32 %v2077, %v2127
      %v2178 = vmax.f32 %v2078, %v2128
      %v2179 = vmax.f32 %v2079, %v2129
      %v2180 = vmax.f32 %v2080, %v2130
      %v2181 = vmax.f32 %v2081, %v2131
      %v2182 = vmax.f32 %v2082, %v2132
      %v2183 = vmax.f32 %v2083, %v2133
      %v2184 = vmax.f32 %v2084, %v2134
      %v2185 = vmax.f32 %v2085, %v2135
      %v2186 = vmax.f32 %v2086, %v2136
      %v2187 = vmax.f32 %v2087, %v2137
      %v2188 = vmax.f32 %v2088, %v2138
      %v2189 = vmax.f32 %v2089, %v2139
      %v2190 = vmax.f32 %v2090, %v2140
      %v2191 = vmax.f32 %v2091, %v2141
      %v2192 = vmax.f32 %v2092, %v2142
      %v2193 = vmax.f32 %v2093, %v2143
      %v2194 = vmax.f32 %v2094, %v2144
      %v2195 = vmax.f32 %v2095, %v2145
      %v2196 = vmax.f32 %v2096, %v2146
      %v2197 = vmax.f32 %v2097, %v2147
      %v2198 = vmax.f32 %v2098, %v2148
      %v2199 = vmax.f32 %v2099, %v2149
      %v2200 = vmax.f32 %v2100, %v2150
      %v2201 = vmax.f32 %v2101, %v2151
      %v2202 = vmax.f32 %v2102, %v2152
      %v2203 = vmax.f32 %v2103, %v2153
      %v2204 = vmax.f32 %v2104, %v2154
      %v2205 = vmax.f32 %v2105, %v2155
      %v2206 = vmax.f32 %v2106, %v2156
      %v2207 = vmax.f32 %v2107, %v2157
      %v2208 = vmax.f32 %v2108, %v2158
      %v2209 = vmax.f32 %v2109, %v2159
      %v2210 = vmax.f32 %v2110, %v2160
      %v2211 = vmax.f32 %v2111, %v2161
      %v2212 = vmax.f32 %v2112, %v2162
      %v2213 = vmax.f32 %v2113, %v2163
      %v2214 = vmax.f32 %v2114, %v2164
      %v2215 = vmax.f32 %v2115, %v2165
      %v2216 = vmax.f32 %v2116, %v2166
      %v2217 = vmax.f32 %v2117, %v2167
      %v2218 = vmax.f32 %v2118, %v2168
      %v2219 = vmax.f32 %v2119, %v2169
      %v2220 = vmax.f32 %v2120, %v2170
      %v2221 = vmax.f32 %v2121, %v2171
      %v2222 = vmax.f32 %v2122, %v2172
      %v2223 = vmax.f32 %v2123, %v2173
      %v2224 = vld [vmem:[%s2] sm:$0x1]
      %v2226 = vlaneseq
      %v2227 = vshrl.u32 %v2226, 7
      %v2228 = vsub.s32 0, %v2227
      %v2229 = vrot.slane %v2224, %v2228
      %v2231 = vadd.f32 %v2174, %v2229
      %v2232 = vadd.f32 %v2175, %v2229
      %v2233 = vadd.f32 %v2176, %v2229
      %v2234 = vadd.f32 %v2177, %v2229
      %v2235 = vadd.f32 %v2178, %v2229
      %v2236 = vadd.f32 %v2179, %v2229
      %v2237 = vadd.f32 %v2180, %v2229
      %v2238 = vadd.f32 %v2181, %v2229
      %v2239 = vadd.f32 %v2182, %v2229
      %v2240 = vadd.f32 %v2183, %v2229
      %v2241 = vadd.f32 %v2184, %v2229
      %v2242 = vadd.f32 %v2185, %v2229
      %v2243 = vadd.f32 %v2186, %v2229
      %v2244 = vadd.f32 %v2187, %v2229
      %v2245 = vadd.f32 %v2188, %v2229
      %v2246 = vadd.f32 %v2189, %v2229
      %v2247 = vadd.f32 %v2190, %v2229
      %v2248 = vadd.f32 %v2191, %v2229
      %v2249 = vadd.f32 %v2192, %v2229
      %v2250 = vadd.f32 %v2193, %v2229
      %v2251 = vadd.f32 %v2194, %v2229
      %v2252 = vadd.f32 %v2195, %v2229
      %v2253 = vadd.f32 %v2196, %v2229
      %v2254 = vadd.f32 %v2197, %v2229
      %v2255 = vadd.f32 %v2198, %v2229
      %v2256 = vadd.f32 %v2199, %v2229
      %v2257 = vadd.f32 %v2200, %v2229
      %v2258 = vadd.f32 %v2201, %v2229
      %v2259 = vadd.f32 %v2202, %v2229
      %v2260 = vadd.f32 %v2203, %v2229
      %v2261 = vadd.f32 %v2204, %v2229
      %v2262 = vadd.f32 %v2205, %v2229
      %v2263 = vadd.f32 %v2206, %v2229
      %v2264 = vadd.f32 %v2207, %v2229
      %v2265 = vadd.f32 %v2208, %v2229
      %v2266 = vadd.f32 %v2209, %v2229
      %v2267 = vadd.f32 %v2210, %v2229
      %v2268 = vadd.f32 %v2211, %v2229
      %v2269 = vadd.f32 %v2212, %v2229
      %v2270 = vadd.f32 %v2213, %v2229
      %v2271 = vadd.f32 %v2214, %v2229
      %v2272 = vadd.f32 %v2215, %v2229
      %v2273 = vadd.f32 %v2216, %v2229
      %v2274 = vadd.f32 %v2217, %v2229
      %v2275 = vadd.f32 %v2218, %v2229
      %v2276 = vadd.f32 %v2219, %v2229
      %v2277 = vadd.f32 %v2220, %v2229
      %v2278 = vadd.f32 %v2221, %v2229
      %v2279 = vadd.f32 %v2222, %v2229
      %v2280 = vadd.f32 %v2223, %v2229
      %v2281 = vmax.f32 %v2231, 0.0
      %v2282 = vmax.f32 %v2232, 0.0
      %v2283 = vmax.f32 %v2233, 0.0
      %v2284 = vmax.f32 %v2234, 0.0
      %v2285 = vmax.f32 %v2235, 0.0
      %v2286 = vmax.f32 %v2236, 0.0
      %v2287 = vmax.f32 %v2237, 0.0
      %v2288 = vmax.f32 %v2238, 0.0
      %v2289 = vmax.f32 %v2239, 0.0
      %v2290 = vmax.f32 %v2240, 0.0
      %v2291 = vmax.f32 %v2241, 0.0
      %v2292 = vmax.f32 %v2242, 0.0
      %v2293 = vmax.f32 %v2243, 0.0
      %v2294 = vmax.f32 %v2244, 0.0
      %v2295 = vmax.f32 %v2245, 0.0
      %v2296 = vmax.f32 %v2246, 0.0
      %v2297 = vmax.f32 %v2247, 0.0
      %v2298 = vmax.f32 %v2248, 0.0
      %v2299 = vmax.f32 %v2249, 0.0
      %v2300 = vmax.f32 %v2250, 0.0
      %v2301 = vmax.f32 %v2251, 0.0
      %v2302 = vmax.f32 %v2252, 0.0
      %v2303 = vmax.f32 %v2253, 0.0
      %v2304 = vmax.f32 %v2254, 0.0
      %v2305 = vmax.f32 %v2255, 0.0
      %v2306 = vmax.f32 %v2256, 0.0
      %v2307 = vmax.f32 %v2257, 0.0
      %v2308 = vmax.f32 %v2258, 0.0
      %v2309 = vmax.f32 %v2259, 0.0
      %v2310 = vmax.f32 %v2260, 0.0
      %v2311 = vmax.f32 %v2261, 0.0
      %v2312 = vmax.f32 %v2262, 0.0
      %v2313 = vmax.f32 %v2263, 0.0
      %v2314 = vmax.f32 %v2264, 0.0
      %v2315 = vmax.f32 %v2265, 0.0
      %v2316 = vmax.f32 %v2266, 0.0
      %v2317 = vmax.f32 %v2267, 0.0
      %v2318 = vmax.f32 %v2268, 0.0
      %v2319 = vmax.f32 %v2269, 0.0
      %v2320 = vmax.f32 %v2270, 0.0
      %v2321 = vmax.f32 %v2271, 0.0
      %v2322 = vmax.f32 %v2272, 0.0
      %v2323 = vmax.f32 %v2273, 0.0
      %v2324 = vmax.f32 %v2274, 0.0
      %v2325 = vmax.f32 %v2275, 0.0
      %v2326 = vmax.f32 %v2276, 0.0
      %v2327 = vmax.f32 %v2277, 0.0
      %v2328 = vmax.f32 %v2278, 0.0
      %v2329 = vmax.f32 %v2279, 0.0
      %v2330 = vmax.f32 %v2280, 0.0
      %vm2344 = vcmask 1042432
      %v2345 = vrot.slane %v2281, 5
      %v2346 = vrot.slane %v2282, 5
      %v2347 = vsel %vm2344, %v2345, %v2346
      %v2348 = vrot.slane %v2283, 5
      %v2349 = vsel %vm2344, %v2346, %v2348
      %v2350 = vrot.slane %v2284, 5
      %v2351 = vsel %vm2344, %v2348, %v2350
      %v2352 = vrot.slane %v2285, 5
      %v2353 = vsel %vm2344, %v2350, %v2352
      %v2354 = vrot.slane %v2286, 5
      %v2355 = vsel %vm2344, %v2352, %v2354
      %v2356 = vrot.slane %v2287, 5
      %v2357 = vsel %vm2344, %v2354, %v2356
      %v2358 = vrot.slane %v2288, 5
      %v2359 = vsel %vm2344, %v2356, %v2358
      %v2360 = vrot.slane %v2289, 5
      %v2361 = vsel %vm2344, %v2358, %v2360
      %v2362 = vrot.slane %v2290, 5
      %v2363 = vsel %vm2344, %v2360, %v2362
      %v2364 = vrot.slane %v2291, 5
      %v2365 = vsel %vm2344, %v2362, %v2364
      %v2366 = vrot.slane %v2292, 5
      %v2367 = vsel %vm2344, %v2364, %v2366
      %v2368 = vrot.slane %v2293, 5
      %v2369 = vsel %vm2344, %v2366, %v2368
      %v2383 = vsel %vm2344, 0.0, %v2345
      %vm2384 = vcmask 1046528
      %v2385 = vsel %vm2384, %v2369, 0.0
      %v2398 = vrot.slane %v2293, 1
      %v2399 = vrot.slane %v2294, 1
      %v2400 = vsel %vm2384, %v2398, %v2399
      %v2401 = vrot.slane %v2295, 1
      %v2402 = vsel %vm2384, %v2399, %v2401
      %v2403 = vrot.slane %v2296, 1
      %v2404 = vsel %vm2384, %v2401, %v2403
      %v2405 = vrot.slane %v2297, 1
      %v2406 = vsel %vm2384, %v2403, %v2405
      %v2407 = vrot.slane %v2298, 1
      %v2408 = vsel %vm2384, %v2405, %v2407
      %v2409 = vrot.slane %v2299, 1
      %v2410 = vsel %vm2384, %v2407, %v2409
      %v2411 = vrot.slane %v2300, 1
      %v2412 = vsel %vm2384, %v2409, %v2411
      %v2413 = vrot.slane %v2301, 1
      %v2414 = vsel %vm2384, %v2411, %v2413
      %v2415 = vrot.slane %v2302, 1
      %v2416 = vsel %vm2384, %v2413, %v2415
      %v2417 = vrot.slane %v2303, 1
      %v2418 = vsel %vm2384, %v2415, %v2417
      %v2419 = vrot.slane %v2304, 1
      %v2420 = vsel %vm2384, %v2417, %v2419
      %v2421 = vrot.slane %v2305, 1
      %v2422 = vsel %vm2384, %v2419, %v2421
      %v2436 = vsel %vm2344, 0.0, %v2400
      %v2437 = vsel %vm2384, %v2421, 0.0
      %v2451 = vrot.slane %v2306, 5
      %v2452 = vrot.slane %v2307, 5
      %v2453 = vsel %vm2344, %v2451, %v2452
      %v2454 = vrot.slane %v2308, 5
      %v2455 = vsel %vm2344, %v2452, %v2454
      %v2456 = vrot.slane %v2309, 5
      %v2457 = vsel %vm2344, %v2454, %v2456
      %v2458 = vrot.slane %v2310, 5
      %v2459 = vsel %vm2344, %v2456, %v2458
      %v2460 = vrot.slane %v2311, 5
      %v2461 = vsel %vm2344, %v2458, %v2460
      %v2462 = vrot.slane %v2312, 5
      %v2463 = vsel %vm2344, %v2460, %v2462
      %v2464 = vrot.slane %v2313, 5
      %v2465 = vsel %vm2344, %v2462, %v2464
      %v2466 = vrot.slane %v2314, 5
      %v2467 = vsel %vm2344, %v2464, %v2466
      %v2468 = vrot.slane %v2315, 5
      %v2469 = vsel %vm2344, %v2466, %v2468
      %v2470 = vrot.slane %v2316, 5
      %v2471 = vsel %vm2344, %v2468, %v2470
      %v2472 = vrot.slane %v2317, 5
      %v2473 = vsel %vm2344, %v2470, %v2472
      %v2474 = vrot.slane %v2318, 5
      %v2475 = vsel %vm2344, %v2472, %v2474
      %v2489 = vsel %vm2344, 0.0, %v2451
      %v2490 = vsel %vm2384, %v2475, 0.0
      %v2503 = vrot.slane %v2318, 1
      %v2504 = vrot.slane %v2319, 1
      %v2505 = vsel %vm2384, %v2503, %v2504
      %v2506 = vrot.slane %v2320, 1
      %v2507 = vsel %vm2384, %v2504, %v2506
      %v2508 = vrot.slane %v2321, 1
      %v2509 = vsel %vm2384, %v2506, %v2508
      %v2510 = vrot.slane %v2322, 1
      %v2511 = vsel %vm2384, %v2508, %v2510
      %v2512 = vrot.slane %v2323, 1
      %v2513 = vsel %vm2384, %v2510, %v2512
      %v2514 = vrot.slane %v2324, 1
      %v2515 = vsel %vm2384, %v2512, %v2514
      %v2516 = vrot.slane %v2325, 1
      %v2517 = vsel %vm2384, %v2514, %v2516
      %v2518 = vrot.slane %v2326, 1
      %v2519 = vsel %vm2384, %v2516, %v2518
      %v2520 = vrot.slane %v2327, 1
      %v2521 = vsel %vm2384, %v2518, %v2520
      %v2522 = vrot.slane %v2328, 1
      %v2523 = vsel %vm2384, %v2520, %v2522
      %v2524 = vrot.slane %v2329, 1
      %v2525 = vsel %vm2384, %v2522, %v2524
      %v2526 = vrot.slane %v2330, 1
      %v2527 = vsel %vm2384, %v2524, %v2526
      %v2541 = vsel %vm2344, 0.0, %v2505
      %v2542 = vsel %vm2384, %v2526, 0.0
      %v2543 = vlaneseq
      %v2544 = vshrl.u32 %v2543, 7
      %v2545 = vadd.s32 %v2544, 8
      %v2546 = vadd.s32 %v2544, 16
      %v2547 = vadd.s32 %v2544, 24
      %v2548 = vadd.s32 %v2544, 32
      %v2549 = vadd.s32 %v2544, 40
      %v2550 = vadd.s32 %v2544, 48
      %v2551 = vadd.s32 %v2544, 56
      %v2552 = vadd.s32 %v2544, 64
      %v2553 = vadd.s32 %v2544, 72
      %v2554 = vadd.s32 %v2544, 80
      %v2555 = vadd.s32 %v2544, 88
      %v2556 = vadd.s32 %v2544, 96
      %vm2557 = vcmp.lt.s32.totalorder %v2544, 0
      %v2558 = vsub.s32 0, %v2544
      %v2559 = vsel %vm2557, %v2558, %v2544
      %v2560 = vmul.u32.u64.compose %v2559, 3435973837
      %v2561 = vextract.low.u32 %v2560
      %v2562 = vextract.high.u32 %v2560
      %v2563 = vshrl.u32 %v2562, 3
      %v2564 = vmul.u32 %v2563, 10
      %v2565 = vsub.s32 %v2559, %v2564
      %v2566 = vsub.s32 0, %v2565
      %v2567 = vsel %vm2557, %v2566, %v2565
      %vm2568 = vcmp.lt.s32.totalorder %v2545, 0
      %v2569 = vsub.s32 0, %v2545
      %v2570 = vsel %vm2568, %v2569, %v2545
      %v2571 = vmul.u32.u64.compose %v2570, 3435973837
      %v2572 = vextract.low.u32 %v2571
      %v2573 = vextract.high.u32 %v2571
      %v2574 = vshrl.u32 %v2573, 3
      %v2575 = vmul.u32 %v2574, 10
      %v2576 = vsub.s32 %v2570, %v2575
      %v2577 = vsub.s32 0, %v2576
      %v2578 = vsel %vm2568, %v2577, %v2576
      %vm2579 = vcmp.lt.s32.totalorder %v2546, 0
      %v2580 = vsub.s32 0, %v2546
      %v2581 = vsel %vm2579, %v2580, %v2546
      %v2582 = vmul.u32.u64.compose %v2581, 3435973837
      %v2583 = vextract.low.u32 %v2582
      %v2584 = vextract.high.u32 %v2582
      %v2585 = vshrl.u32 %v2584, 3
      %v2586 = vmul.u32 %v2585, 10
      %v2587 = vsub.s32 %v2581, %v2586
      %v2588 = vsub.s32 0, %v2587
      %v2589 = vsel %vm2579, %v2588, %v2587
      %vm2590 = vcmp.lt.s32.totalorder %v2547, 0
      %v2591 = vsub.s32 0, %v2547
      %v2592 = vsel %vm2590, %v2591, %v2547
      %v2593 = vmul.u32.u64.compose %v2592, 3435973837
      %v2594 = vextract.low.u32 %v2593
      %v2595 = vextract.high.u32 %v2593
      %v2596 = vshrl.u32 %v2595, 3
      %v2597 = vmul.u32 %v2596, 10
      %v2598 = vsub.s32 %v2592, %v2597
      %v2599 = vsub.s32 0, %v2598
      %v2600 = vsel %vm2590, %v2599, %v2598
      %vm2601 = vcmp.lt.s32.totalorder %v2548, 0
      %v2602 = vsub.s32 0, %v2548
      %v2603 = vsel %vm2601, %v2602, %v2548
      %v2604 = vmul.u32.u64.compose %v2603, 3435973837
      %v2605 = vextract.low.u32 %v2604
      %v2606 = vextract.high.u32 %v2604
      %v2607 = vshrl.u32 %v2606, 3
      %v2608 = vmul.u32 %v2607, 10
      %v2609 = vsub.s32 %v2603, %v2608
      %v2610 = vsub.s32 0, %v2609
      %v2611 = vsel %vm2601, %v2610, %v2609
      %vm2612 = vcmp.lt.s32.totalorder %v2549, 0
      %v2613 = vsub.s32 0, %v2549
      %v2614 = vsel %vm2612, %v2613, %v2549
      %v2615 = vmul.u32.u64.compose %v2614, 3435973837
      %v2616 = vextract.low.u32 %v2615
      %v2617 = vextract.high.u32 %v2615
      %v2618 = vshrl.u32 %v2617, 3
      %v2619 = vmul.u32 %v2618, 10
      %v2620 = vsub.s32 %v2614, %v2619
      %v2621 = vsub.s32 0, %v2620
      %v2622 = vsel %vm2612, %v2621, %v2620
      %vm2623 = vcmp.lt.s32.totalorder %v2550, 0
      %v2624 = vsub.s32 0, %v2550
      %v2625 = vsel %vm2623, %v2624, %v2550
      %v2626 = vmul.u32.u64.compose %v2625, 3435973837
      %v2627 = vextract.low.u32 %v2626
      %v2628 = vextract.high.u32 %v2626
      %v2629 = vshrl.u32 %v2628, 3
      %v2630 = vmul.u32 %v2629, 10
      %v2631 = vsub.s32 %v2625, %v2630
      %v2632 = vsub.s32 0, %v2631
      %v2633 = vsel %vm2623, %v2632, %v2631
      %vm2634 = vcmp.lt.s32.totalorder %v2551, 0
      %v2635 = vsub.s32 0, %v2551
      %v2636 = vsel %vm2634, %v2635, %v2551
      %v2637 = vmul.u32.u64.compose %v2636, 3435973837
      %v2638 = vextract.low.u32 %v2637
      %v2639 = vextract.high.u32 %v2637
      %v2640 = vshrl.u32 %v2639, 3
      %v2641 = vmul.u32 %v2640, 10
      %v2642 = vsub.s32 %v2636, %v2641
      %v2643 = vsub.s32 0, %v2642
      %v2644 = vsel %vm2634, %v2643, %v2642
      %vm2645 = vcmp.lt.s32.totalorder %v2552, 0
      %v2646 = vsub.s32 0, %v2552
      %v2647 = vsel %vm2645, %v2646, %v2552
      %v2648 = vmul.u32.u64.compose %v2647, 3435973837
      %v2649 = vextract.low.u32 %v2648
      %v2650 = vextract.high.u32 %v2648
      %v2651 = vshrl.u32 %v2650, 3
      %v2652 = vmul.u32 %v2651, 10
      %v2653 = vsub.s32 %v2647, %v2652
      %v2654 = vsub.s32 0, %v2653
      %v2655 = vsel %vm2645, %v2654, %v2653
      %vm2656 = vcmp.lt.s32.totalorder %v2553, 0
      %v2657 = vsub.s32 0, %v2553
      %v2658 = vsel %vm2656, %v2657, %v2553
      %v2659 = vmul.u32.u64.compose %v2658, 3435973837
      %v2660 = vextract.low.u32 %v2659
      %v2661 = vextract.high.u32 %v2659
      %v2662 = vshrl.u32 %v2661, 3
      %v2663 = vmul.u32 %v2662, 10
      %v2664 = vsub.s32 %v2658, %v2663
      %v2665 = vsub.s32 0, %v2664
      %v2666 = vsel %vm2656, %v2665, %v2664
      %vm2667 = vcmp.lt.s32.totalorder %v2554, 0
      %v2668 = vsub.s32 0, %v2554
      %v2669 = vsel %vm2667, %v2668, %v2554
      %v2670 = vmul.u32.u64.compose %v2669, 3435973837
      %v2671 = vextract.low.u32 %v2670
      %v2672 = vextract.high.u32 %v2670
      %v2673 = vshrl.u32 %v2672, 3
      %v2674 = vmul.u32 %v2673, 10
      %v2675 = vsub.s32 %v2669, %v2674
      %v2676 = vsub.s32 0, %v2675
      %v2677 = vsel %vm2667, %v2676, %v2675
      %vm2678 = vcmp.lt.s32.totalorder %v2555, 0
      %v2679 = vsub.s32 0, %v2555
      %v2680 = vsel %vm2678, %v2679, %v2555
      %v2681 = vmul.u32.u64.compose %v2680, 3435973837
      %v2682 = vextract.low.u32 %v2681
      %v2683 = vextract.high.u32 %v2681
      %v2684 = vshrl.u32 %v2683, 3
      %v2685 = vmul.u32 %v2684, 10
      %v2686 = vsub.s32 %v2680, %v2685
      %v2687 = vsub.s32 0, %v2686
      %v2688 = vsel %vm2678, %v2687, %v2686
      %vm2689 = vcmp.lt.s32.totalorder %v2556, 0
      %v2690 = vsub.s32 0, %v2556
      %v2691 = vsel %vm2689, %v2690, %v2556
      %v2692 = vmul.u32.u64.compose %v2691, 3435973837
      %v2693 = vextract.low.u32 %v2692
      %v2694 = vextract.high.u32 %v2692
      %v2695 = vshrl.u32 %v2694, 3
      %v2696 = vmul.u32 %v2695, 10
      %v2697 = vsub.s32 %v2691, %v2696
      %v2698 = vsub.s32 0, %v2697
      %v2699 = vsel %vm2689, %v2698, %v2697
      %vm2700 = vcmp.ne.s32.totalorder %v2567, 0
      %vm2701 = vcmp.ne.s32.totalorder %v2578, 0
      %vm2702 = vcmp.ne.s32.totalorder %v2589, 0
      %vm2703 = vcmp.ne.s32.totalorder %v2600, 0
      %vm2704 = vcmp.ne.s32.totalorder %v2611, 0
      %vm2705 = vcmp.ne.s32.totalorder %v2622, 0
      %vm2706 = vcmp.ne.s32.totalorder %v2633, 0
      %vm2707 = vcmp.ne.s32.totalorder %v2644, 0
      %vm2708 = vcmp.ne.s32.totalorder %v2655, 0
      %vm2709 = vcmp.ne.s32.totalorder %v2666, 0
      %vm2710 = vcmp.ne.s32.totalorder %v2677, 0
      %vm2711 = vcmp.ne.s32.totalorder %v2688, 0
      %vm2712 = vcmp.ne.s32.totalorder %v2699, 0
      %vm2713 = vcmp.lt.s32.totalorder %v2567, 0
      %vm2714 = vcmp.lt.s32.totalorder %v2578, 0
      %vm2715 = vcmp.lt.s32.totalorder %v2589, 0
      %vm2716 = vcmp.lt.s32.totalorder %v2600, 0
      %vm2717 = vcmp.lt.s32.totalorder %v2611, 0
      %vm2718 = vcmp.lt.s32.totalorder %v2622, 0
      %vm2719 = vcmp.lt.s32.totalorder %v2633, 0
      %vm2720 = vcmp.lt.s32.totalorder %v2644, 0
      %vm2721 = vcmp.lt.s32.totalorder %v2655, 0
      %vm2722 = vcmp.lt.s32.totalorder %v2666, 0
      %vm2723 = vcmp.lt.s32.totalorder %v2677, 0
      %vm2724 = vcmp.lt.s32.totalorder %v2688, 0
      %vm2725 = vcmp.lt.s32.totalorder %v2699, 0
      %vm2726 = vmand %vm2713, %vm2700
      %vm2727 = vmand %vm2714, %vm2701
      %vm2728 = vmand %vm2715, %vm2702
      %vm2729 = vmand %vm2716, %vm2703
      %vm2730 = vmand %vm2717, %vm2704
      %vm2731 = vmand %vm2718, %vm2705
      %vm2732 = vmand %vm2719, %vm2706
      %vm2733 = vmand %vm2720, %vm2707
      %vm2734 = vmand %vm2721, %vm2708
      %vm2735 = vmand %vm2722, %vm2709
      %vm2736 = vmand %vm2723, %vm2710
      %vm2737 = vmand %vm2724, %vm2711
      %vm2738 = vmand %vm2725, %vm2712
      %v2739 = vadd.s32 %v2567, 10
      %v2740 = vadd.s32 %v2578, 10
      %v2741 = vadd.s32 %v2589, 10
      %v2742 = vadd.s32 %v2600, 10
      %v2743 = vadd.s32 %v2611, 10
      %v2744 = vadd.s32 %v2622, 10
      %v2745 = vadd.s32 %v2633, 10
      %v2746 = vadd.s32 %v2644, 10
      %v2747 = vadd.s32 %v2655, 10
      %v2748 = vadd.s32 %v2666, 10
      %v2749 = vadd.s32 %v2677, 10
      %v2750 = vadd.s32 %v2688, 10
      %v2751 = vadd.s32 %v2699, 10
      %v2752 = vsel %vm2726, %v2739, %v2567
      %v2753 = vsel %vm2727, %v2740, %v2578
      %v2754 = vsel %vm2728, %v2741, %v2589
      %v2755 = vsel %vm2729, %v2742, %v2600
      %v2756 = vsel %vm2730, %v2743, %v2611
      %v2757 = vsel %vm2731, %v2744, %v2622
      %v2758 = vsel %vm2732, %v2745, %v2633
      %v2759 = vsel %vm2733, %v2746, %v2644
      %v2760 = vsel %vm2734, %v2747, %v2655
      %v2761 = vsel %vm2735, %v2748, %v2666
      %v2762 = vsel %vm2736, %v2749, %v2677
      %v2763 = vsel %vm2737, %v2750, %v2688
      %v2764 = vsel %vm2738, %v2751, %v2699
      %vm2765 = vcmp.ne.s32.totalorder %v2752, 0
      %vm2766 = vcmp.ne.s32.totalorder %v2753, 0
      %vm2767 = vcmp.ne.s32.totalorder %v2754, 0
      %vm2768 = vcmp.ne.s32.totalorder %v2755, 0
      %vm2769 = vcmp.ne.s32.totalorder %v2756, 0
      %vm2770 = vcmp.ne.s32.totalorder %v2757, 0
      %vm2771 = vcmp.ne.s32.totalorder %v2758, 0
      %vm2772 = vcmp.ne.s32.totalorder %v2759, 0
      %vm2773 = vcmp.ne.s32.totalorder %v2760, 0
      %vm2774 = vcmp.ne.s32.totalorder %v2761, 0
      %vm2775 = vcmp.ne.s32.totalorder %v2762, 0
      %vm2776 = vcmp.ne.s32.totalorder %v2763, 0
      %vm2777 = vcmp.ne.s32.totalorder %v2764, 0
      %v2778 = vsel %vm2765, 1, 0
      %v2779 = vsel %vm2766, 1, 0
      %v2780 = vsel %vm2767, 1, 0
      %v2781 = vsel %vm2768, 1, 0
      %v2782 = vsel %vm2769, 1, 0
      %v2783 = vsel %vm2770, 1, 0
      %v2784 = vsel %vm2771, 1, 0
      %v2785 = vsel %vm2772, 1, 0
      %v2786 = vsel %vm2773, 1, 0
      %v2787 = vsel %vm2774, 1, 0
      %v2788 = vsel %vm2775, 1, 0
      %v2789 = vsel %vm2776, 1, 0
      %v2790 = vsel %vm2777, 1, 0
      %v2791 = vcvt.s32.f32 %v2778
      %v2792 = vcvt.s32.f32 %v2779
      %v2793 = vcvt.s32.f32 %v2780
      %v2794 = vcvt.s32.f32 %v2781
      %v2795 = vcvt.s32.f32 %v2782
      %v2796 = vcvt.s32.f32 %v2783
      %v2797 = vcvt.s32.f32 %v2784
      %v2798 = vcvt.s32.f32 %v2785
      %v2799 = vcvt.s32.f32 %v2786
      %v2800 = vcvt.s32.f32 %v2787
      %v2801 = vcvt.s32.f32 %v2788
      %v2802 = vcvt.s32.f32 %v2789
      %v2803 = vcvt.s32.f32 %v2790
      %vm2804 = vcmp.ne.s32.totalorder %v2752, 9
      %vm2805 = vcmp.ne.s32.totalorder %v2753, 9
      %vm2806 = vcmp.ne.s32.totalorder %v2754, 9
      %vm2807 = vcmp.ne.s32.totalorder %v2755, 9
      %vm2808 = vcmp.ne.s32.totalorder %v2756, 9
      %vm2809 = vcmp.ne.s32.totalorder %v2757, 9
      %vm2810 = vcmp.ne.s32.totalorder %v2758, 9
      %vm2811 = vcmp.ne.s32.totalorder %v2759, 9
      %vm2812 = vcmp.ne.s32.totalorder %v2760, 9
      %vm2813 = vcmp.ne.s32.totalorder %v2761, 9
      %vm2814 = vcmp.ne.s32.totalorder %v2762, 9
      %vm2815 = vcmp.ne.s32.totalorder %v2763, 9
      %vm2816 = vcmp.ne.s32.totalorder %v2764, 9
      %v2817 = vsel %vm2804, 1, 0
      %v2818 = vsel %vm2805, 1, 0
      %v2819 = vsel %vm2806, 1, 0
      %v2820 = vsel %vm2807, 1, 0
      %v2821 = vsel %vm2808, 1, 0
      %v2822 = vsel %vm2809, 1, 0
      %v2823 = vsel %vm2810, 1, 0
      %v2824 = vsel %vm2811, 1, 0
      %v2825 = vsel %vm2812, 1, 0
      %v2826 = vsel %vm2813, 1, 0
      %v2827 = vsel %vm2814, 1, 0
      %v2828 = vsel %vm2815, 1, 0
      %v2829 = vsel %vm2816, 1, 0
      %v2830 = vcvt.s32.f32 %v2817
      %v2831 = vcvt.s32.f32 %v2818
      %v2832 = vcvt.s32.f32 %v2819
      %v2833 = vcvt.s32.f32 %v2820
      %v2834 = vcvt.s32.f32 %v2821
      %v2835 = vcvt.s32.f32 %v2822
      %v2836 = vcvt.s32.f32 %v2823
      %v2837 = vcvt.s32.f32 %v2824
      %v2838 = vcvt.s32.f32 %v2825
      %v2839 = vcvt.s32.f32 %v2826
      %v2840 = vcvt.s32.f32 %v2827
      %v2841 = vcvt.s32.f32 %v2828
      %v2842 = vcvt.s32.f32 %v2829
      %v2843 = vmul.f32 %v2791, 0.0
      %v2844 = vmul.f32 %v2541, %v2792
      %v2845 = vmul.f32 %v2507, %v2793
      %v2846 = vmul.f32 %v2509, %v2794
      %v2847 = vmul.f32 %v2511, %v2795
      %v2848 = vmul.f32 %v2513, %v2796
      %v2849 = vmul.f32 %v2515, %v2797
      %v2850 = vmul.f32 %v2517, %v2798
      %v2851 = vmul.f32 %v2519, %v2799
      %v2852 = vmul.f32 %v2521, %v2800
      %v2853 = vmul.f32 %v2523, %v2801
      %v2854 = vmul.f32 %v2525, %v2802
      %v2855 = vmul.f32 %v2527, %v2803
      %vm2869 = vcmask 1041408
      %v2870 = vrot.slane %v2791, 6
      %v2871 = vrot.slane %v2792, 6
      %v2872 = vsel %vm2869, %v2870, %v2871
      %v2873 = vrot.slane %v2793, 6
      %v2874 = vsel %vm2869, %v2871, %v2873
      %v2875 = vrot.slane %v2794, 6
      %v2876 = vsel %vm2869, %v2873, %v2875
      %v2877 = vrot.slane %v2795, 6
      %v2878 = vsel %vm2869, %v2875, %v2877
      %v2879 = vrot.slane %v2796, 6
      %v2880 = vsel %vm2869, %v2877, %v2879
      %v2881 = vrot.slane %v2797, 6
      %v2882 = vsel %vm2869, %v2879, %v2881
      %v2883 = vrot.slane %v2798, 6
      %v2884 = vsel %vm2869, %v2881, %v2883
      %v2885 = vrot.slane %v2799, 6
      %v2886 = vsel %vm2869, %v2883, %v2885
      %v2887 = vrot.slane %v2800, 6
      %v2888 = vsel %vm2869, %v2885, %v2887
      %v2889 = vrot.slane %v2801, 6
      %v2890 = vsel %vm2869, %v2887, %v2889
      %v2891 = vrot.slane %v2802, 6
      %v2892 = vsel %vm2869, %v2889, %v2891
      %v2893 = vrot.slane %v2803, 6
      %v2894 = vsel %vm2869, %v2891, %v2893
      %v2908 = vmul.f32 %v2436, %v2870
      %v2909 = vmul.f32 %v2402, %v2872
      %v2910 = vmul.f32 %v2404, %v2874
      %v2911 = vmul.f32 %v2406, %v2876
      %v2912 = vmul.f32 %v2408, %v2878
      %v2913 = vmul.f32 %v2410, %v2880
      %v2914 = vmul.f32 %v2412, %v2882
      %v2915 = vmul.f32 %v2414, %v2884
      %v2916 = vmul.f32 %v2416, %v2886
      %v2917 = vmul.f32 %v2418, %v2888
      %v2918 = vmul.f32 %v2420, %v2890
      %v2919 = vmul.f32 %v2422, %v2892
      %v2920 = vmul.f32 %v2437, %v2894
      %v2923 = vrot.slane 0.0, 5
      %v2924 = vrot.slane %v2489, 5
      %v2925 = vsel %vm2344, %v2923, %v2924
      %v2926 = vrot.slane %v2453, 5
      %v2927 = vsel %vm2344, %v2924, %v2926
      %v2928 = vrot.slane %v2455, 5
      %v2929 = vsel %vm2344, %v2926, %v2928
      %v2930 = vrot.slane %v2457, 5
      %v2931 = vsel %vm2344, %v2928, %v2930
      %v2932 = vrot.slane %v2459, 5
      %v2933 = vsel %vm2344, %v2930, %v2932
      %v2934 = vrot.slane %v2461, 5
      %v2935 = vsel %vm2344, %v2932, %v2934
      %v2936 = vrot.slane %v2463, 5
      %v2937 = vsel %vm2344, %v2934, %v2936
      %v2938 = vrot.slane %v2465, 5
      %v2939 = vsel %vm2344, %v2936, %v2938
      %v2940 = vrot.slane %v2467, 5
      %v2941 = vsel %vm2344, %v2938, %v2940
      %v2942 = vrot.slane %v2469, 5
      %v2943 = vsel %vm2344, %v2940, %v2942
      %v2944 = vrot.slane %v2471, 5
      %v2945 = vsel %vm2344, %v2942, %v2944
      %v2946 = vrot.slane %v2473, 5
      %v2947 = vsel %vm2344, %v2944, %v2946
      %vm2974 = vcmask 1045504
      %v2975 = vrot.slane %v2908, 2
      %v2976 = vrot.slane %v2909, 2
      %v2977 = vsel %vm2974, %v2975, %v2976
      %v2978 = vrot.slane %v2910, 2
      %v2979 = vsel %vm2974, %v2976, %v2978
      %v2980 = vrot.slane %v2911, 2
      %v2981 = vsel %vm2974, %v2978, %v2980
      %v2982 = vrot.slane %v2912, 2
      %v2983 = vsel %vm2974, %v2980, %v2982
      %v2984 = vrot.slane %v2913, 2
      %v2985 = vsel %vm2974, %v2982, %v2984
      %v2986 = vrot.slane %v2914, 2
      %v2987 = vsel %vm2974, %v2984, %v2986
      %v2988 = vrot.slane %v2915, 2
      %v2989 = vsel %vm2974, %v2986, %v2988
      %v2990 = vrot.slane %v2916, 2
      %v2991 = vsel %vm2974, %v2988, %v2990
      %v2992 = vrot.slane %v2917, 2
      %v2993 = vsel %vm2974, %v2990, %v2992
      %v2994 = vrot.slane %v2918, 2
      %v2995 = vsel %vm2974, %v2992, %v2994
      %v2996 = vrot.slane %v2919, 2
      %v2997 = vsel %vm2974, %v2994, %v2996
      %v2998 = vrot.slane %v2920, 2
      %v2999 = vsel %vm2974, %v2996, %v2998
      %vm3015 = vcmask 1040384
      %v3016 = vrot.slane %v2383, 7
      %v3017 = vrot.slane %v2347, 7
      %v3018 = vsel %vm3015, %v3016, %v3017
      %v3019 = vrot.slane %v2349, 7
      %v3020 = vsel %vm3015, %v3017, %v3019
      %v3021 = vrot.slane %v2351, 7
      %v3022 = vsel %vm3015, %v3019, %v3021
      %v3023 = vrot.slane %v2353, 7
      %v3024 = vsel %vm3015, %v3021, %v3023
      %v3025 = vrot.slane %v2355, 7
      %v3026 = vsel %vm3015, %v3023, %v3025
      %v3027 = vrot.slane %v2357, 7
      %v3028 = vsel %vm3015, %v3025, %v3027
      %v3029 = vrot.slane %v2359, 7
      %v3030 = vsel %vm3015, %v3027, %v3029
      %v3031 = vrot.slane %v2361, 7
      %v3032 = vsel %vm3015, %v3029, %v3031
      %v3033 = vrot.slane %v2363, 7
      %v3034 = vsel %vm3015, %v3031, %v3033
      %v3035 = vrot.slane %v2365, 7
      %v3036 = vsel %vm3015, %v3033, %v3035
      %v3037 = vrot.slane %v2367, 7
      %v3038 = vsel %vm3015, %v3035, %v3037
      %v3039 = vrot.slane %v2385, 7
      %v3040 = vsel %vm3015, %v3037, %v3039
      %v3054 = vsel %vm1234, %v2855, %v2923
      %v3055 = vsel %vm1234, %v2998, %v3016
      %v3056 = vpack.c.bf16 %v2844, %v2843
      %v3057 = vpack.c.bf16 %v2846, %v2845
      %v3058 = vpack.c.bf16 %v2848, %v2847
      %v3059 = vpack.c.bf16 %v2850, %v2849
      %v3060 = vpack.c.bf16 %v2852, %v2851
      %v3061 = vpack.c.bf16 %v2854, %v2853
      %v3062 = vpack.c.bf16 %v2925, %v3054
      %v3063 = vpack.c.bf16 %v2929, %v2927
      %v3064 = vpack.c.bf16 %v2933, %v2931
      %v3065 = vpack.c.bf16 %v2937, %v2935
      %v3066 = vpack.c.bf16 %v2941, %v2939
      %v3067 = vpack.c.bf16 %v2945, %v2943
      %v3068 = vpack.c.bf16 %v2977, %v2947
      %v3069 = vpack.c.bf16 %v2981, %v2979
      %v3070 = vpack.c.bf16 %v2985, %v2983
      %v3071 = vpack.c.bf16 %v2989, %v2987
      %v3072 = vpack.c.bf16 %v2993, %v2991
      %v3073 = vpack.c.bf16 %v2997, %v2995
      %v3074 = vpack.c.bf16 %v3055, %v2999
      %v3075 = vpack.c.bf16 %v3020, %v3018
      %v3076 = vpack.c.bf16 %v3024, %v3022
      %v3077 = vpack.c.bf16 %v3028, %v3026
      %v3078 = vpack.c.bf16 %v3032, %v3030
      %v3079 = vpack.c.bf16 %v3036, %v3034
      %v3080 = vpack.c.bf16 %v3040, %v3038
      %v3081 = vld [vmem:[%s3] sm:$0xf]
      %v3082 = vld [vmem:[%s3 + $0x4] sm:$0xf]
      %v3083 = vrot.slane 0.0, 1
      %v3084 = vrot.slane %v2489, 1
      %v3085 = vsel %vm2384, %v3083, %v3084
      %v3086 = vrot.slane %v2453, 1
      %v3087 = vsel %vm2384, %v3084, %v3086
      %v3088 = vrot.slane %v2455, 1
      %v3089 = vsel %vm2384, %v3086, %v3088
      %v3090 = vrot.slane %v2457, 1
      %v3091 = vsel %vm2384, %v3088, %v3090
      %v3092 = vrot.slane %v2459, 1
      %v3093 = vsel %vm2384, %v3090, %v3092
      %v3094 = vrot.slane %v2461, 1
      %v3095 = vsel %vm2384, %v3092, %v3094
      %v3096 = vrot.slane %v2463, 1
      %v3097 = vsel %vm2384, %v3094, %v3096
      %v3098 = vrot.slane %v2465, 1
      %v3099 = vsel %vm2384, %v3096, %v3098
      %v3100 = vrot.slane %v2467, 1
      %v3101 = vsel %vm2384, %v3098, %v3100
      %v3102 = vrot.slane %v2469, 1
      %v3103 = vsel %vm2384, %v3100, %v3102
      %v3104 = vrot.slane %v2471, 1
      %v3105 = vsel %vm2384, %v3102, %v3104
      %v3106 = vrot.slane %v2473, 1
      %v3107 = vsel %vm2384, %v3104, %v3106
      %v3122 = vrot.slane %v2541, 5
      %v3123 = vsel %vm2344, %v2923, %v3122
      %v3124 = vrot.slane %v2507, 5
      %v3125 = vsel %vm2344, %v3122, %v3124
      %v3126 = vrot.slane %v2509, 5
      %v3127 = vsel %vm2344, %v3124, %v3126
      %v3128 = vrot.slane %v2511, 5
      %v3129 = vsel %vm2344, %v3126, %v3128
      %v3130 = vrot.slane %v2513, 5
      %v3131 = vsel %vm2344, %v3128, %v3130
      %v3132 = vrot.slane %v2515, 5
      %v3133 = vsel %vm2344, %v3130, %v3132
      %v3134 = vrot.slane %v2517, 5
      %v3135 = vsel %vm2344, %v3132, %v3134
      %v3136 = vrot.slane %v2519, 5
      %v3137 = vsel %vm2344, %v3134, %v3136
      %v3138 = vrot.slane %v2521, 5
      %v3139 = vsel %vm2344, %v3136, %v3138
      %v3140 = vrot.slane %v2523, 5
      %v3141 = vsel %vm2344, %v3138, %v3140
      %v3142 = vrot.slane %v2525, 5
      %v3143 = vsel %vm2344, %v3140, %v3142
      %v3144 = vrot.slane %v2527, 5
      %v3145 = vsel %vm2344, %v3142, %v3144
      %v3158 = vrot.slane %v2383, 3
      %v3159 = vrot.slane %v2347, 3
      %v3160 = vsel %vm1235, %v3158, %v3159
      %v3161 = vrot.slane %v2349, 3
      %v3162 = vsel %vm1235, %v3159, %v3161
      %v3163 = vrot.slane %v2351, 3
      %v3164 = vsel %vm1235, %v3161, %v3163
      %v3165 = vrot.slane %v2353, 3
      %v3166 = vsel %vm1235, %v3163, %v3165
      %v3167 = vrot.slane %v2355, 3
      %v3168 = vsel %vm1235, %v3165, %v3167
      %v3169 = vrot.slane %v2357, 3
      %v3170 = vsel %vm1235, %v3167, %v3169
      %v3171 = vrot.slane %v2359, 3
      %v3172 = vsel %vm1235, %v3169, %v3171
      %v3173 = vrot.slane %v2361, 3
      %v3174 = vsel %vm1235, %v3171, %v3173
      %v3175 = vrot.slane %v2363, 3
      %v3176 = vsel %vm1235, %v3173, %v3175
      %v3177 = vrot.slane %v2365, 3
      %v3178 = vsel %vm1235, %v3175, %v3177
      %v3179 = vrot.slane %v2367, 3
      %v3180 = vsel %vm1235, %v3177, %v3179
      %v3181 = vrot.slane %v2385, 3
      %v3182 = vsel %vm1235, %v3179, %v3181
      %v3198 = vrot.slane %v2436, 7
      %v3199 = vrot.slane %v2402, 7
      %v3200 = vsel %vm3015, %v3198, %v3199
      %v3201 = vrot.slane %v2404, 7
      %v3202 = vsel %vm3015, %v3199, %v3201
      %v3203 = vrot.slane %v2406, 7
      %v3204 = vsel %vm3015, %v3201, %v3203
      %v3205 = vrot.slane %v2408, 7
      %v3206 = vsel %vm3015, %v3203, %v3205
      %v3207 = vrot.slane %v2410, 7
      %v3208 = vsel %vm3015, %v3205, %v3207
      %v3209 = vrot.slane %v2412, 7
      %v3210 = vsel %vm3015, %v3207, %v3209
      %v3211 = vrot.slane %v2414, 7
      %v3212 = vsel %vm3015, %v3209, %v3211
      %v3213 = vrot.slane %v2416, 7
      %v3214 = vsel %vm3015, %v3211, %v3213
      %v3215 = vrot.slane %v2418, 7
      %v3216 = vsel %vm3015, %v3213, %v3215
      %v3217 = vrot.slane %v2420, 7
      %v3218 = vsel %vm3015, %v3215, %v3217
      %v3219 = vrot.slane %v2422, 7
      %v3220 = vsel %vm3015, %v3217, %v3219
      %v3221 = vrot.slane %v2437, 7
      %v3222 = vsel %vm3015, %v3219, %v3221
      %v3236 = vsel %vm1234, %v3106, %v2923
      %v3237 = vsel %vm1234, %v3181, %v3198
      %v3238 = vpack.c.bf16 %v3087, %v3085
      %v3239 = vpack.c.bf16 %v3091, %v3089
      %v3240 = vpack.c.bf16 %v3095, %v3093
      %v3241 = vpack.c.bf16 %v3099, %v3097
      %v3242 = vpack.c.bf16 %v3103, %v3101
      %v3243 = vpack.c.bf16 %v3107, %v3105
      %v3244 = vpack.c.bf16 %v3123, %v3236
      %v3245 = vpack.c.bf16 %v3127, %v3125
      %v3246 = vpack.c.bf16 %v3131, %v3129
      %v3247 = vpack.c.bf16 %v3135, %v3133
      %v3248 = vpack.c.bf16 %v3139, %v3137
      %v3249 = vpack.c.bf16 %v3143, %v3141
      %v3250 = vpack.c.bf16 %v3160, %v3145
      %v3251 = vpack.c.bf16 %v3164, %v3162
      %v3252 = vpack.c.bf16 %v3168, %v3166
      %v3253 = vpack.c.bf16 %v3172, %v3170
      %v3254 = vpack.c.bf16 %v3176, %v3174
      %v3255 = vpack.c.bf16 %v3180, %v3178
      %v3256 = vpack.c.bf16 %v3237, %v3182
      %v3257 = vpack.c.bf16 %v3202, %v3200
      %v3258 = vpack.c.bf16 %v3206, %v3204
      %v3259 = vpack.c.bf16 %v3210, %v3208
      %v3260 = vpack.c.bf16 %v3214, %v3212
      %v3261 = vpack.c.bf16 %v3218, %v3216
      %v3262 = vpack.c.bf16 %v3222, %v3220
      %v3263 = vld [vmem:[%s3 + $0x8] sm:$0xf]
      %v3264 = vld [vmem:[%s3 + $0xc] sm:$0xf]
      %v3267 = vunpack.c.l.b16 %v3263
      %v3268 = vunpack.c.l.b16 %v3264
      %v3269 = vpack.c.b16 %v3268, %v3267
      %vm3271 = vcmask 130048
      %v3273 = vsel %vm3271, %v3238, 0
      %v3276 = vsel %vm3271, %v3239, 0
      %v3279 = vsel %vm3271, %v3240, 0
      %v3282 = vsel %vm3271, %v3241, 0
      %v3285 = vsel %vm3271, %v3242, 0
      %v3288 = vsel %vm3271, %v3243, 0
      %v3291 = vsel %vm3271, %v3244, 0
      %v3294 = vsel %vm3271, %v3245, 0
      %v3297 = vsel %vm3271, %v3246, 0
      %v3300 = vsel %vm3271, %v3247, 0
      %v3303 = vsel %vm3271, %v3248, 0
      %v3306 = vsel %vm3271, %v3249, 0
      %v3309 = vsel %vm3271, %v3250, 0
      %v3312 = vsel %vm3271, %v3251, 0
      %v3315 = vsel %vm3271, %v3252, 0
      %v3318 = vsel %vm3271, %v3253, 0
      %v3321 = vsel %vm3271, %v3254, 0
      %v3324 = vsel %vm3271, %v3255, 0
      %v3327 = vsel %vm3271, %v3256, 0
      %v3330 = vsel %vm3271, %v3257, 0
      %v3333 = vsel %vm3271, %v3258, 0
      %v3336 = vsel %vm3271, %v3259, 0
      %v3339 = vsel %vm3271, %v3260, 0
      %v3342 = vsel %vm3271, %v3261, 0
      %v3345 = vsel %vm3271, %v3262, 0
      %3347 = vmatprep.subr.bf16.mxu0 0
      %3348 = vmatpush1.bf16.msra.mxu0 %v3269
      %3349 = vmatprep.subr.bf16.mxu0 0
      %3350 = vmatpush1.bf16.msra.mxu0 0
      %3351 = vmatprep.subr.bf16.mxu0 0
      %3352 = vmatpush1.bf16.msra.mxu0 0
      %3353 = vmatprep.subr.bf16.mxu0 0
      %3354 = vmatpush1.bf16.msra.mxu0 0
      %3355 = vmatprep.subr.bf16.mxu0 0
      %3356 = vmatpush1.bf16.msra.mxu0 0
      %3357 = vmatprep.subr.bf16.mxu0 0
      %3358 = vmatpush1.bf16.msra.mxu0 0
      %3359 = vmatprep.subr.bf16.mxu0 0
      %3360 = vmatpush1.bf16.msra.mxu0 0
      %3361 = vmatprep.subr.bf16.mxu0 0
      %3362 = vmatpush1.bf16.msra.mxu0 0
      %3363 = vmatprep.subr.bf16.mxu0 0
      %3364 = vmatpush1.bf16.msra.mxu0 0
      %3365 = vmatprep.subr.bf16.mxu0 0
      %3366 = vmatpush1.bf16.msra.mxu0 0
      %3367 = vmatprep.subr.bf16.mxu0 0
      %3368 = vmatpush1.bf16.msra.mxu0 0
      %3369 = vmatprep.subr.bf16.mxu0 0
      %3370 = vmatpush1.bf16.msra.mxu0 0
      %3371 = vmatprep.subr.bf16.mxu0 0
      %3372 = vmatpush1.bf16.msra.mxu0 0
      %3373 = vmatprep.subr.bf16.mxu0 0
      %3374 = vmatpush1.bf16.msra.mxu0 0
      %3375 = vmatprep.subr.bf16.mxu0 0
      %3376 = vmatpush1.bf16.msra.mxu0 0
      %3377 = vmatprep.subr.bf16.mxu0 0
      %3378 = vmatpush1.bf16.msra.mxu0 0
      %3379 = vmatprep.mubr.bf16.mxu0 0
      %3380 = vmatmul.mubr.bf16.gmra.mrb[0].mxu0 %v3273
      %v3381 = vpop.f32.mrb[0].mxu0
      %v3382 = vadd.f32 0.0, %v3381
      %v3383 = vpop.f32.mrb[0].mxu0
      %v3384 = vpop.f32.mrb[0].mxu0
      %v3385 = vadd.f32 0.0, %v3384
      %v3386 = vpop.f32.mrb[0].mxu0
      %3387 = vmatprep.mubr.bf16.mxu0 0
      %3388 = vmatmul.mubr.bf16.gmra.mrb[0].mxu0 %v3276
      %v3389 = vpop.f32.mrb[0].mxu0
      %v3390 = vadd.f32 0.0, %v3389
      %v3391 = vpop.f32.mrb[0].mxu0
      %v3392 = vpop.f32.mrb[0].mxu0
      %v3393 = vadd.f32 0.0, %v3392
      %v3394 = vpop.f32.mrb[0].mxu0
      %3395 = vmatprep.mubr.bf16.mxu0 0
      %3396 = vmatmul.mubr.bf16.gmra.mrb[0].mxu0 %v3279
      %v3397 = vpop.f32.mrb[0].mxu0
      %v3398 = vadd.f32 0.0, %v3397
      %v3399 = vpop.f32.mrb[0].mxu0
      %v3400 = vpop.f32.mrb[0].mxu0
      %v3401 = vadd.f32 0.0, %v3400
      %v3402 = vpop.f32.mrb[0].mxu0
      %3403 = vmatprep.mubr.bf16.mxu0 0
      %3404 = vmatmul.mubr.bf16.gmra.mrb[0].mxu0 %v3282
      %v3405 = vpop.f32.mrb[0].mxu0
      %v3406 = vadd.f32 0.0, %v3405
      %v3407 = vpop.f32.mrb[0].mxu0
      %v3408 = vpop.f32.mrb[0].mxu0
      %v3409 = vadd.f32 0.0, %v3408
      %v3410 = vpop.f32.mrb[0].mxu0
      %3411 = vmatprep.mubr.bf16.mxu0 0
      %3412 = vmatmul.mubr.bf16.gmra.mrb[0].mxu0 %v3285
      %v3413 = vpop.f32.mrb[0].mxu0
      %v3414 = vadd.f32 0.0, %v3413
      %v3415 = vpop.f32.mrb[0].mxu0
      %v3416 = vpop.f32.mrb[0].mxu0
      %v3417 = vadd.f32 0.0, %v3416
      %v3418 = vpop.f32.mrb[0].mxu0
      %3419 = vmatprep.mubr.bf16.mxu0 0
      %3420 = vmatmul.mubr.bf16.gmra.mrb[0].mxu0 %v3288
      %v3421 = vpop.f32.mrb[0].mxu0
      %v3422 = vadd.f32 0.0, %v3421
      %v3423 = vpop.f32.mrb[0].mxu0
      %v3424 = vpop.f32.mrb[0].mxu0
      %v3425 = vadd.f32 0.0, %v3424
      %v3426 = vpop.f32.mrb[0].mxu0
      %3427 = vmatprep.mubr.bf16.mxu0 0
      %3428 = vmatmul.mubr.bf16.gmra.mrb[0].mxu0 %v3291
      %v3429 = vpop.f32.mrb[0].mxu0
      %v3430 = vadd.f32 0.0, %v3429
      %v3431 = vpop.f32.mrb[0].mxu0
      %v3432 = vpop.f32.mrb[0].mxu0
      %v3433 = vadd.f32 0.0, %v3432
      %v3434 = vpop.f32.mrb[0].mxu0
      %3435 = vmatprep.mubr.bf16.mxu0 0
      %3436 = vmatmul.mubr.bf16.gmra.mrb[0].mxu0 %v3294
      %v3437 = vpop.f32.mrb[0].mxu0
      %v3438 = vadd.f32 0.0, %v3437
      %v3439 = vpop.f32.mrb[0].mxu0
      %v3440 = vpop.f32.mrb[0].mxu0
      %v3441 = vadd.f32 0.0, %v3440
      %v3442 = vpop.f32.mrb[0].mxu0
      %3443 = vmatprep.mubr.bf16.mxu0 0
      %3444 = vmatmul.mubr.bf16.gmra.mrb[0].mxu0 %v3297
      %v3445 = vpop.f32.mrb[0].mxu0
      %v3446 = vadd.f32 0.0, %v3445
      %v3447 = vpop.f32.mrb[0].mxu0
      %v3448 = vpop.f32.mrb[0].mxu0
      %v3449 = vadd.f32 0.0, %v3448
      %v3450 = vpop.f32.mrb[0].mxu0
      %3451 = vmatprep.mubr.bf16.mxu0 0
      %3452 = vmatmul.mubr.bf16.gmra.mrb[0].mxu0 %v3300
      %v3453 = vpop.f32.mrb[0].mxu0
      %v3454 = vadd.f32 0.0, %v3453
      %v3455 = vpop.f32.mrb[0].mxu0
      %v3456 = vpop.f32.mrb[0].mxu0
      %v3457 = vadd.f32 0.0, %v3456
      %v3458 = vpop.f32.mrb[0].mxu0
      %3459 = vmatprep.mubr.bf16.mxu0 0
      %3460 = vmatmul.mubr.bf16.gmra.mrb[0].mxu0 %v3303
      %v3461 = vpop.f32.mrb[0].mxu0
      %v3462 = vadd.f32 0.0, %v3461
      %v3463 = vpop.f32.mrb[0].mxu0
      %v3464 = vpop.f32.mrb[0].mxu0
      %v3465 = vadd.f32 0.0, %v3464
      %v3466 = vpop.f32.mrb[0].mxu0
      %3467 = vmatprep.mubr.bf16.mxu0 0
      %3468 = vmatmul.mubr.bf16.gmra.mrb[0].mxu0 %v3306
      %v3469 = vpop.f32.mrb[0].mxu0
      %v3470 = vadd.f32 0.0, %v3469
      %v3471 = vpop.f32.mrb[0].mxu0
      %v3472 = vpop.f32.mrb[0].mxu0
      %v3473 = vadd.f32 0.0, %v3472
      %v3474 = vpop.f32.mrb[0].mxu0
      %3475 = vmatprep.mubr.bf16.mxu0 0
      %3476 = vmatmul.mubr.bf16.gmra.mrb[0].mxu0 %v3309
      %v3477 = vpop.f32.mrb[0].mxu0
      %v3478 = vadd.f32 0.0, %v3477
      %v3479 = vpop.f32.mrb[0].mxu0
      %v3480 = vpop.f32.mrb[0].mxu0
      %v3481 = vadd.f32 0.0, %v3480
      %v3482 = vpop.f32.mrb[0].mxu0
      %3483 = vmatprep.mubr.bf16.mxu0 0
      %3484 = vmatmul.mubr.bf16.gmra.mrb[0].mxu0 %v3312
      %v3485 = vpop.f32.mrb[0].mxu0
      %v3486 = vadd.f32 0.0, %v3485
      %v3487 = vpop.f32.mrb[0].mxu0
      %v3488 = vpop.f32.mrb[0].mxu0
      %v3489 = vadd.f32 0.0, %v3488
      %v3490 = vpop.f32.mrb[0].mxu0
      %3491 = vmatprep.mubr.bf16.mxu0 0
      %3492 = vmatmul.mubr.bf16.gmra.mrb[0].mxu0 %v3315
      %v3493 = vpop.f32.mrb[0].mxu0
      %v3494 = vadd.f32 0.0, %v3493
      %v3495 = vpop.f32.mrb[0].mxu0
      %v3496 = vpop.f32.mrb[0].mxu0
      %v3497 = vadd.f32 0.0, %v3496
      %v3498 = vpop.f32.mrb[0].mxu0
      %3499 = vmatprep.mubr.bf16.mxu0 0
      %3500 = vmatmul.mubr.bf16.gmra.mrb[0].mxu0 %v3318
      %v3501 = vpop.f32.mrb[0].mxu0
      %v3502 = vadd.f32 0.0, %v3501
      %v3503 = vpop.f32.mrb[0].mxu0
      %v3504 = vpop.f32.mrb[0].mxu0
      %v3505 = vadd.f32 0.0, %v3504
      %v3506 = vpop.f32.mrb[0].mxu0
      %3507 = vmatprep.mubr.bf16.mxu0 0
      %3508 = vmatmul.mubr.bf16.gmra.mrb[0].mxu0 %v3321
      %v3509 = vpop.f32.mrb[0].mxu0
      %v3510 = vadd.f32 0.0, %v3509
      %v3511 = vpop.f32.mrb[0].mxu0
      %v3512 = vpop.f32.mrb[0].mxu0
      %v3513 = vadd.f32 0.0, %v3512
      %v3514 = vpop.f32.mrb[0].mxu0
      %3515 = vmatprep.mubr.bf16.mxu0 0
      %3516 = vmatmul.mubr.bf16.gmra.mrb[0].mxu0 %v3324
      %v3517 = vpop.f32.mrb[0].mxu0
      %v3518 = vadd.f32 0.0, %v3517
      %v3519 = vpop.f32.mrb[0].mxu0
      %v3520 = vpop.f32.mrb[0].mxu0
      %v3521 = vadd.f32 0.0, %v3520
      %v3522 = vpop.f32.mrb[0].mxu0
      %3523 = vmatprep.mubr.bf16.mxu0 0
      %3524 = vmatmul.mubr.bf16.gmra.mrb[0].mxu0 %v3327
      %v3525 = vpop.f32.mrb[0].mxu0
      %v3526 = vadd.f32 0.0, %v3525
      %v3527 = vpop.f32.mrb[0].mxu0
      %v3528 = vpop.f32.mrb[0].mxu0
      %v3529 = vadd.f32 0.0, %v3528
      %v3530 = vpop.f32.mrb[0].mxu0
      %3531 = vmatprep.mubr.bf16.mxu0 0
      %3532 = vmatmul.mubr.bf16.gmra.mrb[0].mxu0 %v3330
      %v3533 = vpop.f32.mrb[0].mxu0
      %v3534 = vadd.f32 0.0, %v3533
      %v3535 = vpop.f32.mrb[0].mxu0
      %v3536 = vpop.f32.mrb[0].mxu0
      %v3537 = vadd.f32 0.0, %v3536
      %v3538 = vpop.f32.mrb[0].mxu0
      %3539 = vmatprep.mubr.bf16.mxu0 0
      %3540 = vmatmul.mubr.bf16.gmra.mrb[0].mxu0 %v3333
      %v3541 = vpop.f32.mrb[0].mxu0
      %v3542 = vadd.f32 0.0, %v3541
      %v3543 = vpop.f32.mrb[0].mxu0
      %v3544 = vpop.f32.mrb[0].mxu0
      %v3545 = vadd.f32 0.0, %v3544
      %v3546 = vpop.f32.mrb[0].mxu0
      %3547 = vmatprep.mubr.bf16.mxu0 0
      %3548 = vmatmul.mubr.bf16.gmra.mrb[0].mxu0 %v3336
      %v3549 = vpop.f32.mrb[0].mxu0
      %v3550 = vadd.f32 0.0, %v3549
      %v3551 = vpop.f32.mrb[0].mxu0
      %v3552 = vpop.f32.mrb[0].mxu0
      %v3553 = vadd.f32 0.0, %v3552
      %v3554 = vpop.f32.mrb[0].mxu0
      %3555 = vmatprep.mubr.bf16.mxu0 0
      %3556 = vmatmul.mubr.bf16.gmra.mrb[0].mxu0 %v3339
      %v3557 = vpop.f32.mrb[0].mxu0
      %v3558 = vadd.f32 0.0, %v3557
      %v3559 = vpop.f32.mrb[0].mxu0
      %v3560 = vpop.f32.mrb[0].mxu0
      %v3561 = vadd.f32 0.0, %v3560
      %v3562 = vpop.f32.mrb[0].mxu0
      %3563 = vmatprep.mubr.bf16.mxu0 0
      %3564 = vmatmul.mubr.bf16.gmra.mrb[0].mxu0 %v3342
      %v3565 = vpop.f32.mrb[0].mxu0
      %v3566 = vadd.f32 0.0, %v3565
      %v3567 = vpop.f32.mrb[0].mxu0
      %v3568 = vpop.f32.mrb[0].mxu0
      %v3569 = vadd.f32 0.0, %v3568
      %v3570 = vpop.f32.mrb[0].mxu0
      %3571 = vmatprep.mubr.bf16.mxu0 0
      %3572 = vmatmul.mubr.bf16.gmra.mrb[0].mxu0 %v3345
      %v3573 = vpop.f32.mrb[0].mxu0
      %v3574 = vadd.f32 0.0, %v3573
      %v3575 = vpop.f32.mrb[0].mxu0
      %v3576 = vpop.f32.mrb[0].mxu0
      %v3577 = vadd.f32 0.0, %v3576
      %v3578 = vpop.f32.mrb[0].mxu0
      %3579 = vdwg.mxu0
      %v3582 = vunpack.c.l.b16 %v3081
      %v3583 = vunpack.c.l.b16 %v3082
      %v3584 = vpack.c.b16 %v3583, %v3582
      %v3587 = vsel %vm3271, %v3056, 0
      %v3590 = vsel %vm3271, %v3057, 0
      %v3593 = vsel %vm3271, %v3058, 0
      %v3596 = vsel %vm3271, %v3059, 0
      %v3599 = vsel %vm3271, %v3060, 0
      %v3602 = vsel %vm3271, %v3061, 0
      %v3605 = vsel %vm3271, %v3062, 0
      %v3608 = vsel %vm3271, %v3063, 0
      %v3611 = vsel %vm3271, %v3064, 0
      %v3614 = vsel %vm3271, %v3065, 0
      %v3617 = vsel %vm3271, %v3066, 0
      %v3620 = vsel %vm3271, %v3067, 0
      %v3623 = vsel %vm3271, %v3068, 0
      %v3626 = vsel %vm3271, %v3069, 0
      %v3629 = vsel %vm3271, %v3070, 0
      %v3632 = vsel %vm3271, %v3071, 0
      %v3635 = vsel %vm3271, %v3072, 0
      %v3638 = vsel %vm3271, %v3073, 0
      %v3641 = vsel %vm3271, %v3074, 0
      %v3644 = vsel %vm3271, %v3075, 0
      %v3647 = vsel %vm3271, %v3076, 0
      %v3650 = vsel %vm3271, %v3077, 0
      %v3653 = vsel %vm3271, %v3078, 0
      %v3656 = vsel %vm3271, %v3079, 0
      %v3659 = vsel %vm3271, %v3080, 0
      %3661 = vmatprep.subr.bf16.mxu0 0
      %3662 = vmatpush1.bf16.msra.mxu0 %v3584
      %3663 = vmatprep.subr.bf16.mxu0 0
      %3664 = vmatpush1.bf16.msra.mxu0 0
      %3665 = vmatprep.subr.bf16.mxu0 0
      %3666 = vmatpush1.bf16.msra.mxu0 0
      %3667 = vmatprep.subr.bf16.mxu0 0
      %3668 = vmatpush1.bf16.msra.mxu0 0
      %3669 = vmatprep.subr.bf16.mxu0 0
      %3670 = vmatpush1.bf16.msra.mxu0 0
      %3671 = vmatprep.subr.bf16.mxu0 0
      %3672 = vmatpush1.bf16.msra.mxu0 0
      %3673 = vmatprep.subr.bf16.mxu0 0
      %3674 = vmatpush1.bf16.msra.mxu0 0
      %3675 = vmatprep.subr.bf16.mxu0 0
      %3676 = vmatpush1.bf16.msra.mxu0 0
      %3677 = vmatprep.subr.bf16.mxu0 0
      %3678 = vmatpush1.bf16.msra.mxu0 0
      %3679 = vmatprep.subr.bf16.mxu0 0
      %3680 = vmatpush1.bf16.msra.mxu0 0
      %3681 = vmatprep.subr.bf16.mxu0 0
      %3682 = vmatpush1.bf16.msra.mxu0 0
      %3683 = vmatprep.subr.bf16.mxu0 0
      %3684 = vmatpush1.bf16.msra.mxu0 0
      %3685 = vmatprep.subr.bf16.mxu0 0
      %3686 = vmatpush1.bf16.msra.mxu0 0
      %3687 = vmatprep.subr.bf16.mxu0 0
      %3688 = vmatpush1.bf16.msra.mxu0 0
      %3689 = vmatprep.subr.bf16.mxu0 0
      %3690 = vmatpush1.bf16.msra.mxu0 0
      %3691 = vmatprep.subr.bf16.mxu0 0
      %3692 = vmatpush1.bf16.msra.mxu0 0
      %3693 = vmatprep.mubr.bf16.mxu0 0
      %3694 = vmatmul.mubr.bf16.gmra.mrb[0].mxu0 %v3587
      %v3695 = vpop.f32.mrb[0].mxu0
      %v3696 = vadd.f32 %v3382, %v3695
      %v3697 = vpop.f32.mrb[0].mxu0
      %v3698 = vpop.f32.mrb[0].mxu0
      %v3699 = vadd.f32 %v3385, %v3698
      %v3700 = vpop.f32.mrb[0].mxu0
      %3701 = vmatprep.mubr.bf16.mxu0 0
      %3702 = vmatmul.mubr.bf16.gmra.mrb[0].mxu0 %v3590
      %v3703 = vpop.f32.mrb[0].mxu0
      %v3704 = vadd.f32 %v3390, %v3703
      %v3705 = vpop.f32.mrb[0].mxu0
      %v3706 = vpop.f32.mrb[0].mxu0
      %v3707 = vadd.f32 %v3393, %v3706
      %v3708 = vpop.f32.mrb[0].mxu0
      %3709 = vmatprep.mubr.bf16.mxu0 0
      %3710 = vmatmul.mubr.bf16.gmra.mrb[0].mxu0 %v3593
      %v3711 = vpop.f32.mrb[0].mxu0
      %v3712 = vadd.f32 %v3398, %v3711
      %v3713 = vpop.f32.mrb[0].mxu0
      %v3714 = vpop.f32.mrb[0].mxu0
      %v3715 = vadd.f32 %v3401, %v3714
      %v3716 = vpop.f32.mrb[0].mxu0
      %3717 = vmatprep.mubr.bf16.mxu0 0
      %3718 = vmatmul.mubr.bf16.gmra.mrb[0].mxu0 %v3596
      %v3719 = vpop.f32.mrb[0].mxu0
      %v3720 = vadd.f32 %v3406, %v3719
      %v3721 = vpop.f32.mrb[0].mxu0
      %v3722 = vpop.f32.mrb[0].mxu0
      %v3723 = vadd.f32 %v3409, %v3722
      %v3724 = vpop.f32.mrb[0].mxu0
      %3725 = vmatprep.mubr.bf16.mxu0 0
      %3726 = vmatmul.mubr.bf16.gmra.mrb[0].mxu0 %v3599
      %v3727 = vpop.f32.mrb[0].mxu0
      %v3728 = vadd.f32 %v3414, %v3727
      %v3729 = vpop.f32.mrb[0].mxu0
      %v3730 = vpop.f32.mrb[0].mxu0
      %v3731 = vadd.f32 %v3417, %v3730
      %v3732 = vpop.f32.mrb[0].mxu0
      %3733 = vmatprep.mubr.bf16.mxu0 0
      %3734 = vmatmul.mubr.bf16.gmra.mrb[0].mxu0 %v3602
      %v3735 = vpop.f32.mrb[0].mxu0
      %v3736 = vadd.f32 %v3422, %v3735
      %v3737 = vpop.f32.mrb[0].mxu0
      %v3738 = vpop.f32.mrb[0].mxu0
      %v3739 = vadd.f32 %v3425, %v3738
      %v3740 = vpop.f32.mrb[0].mxu0
      %3741 = vmatprep.mubr.bf16.mxu0 0
      %3742 = vmatmul.mubr.bf16.gmra.mrb[0].mxu0 %v3605
      %v3743 = vpop.f32.mrb[0].mxu0
      %v3744 = vadd.f32 %v3430, %v3743
      %v3745 = vpop.f32.mrb[0].mxu0
      %v3746 = vpop.f32.mrb[0].mxu0
      %v3747 = vadd.f32 %v3433, %v3746
      %v3748 = vpop.f32.mrb[0].mxu0
      %3749 = vmatprep.mubr.bf16.mxu0 0
      %3750 = vmatmul.mubr.bf16.gmra.mrb[0].mxu0 %v3608
      %v3751 = vpop.f32.mrb[0].mxu0
      %v3752 = vadd.f32 %v3438, %v3751
      %v3753 = vpop.f32.mrb[0].mxu0
      %v3754 = vpop.f32.mrb[0].mxu0
      %v3755 = vadd.f32 %v3441, %v3754
      %v3756 = vpop.f32.mrb[0].mxu0
      %3757 = vmatprep.mubr.bf16.mxu0 0
      %3758 = vmatmul.mubr.bf16.gmra.mrb[0].mxu0 %v3611
      %v3759 = vpop.f32.mrb[0].mxu0
      %v3760 = vadd.f32 %v3446, %v3759
      %v3761 = vpop.f32.mrb[0].mxu0
      %v3762 = vpop.f32.mrb[0].mxu0
      %v3763 = vadd.f32 %v3449, %v3762
      %v3764 = vpop.f32.mrb[0].mxu0
      %3765 = vmatprep.mubr.bf16.mxu0 0
      %3766 = vmatmul.mubr.bf16.gmra.mrb[0].mxu0 %v3614
      %v3767 = vpop.f32.mrb[0].mxu0
      %v3768 = vadd.f32 %v3454, %v3767
      %v3769 = vpop.f32.mrb[0].mxu0
      %v3770 = vpop.f32.mrb[0].mxu0
      %v3771 = vadd.f32 %v3457, %v3770
      %v3772 = vpop.f32.mrb[0].mxu0
      %3773 = vmatprep.mubr.bf16.mxu0 0
      %3774 = vmatmul.mubr.bf16.gmra.mrb[0].mxu0 %v3617
      %v3775 = vpop.f32.mrb[0].mxu0
      %v3776 = vadd.f32 %v3462, %v3775
      %v3777 = vpop.f32.mrb[0].mxu0
      %v3778 = vpop.f32.mrb[0].mxu0
      %v3779 = vadd.f32 %v3465, %v3778
      %v3780 = vpop.f32.mrb[0].mxu0
      %3781 = vmatprep.mubr.bf16.mxu0 0
      %3782 = vmatmul.mubr.bf16.gmra.mrb[0].mxu0 %v3620
      %v3783 = vpop.f32.mrb[0].mxu0
      %v3784 = vadd.f32 %v3470, %v3783
      %v3785 = vpop.f32.mrb[0].mxu0
      %v3786 = vpop.f32.mrb[0].mxu0
      %v3787 = vadd.f32 %v3473, %v3786
      %v3788 = vpop.f32.mrb[0].mxu0
      %3789 = vmatprep.mubr.bf16.mxu0 0
      %3790 = vmatmul.mubr.bf16.gmra.mrb[0].mxu0 %v3623
      %v3791 = vpop.f32.mrb[0].mxu0
      %v3792 = vadd.f32 %v3478, %v3791
      %v3793 = vpop.f32.mrb[0].mxu0
      %v3794 = vpop.f32.mrb[0].mxu0
      %v3795 = vadd.f32 %v3481, %v3794
      %v3796 = vpop.f32.mrb[0].mxu0
      %3797 = vmatprep.mubr.bf16.mxu0 0
      %3798 = vmatmul.mubr.bf16.gmra.mrb[0].mxu0 %v3626
      %v3799 = vpop.f32.mrb[0].mxu0
      %v3800 = vadd.f32 %v3486, %v3799
      %v3801 = vpop.f32.mrb[0].mxu0
      %v3802 = vpop.f32.mrb[0].mxu0
      %v3803 = vadd.f32 %v3489, %v3802
      %v3804 = vpop.f32.mrb[0].mxu0
      %3805 = vmatprep.mubr.bf16.mxu0 0
      %3806 = vmatmul.mubr.bf16.gmra.mrb[0].mxu0 %v3629
      %v3807 = vpop.f32.mrb[0].mxu0
      %v3808 = vadd.f32 %v3494, %v3807
      %v3809 = vpop.f32.mrb[0].mxu0
      %v3810 = vpop.f32.mrb[0].mxu0
      %v3811 = vadd.f32 %v3497, %v3810
      %v3812 = vpop.f32.mrb[0].mxu0
      %3813 = vmatprep.mubr.bf16.mxu0 0
      %3814 = vmatmul.mubr.bf16.gmra.mrb[0].mxu0 %v3632
      %v3815 = vpop.f32.mrb[0].mxu0
      %v3816 = vadd.f32 %v3502, %v3815
      %v3817 = vpop.f32.mrb[0].mxu0
      %v3818 = vpop.f32.mrb[0].mxu0
      %v3819 = vadd.f32 %v3505, %v3818
      %v3820 = vpop.f32.mrb[0].mxu0
      %3821 = vmatprep.mubr.bf16.mxu0 0
      %3822 = vmatmul.mubr.bf16.gmra.mrb[0].mxu0 %v3635
      %v3823 = vpop.f32.mrb[0].mxu0
      %v3824 = vadd.f32 %v3510, %v3823
      %v3825 = vpop.f32.mrb[0].mxu0
      %v3826 = vpop.f32.mrb[0].mxu0
      %v3827 = vadd.f32 %v3513, %v3826
      %v3828 = vpop.f32.mrb[0].mxu0
      %3829 = vmatprep.mubr.bf16.mxu0 0
      %3830 = vmatmul.mubr.bf16.gmra.mrb[0].mxu0 %v3638
      %v3831 = vpop.f32.mrb[0].mxu0
      %v3832 = vadd.f32 %v3518, %v3831
      %v3833 = vpop.f32.mrb[0].mxu0
      %v3834 = vpop.f32.mrb[0].mxu0
      %v3835 = vadd.f32 %v3521, %v3834
      %v3836 = vpop.f32.mrb[0].mxu0
      %3837 = vmatprep.mubr.bf16.mxu0 0
      %3838 = vmatmul.mubr.bf16.gmra.mrb[0].mxu0 %v3641
      %v3839 = vpop.f32.mrb[0].mxu0
      %v3840 = vadd.f32 %v3526, %v3839
      %v3841 = vpop.f32.mrb[0].mxu0
      %v3842 = vpop.f32.mrb[0].mxu0
      %v3843 = vadd.f32 %v3529, %v3842
      %v3844 = vpop.f32.mrb[0].mxu0
      %3845 = vmatprep.mubr.bf16.mxu0 0
      %3846 = vmatmul.mubr.bf16.gmra.mrb[0].mxu0 %v3644
      %v3847 = vpop.f32.mrb[0].mxu0
      %v3848 = vadd.f32 %v3534, %v3847
      %v3849 = vpop.f32.mrb[0].mxu0
      %v3850 = vpop.f32.mrb[0].mxu0
      %v3851 = vadd.f32 %v3537, %v3850
      %v3852 = vpop.f32.mrb[0].mxu0
      %3853 = vmatprep.mubr.bf16.mxu0 0
      %3854 = vmatmul.mubr.bf16.gmra.mrb[0].mxu0 %v3647
      %v3855 = vpop.f32.mrb[0].mxu0
      %v3856 = vadd.f32 %v3542, %v3855
      %v3857 = vpop.f32.mrb[0].mxu0
      %v3858 = vpop.f32.mrb[0].mxu0
      %v3859 = vadd.f32 %v3545, %v3858
      %v3860 = vpop.f32.mrb[0].mxu0
      %3861 = vmatprep.mubr.bf16.mxu0 0
      %3862 = vmatmul.mubr.bf16.gmra.mrb[0].mxu0 %v3650
      %v3863 = vpop.f32.mrb[0].mxu0
      %v3864 = vadd.f32 %v3550, %v3863
      %v3865 = vpop.f32.mrb[0].mxu0
      %v3866 = vpop.f32.mrb[0].mxu0
      %v3867 = vadd.f32 %v3553, %v3866
      %v3868 = vpop.f32.mrb[0].mxu0
      %3869 = vmatprep.mubr.bf16.mxu0 0
      %3870 = vmatmul.mubr.bf16.gmra.mrb[0].mxu0 %v3653
      %v3871 = vpop.f32.mrb[0].mxu0
      %v3872 = vadd.f32 %v3558, %v3871
      %v3873 = vpop.f32.mrb[0].mxu0
      %v3874 = vpop.f32.mrb[0].mxu0
      %v3875 = vadd.f32 %v3561, %v3874
      %v3876 = vpop.f32.mrb[0].mxu0
      %3877 = vmatprep.mubr.bf16.mxu0 0
      %3878 = vmatmul.mubr.bf16.gmra.mrb[0].mxu0 %v3656
      %v3879 = vpop.f32.mrb[0].mxu0
      %v3880 = vadd.f32 %v3566, %v3879
      %v3881 = vpop.f32.mrb[0].mxu0
      %v3882 = vpop.f32.mrb[0].mxu0
      %v3883 = vadd.f32 %v3569, %v3882
      %v3884 = vpop.f32.mrb[0].mxu0
      %3885 = vmatprep.mubr.bf16.mxu0 0
      %3886 = vmatmul.mubr.bf16.gmra.mrb[0].mxu0 %v3659
      %v3887 = vpop.f32.mrb[0].mxu0
      %v3888 = vadd.f32 %v3574, %v3887
      %v3889 = vpop.f32.mrb[0].mxu0
      %v3890 = vpop.f32.mrb[0].mxu0
      %v3891 = vadd.f32 %v3577, %v3890
      %v3892 = vpop.f32.mrb[0].mxu0
      %3893 = vdwg.mxu0
      %v3907 = vrot.slane %v2830, 6
      %v3908 = vrot.slane %v2831, 6
      %v3909 = vsel %vm2869, %v3907, %v3908
      %v3910 = vrot.slane %v2832, 6
      %v3911 = vsel %vm2869, %v3908, %v3910
      %v3912 = vrot.slane %v2833, 6
      %v3913 = vsel %vm2869, %v3910, %v3912
      %v3914 = vrot.slane %v2834, 6
      %v3915 = vsel %vm2869, %v3912, %v3914
      %v3916 = vrot.slane %v2835, 6
      %v3917 = vsel %vm2869, %v3914, %v3916
      %v3918 = vrot.slane %v2836, 6
      %v3919 = vsel %vm2869, %v3916, %v3918
      %v3920 = vrot.slane %v2837, 6
      %v3921 = vsel %vm2869, %v3918, %v3920
      %v3922 = vrot.slane %v2838, 6
      %v3923 = vsel %vm2869, %v3920, %v3922
      %v3924 = vrot.slane %v2839, 6
      %v3925 = vsel %vm2869, %v3922, %v3924
      %v3926 = vrot.slane %v2840, 6
      %v3927 = vsel %vm2869, %v3924, %v3926
      %v3928 = vrot.slane %v2841, 6
      %v3929 = vsel %vm2869, %v3926, %v3928
      %v3930 = vrot.slane %v2842, 6
      %v3931 = vsel %vm2869, %v3928, %v3930
      %v3945 = vmul.f32 %v3907, 0.0
      %v3946 = vmul.f32 %v2489, %v3909
      %v3947 = vmul.f32 %v2453, %v3911
      %v3948 = vmul.f32 %v2455, %v3913
      %v3949 = vmul.f32 %v2457, %v3915
      %v3950 = vmul.f32 %v2459, %v3917
      %v3951 = vmul.f32 %v2461, %v3919
      %v3952 = vmul.f32 %v2463, %v3921
      %v3953 = vmul.f32 %v2465, %v3923
      %v3954 = vmul.f32 %v2467, %v3925
      %v3955 = vmul.f32 %v2469, %v3927
      %v3956 = vmul.f32 %v2471, %v3929
      %v3957 = vmul.f32 %v2473, %v3931
      %v3958 = vrot.slane %v2830, 4
      %v3959 = vrot.slane %v2831, 4
      %v3960 = vsel %vm1234, %v3958, %v3959
      %v3961 = vrot.slane %v2832, 4
      %v3962 = vsel %vm1234, %v3959, %v3961
      %v3963 = vrot.slane %v2833, 4
      %v3964 = vsel %vm1234, %v3961, %v3963
      %v3965 = vrot.slane %v2834, 4
      %v3966 = vsel %vm1234, %v3963, %v3965
      %v3967 = vrot.slane %v2835, 4
      %v3968 = vsel %vm1234, %v3965, %v3967
      %v3969 = vrot.slane %v2836, 4
      %v3970 = vsel %vm1234, %v3967, %v3969
      %v3971 = vrot.slane %v2837, 4
      %v3972 = vsel %vm1234, %v3969, %v3971
      %v3973 = vrot.slane %v2838, 4
      %v3974 = vsel %vm1234, %v3971, %v3973
      %v3975 = vrot.slane %v2839, 4
      %v3976 = vsel %vm1234, %v3973, %v3975
      %v3977 = vrot.slane %v2840, 4
      %v3978 = vsel %vm1234, %v3975, %v3977
      %v3979 = vrot.slane %v2841, 4
      %v3980 = vsel %vm1234, %v3977, %v3979
      %v3981 = vrot.slane %v2842, 4
      %v3982 = vsel %vm1234, %v3979, %v3981
      %v3996 = vmul.f32 %v2383, %v3958
      %v3997 = vmul.f32 %v2347, %v3960
      %v3998 = vmul.f32 %v2349, %v3962
      %v3999 = vmul.f32 %v2351, %v3964
      %v4000 = vmul.f32 %v2353, %v3966
      %v4001 = vmul.f32 %v2355, %v3968
      %v4002 = vmul.f32 %v2357, %v3970
      %v4003 = vmul.f32 %v2359, %v3972
      %v4004 = vmul.f32 %v2361, %v3974
      %v4005 = vmul.f32 %v2363, %v3976
      %v4006 = vmul.f32 %v2365, %v3978
      %v4007 = vmul.f32 %v2367, %v3980
      %v4008 = vmul.f32 %v2385, %v3982
      %v4009 = vrot.slane %v2541, 1
      %v4010 = vsel %vm2384, %v3083, %v4009
      %v4011 = vrot.slane %v2507, 1
      %v4012 = vsel %vm2384, %v4009, %v4011
      %v4013 = vrot.slane %v2509, 1
      %v4014 = vsel %vm2384, %v4011, %v4013
      %v4015 = vrot.slane %v2511, 1
      %v4016 = vsel %vm2384, %v4013, %v4015
      %v4017 = vrot.slane %v2513, 1
      %v4018 = vsel %vm2384, %v4015, %v4017
      %v4019 = vrot.slane %v2515, 1
      %v4020 = vsel %vm2384, %v4017, %v4019
      %v4021 = vrot.slane %v2517, 1
      %v4022 = vsel %vm2384, %v4019, %v4021
      %v4023 = vrot.slane %v2519, 1
      %v4024 = vsel %vm2384, %v4021, %v4023
      %v4025 = vrot.slane %v2521, 1
      %v4026 = vsel %vm2384, %v4023, %v4025
      %v4027 = vrot.slane %v2523, 1
      %v4028 = vsel %vm2384, %v4025, %v4027
      %v4029 = vrot.slane %v2525, 1
      %v4030 = vsel %vm2384, %v4027, %v4029
      %v4031 = vrot.slane %v2527, 1
      %v4032 = vsel %vm2384, %v4029, %v4031
      %v4059 = vrot.slane %v3945, 6
      %v4060 = vrot.slane %v3946, 6
      %v4061 = vsel %vm2869, %v4059, %v4060
      %v4062 = vrot.slane %v3947, 6
      %v4063 = vsel %vm2869, %v4060, %v4062
      %v4064 = vrot.slane %v3948, 6
      %v4065 = vsel %vm2869, %v4062, %v4064
      %v4066 = vrot.slane %v3949, 6
      %v4067 = vsel %vm2869, %v4064, %v4066
      %v4068 = vrot.slane %v3950, 6
      %v4069 = vsel %vm2869, %v4066, %v4068
      %v4070 = vrot.slane %v3951, 6
      %v4071 = vsel %vm2869, %v4068, %v4070
      %v4072 = vrot.slane %v3952, 6
      %v4073 = vsel %vm2869, %v4070, %v4072
      %v4074 = vrot.slane %v3953, 6
      %v4075 = vsel %vm2869, %v4072, %v4074
      %v4076 = vrot.slane %v3954, 6
      %v4077 = vsel %vm2869, %v4074, %v4076
      %v4078 = vrot.slane %v3955, 6
      %v4079 = vsel %vm2869, %v4076, %v4078
      %v4080 = vrot.slane %v3956, 6
      %v4081 = vsel %vm2869, %v4078, %v4080
      %v4082 = vrot.slane %v3957, 6
      %v4083 = vsel %vm2869, %v4080, %v4082
      %v4097 = vrot.slane %v2436, 3
      %v4098 = vrot.slane %v2402, 3
      %v4099 = vsel %vm1235, %v4097, %v4098
      %v4100 = vrot.slane %v2404, 3
      %v4101 = vsel %vm1235, %v4098, %v4100
      %v4102 = vrot.slane %v2406, 3
      %v4103 = vsel %vm1235, %v4100, %v4102
      %v4104 = vrot.slane %v2408, 3
      %v4105 = vsel %vm1235, %v4102, %v4104
      %v4106 = vrot.slane %v2410, 3
      %v4107 = vsel %vm1235, %v4104, %v4106
      %v4108 = vrot.slane %v2412, 3
      %v4109 = vsel %vm1235, %v4106, %v4108
      %v4110 = vrot.slane %v2414, 3
      %v4111 = vsel %vm1235, %v4108, %v4110
      %v4112 = vrot.slane %v2416, 3
      %v4113 = vsel %vm1235, %v4110, %v4112
      %v4114 = vrot.slane %v2418, 3
      %v4115 = vsel %vm1235, %v4112, %v4114
      %v4116 = vrot.slane %v2420, 3
      %v4117 = vsel %vm1235, %v4114, %v4116
      %v4118 = vrot.slane %v2422, 3
      %v4119 = vsel %vm1235, %v4116, %v4118
      %v4120 = vrot.slane %v2437, 3
      %v4121 = vsel %vm1235, %v4118, %v4120
      %v4135 = vsel %vm1234, %v4031, %v4059
      %v4136 = vsel %vm1234, %v4120, %v3996
      %v4137 = vpack.c.bf16 %v4012, %v4010
      %v4138 = vpack.c.bf16 %v4016, %v4014
      %v4139 = vpack.c.bf16 %v4020, %v4018
      %v4140 = vpack.c.bf16 %v4024, %v4022
      %v4141 = vpack.c.bf16 %v4028, %v4026
      %v4142 = vpack.c.bf16 %v4032, %v4030
      %v4143 = vpack.c.bf16 %v4061, %v4135
      %v4144 = vpack.c.bf16 %v4065, %v4063
      %v4145 = vpack.c.bf16 %v4069, %v4067
      %v4146 = vpack.c.bf16 %v4073, %v4071
      %v4147 = vpack.c.bf16 %v4077, %v4075
      %v4148 = vpack.c.bf16 %v4081, %v4079
      %v4149 = vpack.c.bf16 %v4099, %v4083
      %v4150 = vpack.c.bf16 %v4103, %v4101
      %v4151 = vpack.c.bf16 %v4107, %v4105
      %v4152 = vpack.c.bf16 %v4111, %v4109
      %v4153 = vpack.c.bf16 %v4115, %v4113
      %v4154 = vpack.c.bf16 %v4119, %v4117
      %v4155 = vpack.c.bf16 %v4136, %v4121
      %v4156 = vpack.c.bf16 %v3998, %v3997
      %v4157 = vpack.c.bf16 %v4000, %v3999
      %v4158 = vpack.c.bf16 %v4002, %v4001
      %v4159 = vpack.c.bf16 %v4004, %v4003
      %v4160 = vpack.c.bf16 %v4006, %v4005
      %v4161 = vpack.c.bf16 %v4008, %v4007
      %v4162 = vld [vmem:[%s3 + $0x10] sm:$0xf]
      %v4163 = vld [vmem:[%s3 + $0x14] sm:$0xf]
      %v4166 = vunpack.c.l.b16 %v4162
      %v4167 = vunpack.c.l.b16 %v4163
      %v4168 = vpack.c.b16 %v4167, %v4166
      %v4171 = vsel %vm3271, %v4137, 0
      %v4174 = vsel %vm3271, %v4138, 0
      %v4177 = vsel %vm3271, %v4139, 0
      %v4180 = vsel %vm3271, %v4140, 0
      %v4183 = vsel %vm3271, %v4141, 0
      %v4186 = vsel %vm3271, %v4142, 0
      %v4189 = vsel %vm3271, %v4143, 0
      %v4192 = vsel %vm3271, %v4144, 0
      %v4195 = vsel %vm3271, %v4145, 0
      %v4198 = vsel %vm3271, %v4146, 0
      %v4201 = vsel %vm3271, %v4147, 0
      %v4204 = vsel %vm3271, %v4148, 0
      %v4207 = vsel %vm3271, %v4149, 0
      %v4210 = vsel %vm3271, %v4150, 0
      %v4213 = vsel %vm3271, %v4151, 0
      %v4216 = vsel %vm3271, %v4152, 0
      %v4219 = vsel %vm3271, %v4153, 0
      %v4222 = vsel %vm3271, %v4154, 0
      %v4225 = vsel %vm3271, %v4155, 0
      %v4228 = vsel %vm3271, %v4156, 0
      %v4231 = vsel %vm3271, %v4157, 0
      %v4234 = vsel %vm3271, %v4158, 0
      %v4237 = vsel %vm3271, %v4159, 0
      %v4240 = vsel %vm3271, %v4160, 0
      %v4243 = vsel %vm3271, %v4161, 0
      %4245 = vmatprep.subr.bf16.mxu0 0
      %4246 = vmatpush1.bf16.msra.mxu0 %v4168
      %4247 = vmatprep.subr.bf16.mxu0 0
      %4248 = vmatpush1.bf16.msra.mxu0 0
      %4249 = vmatprep.subr.bf16.mxu0 0
      %4250 = vmatpush1.bf16.msra.mxu0 0
      %4251 = vmatprep.subr.bf16.mxu0 0
      %4252 = vmatpush1.bf16.msra.mxu0 0
      %4253 = vmatprep.subr.bf16.mxu0 0
      %4254 = vmatpush1.bf16.msra.mxu0 0
      %4255 = vmatprep.subr.bf16.mxu0 0
      %4256 = vmatpush1.bf16.msra.mxu0 0
      %4257 = vmatprep.subr.bf16.mxu0 0
      %4258 = vmatpush1.bf16.msra.mxu0 0
      %4259 = vmatprep.subr.bf16.mxu0 0
      %4260 = vmatpush1.bf16.msra.mxu0 0
      %4261 = vmatprep.subr.bf16.mxu0 0
      %4262 = vmatpush1.bf16.msra.mxu0 0
      %4263 = vmatprep.subr.bf16.mxu0 0
      %4264 = vmatpush1.bf16.msra.mxu0 0
      %4265 = vmatprep.subr.bf16.mxu0 0
      %4266 = vmatpush1.bf16.msra.mxu0 0
      %4267 = vmatprep.subr.bf16.mxu0 0
      %4268 = vmatpush1.bf16.msra.mxu0 0
      %4269 = vmatprep.subr.bf16.mxu0 0
      %4270 = vmatpush1.bf16.msra.mxu0 0
      %4271 = vmatprep.subr.bf16.mxu0 0
      %4272 = vmatpush1.bf16.msra.mxu0 0
      %4273 = vmatprep.subr.bf16.mxu0 0
      %4274 = vmatpush1.bf16.msra.mxu0 0
      %4275 = vmatprep.subr.bf16.mxu0 0
      %4276 = vmatpush1.bf16.msra.mxu0 0
      %4277 = vmatprep.mubr.bf16.mxu0 0
      %4278 = vmatmul.mubr.bf16.gmra.mrb[0].mxu0 %v4171
      %v4279 = vpop.f32.mrb[0].mxu0
      %v4280 = vadd.f32 0.0, %v4279
      %v4281 = vpop.f32.mrb[0].mxu0
      %v4282 = vpop.f32.mrb[0].mxu0
      %v4283 = vadd.f32 0.0, %v4282
      %v4284 = vpop.f32.mrb[0].mxu0
      %4285 = vmatprep.mubr.bf16.mxu0 0
      %4286 = vmatmul.mubr.bf16.gmra.mrb[0].mxu0 %v4174
      %v4287 = vpop.f32.mrb[0].mxu0
      %v4288 = vadd.f32 0.0, %v4287
      %v4289 = vpop.f32.mrb[0].mxu0
      %v4290 = vpop.f32.mrb[0].mxu0
      %v4291 = vadd.f32 0.0, %v4290
      %v4292 = vpop.f32.mrb[0].mxu0
      %4293 = vmatprep.mubr.bf16.mxu0 0
      %4294 = vmatmul.mubr.bf16.gmra.mrb[0].mxu0 %v4177
      %v4295 = vpop.f32.mrb[0].mxu0
      %v4296 = vadd.f32 0.0, %v4295
      %v4297 = vpop.f32.mrb[0].mxu0
      %v4298 = vpop.f32.mrb[0].mxu0
      %v4299 = vadd.f32 0.0, %v4298
      %v4300 = vpop.f32.mrb[0].mxu0
      %4301 = vmatprep.mubr.bf16.mxu0 0
      %4302 = vmatmul.mubr.bf16.gmra.mrb[0].mxu0 %v4180
      %v4303 = vpop.f32.mrb[0].mxu0
      %v4304 = vadd.f32 0.0, %v4303
      %v4305 = vpop.f32.mrb[0].mxu0
      %v4306 = vpop.f32.mrb[0].mxu0
      %v4307 = vadd.f32 0.0, %v4306
      %v4308 = vpop.f32.mrb[0].mxu0
      %4309 = vmatprep.mubr.bf16.mxu0 0
      %4310 = vmatmul.mubr.bf16.gmra.mrb[0].mxu0 %v4183
      %v4311 = vpop.f32.mrb[0].mxu0
      %v4312 = vadd.f32 0.0, %v4311
      %v4313 = vpop.f32.mrb[0].mxu0
      %v4314 = vpop.f32.mrb[0].mxu0
      %v4315 = vadd.f32 0.0, %v4314
      %v4316 = vpop.f32.mrb[0].mxu0
      %4317 = vmatprep.mubr.bf16.mxu0 0
      %4318 = vmatmul.mubr.bf16.gmra.mrb[0].mxu0 %v4186
      %v4319 = vpop.f32.mrb[0].mxu0
      %v4320 = vadd.f32 0.0, %v4319
      %v4321 = vpop.f32.mrb[0].mxu0
      %v4322 = vpop.f32.mrb[0].mxu0
      %v4323 = vadd.f32 0.0, %v4322
      %v4324 = vpop.f32.mrb[0].mxu0
      %4325 = vmatprep.mubr.bf16.mxu0 0
      %4326 = vmatmul.mubr.bf16.gmra.mrb[0].mxu0 %v4189
      %v4327 = vpop.f32.mrb[0].mxu0
      %v4328 = vadd.f32 0.0, %v4327
      %v4329 = vpop.f32.mrb[0].mxu0
      %v4330 = vpop.f32.mrb[0].mxu0
      %v4331 = vadd.f32 0.0, %v4330
      %v4332 = vpop.f32.mrb[0].mxu0
      %4333 = vmatprep.mubr.bf16.mxu0 0
      %4334 = vmatmul.mubr.bf16.gmra.mrb[0].mxu0 %v4192
      %v4335 = vpop.f32.mrb[0].mxu0
      %v4336 = vadd.f32 0.0, %v4335
      %v4337 = vpop.f32.mrb[0].mxu0
      %v4338 = vpop.f32.mrb[0].mxu0
      %v4339 = vadd.f32 0.0, %v4338
      %v4340 = vpop.f32.mrb[0].mxu0
      %4341 = vmatprep.mubr.bf16.mxu0 0
      %4342 = vmatmul.mubr.bf16.gmra.mrb[0].mxu0 %v4195
      %v4343 = vpop.f32.mrb[0].mxu0
      %v4344 = vadd.f32 0.0, %v4343
      %v4345 = vpop.f32.mrb[0].mxu0
      %v4346 = vpop.f32.mrb[0].mxu0
      %v4347 = vadd.f32 0.0, %v4346
      %v4348 = vpop.f32.mrb[0].mxu0
      %4349 = vmatprep.mubr.bf16.mxu0 0
      %4350 = vmatmul.mubr.bf16.gmra.mrb[0].mxu0 %v4198
      %v4351 = vpop.f32.mrb[0].mxu0
      %v4352 = vadd.f32 0.0, %v4351
      %v4353 = vpop.f32.mrb[0].mxu0
      %v4354 = vpop.f32.mrb[0].mxu0
      %v4355 = vadd.f32 0.0, %v4354
      %v4356 = vpop.f32.mrb[0].mxu0
      %4357 = vmatprep.mubr.bf16.mxu0 0
      %4358 = vmatmul.mubr.bf16.gmra.mrb[0].mxu0 %v4201
      %v4359 = vpop.f32.mrb[0].mxu0
      %v4360 = vadd.f32 0.0, %v4359
      %v4361 = vpop.f32.mrb[0].mxu0
      %v4362 = vpop.f32.mrb[0].mxu0
      %v4363 = vadd.f32 0.0, %v4362
      %v4364 = vpop.f32.mrb[0].mxu0
      %4365 = vmatprep.mubr.bf16.mxu0 0
      %4366 = vmatmul.mubr.bf16.gmra.mrb[0].mxu0 %v4204
      %v4367 = vpop.f32.mrb[0].mxu0
      %v4368 = vadd.f32 0.0, %v4367
      %v4369 = vpop.f32.mrb[0].mxu0
      %v4370 = vpop.f32.mrb[0].mxu0
      %v4371 = vadd.f32 0.0, %v4370
      %v4372 = vpop.f32.mrb[0].mxu0
      %4373 = vmatprep.mubr.bf16.mxu0 0
      %4374 = vmatmul.mubr.bf16.gmra.mrb[0].mxu0 %v4207
      %v4375 = vpop.f32.mrb[0].mxu0
      %v4376 = vadd.f32 0.0, %v4375
      %v4377 = vpop.f32.mrb[0].mxu0
      %v4378 = vpop.f32.mrb[0].mxu0
      %v4379 = vadd.f32 0.0, %v4378
      %v4380 = vpop.f32.mrb[0].mxu0
      %4381 = vmatprep.mubr.bf16.mxu0 0
      %4382 = vmatmul.mubr.bf16.gmra.mrb[0].mxu0 %v4210
      %v4383 = vpop.f32.mrb[0].mxu0
      %v4384 = vadd.f32 0.0, %v4383
      %v4385 = vpop.f32.mrb[0].mxu0
      %v4386 = vpop.f32.mrb[0].mxu0
      %v4387 = vadd.f32 0.0, %v4386
      %v4388 = vpop.f32.mrb[0].mxu0
      %4389 = vmatprep.mubr.bf16.mxu0 0
      %4390 = vmatmul.mubr.bf16.gmra.mrb[0].mxu0 %v4213
      %v4391 = vpop.f32.mrb[0].mxu0
      %v4392 = vadd.f32 0.0, %v4391
      %v4393 = vpop.f32.mrb[0].mxu0
      %v4394 = vpop.f32.mrb[0].mxu0
      %v4395 = vadd.f32 0.0, %v4394
      %v4396 = vpop.f32.mrb[0].mxu0
      %4397 = vmatprep.mubr.bf16.mxu0 0
      %4398 = vmatmul.mubr.bf16.gmra.mrb[0].mxu0 %v4216
      %v4399 = vpop.f32.mrb[0].mxu0
      %v4400 = vadd.f32 0.0, %v4399
      %v4401 = vpop.f32.mrb[0].mxu0
      %v4402 = vpop.f32.mrb[0].mxu0
      %v4403 = vadd.f32 0.0, %v4402
      %v4404 = vpop.f32.mrb[0].mxu0
      %4405 = vmatprep.mubr.bf16.mxu0 0
      %4406 = vmatmul.mubr.bf16.gmra.mrb[0].mxu0 %v4219
      %v4407 = vpop.f32.mrb[0].mxu0
      %v4408 = vadd.f32 0.0, %v4407
      %v4409 = vpop.f32.mrb[0].mxu0
      %v4410 = vpop.f32.mrb[0].mxu0
      %v4411 = vadd.f32 0.0, %v4410
      %v4412 = vpop.f32.mrb[0].mxu0
      %4413 = vmatprep.mubr.bf16.mxu0 0
      %4414 = vmatmul.mubr.bf16.gmra.mrb[0].mxu0 %v4222
      %v4415 = vpop.f32.mrb[0].mxu0
      %v4416 = vadd.f32 0.0, %v4415
      %v4417 = vpop.f32.mrb[0].mxu0
      %v4418 = vpop.f32.mrb[0].mxu0
      %v4419 = vadd.f32 0.0, %v4418
      %v4420 = vpop.f32.mrb[0].mxu0
      %4421 = vmatprep.mubr.bf16.mxu0 0
      %4422 = vmatmul.mubr.bf16.gmra.mrb[0].mxu0 %v4225
      %v4423 = vpop.f32.mrb[0].mxu0
      %v4424 = vadd.f32 0.0, %v4423
      %v4425 = vpop.f32.mrb[0].mxu0
      %v4426 = vpop.f32.mrb[0].mxu0
      %v4427 = vadd.f32 0.0, %v4426
      %v4428 = vpop.f32.mrb[0].mxu0
      %4429 = vmatprep.mubr.bf16.mxu0 0
      %4430 = vmatmul.mubr.bf16.gmra.mrb[0].mxu0 %v4228
      %v4431 = vpop.f32.mrb[0].mxu0
      %v4432 = vadd.f32 0.0, %v4431
      %v4433 = vpop.f32.mrb[0].mxu0
      %v4434 = vpop.f32.mrb[0].mxu0
      %v4435 = vadd.f32 0.0, %v4434
      %v4436 = vpop.f32.mrb[0].mxu0
      %4437 = vmatprep.mubr.bf16.mxu0 0
      %4438 = vmatmul.mubr.bf16.gmra.mrb[0].mxu0 %v4231
      %v4439 = vpop.f32.mrb[0].mxu0
      %v4440 = vadd.f32 0.0, %v4439
      %v4441 = vpop.f32.mrb[0].mxu0
      %v4442 = vpop.f32.mrb[0].mxu0
      %v4443 = vadd.f32 0.0, %v4442
      %v4444 = vpop.f32.mrb[0].mxu0
      %4445 = vmatprep.mubr.bf16.mxu0 0
      %4446 = vmatmul.mubr.bf16.gmra.mrb[0].mxu0 %v4234
      %v4447 = vpop.f32.mrb[0].mxu0
      %v4448 = vadd.f32 0.0, %v4447
      %v4449 = vpop.f32.mrb[0].mxu0
      %v4450 = vpop.f32.mrb[0].mxu0
      %v4451 = vadd.f32 0.0, %v4450
      %v4452 = vpop.f32.mrb[0].mxu0
      %4453 = vmatprep.mubr.bf16.mxu0 0
      %4454 = vmatmul.mubr.bf16.gmra.mrb[0].mxu0 %v4237
      %v4455 = vpop.f32.mrb[0].mxu0
      %v4456 = vadd.f32 0.0, %v4455
      %v4457 = vpop.f32.mrb[0].mxu0
      %v4458 = vpop.f32.mrb[0].mxu0
      %v4459 = vadd.f32 0.0, %v4458
      %v4460 = vpop.f32.mrb[0].mxu0
      %4461 = vmatprep.mubr.bf16.mxu0 0
      %4462 = vmatmul.mubr.bf16.gmra.mrb[0].mxu0 %v4240
      %v4463 = vpop.f32.mrb[0].mxu0
      %v4464 = vadd.f32 0.0, %v4463
      %v4465 = vpop.f32.mrb[0].mxu0
      %v4466 = vpop.f32.mrb[0].mxu0
      %v4467 = vadd.f32 0.0, %v4466
      %v4468 = vpop.f32.mrb[0].mxu0
      %4469 = vmatprep.mubr.bf16.mxu0 0
      %4470 = vmatmul.mubr.bf16.gmra.mrb[0].mxu0 %v4243
      %v4471 = vpop.f32.mrb[0].mxu0
      %v4472 = vadd.f32 0.0, %v4471
      %v4473 = vpop.f32.mrb[0].mxu0
      %v4474 = vpop.f32.mrb[0].mxu0
      %v4475 = vadd.f32 0.0, %v4474
      %v4476 = vpop.f32.mrb[0].mxu0
      %4477 = vdwg.mxu0
      %v4478 = vadd.f32 %v3696, %v4280
      %v4479 = vadd.f32 %v3699, %v4283
      %v4480 = vadd.f32 %v3704, %v4288
      %v4481 = vadd.f32 %v3707, %v4291
      %v4482 = vadd.f32 %v3712, %v4296
      %v4483 = vadd.f32 %v3715, %v4299
      %v4484 = vadd.f32 %v3720, %v4304
      %v4485 = vadd.f32 %v3723, %v4307
      %v4486 = vadd.f32 %v3728, %v4312
      %v4487 = vadd.f32 %v3731, %v4315
      %v4488 = vadd.f32 %v3736, %v4320
      %v4489 = vadd.f32 %v3739, %v4323
      %v4490 = vadd.f32 %v3744, %v4328
      %v4491 = vadd.f32 %v3747, %v4331
      %v4492 = vadd.f32 %v3752, %v4336
      %v4493 = vadd.f32 %v3755, %v4339
      %v4494 = vadd.f32 %v3760, %v4344
      %v4495 = vadd.f32 %v3763, %v4347
      %v4496 = vadd.f32 %v3768, %v4352
      %v4497 = vadd.f32 %v3771, %v4355
      %v4498 = vadd.f32 %v3776, %v4360
      %v4499 = vadd.f32 %v3779, %v4363
      %v4500 = vadd.f32 %v3784, %v4368
      %v4501 = vadd.f32 %v3787, %v4371
      %v4502 = vadd.f32 %v3792, %v4376
      %v4503 = vadd.f32 %v3795, %v4379
      %v4504 = vadd.f32 %v3800, %v4384
      %v4505 = vadd.f32 %v3803, %v4387
      %v4506 = vadd.f32 %v3808, %v4392
      %v4507 = vadd.f32 %v3811, %v4395
      %v4508 = vadd.f32 %v3816, %v4400
      %v4509 = vadd.f32 %v3819, %v4403
      %v4510 = vadd.f32 %v3824, %v4408
      %v4511 = vadd.f32 %v3827, %v4411
      %v4512 = vadd.f32 %v3832, %v4416
      %v4513 = vadd.f32 %v3835, %v4419
      %v4514 = vadd.f32 %v3840, %v4424
      %v4515 = vadd.f32 %v3843, %v4427
      %v4516 = vadd.f32 %v3848, %v4432
      %v4517 = vadd.f32 %v3851, %v4435
      %v4518 = vadd.f32 %v3856, %v4440
      %v4519 = vadd.f32 %v3859, %v4443
      %v4520 = vadd.f32 %v3864, %v4448
      %v4521 = vadd.f32 %v3867, %v4451
      %v4522 = vadd.f32 %v3872, %v4456
      %v4523 = vadd.f32 %v3875, %v4459
      %v4524 = vadd.f32 %v3880, %v4464
      %v4525 = vadd.f32 %v3883, %v4467
      %v4526 = vadd.f32 %v3888, %v4472
      %v4527 = vadd.f32 %v3891, %v4475
      %v4528 = vmul.f32 %v2541, %v2870
      %v4529 = vmul.f32 %v2507, %v2872
      %v4530 = vmul.f32 %v2509, %v2874
      %v4531 = vmul.f32 %v2511, %v2876
      %v4532 = vmul.f32 %v2513, %v2878
      %v4533 = vmul.f32 %v2515, %v2880
      %v4534 = vmul.f32 %v2517, %v2882
      %v4535 = vmul.f32 %v2519, %v2884
      %v4536 = vmul.f32 %v2521, %v2886
      %v4537 = vmul.f32 %v2523, %v2888
      %v4538 = vmul.f32 %v2525, %v2890
      %v4539 = vmul.f32 %v2527, %v2892
      %v4540 = vmul.f32 %v2542, %v2894
      %v4554 = vrot.slane %v4528, 2
      %v4555 = vrot.slane %v4529, 2
      %v4556 = vsel %vm2974, %v4554, %v4555
      %v4557 = vrot.slane %v4530, 2
      %v4558 = vsel %vm2974, %v4555, %v4557
      %v4559 = vrot.slane %v4531, 2
      %v4560 = vsel %vm2974, %v4557, %v4559
      %v4561 = vrot.slane %v4532, 2
      %v4562 = vsel %vm2974, %v4559, %v4561
      %v4563 = vrot.slane %v4533, 2
      %v4564 = vsel %vm2974, %v4561, %v4563
      %v4565 = vrot.slane %v4534, 2
      %v4566 = vsel %vm2974, %v4563, %v4565
      %v4567 = vrot.slane %v4535, 2
      %v4568 = vsel %vm2974, %v4565, %v4567
      %v4569 = vrot.slane %v4536, 2
      %v4570 = vsel %vm2974, %v4567, %v4569
      %v4571 = vrot.slane %v4537, 2
      %v4572 = vsel %vm2974, %v4569, %v4571
      %v4573 = vrot.slane %v4538, 2
      %v4574 = vsel %vm2974, %v4571, %v4573
      %v4575 = vrot.slane %v4539, 2
      %v4576 = vsel %vm2974, %v4573, %v4575
      %v4577 = vrot.slane %v4540, 2
      %v4578 = vsel %vm2974, %v4575, %v4577
      %v4593 = vrot.slane %v2489, 7
      %v4594 = vrot.slane %v2453, 7
      %v4595 = vsel %vm3015, %v4593, %v4594
      %v4596 = vrot.slane %v2455, 7
      %v4597 = vsel %vm3015, %v4594, %v4596
      %v4598 = vrot.slane %v2457, 7
      %v4599 = vsel %vm3015, %v4596, %v4598
      %v4600 = vrot.slane %v2459, 7
      %v4601 = vsel %vm3015, %v4598, %v4600
      %v4602 = vrot.slane %v2461, 7
      %v4603 = vsel %vm3015, %v4600, %v4602
      %v4604 = vrot.slane %v2463, 7
      %v4605 = vsel %vm3015, %v4602, %v4604
      %v4606 = vrot.slane %v2465, 7
      %v4607 = vsel %vm3015, %v4604, %v4606
      %v4608 = vrot.slane %v2467, 7
      %v4609 = vsel %vm3015, %v4606, %v4608
      %v4610 = vrot.slane %v2469, 7
      %v4611 = vsel %vm3015, %v4608, %v4610
      %v4612 = vrot.slane %v2471, 7
      %v4613 = vsel %vm3015, %v4610, %v4612
      %v4614 = vrot.slane %v2473, 7
      %v4615 = vsel %vm3015, %v4612, %v4614
      %v4616 = vrot.slane %v2490, 7
      %v4617 = vsel %vm3015, %v4614, %v4616
      %v4631 = vsel %vm1234, %v4577, %v4593
      %v4632 = vpack.c.bf16 %v2979, %v2977
      %v4633 = vpack.c.bf16 %v2983, %v2981
      %v4634 = vpack.c.bf16 %v2987, %v2985
      %v4635 = vpack.c.bf16 %v2991, %v2989
      %v4636 = vpack.c.bf16 %v2995, %v2993
      %v4637 = vpack.c.bf16 %v2999, %v2997
      %v4638 = vpack.c.bf16 %v3018, %v3055
      %v4639 = vpack.c.bf16 %v3022, %v3020
      %v4640 = vpack.c.bf16 %v3026, %v3024
      %v4641 = vpack.c.bf16 %v3030, %v3028
      %v4642 = vpack.c.bf16 %v3034, %v3032
      %v4643 = vpack.c.bf16 %v3038, %v3036
      %v4644 = vpack.c.bf16 %v4556, %v3040
      %v4645 = vpack.c.bf16 %v4560, %v4558
      %v4646 = vpack.c.bf16 %v4564, %v4562
      %v4647 = vpack.c.bf16 %v4568, %v4566
      %v4648 = vpack.c.bf16 %v4572, %v4570
      %v4649 = vpack.c.bf16 %v4576, %v4574
      %v4650 = vpack.c.bf16 %v4631, %v4578
      %v4651 = vpack.c.bf16 %v4597, %v4595
      %v4652 = vpack.c.bf16 %v4601, %v4599
      %v4653 = vpack.c.bf16 %v4605, %v4603
      %v4654 = vpack.c.bf16 %v4609, %v4607
      %v4655 = vpack.c.bf16 %v4613, %v4611
      %v4656 = vpack.c.bf16 %v4617, %v4615
      %v4657 = vld [vmem:[%s3 + $0x18] sm:$0xf]
      %v4658 = vld [vmem:[%s3 + $0x1c] sm:$0xf]
      %v4661 = vunpack.c.l.b16 %v4657
      %v4662 = vunpack.c.l.b16 %v4658
      %v4663 = vpack.c.b16 %v4662, %v4661
      %v4666 = vsel %vm3271, %v4632, 0
      %v4669 = vsel %vm3271, %v4633, 0
      %v4672 = vsel %vm3271, %v4634, 0
      %v4675 = vsel %vm3271, %v4635, 0
      %v4678 = vsel %vm3271, %v4636, 0
      %v4681 = vsel %vm3271, %v4637, 0
      %v4684 = vsel %vm3271, %v4638, 0
      %v4687 = vsel %vm3271, %v4639, 0
      %v4690 = vsel %vm3271, %v4640, 0
      %v4693 = vsel %vm3271, %v4641, 0
      %v4696 = vsel %vm3271, %v4642, 0
      %v4699 = vsel %vm3271, %v4643, 0
      %v4702 = vsel %vm3271, %v4644, 0
      %v4705 = vsel %vm3271, %v4645, 0
      %v4708 = vsel %vm3271, %v4646, 0
      %v4711 = vsel %vm3271, %v4647, 0
      %v4714 = vsel %vm3271, %v4648, 0
      %v4717 = vsel %vm3271, %v4649, 0
      %v4720 = vsel %vm3271, %v4650, 0
      %v4723 = vsel %vm3271, %v4651, 0
      %v4726 = vsel %vm3271, %v4652, 0
      %v4729 = vsel %vm3271, %v4653, 0
      %v4732 = vsel %vm3271, %v4654, 0
      %v4735 = vsel %vm3271, %v4655, 0
      %v4738 = vsel %vm3271, %v4656, 0
      %4740 = vmatprep.subr.bf16.mxu0 0
      %4741 = vmatpush1.bf16.msra.mxu0 %v4663
      %4742 = vmatprep.subr.bf16.mxu0 0
      %4743 = vmatpush1.bf16.msra.mxu0 0
      %4744 = vmatprep.subr.bf16.mxu0 0
      %4745 = vmatpush1.bf16.msra.mxu0 0
      %4746 = vmatprep.subr.bf16.mxu0 0
      %4747 = vmatpush1.bf16.msra.mxu0 0
      %4748 = vmatprep.subr.bf16.mxu0 0
      %4749 = vmatpush1.bf16.msra.mxu0 0
      %4750 = vmatprep.subr.bf16.mxu0 0
      %4751 = vmatpush1.bf16.msra.mxu0 0
      %4752 = vmatprep.subr.bf16.mxu0 0
      %4753 = vmatpush1.bf16.msra.mxu0 0
      %4754 = vmatprep.subr.bf16.mxu0 0
      %4755 = vmatpush1.bf16.msra.mxu0 0
      %4756 = vmatprep.subr.bf16.mxu0 0
      %4757 = vmatpush1.bf16.msra.mxu0 0
      %4758 = vmatprep.subr.bf16.mxu0 0
      %4759 = vmatpush1.bf16.msra.mxu0 0
      %4760 = vmatprep.subr.bf16.mxu0 0
      %4761 = vmatpush1.bf16.msra.mxu0 0
      %4762 = vmatprep.subr.bf16.mxu0 0
      %4763 = vmatpush1.bf16.msra.mxu0 0
      %4764 = vmatprep.subr.bf16.mxu0 0
      %4765 = vmatpush1.bf16.msra.mxu0 0
      %4766 = vmatprep.subr.bf16.mxu0 0
      %4767 = vmatpush1.bf16.msra.mxu0 0
      %4768 = vmatprep.subr.bf16.mxu0 0
      %4769 = vmatpush1.bf16.msra.mxu0 0
      %4770 = vmatprep.subr.bf16.mxu0 0
      %4771 = vmatpush1.bf16.msra.mxu0 0
      %4772 = vmatprep.mubr.bf16.mxu0 0
      %4773 = vmatmul.mubr.bf16.gmra.mrb[0].mxu0 %v4666
      %v4774 = vpop.f32.mrb[0].mxu0
      %v4775 = vadd.f32 0.0, %v4774
      %v4776 = vpop.f32.mrb[0].mxu0
      %v4777 = vpop.f32.mrb[0].mxu0
      %v4778 = vadd.f32 0.0, %v4777
      %v4779 = vpop.f32.mrb[0].mxu0
      %4780 = vmatprep.mubr.bf16.mxu0 0
      %4781 = vmatmul.mubr.bf16.gmra.mrb[0].mxu0 %v4669
      %v4782 = vpop.f32.mrb[0].mxu0
      %v4783 = vadd.f32 0.0, %v4782
      %v4784 = vpop.f32.mrb[0].mxu0
      %v4785 = vpop.f32.mrb[0].mxu0
      %v4786 = vadd.f32 0.0, %v4785
      %v4787 = vpop.f32.mrb[0].mxu0
      %4788 = vmatprep.mubr.bf16.mxu0 0
      %4789 = vmatmul.mubr.bf16.gmra.mrb[0].mxu0 %v4672
      %v4790 = vpop.f32.mrb[0].mxu0
      %v4791 = vadd.f32 0.0, %v4790
      %v4792 = vpop.f32.mrb[0].mxu0
      %v4793 = vpop.f32.mrb[0].mxu0
      %v4794 = vadd.f32 0.0, %v4793
      %v4795 = vpop.f32.mrb[0].mxu0
      %4796 = vmatprep.mubr.bf16.mxu0 0
      %4797 = vmatmul.mubr.bf16.gmra.mrb[0].mxu0 %v4675
      %v4798 = vpop.f32.mrb[0].mxu0
      %v4799 = vadd.f32 0.0, %v4798
      %v4800 = vpop.f32.mrb[0].mxu0
      %v4801 = vpop.f32.mrb[0].mxu0
      %v4802 = vadd.f32 0.0, %v4801
      %v4803 = vpop.f32.mrb[0].mxu0
      %4804 = vmatprep.mubr.bf16.mxu0 0
      %4805 = vmatmul.mubr.bf16.gmra.mrb[0].mxu0 %v4678
      %v4806 = vpop.f32.mrb[0].mxu0
      %v4807 = vadd.f32 0.0, %v4806
      %v4808 = vpop.f32.mrb[0].mxu0
      %v4809 = vpop.f32.mrb[0].mxu0
      %v4810 = vadd.f32 0.0, %v4809
      %v4811 = vpop.f32.mrb[0].mxu0
      %4812 = vmatprep.mubr.bf16.mxu0 0
      %4813 = vmatmul.mubr.bf16.gmra.mrb[0].mxu0 %v4681
      %v4814 = vpop.f32.mrb[0].mxu0
      %v4815 = vadd.f32 0.0, %v4814
      %v4816 = vpop.f32.mrb[0].mxu0
      %v4817 = vpop.f32.mrb[0].mxu0
      %v4818 = vadd.f32 0.0, %v4817
      %v4819 = vpop.f32.mrb[0].mxu0
      %4820 = vmatprep.mubr.bf16.mxu0 0
      %4821 = vmatmul.mubr.bf16.gmra.mrb[0].mxu0 %v4684
      %v4822 = vpop.f32.mrb[0].mxu0
      %v4823 = vadd.f32 0.0, %v4822
      %v4824 = vpop.f32.mrb[0].mxu0
      %v4825 = vpop.f32.mrb[0].mxu0
      %v4826 = vadd.f32 0.0, %v4825
      %v4827 = vpop.f32.mrb[0].mxu0
      %4828 = vmatprep.mubr.bf16.mxu0 0
      %4829 = vmatmul.mubr.bf16.gmra.mrb[0].mxu0 %v4687
      %v4830 = vpop.f32.mrb[0].mxu0
      %v4831 = vadd.f32 0.0, %v4830
      %v4832 = vpop.f32.mrb[0].mxu0
      %v4833 = vpop.f32.mrb[0].mxu0
      %v4834 = vadd.f32 0.0, %v4833
      %v4835 = vpop.f32.mrb[0].mxu0
      %4836 = vmatprep.mubr.bf16.mxu0 0
      %4837 = vmatmul.mubr.bf16.gmra.mrb[0].mxu0 %v4690
      %v4838 = vpop.f32.mrb[0].mxu0
      %v4839 = vadd.f32 0.0, %v4838
      %v4840 = vpop.f32.mrb[0].mxu0
      %v4841 = vpop.f32.mrb[0].mxu0
      %v4842 = vadd.f32 0.0, %v4841
      %v4843 = vpop.f32.mrb[0].mxu0
      %4844 = vmatprep.mubr.bf16.mxu0 0
      %4845 = vmatmul.mubr.bf16.gmra.mrb[0].mxu0 %v4693
      %v4846 = vpop.f32.mrb[0].mxu0
      %v4847 = vadd.f32 0.0, %v4846
      %v4848 = vpop.f32.mrb[0].mxu0
      %v4849 = vpop.f32.mrb[0].mxu0
      %v4850 = vadd.f32 0.0, %v4849
      %v4851 = vpop.f32.mrb[0].mxu0
      %4852 = vmatprep.mubr.bf16.mxu0 0
      %4853 = vmatmul.mubr.bf16.gmra.mrb[0].mxu0 %v4696
      %v4854 = vpop.f32.mrb[0].mxu0
      %v4855 = vadd.f32 0.0, %v4854
      %v4856 = vpop.f32.mrb[0].mxu0
      %v4857 = vpop.f32.mrb[0].mxu0
      %v4858 = vadd.f32 0.0, %v4857
      %v4859 = vpop.f32.mrb[0].mxu0
      %4860 = vmatprep.mubr.bf16.mxu0 0
      %4861 = vmatmul.mubr.bf16.gmra.mrb[0].mxu0 %v4699
      %v4862 = vpop.f32.mrb[0].mxu0
      %v4863 = vadd.f32 0.0, %v4862
      %v4864 = vpop.f32.mrb[0].mxu0
      %v4865 = vpop.f32.mrb[0].mxu0
      %v4866 = vadd.f32 0.0, %v4865
      %v4867 = vpop.f32.mrb[0].mxu0
      %4868 = vmatprep.mubr.bf16.mxu0 0
      %4869 = vmatmul.mubr.bf16.gmra.mrb[0].mxu0 %v4702
      %v4870 = vpop.f32.mrb[0].mxu0
      %v4871 = vadd.f32 0.0, %v4870
      %v4872 = vpop.f32.mrb[0].mxu0
      %v4873 = vpop.f32.mrb[0].mxu0
      %v4874 = vadd.f32 0.0, %v4873
      %v4875 = vpop.f32.mrb[0].mxu0
      %4876 = vmatprep.mubr.bf16.mxu0 0
      %4877 = vmatmul.mubr.bf16.gmra.mrb[0].mxu0 %v4705
      %v4878 = vpop.f32.mrb[0].mxu0
      %v4879 = vadd.f32 0.0, %v4878
      %v4880 = vpop.f32.mrb[0].mxu0
      %v4881 = vpop.f32.mrb[0].mxu0
      %v4882 = vadd.f32 0.0, %v4881
      %v4883 = vpop.f32.mrb[0].mxu0
      %4884 = vmatprep.mubr.bf16.mxu0 0
      %4885 = vmatmul.mubr.bf16.gmra.mrb[0].mxu0 %v4708
      %v4886 = vpop.f32.mrb[0].mxu0
      %v4887 = vadd.f32 0.0, %v4886
      %v4888 = vpop.f32.mrb[0].mxu0
      %v4889 = vpop.f32.mrb[0].mxu0
      %v4890 = vadd.f32 0.0, %v4889
      %v4891 = vpop.f32.mrb[0].mxu0
      %4892 = vmatprep.mubr.bf16.mxu0 0
      %4893 = vmatmul.mubr.bf16.gmra.mrb[0].mxu0 %v4711
      %v4894 = vpop.f32.mrb[0].mxu0
      %v4895 = vadd.f32 0.0, %v4894
      %v4896 = vpop.f32.mrb[0].mxu0
      %v4897 = vpop.f32.mrb[0].mxu0
      %v4898 = vadd.f32 0.0, %v4897
      %v4899 = vpop.f32.mrb[0].mxu0
      %4900 = vmatprep.mubr.bf16.mxu0 0
      %4901 = vmatmul.mubr.bf16.gmra.mrb[0].mxu0 %v4714
      %v4902 = vpop.f32.mrb[0].mxu0
      %v4903 = vadd.f32 0.0, %v4902
      %v4904 = vpop.f32.mrb[0].mxu0
      %v4905 = vpop.f32.mrb[0].mxu0
      %v4906 = vadd.f32 0.0, %v4905
      %v4907 = vpop.f32.mrb[0].mxu0
      %4908 = vmatprep.mubr.bf16.mxu0 0
      %4909 = vmatmul.mubr.bf16.gmra.mrb[0].mxu0 %v4717
      %v4910 = vpop.f32.mrb[0].mxu0
      %v4911 = vadd.f32 0.0, %v4910
      %v4912 = vpop.f32.mrb[0].mxu0
      %v4913 = vpop.f32.mrb[0].mxu0
      %v4914 = vadd.f32 0.0, %v4913
      %v4915 = vpop.f32.mrb[0].mxu0
      %4916 = vmatprep.mubr.bf16.mxu0 0
      %4917 = vmatmul.mubr.bf16.gmra.mrb[0].mxu0 %v4720
      %v4918 = vpop.f32.mrb[0].mxu0
      %v4919 = vadd.f32 0.0, %v4918
      %v4920 = vpop.f32.mrb[0].mxu0
      %v4921 = vpop.f32.mrb[0].mxu0
      %v4922 = vadd.f32 0.0, %v4921
      %v4923 = vpop.f32.mrb[0].mxu0
      %4924 = vmatprep.mubr.bf16.mxu0 0
      %4925 = vmatmul.mubr.bf16.gmra.mrb[0].mxu0 %v4723
      %v4926 = vpop.f32.mrb[0].mxu0
      %v4927 = vadd.f32 0.0, %v4926
      %v4928 = vpop.f32.mrb[0].mxu0
      %v4929 = vpop.f32.mrb[0].mxu0
      %v4930 = vadd.f32 0.0, %v4929
      %v4931 = vpop.f32.mrb[0].mxu0
      %4932 = vmatprep.mubr.bf16.mxu0 0
      %4933 = vmatmul.mubr.bf16.gmra.mrb[0].mxu0 %v4726
      %v4934 = vpop.f32.mrb[0].mxu0
      %v4935 = vadd.f32 0.0, %v4934
      %v4936 = vpop.f32.mrb[0].mxu0
      %v4937 = vpop.f32.mrb[0].mxu0
      %v4938 = vadd.f32 0.0, %v4937
      %v4939 = vpop.f32.mrb[0].mxu0
      %4940 = vmatprep.mubr.bf16.mxu0 0
      %4941 = vmatmul.mubr.bf16.gmra.mrb[0].mxu0 %v4729
      %v4942 = vpop.f32.mrb[0].mxu0
      %v4943 = vadd.f32 0.0, %v4942
      %v4944 = vpop.f32.mrb[0].mxu0
      %v4945 = vpop.f32.mrb[0].mxu0
      %v4946 = vadd.f32 0.0, %v4945
      %v4947 = vpop.f32.mrb[0].mxu0
      %4948 = vmatprep.mubr.bf16.mxu0 0
      %4949 = vmatmul.mubr.bf16.gmra.mrb[0].mxu0 %v4732
      %v4950 = vpop.f32.mrb[0].mxu0
      %v4951 = vadd.f32 0.0, %v4950
      %v4952 = vpop.f32.mrb[0].mxu0
      %v4953 = vpop.f32.mrb[0].mxu0
      %v4954 = vadd.f32 0.0, %v4953
      %v4955 = vpop.f32.mrb[0].mxu0
      %4956 = vmatprep.mubr.bf16.mxu0 0
      %4957 = vmatmul.mubr.bf16.gmra.mrb[0].mxu0 %v4735
      %v4958 = vpop.f32.mrb[0].mxu0
      %v4959 = vadd.f32 0.0, %v4958
      %v4960 = vpop.f32.mrb[0].mxu0
      %v4961 = vpop.f32.mrb[0].mxu0
      %v4962 = vadd.f32 0.0, %v4961
      %v4963 = vpop.f32.mrb[0].mxu0
      %4964 = vmatprep.mubr.bf16.mxu0 0
      %4965 = vmatmul.mubr.bf16.gmra.mrb[0].mxu0 %v4738
      %v4966 = vpop.f32.mrb[0].mxu0
      %v4967 = vadd.f32 0.0, %v4966
      %v4968 = vpop.f32.mrb[0].mxu0
      %v4969 = vpop.f32.mrb[0].mxu0
      %v4970 = vadd.f32 0.0, %v4969
      %v4971 = vpop.f32.mrb[0].mxu0
      %4972 = vdwg.mxu0
      %v4973 = vadd.f32 %v4478, %v4775
      %v4974 = vadd.f32 %v4479, %v4778
      %v4975 = vadd.f32 %v4480, %v4783
      %v4976 = vadd.f32 %v4481, %v4786
      %v4977 = vadd.f32 %v4482, %v4791
      %v4978 = vadd.f32 %v4483, %v4794
      %v4979 = vadd.f32 %v4484, %v4799
      %v4980 = vadd.f32 %v4485, %v4802
      %v4981 = vadd.f32 %v4486, %v4807
      %v4982 = vadd.f32 %v4487, %v4810
      %v4983 = vadd.f32 %v4488, %v4815
      %v4984 = vadd.f32 %v4489, %v4818
      %v4985 = vadd.f32 %v4490, %v4823
      %v4986 = vadd.f32 %v4491, %v4826
      %v4987 = vadd.f32 %v4492, %v4831
      %v4988 = vadd.f32 %v4493, %v4834
      %v4989 = vadd.f32 %v4494, %v4839
      %v4990 = vadd.f32 %v4495, %v4842
      %v4991 = vadd.f32 %v4496, %v4847
      %v4992 = vadd.f32 %v4497, %v4850
      %v4993 = vadd.f32 %v4498, %v4855
      %v4994 = vadd.f32 %v4499, %v4858
      %v4995 = vadd.f32 %v4500, %v4863
      %v4996 = vadd.f32 %v4501, %v4866
      %v4997 = vadd.f32 %v4502, %v4871
      %v4998 = vadd.f32 %v4503, %v4874
      %v4999 = vadd.f32 %v4504, %v4879
      %v5000 = vadd.f32 %v4505, %v4882
      %v5001 = vadd.f32 %v4506, %v4887
      %v5002 = vadd.f32 %v4507, %v4890
      %v5003 = vadd.f32 %v4508, %v4895
      %v5004 = vadd.f32 %v4509, %v4898
      %v5005 = vadd.f32 %v4510, %v4903
      %v5006 = vadd.f32 %v4511, %v4906
      %v5007 = vadd.f32 %v4512, %v4911
      %v5008 = vadd.f32 %v4513, %v4914
      %v5009 = vadd.f32 %v4514, %v4919
      %v5010 = vadd.f32 %v4515, %v4922
      %v5011 = vadd.f32 %v4516, %v4927
      %v5012 = vadd.f32 %v4517, %v4930
      %v5013 = vadd.f32 %v4518, %v4935
      %v5014 = vadd.f32 %v4519, %v4938
      %v5015 = vadd.f32 %v4520, %v4943
      %v5016 = vadd.f32 %v4521, %v4946
      %v5017 = vadd.f32 %v4522, %v4951
      %v5018 = vadd.f32 %v4523, %v4954
      %v5019 = vadd.f32 %v4524, %v4959
      %v5020 = vadd.f32 %v4525, %v4962
      %v5021 = vadd.f32 %v4526, %v4967
      %v5022 = vadd.f32 %v4527, %v4970
      %v5023 = vrot.slane %v2489, 3
      %v5024 = vrot.slane %v2453, 3
      %v5025 = vsel %vm1235, %v5023, %v5024
      %v5026 = vrot.slane %v2455, 3
      %v5027 = vsel %vm1235, %v5024, %v5026
      %v5028 = vrot.slane %v2457, 3
      %v5029 = vsel %vm1235, %v5026, %v5028
      %v5030 = vrot.slane %v2459, 3
      %v5031 = vsel %vm1235, %v5028, %v5030
      %v5032 = vrot.slane %v2461, 3
      %v5033 = vsel %vm1235, %v5030, %v5032
      %v5034 = vrot.slane %v2463, 3
      %v5035 = vsel %vm1235, %v5032, %v5034
      %v5036 = vrot.slane %v2465, 3
      %v5037 = vsel %vm1235, %v5034, %v5036
      %v5038 = vrot.slane %v2467, 3
      %v5039 = vsel %vm1235, %v5036, %v5038
      %v5040 = vrot.slane %v2469, 3
      %v5041 = vsel %vm1235, %v5038, %v5040
      %v5042 = vrot.slane %v2471, 3
      %v5043 = vsel %vm1235, %v5040, %v5042
      %v5044 = vrot.slane %v2473, 3
      %v5045 = vsel %vm1235, %v5042, %v5044
      %v5046 = vrot.slane %v2490, 3
      %v5047 = vsel %vm1235, %v5044, %v5046
      %v5062 = vrot.slane %v2541, 7
      %v5063 = vrot.slane %v2507, 7
      %v5064 = vsel %vm3015, %v5062, %v5063
      %v5065 = vrot.slane %v2509, 7
      %v5066 = vsel %vm3015, %v5063, %v5065
      %v5067 = vrot.slane %v2511, 7
      %v5068 = vsel %vm3015, %v5065, %v5067
      %v5069 = vrot.slane %v2513, 7
      %v5070 = vsel %vm3015, %v5067, %v5069
      %v5071 = vrot.slane %v2515, 7
      %v5072 = vsel %vm3015, %v5069, %v5071
      %v5073 = vrot.slane %v2517, 7
      %v5074 = vsel %vm3015, %v5071, %v5073
      %v5075 = vrot.slane %v2519, 7
      %v5076 = vsel %vm3015, %v5073, %v5075
      %v5077 = vrot.slane %v2521, 7
      %v5078 = vsel %vm3015, %v5075, %v5077
      %v5079 = vrot.slane %v2523, 7
      %v5080 = vsel %vm3015, %v5077, %v5079
      %v5081 = vrot.slane %v2525, 7
      %v5082 = vsel %vm3015, %v5079, %v5081
      %v5083 = vrot.slane %v2527, 7
      %v5084 = vsel %vm3015, %v5081, %v5083
      %v5085 = vrot.slane %v2542, 7
      %v5086 = vsel %vm3015, %v5083, %v5085
      %v5100 = vsel %vm1234, %v5046, %v5062
      %v5101 = vpack.c.bf16 %v3162, %v3160
      %v5102 = vpack.c.bf16 %v3166, %v3164
      %v5103 = vpack.c.bf16 %v3170, %v3168
      %v5104 = vpack.c.bf16 %v3174, %v3172
      %v5105 = vpack.c.bf16 %v3178, %v3176
      %v5106 = vpack.c.bf16 %v3182, %v3180
      %v5107 = vpack.c.bf16 %v3200, %v3237
      %v5108 = vpack.c.bf16 %v3204, %v3202
      %v5109 = vpack.c.bf16 %v3208, %v3206
      %v5110 = vpack.c.bf16 %v3212, %v3210
      %v5111 = vpack.c.bf16 %v3216, %v3214
      %v5112 = vpack.c.bf16 %v3220, %v3218
      %v5113 = vpack.c.bf16 %v5025, %v3222
      %v5114 = vpack.c.bf16 %v5029, %v5027
      %v5115 = vpack.c.bf16 %v5033, %v5031
      %v5116 = vpack.c.bf16 %v5037, %v5035
      %v5117 = vpack.c.bf16 %v5041, %v5039
      %v5118 = vpack.c.bf16 %v5045, %v5043
      %v5119 = vpack.c.bf16 %v5100, %v5047
      %v5120 = vpack.c.bf16 %v5066, %v5064
      %v5121 = vpack.c.bf16 %v5070, %v5068
      %v5122 = vpack.c.bf16 %v5074, %v5072
      %v5123 = vpack.c.bf16 %v5078, %v5076
      %v5124 = vpack.c.bf16 %v5082, %v5080
      %v5125 = vpack.c.bf16 %v5086, %v5084
      %v5126 = vld [vmem:[%s3 + $0x20] sm:$0xf]
      %v5127 = vld [vmem:[%s3 + $0x24] sm:$0xf]
      %v5130 = vunpack.c.l.b16 %v5126
      %v5131 = vunpack.c.l.b16 %v5127
      %v5132 = vpack.c.b16 %v5131, %v5130
      %v5135 = vsel %vm3271, %v5101, 0
      %v5138 = vsel %vm3271, %v5102, 0
      %v5141 = vsel %vm3271, %v5103, 0
      %v5144 = vsel %vm3271, %v5104, 0
      %v5147 = vsel %vm3271, %v5105, 0
      %v5150 = vsel %vm3271, %v5106, 0
      %v5153 = vsel %vm3271, %v5107, 0
      %v5156 = vsel %vm3271, %v5108, 0
      %v5159 = vsel %vm3271, %v5109, 0
      %v5162 = vsel %vm3271, %v5110, 0
      %v5165 = vsel %vm3271, %v5111, 0
      %v5168 = vsel %vm3271, %v5112, 0
      %v5171 = vsel %vm3271, %v5113, 0
      %v5174 = vsel %vm3271, %v5114, 0
      %v5177 = vsel %vm3271, %v5115, 0
      %v5180 = vsel %vm3271, %v5116, 0
      %v5183 = vsel %vm3271, %v5117, 0
      %v5186 = vsel %vm3271, %v5118, 0
      %v5189 = vsel %vm3271, %v5119, 0
      %v5192 = vsel %vm3271, %v5120, 0
      %v5195 = vsel %vm3271, %v5121, 0
      %v5198 = vsel %vm3271, %v5122, 0
      %v5201 = vsel %vm3271, %v5123, 0
      %v5204 = vsel %vm3271, %v5124, 0
      %v5207 = vsel %vm3271, %v5125, 0
      %5209 = vmatprep.subr.bf16.mxu0 0
      %5210 = vmatpush1.bf16.msra.mxu0 %v5132
      %5211 = vmatprep.subr.bf16.mxu0 0
      %5212 = vmatpush1.bf16.msra.mxu0 0
      %5213 = vmatprep.subr.bf16.mxu0 0
      %5214 = vmatpush1.bf16.msra.mxu0 0
      %5215 = vmatprep.subr.bf16.mxu0 0
      %5216 = vmatpush1.bf16.msra.mxu0 0
      %5217 = vmatprep.subr.bf16.mxu0 0
      %5218 = vmatpush1.bf16.msra.mxu0 0
      %5219 = vmatprep.subr.bf16.mxu0 0
      %5220 = vmatpush1.bf16.msra.mxu0 0
      %5221 = vmatprep.subr.bf16.mxu0 0
      %5222 = vmatpush1.bf16.msra.mxu0 0
      %5223 = vmatprep.subr.bf16.mxu0 0
      %5224 = vmatpush1.bf16.msra.mxu0 0
      %5225 = vmatprep.subr.bf16.mxu0 0
      %5226 = vmatpush1.bf16.msra.mxu0 0
      %5227 = vmatprep.subr.bf16.mxu0 0
      %5228 = vmatpush1.bf16.msra.mxu0 0
      %5229 = vmatprep.subr.bf16.mxu0 0
      %5230 = vmatpush1.bf16.msra.mxu0 0
      %5231 = vmatprep.subr.bf16.mxu0 0
      %5232 = vmatpush1.bf16.msra.mxu0 0
      %5233 = vmatprep.subr.bf16.mxu0 0
      %5234 = vmatpush1.bf16.msra.mxu0 0
      %5235 = vmatprep.subr.bf16.mxu0 0
      %5236 = vmatpush1.bf16.msra.mxu0 0
      %5237 = vmatprep.subr.bf16.mxu0 0
      %5238 = vmatpush1.bf16.msra.mxu0 0
      %5239 = vmatprep.subr.bf16.mxu0 0
      %5240 = vmatpush1.bf16.msra.mxu0 0
      %5241 = vmatprep.mubr.bf16.mxu0 0
      %5242 = vmatmul.mubr.bf16.gmra.mrb[0].mxu0 %v5135
      %v5243 = vpop.f32.mrb[0].mxu0
      %v5244 = vadd.f32 0.0, %v5243
      %v5245 = vpop.f32.mrb[0].mxu0
      %v5246 = vpop.f32.mrb[0].mxu0
      %v5247 = vadd.f32 0.0, %v5246
      %v5248 = vpop.f32.mrb[0].mxu0
      %5249 = vmatprep.mubr.bf16.mxu0 0
      %5250 = vmatmul.mubr.bf16.gmra.mrb[0].mxu0 %v5138
      %v5251 = vpop.f32.mrb[0].mxu0
      %v5252 = vadd.f32 0.0, %v5251
      %v5253 = vpop.f32.mrb[0].mxu0
      %v5254 = vpop.f32.mrb[0].mxu0
      %v5255 = vadd.f32 0.0, %v5254
      %v5256 = vpop.f32.mrb[0].mxu0
      %5257 = vmatprep.mubr.bf16.mxu0 0
      %5258 = vmatmul.mubr.bf16.gmra.mrb[0].mxu0 %v5141
      %v5259 = vpop.f32.mrb[0].mxu0
      %v5260 = vadd.f32 0.0, %v5259
      %v5261 = vpop.f32.mrb[0].mxu0
      %v5262 = vpop.f32.mrb[0].mxu0
      %v5263 = vadd.f32 0.0, %v5262
      %v5264 = vpop.f32.mrb[0].mxu0
      %5265 = vmatprep.mubr.bf16.mxu0 0
      %5266 = vmatmul.mubr.bf16.gmra.mrb[0].mxu0 %v5144
      %v5267 = vpop.f32.mrb[0].mxu0
      %v5268 = vadd.f32 0.0, %v5267
      %v5269 = vpop.f32.mrb[0].mxu0
      %v5270 = vpop.f32.mrb[0].mxu0
      %v5271 = vadd.f32 0.0, %v5270
      %v5272 = vpop.f32.mrb[0].mxu0
      %5273 = vmatprep.mubr.bf16.mxu0 0
      %5274 = vmatmul.mubr.bf16.gmra.mrb[0].mxu0 %v5147
      %v5275 = vpop.f32.mrb[0].mxu0
      %v5276 = vadd.f32 0.0, %v5275
      %v5277 = vpop.f32.mrb[0].mxu0
      %v5278 = vpop.f32.mrb[0].mxu0
      %v5279 = vadd.f32 0.0, %v5278
      %v5280 = vpop.f32.mrb[0].mxu0
      %5281 = vmatprep.mubr.bf16.mxu0 0
      %5282 = vmatmul.mubr.bf16.gmra.mrb[0].mxu0 %v5150
      %v5283 = vpop.f32.mrb[0].mxu0
      %v5284 = vadd.f32 0.0, %v5283
      %v5285 = vpop.f32.mrb[0].mxu0
      %v5286 = vpop.f32.mrb[0].mxu0
      %v5287 = vadd.f32 0.0, %v5286
      %v5288 = vpop.f32.mrb[0].mxu0
      %5289 = vmatprep.mubr.bf16.mxu0 0
      %5290 = vmatmul.mubr.bf16.gmra.mrb[0].mxu0 %v5153
      %v5291 = vpop.f32.mrb[0].mxu0
      %v5292 = vadd.f32 0.0, %v5291
      %v5293 = vpop.f32.mrb[0].mxu0
      %v5294 = vpop.f32.mrb[0].mxu0
      %v5295 = vadd.f32 0.0, %v5294
      %v5296 = vpop.f32.mrb[0].mxu0
      %5297 = vmatprep.mubr.bf16.mxu0 0
      %5298 = vmatmul.mubr.bf16.gmra.mrb[0].mxu0 %v5156
      %v5299 = vpop.f32.mrb[0].mxu0
      %v5300 = vadd.f32 0.0, %v5299
      %v5301 = vpop.f32.mrb[0].mxu0
      %v5302 = vpop.f32.mrb[0].mxu0
      %v5303 = vadd.f32 0.0, %v5302
      %v5304 = vpop.f32.mrb[0].mxu0
      %5305 = vmatprep.mubr.bf16.mxu0 0
      %5306 = vmatmul.mubr.bf16.gmra.mrb[0].mxu0 %v5159
      %v5307 = vpop.f32.mrb[0].mxu0
      %v5308 = vadd.f32 0.0, %v5307
      %v5309 = vpop.f32.mrb[0].mxu0
      %v5310 = vpop.f32.mrb[0].mxu0
      %v5311 = vadd.f32 0.0, %v5310
      %v5312 = vpop.f32.mrb[0].mxu0
      %5313 = vmatprep.mubr.bf16.mxu0 0
      %5314 = vmatmul.mubr.bf16.gmra.mrb[0].mxu0 %v5162
      %v5315 = vpop.f32.mrb[0].mxu0
      %v5316 = vadd.f32 0.0, %v5315
      %v5317 = vpop.f32.mrb[0].mxu0
      %v5318 = vpop.f32.mrb[0].mxu0
      %v5319 = vadd.f32 0.0, %v5318
      %v5320 = vpop.f32.mrb[0].mxu0
      %5321 = vmatprep.mubr.bf16.mxu0 0
      %5322 = vmatmul.mubr.bf16.gmra.mrb[0].mxu0 %v5165
      %v5323 = vpop.f32.mrb[0].mxu0
      %v5324 = vadd.f32 0.0, %v5323
      %v5325 = vpop.f32.mrb[0].mxu0
      %v5326 = vpop.f32.mrb[0].mxu0
      %v5327 = vadd.f32 0.0, %v5326
      %v5328 = vpop.f32.mrb[0].mxu0
      %5329 = vmatprep.mubr.bf16.mxu0 0
      %5330 = vmatmul.mubr.bf16.gmra.mrb[0].mxu0 %v5168
      %v5331 = vpop.f32.mrb[0].mxu0
      %v5332 = vadd.f32 0.0, %v5331
      %v5333 = vpop.f32.mrb[0].mxu0
      %v5334 = vpop.f32.mrb[0].mxu0
      %v5335 = vadd.f32 0.0, %v5334
      %v5336 = vpop.f32.mrb[0].mxu0
      %5337 = vmatprep.mubr.bf16.mxu0 0
      %5338 = vmatmul.mubr.bf16.gmra.mrb[0].mxu0 %v5171
      %v5339 = vpop.f32.mrb[0].mxu0
      %v5340 = vadd.f32 0.0, %v5339
      %v5341 = vpop.f32.mrb[0].mxu0
      %v5342 = vpop.f32.mrb[0].mxu0
      %v5343 = vadd.f32 0.0, %v5342
      %v5344 = vpop.f32.mrb[0].mxu0
      %5345 = vmatprep.mubr.bf16.mxu0 0
      %5346 = vmatmul.mubr.bf16.gmra.mrb[0].mxu0 %v5174
      %v5347 = vpop.f32.mrb[0].mxu0
      %v5348 = vadd.f32 0.0, %v5347
      %v5349 = vpop.f32.mrb[0].mxu0
      %v5350 = vpop.f32.mrb[0].mxu0
      %v5351 = vadd.f32 0.0, %v5350
      %v5352 = vpop.f32.mrb[0].mxu0
      %5353 = vmatprep.mubr.bf16.mxu0 0
      %5354 = vmatmul.mubr.bf16.gmra.mrb[0].mxu0 %v5177
      %v5355 = vpop.f32.mrb[0].mxu0
      %v5356 = vadd.f32 0.0, %v5355
      %v5357 = vpop.f32.mrb[0].mxu0
      %v5358 = vpop.f32.mrb[0].mxu0
      %v5359 = vadd.f32 0.0, %v5358
      %v5360 = vpop.f32.mrb[0].mxu0
      %5361 = vmatprep.mubr.bf16.mxu0 0
      %5362 = vmatmul.mubr.bf16.gmra.mrb[0].mxu0 %v5180
      %v5363 = vpop.f32.mrb[0].mxu0
      %v5364 = vadd.f32 0.0, %v5363
      %v5365 = vpop.f32.mrb[0].mxu0
      %v5366 = vpop.f32.mrb[0].mxu0
      %v5367 = vadd.f32 0.0, %v5366
      %v5368 = vpop.f32.mrb[0].mxu0
      %5369 = vmatprep.mubr.bf16.mxu0 0
      %5370 = vmatmul.mubr.bf16.gmra.mrb[0].mxu0 %v5183
      %v5371 = vpop.f32.mrb[0].mxu0
      %v5372 = vadd.f32 0.0, %v5371
      %v5373 = vpop.f32.mrb[0].mxu0
      %v5374 = vpop.f32.mrb[0].mxu0
      %v5375 = vadd.f32 0.0, %v5374
      %v5376 = vpop.f32.mrb[0].mxu0
      %5377 = vmatprep.mubr.bf16.mxu0 0
      %5378 = vmatmul.mubr.bf16.gmra.mrb[0].mxu0 %v5186
      %v5379 = vpop.f32.mrb[0].mxu0
      %v5380 = vadd.f32 0.0, %v5379
      %v5381 = vpop.f32.mrb[0].mxu0
      %v5382 = vpop.f32.mrb[0].mxu0
      %v5383 = vadd.f32 0.0, %v5382
      %v5384 = vpop.f32.mrb[0].mxu0
      %5385 = vmatprep.mubr.bf16.mxu0 0
      %5386 = vmatmul.mubr.bf16.gmra.mrb[0].mxu0 %v5189
      %v5387 = vpop.f32.mrb[0].mxu0
      %v5388 = vadd.f32 0.0, %v5387
      %v5389 = vpop.f32.mrb[0].mxu0
      %v5390 = vpop.f32.mrb[0].mxu0
      %v5391 = vadd.f32 0.0, %v5390
      %v5392 = vpop.f32.mrb[0].mxu0
      %5393 = vmatprep.mubr.bf16.mxu0 0
      %5394 = vmatmul.mubr.bf16.gmra.mrb[0].mxu0 %v5192
      %v5395 = vpop.f32.mrb[0].mxu0
      %v5396 = vadd.f32 0.0, %v5395
      %v5397 = vpop.f32.mrb[0].mxu0
      %v5398 = vpop.f32.mrb[0].mxu0
      %v5399 = vadd.f32 0.0, %v5398
      %v5400 = vpop.f32.mrb[0].mxu0
      %5401 = vmatprep.mubr.bf16.mxu0 0
      %5402 = vmatmul.mubr.bf16.gmra.mrb[0].mxu0 %v5195
      %v5403 = vpop.f32.mrb[0].mxu0
      %v5404 = vadd.f32 0.0, %v5403
      %v5405 = vpop.f32.mrb[0].mxu0
      %v5406 = vpop.f32.mrb[0].mxu0
      %v5407 = vadd.f32 0.0, %v5406
      %v5408 = vpop.f32.mrb[0].mxu0
      %5409 = vmatprep.mubr.bf16.mxu0 0
      %5410 = vmatmul.mubr.bf16.gmra.mrb[0].mxu0 %v5198
      %v5411 = vpop.f32.mrb[0].mxu0
      %v5412 = vadd.f32 0.0, %v5411
      %v5413 = vpop.f32.mrb[0].mxu0
      %v5414 = vpop.f32.mrb[0].mxu0
      %v5415 = vadd.f32 0.0, %v5414
      %v5416 = vpop.f32.mrb[0].mxu0
      %5417 = vmatprep.mubr.bf16.mxu0 0
      %5418 = vmatmul.mubr.bf16.gmra.mrb[0].mxu0 %v5201
      %v5419 = vpop.f32.mrb[0].mxu0
      %v5420 = vadd.f32 0.0, %v5419
      %v5421 = vpop.f32.mrb[0].mxu0
      %v5422 = vpop.f32.mrb[0].mxu0
      %v5423 = vadd.f32 0.0, %v5422
      %v5424 = vpop.f32.mrb[0].mxu0
      %5425 = vmatprep.mubr.bf16.mxu0 0
      %5426 = vmatmul.mubr.bf16.gmra.mrb[0].mxu0 %v5204
      %v5427 = vpop.f32.mrb[0].mxu0
      %v5428 = vadd.f32 0.0, %v5427
      %v5429 = vpop.f32.mrb[0].mxu0
      %v5430 = vpop.f32.mrb[0].mxu0
      %v5431 = vadd.f32 0.0, %v5430
      %v5432 = vpop.f32.mrb[0].mxu0
      %5433 = vmatprep.mubr.bf16.mxu0 0
      %5434 = vmatmul.mubr.bf16.gmra.mrb[0].mxu0 %v5207
      %v5435 = vpop.f32.mrb[0].mxu0
      %v5436 = vadd.f32 0.0, %v5435
      %v5437 = vpop.f32.mrb[0].mxu0
      %v5438 = vpop.f32.mrb[0].mxu0
      %v5439 = vadd.f32 0.0, %v5438
      %v5440 = vpop.f32.mrb[0].mxu0
      %5441 = vdwg.mxu0
      %v5442 = vadd.f32 %v4973, %v5244
      %v5443 = vadd.f32 %v4974, %v5247
      %v5444 = vadd.f32 %v4975, %v5252
      %v5445 = vadd.f32 %v4976, %v5255
      %v5446 = vadd.f32 %v4977, %v5260
      %v5447 = vadd.f32 %v4978, %v5263
      %v5448 = vadd.f32 %v4979, %v5268
      %v5449 = vadd.f32 %v4980, %v5271
      %v5450 = vadd.f32 %v4981, %v5276
      %v5451 = vadd.f32 %v4982, %v5279
      %v5452 = vadd.f32 %v4983, %v5284
      %v5453 = vadd.f32 %v4984, %v5287
      %v5454 = vadd.f32 %v4985, %v5292
      %v5455 = vadd.f32 %v4986, %v5295
      %v5456 = vadd.f32 %v4987, %v5300
      %v5457 = vadd.f32 %v4988, %v5303
      %v5458 = vadd.f32 %v4989, %v5308
      %v5459 = vadd.f32 %v4990, %v5311
      %v5460 = vadd.f32 %v4991, %v5316
      %v5461 = vadd.f32 %v4992, %v5319
      %v5462 = vadd.f32 %v4993, %v5324
      %v5463 = vadd.f32 %v4994, %v5327
      %v5464 = vadd.f32 %v4995, %v5332
      %v5465 = vadd.f32 %v4996, %v5335
      %v5466 = vadd.f32 %v4997, %v5340
      %v5467 = vadd.f32 %v4998, %v5343
      %v5468 = vadd.f32 %v4999, %v5348
      %v5469 = vadd.f32 %v5000, %v5351
      %v5470 = vadd.f32 %v5001, %v5356
      %v5471 = vadd.f32 %v5002, %v5359
      %v5472 = vadd.f32 %v5003, %v5364
      %v5473 = vadd.f32 %v5004, %v5367
      %v5474 = vadd.f32 %v5005, %v5372
      %v5475 = vadd.f32 %v5006, %v5375
      %v5476 = vadd.f32 %v5007, %v5380
      %v5477 = vadd.f32 %v5008, %v5383
      %v5478 = vadd.f32 %v5009, %v5388
      %v5479 = vadd.f32 %v5010, %v5391
      %v5480 = vadd.f32 %v5011, %v5396
      %v5481 = vadd.f32 %v5012, %v5399
      %v5482 = vadd.f32 %v5013, %v5404
      %v5483 = vadd.f32 %v5014, %v5407
      %v5484 = vadd.f32 %v5015, %v5412
      %v5485 = vadd.f32 %v5016, %v5415
      %v5486 = vadd.f32 %v5017, %v5420
      %v5487 = vadd.f32 %v5018, %v5423
      %v5488 = vadd.f32 %v5019, %v5428
      %v5489 = vadd.f32 %v5020, %v5431
      %v5490 = vadd.f32 %v5021, %v5436
      %v5491 = vadd.f32 %v5022, %v5439
      %v5492 = vmul.f32 %v2489, %v3958
      %v5493 = vmul.f32 %v2453, %v3960
      %v5494 = vmul.f32 %v2455, %v3962
      %v5495 = vmul.f32 %v2457, %v3964
      %v5496 = vmul.f32 %v2459, %v3966
      %v5497 = vmul.f32 %v2461, %v3968
      %v5498 = vmul.f32 %v2463, %v3970
      %v5499 = vmul.f32 %v2465, %v3972
      %v5500 = vmul.f32 %v2467, %v3974
      %v5501 = vmul.f32 %v2469, %v3976
      %v5502 = vmul.f32 %v2471, %v3978
      %v5503 = vmul.f32 %v2473, %v3980
      %v5504 = vmul.f32 %v2490, %v3982
      %v5505 = vrot.slane %v2541, 3
      %v5506 = vrot.slane %v2507, 3
      %v5507 = vsel %vm1235, %v5505, %v5506
      %v5508 = vrot.slane %v2509, 3
      %v5509 = vsel %vm1235, %v5506, %v5508
      %v5510 = vrot.slane %v2511, 3
      %v5511 = vsel %vm1235, %v5508, %v5510
      %v5512 = vrot.slane %v2513, 3
      %v5513 = vsel %vm1235, %v5510, %v5512
      %v5514 = vrot.slane %v2515, 3
      %v5515 = vsel %vm1235, %v5512, %v5514
      %v5516 = vrot.slane %v2517, 3
      %v5517 = vsel %vm1235, %v5514, %v5516
      %v5518 = vrot.slane %v2519, 3
      %v5519 = vsel %vm1235, %v5516, %v5518
      %v5520 = vrot.slane %v2521, 3
      %v5521 = vsel %vm1235, %v5518, %v5520
      %v5522 = vrot.slane %v2523, 3
      %v5523 = vsel %vm1235, %v5520, %v5522
      %v5524 = vrot.slane %v2525, 3
      %v5525 = vsel %vm1235, %v5522, %v5524
      %v5526 = vrot.slane %v2527, 3
      %v5527 = vsel %vm1235, %v5524, %v5526
      %v5528 = vrot.slane %v2542, 3
      %v5529 = vsel %vm1235, %v5526, %v5528
      %v5543 = vsel %vm1234, %v5528, %v5492
      %v5544 = vpack.c.bf16 %v4101, %v4099
      %v5545 = vpack.c.bf16 %v4105, %v4103
      %v5546 = vpack.c.bf16 %v4109, %v4107
      %v5547 = vpack.c.bf16 %v4113, %v4111
      %v5548 = vpack.c.bf16 %v4117, %v4115
      %v5549 = vpack.c.bf16 %v4121, %v4119
      %v5550 = vpack.c.bf16 %v3997, %v4136
      %v5551 = vpack.c.bf16 %v3999, %v3998
      %v5552 = vpack.c.bf16 %v4001, %v4000
      %v5553 = vpack.c.bf16 %v4003, %v4002
      %v5554 = vpack.c.bf16 %v4005, %v4004
      %v5555 = vpack.c.bf16 %v4007, %v4006
      %v5556 = vpack.c.bf16 %v5507, %v4008
      %v5557 = vpack.c.bf16 %v5511, %v5509
      %v5558 = vpack.c.bf16 %v5515, %v5513
      %v5559 = vpack.c.bf16 %v5519, %v5517
      %v5560 = vpack.c.bf16 %v5523, %v5521
      %v5561 = vpack.c.bf16 %v5527, %v5525
      %v5562 = vpack.c.bf16 %v5543, %v5529
      %v5563 = vpack.c.bf16 %v5494, %v5493
      %v5564 = vpack.c.bf16 %v5496, %v5495
      %v5565 = vpack.c.bf16 %v5498, %v5497
      %v5566 = vpack.c.bf16 %v5500, %v5499
      %v5567 = vpack.c.bf16 %v5502, %v5501
      %v5568 = vpack.c.bf16 %v5504, %v5503
      %v5569 = vld [vmem:[%s3 + $0x28] sm:$0xf]
      %v5570 = vld [vmem:[%s3 + $0x2c] sm:$0xf]
      %v5573 = vunpack.c.l.b16 %v5569
      %v5574 = vunpack.c.l.b16 %v5570
      %v5575 = vpack.c.b16 %v5574, %v5573
      %v5578 = vsel %vm3271, %v5544, 0
      %v5581 = vsel %vm3271, %v5545, 0
      %v5584 = vsel %vm3271, %v5546, 0
      %v5587 = vsel %vm3271, %v5547, 0
      %v5590 = vsel %vm3271, %v5548, 0
      %v5593 = vsel %vm3271, %v5549, 0
      %v5596 = vsel %vm3271, %v5550, 0
      %v5599 = vsel %vm3271, %v5551, 0
      %v5602 = vsel %vm3271, %v5552, 0
      %v5605 = vsel %vm3271, %v5553, 0
      %v5608 = vsel %vm3271, %v5554, 0
      %v5611 = vsel %vm3271, %v5555, 0
      %v5614 = vsel %vm3271, %v5556, 0
      %v5617 = vsel %vm3271, %v5557, 0
      %v5620 = vsel %vm3271, %v5558, 0
      %v5623 = vsel %vm3271, %v5559, 0
      %v5626 = vsel %vm3271, %v5560, 0
      %v5629 = vsel %vm3271, %v5561, 0
      %v5632 = vsel %vm3271, %v5562, 0
      %v5635 = vsel %vm3271, %v5563, 0
      %v5638 = vsel %vm3271, %v5564, 0
      %v5641 = vsel %vm3271, %v5565, 0
      %v5644 = vsel %vm3271, %v5566, 0
      %v5647 = vsel %vm3271, %v5567, 0
      %v5650 = vsel %vm3271, %v5568, 0
      %5652 = vmatprep.subr.bf16.mxu0 0
      %5653 = vmatpush1.bf16.msra.mxu0 %v5575
      %5654 = vmatprep.subr.bf16.mxu0 0
      %5655 = vmatpush1.bf16.msra.mxu0 0
      %5656 = vmatprep.subr.bf16.mxu0 0
      %5657 = vmatpush1.bf16.msra.mxu0 0
      %5658 = vmatprep.subr.bf16.mxu0 0
      %5659 = vmatpush1.bf16.msra.mxu0 0
      %5660 = vmatprep.subr.bf16.mxu0 0
      %5661 = vmatpush1.bf16.msra.mxu0 0
      %5662 = vmatprep.subr.bf16.mxu0 0
      %5663 = vmatpush1.bf16.msra.mxu0 0
      %5664 = vmatprep.subr.bf16.mxu0 0
      %5665 = vmatpush1.bf16.msra.mxu0 0
      %5666 = vmatprep.subr.bf16.mxu0 0
      %5667 = vmatpush1.bf16.msra.mxu0 0
      %5668 = vmatprep.subr.bf16.mxu0 0
      %5669 = vmatpush1.bf16.msra.mxu0 0
      %5670 = vmatprep.subr.bf16.mxu0 0
      %5671 = vmatpush1.bf16.msra.mxu0 0
      %5672 = vmatprep.subr.bf16.mxu0 0
      %5673 = vmatpush1.bf16.msra.mxu0 0
      %5674 = vmatprep.subr.bf16.mxu0 0
      %5675 = vmatpush1.bf16.msra.mxu0 0
      %5676 = vmatprep.subr.bf16.mxu0 0
      %5677 = vmatpush1.bf16.msra.mxu0 0
      %5678 = vmatprep.subr.bf16.mxu0 0
      %5679 = vmatpush1.bf16.msra.mxu0 0
      %5680 = vmatprep.subr.bf16.mxu0 0
      %5681 = vmatpush1.bf16.msra.mxu0 0
      %5682 = vmatprep.subr.bf16.mxu0 0
      %5683 = vmatpush1.bf16.msra.mxu0 0
      %5684 = vmatprep.mubr.bf16.mxu0 0
      %5685 = vmatmul.mubr.bf16.gmra.mrb[0].mxu0 %v5578
      %v5686 = vpop.f32.mrb[0].mxu0
      %v5687 = vadd.f32 0.0, %v5686
      %v5688 = vpop.f32.mrb[0].mxu0
      %v5689 = vpop.f32.mrb[0].mxu0
      %v5690 = vadd.f32 0.0, %v5689
      %v5691 = vpop.f32.mrb[0].mxu0
      %5692 = vmatprep.mubr.bf16.mxu0 0
      %5693 = vmatmul.mubr.bf16.gmra.mrb[0].mxu0 %v5581
      %v5694 = vpop.f32.mrb[0].mxu0
      %v5695 = vadd.f32 0.0, %v5694
      %v5696 = vpop.f32.mrb[0].mxu0
      %v5697 = vpop.f32.mrb[0].mxu0
      %v5698 = vadd.f32 0.0, %v5697
      %v5699 = vpop.f32.mrb[0].mxu0
      %5700 = vmatprep.mubr.bf16.mxu0 0
      %5701 = vmatmul.mubr.bf16.gmra.mrb[0].mxu0 %v5584
      %v5702 = vpop.f32.mrb[0].mxu0
      %v5703 = vadd.f32 0.0, %v5702
      %v5704 = vpop.f32.mrb[0].mxu0
      %v5705 = vpop.f32.mrb[0].mxu0
      %v5706 = vadd.f32 0.0, %v5705
      %v5707 = vpop.f32.mrb[0].mxu0
      %5708 = vmatprep.mubr.bf16.mxu0 0
      %5709 = vmatmul.mubr.bf16.gmra.mrb[0].mxu0 %v5587
      %v5710 = vpop.f32.mrb[0].mxu0
      %v5711 = vadd.f32 0.0, %v5710
      %v5712 = vpop.f32.mrb[0].mxu0
      %v5713 = vpop.f32.mrb[0].mxu0
      %v5714 = vadd.f32 0.0, %v5713
      %v5715 = vpop.f32.mrb[0].mxu0
      %5716 = vmatprep.mubr.bf16.mxu0 0
      %5717 = vmatmul.mubr.bf16.gmra.mrb[0].mxu0 %v5590
      %v5718 = vpop.f32.mrb[0].mxu0
      %v5719 = vadd.f32 0.0, %v5718
      %v5720 = vpop.f32.mrb[0].mxu0
      %v5721 = vpop.f32.mrb[0].mxu0
      %v5722 = vadd.f32 0.0, %v5721
      %v5723 = vpop.f32.mrb[0].mxu0
      %5724 = vmatprep.mubr.bf16.mxu0 0
      %5725 = vmatmul.mubr.bf16.gmra.mrb[0].mxu0 %v5593
      %v5726 = vpop.f32.mrb[0].mxu0
      %v5727 = vadd.f32 0.0, %v5726
      %v5728 = vpop.f32.mrb[0].mxu0
      %v5729 = vpop.f32.mrb[0].mxu0
      %v5730 = vadd.f32 0.0, %v5729
      %v5731 = vpop.f32.mrb[0].mxu0
      %5732 = vmatprep.mubr.bf16.mxu0 0
      %5733 = vmatmul.mubr.bf16.gmra.mrb[0].mxu0 %v5596
      %v5734 = vpop.f32.mrb[0].mxu0
      %v5735 = vadd.f32 0.0, %v5734
      %v5736 = vpop.f32.mrb[0].mxu0
      %v5737 = vpop.f32.mrb[0].mxu0
      %v5738 = vadd.f32 0.0, %v5737
      %v5739 = vpop.f32.mrb[0].mxu0
      %5740 = vmatprep.mubr.bf16.mxu0 0
      %5741 = vmatmul.mubr.bf16.gmra.mrb[0].mxu0 %v5599
      %v5742 = vpop.f32.mrb[0].mxu0
      %v5743 = vadd.f32 0.0, %v5742
      %v5744 = vpop.f32.mrb[0].mxu0
      %v5745 = vpop.f32.mrb[0].mxu0
      %v5746 = vadd.f32 0.0, %v5745
      %v5747 = vpop.f32.mrb[0].mxu0
      %5748 = vmatprep.mubr.bf16.mxu0 0
      %5749 = vmatmul.mubr.bf16.gmra.mrb[0].mxu0 %v5602
      %v5750 = vpop.f32.mrb[0].mxu0
      %v5751 = vadd.f32 0.0, %v5750
      %v5752 = vpop.f32.mrb[0].mxu0
      %v5753 = vpop.f32.mrb[0].mxu0
      %v5754 = vadd.f32 0.0, %v5753
      %v5755 = vpop.f32.mrb[0].mxu0
      %5756 = vmatprep.mubr.bf16.mxu0 0
      %5757 = vmatmul.mubr.bf16.gmra.mrb[0].mxu0 %v5605
      %v5758 = vpop.f32.mrb[0].mxu0
      %v5759 = vadd.f32 0.0, %v5758
      %v5760 = vpop.f32.mrb[0].mxu0
      %v5761 = vpop.f32.mrb[0].mxu0
      %v5762 = vadd.f32 0.0, %v5761
      %v5763 = vpop.f32.mrb[0].mxu0
      %5764 = vmatprep.mubr.bf16.mxu0 0
      %5765 = vmatmul.mubr.bf16.gmra.mrb[0].mxu0 %v5608
      %v5766 = vpop.f32.mrb[0].mxu0
      %v5767 = vadd.f32 0.0, %v5766
      %v5768 = vpop.f32.mrb[0].mxu0
      %v5769 = vpop.f32.mrb[0].mxu0
      %v5770 = vadd.f32 0.0, %v5769
      %v5771 = vpop.f32.mrb[0].mxu0
      %5772 = vmatprep.mubr.bf16.mxu0 0
      %5773 = vmatmul.mubr.bf16.gmra.mrb[0].mxu0 %v5611
      %v5774 = vpop.f32.mrb[0].mxu0
      %v5775 = vadd.f32 0.0, %v5774
      %v5776 = vpop.f32.mrb[0].mxu0
      %v5777 = vpop.f32.mrb[0].mxu0
      %v5778 = vadd.f32 0.0, %v5777
      %v5779 = vpop.f32.mrb[0].mxu0
      %5780 = vmatprep.mubr.bf16.mxu0 0
      %5781 = vmatmul.mubr.bf16.gmra.mrb[0].mxu0 %v5614
      %v5782 = vpop.f32.mrb[0].mxu0
      %v5783 = vadd.f32 0.0, %v5782
      %v5784 = vpop.f32.mrb[0].mxu0
      %v5785 = vpop.f32.mrb[0].mxu0
      %v5786 = vadd.f32 0.0, %v5785
      %v5787 = vpop.f32.mrb[0].mxu0
      %5788 = vmatprep.mubr.bf16.mxu0 0
      %5789 = vmatmul.mubr.bf16.gmra.mrb[0].mxu0 %v5617
      %v5790 = vpop.f32.mrb[0].mxu0
      %v5791 = vadd.f32 0.0, %v5790
      %v5792 = vpop.f32.mrb[0].mxu0
      %v5793 = vpop.f32.mrb[0].mxu0
      %v5794 = vadd.f32 0.0, %v5793
      %v5795 = vpop.f32.mrb[0].mxu0
      %5796 = vmatprep.mubr.bf16.mxu0 0
      %5797 = vmatmul.mubr.bf16.gmra.mrb[0].mxu0 %v5620
      %v5798 = vpop.f32.mrb[0].mxu0
      %v5799 = vadd.f32 0.0, %v5798
      %v5800 = vpop.f32.mrb[0].mxu0
      %v5801 = vpop.f32.mrb[0].mxu0
      %v5802 = vadd.f32 0.0, %v5801
      %v5803 = vpop.f32.mrb[0].mxu0
      %5804 = vmatprep.mubr.bf16.mxu0 0
      %5805 = vmatmul.mubr.bf16.gmra.mrb[0].mxu0 %v5623
      %v5806 = vpop.f32.mrb[0].mxu0
      %v5807 = vadd.f32 0.0, %v5806
      %v5808 = vpop.f32.mrb[0].mxu0
      %v5809 = vpop.f32.mrb[0].mxu0
      %v5810 = vadd.f32 0.0, %v5809
      %v5811 = vpop.f32.mrb[0].mxu0
      %5812 = vmatprep.mubr.bf16.mxu0 0
      %5813 = vmatmul.mubr.bf16.gmra.mrb[0].mxu0 %v5626
      %v5814 = vpop.f32.mrb[0].mxu0
      %v5815 = vadd.f32 0.0, %v5814
      %v5816 = vpop.f32.mrb[0].mxu0
      %v5817 = vpop.f32.mrb[0].mxu0
      %v5818 = vadd.f32 0.0, %v5817
      %v5819 = vpop.f32.mrb[0].mxu0
      %5820 = vmatprep.mubr.bf16.mxu0 0
      %5821 = vmatmul.mubr.bf16.gmra.mrb[0].mxu0 %v5629
      %v5822 = vpop.f32.mrb[0].mxu0
      %v5823 = vadd.f32 0.0, %v5822
      %v5824 = vpop.f32.mrb[0].mxu0
      %v5825 = vpop.f32.mrb[0].mxu0
      %v5826 = vadd.f32 0.0, %v5825
      %v5827 = vpop.f32.mrb[0].mxu0
      %5828 = vmatprep.mubr.bf16.mxu0 0
      %5829 = vmatmul.mubr.bf16.gmra.mrb[0].mxu0 %v5632
      %v5830 = vpop.f32.mrb[0].mxu0
      %v5831 = vadd.f32 0.0, %v5830
      %v5832 = vpop.f32.mrb[0].mxu0
      %v5833 = vpop.f32.mrb[0].mxu0
      %v5834 = vadd.f32 0.0, %v5833
      %v5835 = vpop.f32.mrb[0].mxu0
      %5836 = vmatprep.mubr.bf16.mxu0 0
      %5837 = vmatmul.mubr.bf16.gmra.mrb[0].mxu0 %v5635
      %v5838 = vpop.f32.mrb[0].mxu0
      %v5839 = vadd.f32 0.0, %v5838
      %v5840 = vpop.f32.mrb[0].mxu0
      %v5841 = vpop.f32.mrb[0].mxu0
      %v5842 = vadd.f32 0.0, %v5841
      %v5843 = vpop.f32.mrb[0].mxu0
      %5844 = vmatprep.mubr.bf16.mxu0 0
      %5845 = vmatmul.mubr.bf16.gmra.mrb[0].mxu0 %v5638
      %v5846 = vpop.f32.mrb[0].mxu0
      %v5847 = vadd.f32 0.0, %v5846
      %v5848 = vpop.f32.mrb[0].mxu0
      %v5849 = vpop.f32.mrb[0].mxu0
      %v5850 = vadd.f32 0.0, %v5849
      %v5851 = vpop.f32.mrb[0].mxu0
      %5852 = vmatprep.mubr.bf16.mxu0 0
      %5853 = vmatmul.mubr.bf16.gmra.mrb[0].mxu0 %v5641
      %v5854 = vpop.f32.mrb[0].mxu0
      %v5855 = vadd.f32 0.0, %v5854
      %v5856 = vpop.f32.mrb[0].mxu0
      %v5857 = vpop.f32.mrb[0].mxu0
      %v5858 = vadd.f32 0.0, %v5857
      %v5859 = vpop.f32.mrb[0].mxu0
      %5860 = vmatprep.mubr.bf16.mxu0 0
      %5861 = vmatmul.mubr.bf16.gmra.mrb[0].mxu0 %v5644
      %v5862 = vpop.f32.mrb[0].mxu0
      %v5863 = vadd.f32 0.0, %v5862
      %v5864 = vpop.f32.mrb[0].mxu0
      %v5865 = vpop.f32.mrb[0].mxu0
      %v5866 = vadd.f32 0.0, %v5865
      %v5867 = vpop.f32.mrb[0].mxu0
      %5868 = vmatprep.mubr.bf16.mxu0 0
      %5869 = vmatmul.mubr.bf16.gmra.mrb[0].mxu0 %v5647
      %v5870 = vpop.f32.mrb[0].mxu0
      %v5871 = vadd.f32 0.0, %v5870
      %v5872 = vpop.f32.mrb[0].mxu0
      %v5873 = vpop.f32.mrb[0].mxu0
      %v5874 = vadd.f32 0.0, %v5873
      %v5875 = vpop.f32.mrb[0].mxu0
      %5876 = vmatprep.mubr.bf16.mxu0 0
      %5877 = vmatmul.mubr.bf16.gmra.mrb[0].mxu0 %v5650
      %v5878 = vpop.f32.mrb[0].mxu0
      %v5879 = vadd.f32 0.0, %v5878
      %v5880 = vpop.f32.mrb[0].mxu0
      %v5881 = vpop.f32.mrb[0].mxu0
      %v5882 = vadd.f32 0.0, %v5881
      %v5883 = vpop.f32.mrb[0].mxu0
      %5884 = vdwg.mxu0
      %v5885 = vadd.f32 %v5442, %v5687
      %v5886 = vadd.f32 %v5443, %v5690
      %v5887 = vadd.f32 %v5444, %v5695
      %v5888 = vadd.f32 %v5445, %v5698
      %v5889 = vadd.f32 %v5446, %v5703
      %v5890 = vadd.f32 %v5447, %v5706
      %v5891 = vadd.f32 %v5448, %v5711
      %v5892 = vadd.f32 %v5449, %v5714
      %v5893 = vadd.f32 %v5450, %v5719
      %v5894 = vadd.f32 %v5451, %v5722
      %v5895 = vadd.f32 %v5452, %v5727
      %v5896 = vadd.f32 %v5453, %v5730
      %v5897 = vadd.f32 %v5454, %v5735
      %v5898 = vadd.f32 %v5455, %v5738
      %v5899 = vadd.f32 %v5456, %v5743
      %v5900 = vadd.f32 %v5457, %v5746
      %v5901 = vadd.f32 %v5458, %v5751
      %v5902 = vadd.f32 %v5459, %v5754
      %v5903 = vadd.f32 %v5460, %v5759
      %v5904 = vadd.f32 %v5461, %v5762
      %v5905 = vadd.f32 %v5462, %v5767
      %v5906 = vadd.f32 %v5463, %v5770
      %v5907 = vadd.f32 %v5464, %v5775
      %v5908 = vadd.f32 %v5465, %v5778
      %v5909 = vadd.f32 %v5466, %v5783
      %v5910 = vadd.f32 %v5467, %v5786
      %v5911 = vadd.f32 %v5468, %v5791
      %v5912 = vadd.f32 %v5469, %v5794
      %v5913 = vadd.f32 %v5470, %v5799
      %v5914 = vadd.f32 %v5471, %v5802
      %v5915 = vadd.f32 %v5472, %v5807
      %v5916 = vadd.f32 %v5473, %v5810
      %v5917 = vadd.f32 %v5474, %v5815
      %v5918 = vadd.f32 %v5475, %v5818
      %v5919 = vadd.f32 %v5476, %v5823
      %v5920 = vadd.f32 %v5477, %v5826
      %v5921 = vadd.f32 %v5478, %v5831
      %v5922 = vadd.f32 %v5479, %v5834
      %v5923 = vadd.f32 %v5480, %v5839
      %v5924 = vadd.f32 %v5481, %v5842
      %v5925 = vadd.f32 %v5482, %v5847
      %v5926 = vadd.f32 %v5483, %v5850
      %v5927 = vadd.f32 %v5484, %v5855
      %v5928 = vadd.f32 %v5485, %v5858
      %v5929 = vadd.f32 %v5486, %v5863
      %v5930 = vadd.f32 %v5487, %v5866
      %v5931 = vadd.f32 %v5488, %v5871
      %v5932 = vadd.f32 %v5489, %v5874
      %v5933 = vadd.f32 %v5490, %v5879
      %v5934 = vadd.f32 %v5491, %v5882
      %v5935 = vrot.slane %v2791, 4
      %v5936 = vrot.slane %v2792, 4
      %v5937 = vsel %vm1234, %v5935, %v5936
      %v5938 = vrot.slane %v2793, 4
      %v5939 = vsel %vm1234, %v5936, %v5938
      %v5940 = vrot.slane %v2794, 4
      %v5941 = vsel %vm1234, %v5938, %v5940
      %v5942 = vrot.slane %v2795, 4
      %v5943 = vsel %vm1234, %v5940, %v5942
      %v5944 = vrot.slane %v2796, 4
      %v5945 = vsel %vm1234, %v5942, %v5944
      %v5946 = vrot.slane %v2797, 4
      %v5947 = vsel %vm1234, %v5944, %v5946
      %v5948 = vrot.slane %v2798, 4
      %v5949 = vsel %vm1234, %v5946, %v5948
      %v5950 = vrot.slane %v2799, 4
      %v5951 = vsel %vm1234, %v5948, %v5950
      %v5952 = vrot.slane %v2800, 4
      %v5953 = vsel %vm1234, %v5950, %v5952
      %v5954 = vrot.slane %v2801, 4
      %v5955 = vsel %vm1234, %v5952, %v5954
      %v5956 = vrot.slane %v2802, 4
      %v5957 = vsel %vm1234, %v5954, %v5956
      %v5958 = vrot.slane %v2803, 4
      %v5959 = vsel %vm1234, %v5956, %v5958
      %v5973 = vmul.f32 %v2402, %v5935
      %v5974 = vmul.f32 %v2404, %v5937
      %v5975 = vmul.f32 %v2406, %v5939
      %v5976 = vmul.f32 %v2408, %v5941
      %v5977 = vmul.f32 %v2410, %v5943
      %v5978 = vmul.f32 %v2412, %v5945
      %v5979 = vmul.f32 %v2414, %v5947
      %v5980 = vmul.f32 %v2416, %v5949
      %v5981 = vmul.f32 %v2418, %v5951
      %v5982 = vmul.f32 %v2420, %v5953
      %v5983 = vmul.f32 %v2422, %v5955
      %v5984 = vmul.f32 %v2437, %v5957
      %v5985 = vmul.f32 %v5959, 0.0
      %v5999 = vrot.slane %v5973, 4
      %v6000 = vrot.slane %v5974, 4
      %v6001 = vsel %vm1234, %v5999, %v6000
      %v6002 = vrot.slane %v5975, 4
      %v6003 = vsel %vm1234, %v6000, %v6002
      %v6004 = vrot.slane %v5976, 4
      %v6005 = vsel %vm1234, %v6002, %v6004
      %v6006 = vrot.slane %v5977, 4
      %v6007 = vsel %vm1234, %v6004, %v6006
      %v6008 = vrot.slane %v5978, 4
      %v6009 = vsel %vm1234, %v6006, %v6008
      %v6010 = vrot.slane %v5979, 4
      %v6011 = vsel %vm1234, %v6008, %v6010
      %v6012 = vrot.slane %v5980, 4
      %v6013 = vsel %vm1234, %v6010, %v6012
      %v6014 = vrot.slane %v5981, 4
      %v6015 = vsel %vm1234, %v6012, %v6014
      %v6016 = vrot.slane %v5982, 4
      %v6017 = vsel %vm1234, %v6014, %v6016
      %v6018 = vrot.slane %v5983, 4
      %v6019 = vsel %vm1234, %v6016, %v6018
      %v6020 = vrot.slane %v5984, 4
      %v6021 = vsel %vm1234, %v6018, %v6020
      %v6022 = vrot.slane %v5985, 4
      %v6023 = vsel %vm1234, %v6020, %v6022
      %v6037 = vrot.slane %v2347, 1
      %v6038 = vrot.slane %v2349, 1
      %v6039 = vsel %vm2384, %v6037, %v6038
      %v6040 = vrot.slane %v2351, 1
      %v6041 = vsel %vm2384, %v6038, %v6040
      %v6042 = vrot.slane %v2353, 1
      %v6043 = vsel %vm2384, %v6040, %v6042
      %v6044 = vrot.slane %v2355, 1
      %v6045 = vsel %vm2384, %v6042, %v6044
      %v6046 = vrot.slane %v2357, 1
      %v6047 = vsel %vm2384, %v6044, %v6046
      %v6048 = vrot.slane %v2359, 1
      %v6049 = vsel %vm2384, %v6046, %v6048
      %v6050 = vrot.slane %v2361, 1
      %v6051 = vsel %vm2384, %v6048, %v6050
      %v6052 = vrot.slane %v2363, 1
      %v6053 = vsel %vm2384, %v6050, %v6052
      %v6054 = vrot.slane %v2365, 1
      %v6055 = vsel %vm2384, %v6052, %v6054
      %v6056 = vrot.slane %v2367, 1
      %v6057 = vsel %vm2384, %v6054, %v6056
      %v6058 = vrot.slane %v2385, 1
      %v6059 = vsel %vm2384, %v6056, %v6058
      %v6060 = vsel %vm2384, %v6058, %v3083
      %v6061 = vsel %vm2384, %v3083, %v3083
      %v6075 = vsel %vm1234, %v6022, %v6039
      %v6076 = vpack.c.bf16 %v4558, %v4556
      %v6077 = vpack.c.bf16 %v4562, %v4560
      %v6078 = vpack.c.bf16 %v4566, %v4564
      %v6079 = vpack.c.bf16 %v4570, %v4568
      %v6080 = vpack.c.bf16 %v4574, %v4572
      %v6081 = vpack.c.bf16 %v4578, %v4576
      %v6082 = vpack.c.bf16 %v4595, %v4631
      %v6083 = vpack.c.bf16 %v4599, %v4597
      %v6084 = vpack.c.bf16 %v4603, %v4601
      %v6085 = vpack.c.bf16 %v4607, %v4605
      %v6086 = vpack.c.bf16 %v4611, %v4609
      %v6087 = vpack.c.bf16 %v4615, %v4613
      %v6088 = vpack.c.bf16 %v6001, %v4617
      %v6089 = vpack.c.bf16 %v6005, %v6003
      %v6090 = vpack.c.bf16 %v6009, %v6007
      %v6091 = vpack.c.bf16 %v6013, %v6011
      %v6092 = vpack.c.bf16 %v6017, %v6015
      %v6093 = vpack.c.bf16 %v6021, %v6019
      %v6094 = vpack.c.bf16 %v6075, %v6023
      %v6095 = vpack.c.bf16 %v6043, %v6041
      %v6096 = vpack.c.bf16 %v6047, %v6045
      %v6097 = vpack.c.bf16 %v6051, %v6049
      %v6098 = vpack.c.bf16 %v6055, %v6053
      %v6099 = vpack.c.bf16 %v6059, %v6057
      %v6100 = vpack.c.bf16 %v6061, %v6060
      %v6101 = vld [vmem:[%s3 + $0x30] sm:$0xf]
      %v6102 = vld [vmem:[%s3 + $0x34] sm:$0xf]
      %v6105 = vunpack.c.l.b16 %v6101
      %v6106 = vunpack.c.l.b16 %v6102
      %v6107 = vpack.c.b16 %v6106, %v6105
      %v6110 = vsel %vm3271, %v6076, 0
      %v6113 = vsel %vm3271, %v6077, 0
      %v6116 = vsel %vm3271, %v6078, 0
      %v6119 = vsel %vm3271, %v6079, 0
      %v6122 = vsel %vm3271, %v6080, 0
      %v6125 = vsel %vm3271, %v6081, 0
      %v6128 = vsel %vm3271, %v6082, 0
      %v6131 = vsel %vm3271, %v6083, 0
      %v6134 = vsel %vm3271, %v6084, 0
      %v6137 = vsel %vm3271, %v6085, 0
      %v6140 = vsel %vm3271, %v6086, 0
      %v6143 = vsel %vm3271, %v6087, 0
      %v6146 = vsel %vm3271, %v6088, 0
      %v6149 = vsel %vm3271, %v6089, 0
      %v6152 = vsel %vm3271, %v6090, 0
      %v6155 = vsel %vm3271, %v6091, 0
      %v6158 = vsel %vm3271, %v6092, 0
      %v6161 = vsel %vm3271, %v6093, 0
      %v6164 = vsel %vm3271, %v6094, 0
      %v6167 = vsel %vm3271, %v6095, 0
      %v6170 = vsel %vm3271, %v6096, 0
      %v6173 = vsel %vm3271, %v6097, 0
      %v6176 = vsel %vm3271, %v6098, 0
      %v6179 = vsel %vm3271, %v6099, 0
      %v6182 = vsel %vm3271, %v6100, 0
      %6184 = vmatprep.subr.bf16.mxu0 0
      %6185 = vmatpush1.bf16.msra.mxu0 %v6107
      %6186 = vmatprep.subr.bf16.mxu0 0
      %6187 = vmatpush1.bf16.msra.mxu0 0
      %6188 = vmatprep.subr.bf16.mxu0 0
      %6189 = vmatpush1.bf16.msra.mxu0 0
      %6190 = vmatprep.subr.bf16.mxu0 0
      %6191 = vmatpush1.bf16.msra.mxu0 0
      %6192 = vmatprep.subr.bf16.mxu0 0
      %6193 = vmatpush1.bf16.msra.mxu0 0
      %6194 = vmatprep.subr.bf16.mxu0 0
      %6195 = vmatpush1.bf16.msra.mxu0 0
      %6196 = vmatprep.subr.bf16.mxu0 0
      %6197 = vmatpush1.bf16.msra.mxu0 0
      %6198 = vmatprep.subr.bf16.mxu0 0
      %6199 = vmatpush1.bf16.msra.mxu0 0
      %6200 = vmatprep.subr.bf16.mxu0 0
      %6201 = vmatpush1.bf16.msra.mxu0 0
      %6202 = vmatprep.subr.bf16.mxu0 0
      %6203 = vmatpush1.bf16.msra.mxu0 0
      %6204 = vmatprep.subr.bf16.mxu0 0
      %6205 = vmatpush1.bf16.msra.mxu0 0
      %6206 = vmatprep.subr.bf16.mxu0 0
      %6207 = vmatpush1.bf16.msra.mxu0 0
      %6208 = vmatprep.subr.bf16.mxu0 0
      %6209 = vmatpush1.bf16.msra.mxu0 0
      %6210 = vmatprep.subr.bf16.mxu0 0
      %6211 = vmatpush1.bf16.msra.mxu0 0
      %6212 = vmatprep.subr.bf16.mxu0 0
      %6213 = vmatpush1.bf16.msra.mxu0 0
      %6214 = vmatprep.subr.bf16.mxu0 0
      %6215 = vmatpush1.bf16.msra.mxu0 0
      %6216 = vmatprep.mubr.bf16.mxu0 0
      %6217 = vmatmul.mubr.bf16.gmra.mrb[0].mxu0 %v6110
      %v6218 = vpop.f32.mrb[0].mxu0
      %v6219 = vadd.f32 0.0, %v6218
      %v6220 = vpop.f32.mrb[0].mxu0
      %v6221 = vpop.f32.mrb[0].mxu0
      %v6222 = vadd.f32 0.0, %v6221
      %v6223 = vpop.f32.mrb[0].mxu0
      %6224 = vmatprep.mubr.bf16.mxu0 0
      %6225 = vmatmul.mubr.bf16.gmra.mrb[0].mxu0 %v6113
      %v6226 = vpop.f32.mrb[0].mxu0
      %v6227 = vadd.f32 0.0, %v6226
      %v6228 = vpop.f32.mrb[0].mxu0
      %v6229 = vpop.f32.mrb[0].mxu0
      %v6230 = vadd.f32 0.0, %v6229
      %v6231 = vpop.f32.mrb[0].mxu0
      %6232 = vmatprep.mubr.bf16.mxu0 0
      %6233 = vmatmul.mubr.bf16.gmra.mrb[0].mxu0 %v6116
      %v6234 = vpop.f32.mrb[0].mxu0
      %v6235 = vadd.f32 0.0, %v6234
      %v6236 = vpop.f32.mrb[0].mxu0
      %v6237 = vpop.f32.mrb[0].mxu0
      %v6238 = vadd.f32 0.0, %v6237
      %v6239 = vpop.f32.mrb[0].mxu0
      %6240 = vmatprep.mubr.bf16.mxu0 0
      %6241 = vmatmul.mubr.bf16.gmra.mrb[0].mxu0 %v6119
      %v6242 = vpop.f32.mrb[0].mxu0
      %v6243 = vadd.f32 0.0, %v6242
      %v6244 = vpop.f32.mrb[0].mxu0
      %v6245 = vpop.f32.mrb[0].mxu0
      %v6246 = vadd.f32 0.0, %v6245
      %v6247 = vpop.f32.mrb[0].mxu0
      %6248 = vmatprep.mubr.bf16.mxu0 0
      %6249 = vmatmul.mubr.bf16.gmra.mrb[0].mxu0 %v6122
      %v6250 = vpop.f32.mrb[0].mxu0
      %v6251 = vadd.f32 0.0, %v6250
      %v6252 = vpop.f32.mrb[0].mxu0
      %v6253 = vpop.f32.mrb[0].mxu0
      %v6254 = vadd.f32 0.0, %v6253
      %v6255 = vpop.f32.mrb[0].mxu0
      %6256 = vmatprep.mubr.bf16.mxu0 0
      %6257 = vmatmul.mubr.bf16.gmra.mrb[0].mxu0 %v6125
      %v6258 = vpop.f32.mrb[0].mxu0
      %v6259 = vadd.f32 0.0, %v6258
      %v6260 = vpop.f32.mrb[0].mxu0
      %v6261 = vpop.f32.mrb[0].mxu0
      %v6262 = vadd.f32 0.0, %v6261
      %v6263 = vpop.f32.mrb[0].mxu0
      %6264 = vmatprep.mubr.bf16.mxu0 0
      %6265 = vmatmul.mubr.bf16.gmra.mrb[0].mxu0 %v6128
      %v6266 = vpop.f32.mrb[0].mxu0
      %v6267 = vadd.f32 0.0, %v6266
      %v6268 = vpop.f32.mrb[0].mxu0
      %v6269 = vpop.f32.mrb[0].mxu0
      %v6270 = vadd.f32 0.0, %v6269
      %v6271 = vpop.f32.mrb[0].mxu0
      %6272 = vmatprep.mubr.bf16.mxu0 0
      %6273 = vmatmul.mubr.bf16.gmra.mrb[0].mxu0 %v6131
      %v6274 = vpop.f32.mrb[0].mxu0
      %v6275 = vadd.f32 0.0, %v6274
      %v6276 = vpop.f32.mrb[0].mxu0
      %v6277 = vpop.f32.mrb[0].mxu0
      %v6278 = vadd.f32 0.0, %v6277
      %v6279 = vpop.f32.mrb[0].mxu0
      %6280 = vmatprep.mubr.bf16.mxu0 0
      %6281 = vmatmul.mubr.bf16.gmra.mrb[0].mxu0 %v6134
      %v6282 = vpop.f32.mrb[0].mxu0
      %v6283 = vadd.f32 0.0, %v6282
      %v6284 = vpop.f32.mrb[0].mxu0
      %v6285 = vpop.f32.mrb[0].mxu0
      %v6286 = vadd.f32 0.0, %v6285
      %v6287 = vpop.f32.mrb[0].mxu0
      %6288 = vmatprep.mubr.bf16.mxu0 0
      %6289 = vmatmul.mubr.bf16.gmra.mrb[0].mxu0 %v6137
      %v6290 = vpop.f32.mrb[0].mxu0
      %v6291 = vadd.f32 0.0, %v6290
      %v6292 = vpop.f32.mrb[0].mxu0
      %v6293 = vpop.f32.mrb[0].mxu0
      %v6294 = vadd.f32 0.0, %v6293
      %v6295 = vpop.f32.mrb[0].mxu0
      %6296 = vmatprep.mubr.bf16.mxu0 0
      %6297 = vmatmul.mubr.bf16.gmra.mrb[0].mxu0 %v6140
      %v6298 = vpop.f32.mrb[0].mxu0
      %v6299 = vadd.f32 0.0, %v6298
      %v6300 = vpop.f32.mrb[0].mxu0
      %v6301 = vpop.f32.mrb[0].mxu0
      %v6302 = vadd.f32 0.0, %v6301
      %v6303 = vpop.f32.mrb[0].mxu0
      %6304 = vmatprep.mubr.bf16.mxu0 0
      %6305 = vmatmul.mubr.bf16.gmra.mrb[0].mxu0 %v6143
      %v6306 = vpop.f32.mrb[0].mxu0
      %v6307 = vadd.f32 0.0, %v6306
      %v6308 = vpop.f32.mrb[0].mxu0
      %v6309 = vpop.f32.mrb[0].mxu0
      %v6310 = vadd.f32 0.0, %v6309
      %v6311 = vpop.f32.mrb[0].mxu0
      %6312 = vmatprep.mubr.bf16.mxu0 0
      %6313 = vmatmul.mubr.bf16.gmra.mrb[0].mxu0 %v6146
      %v6314 = vpop.f32.mrb[0].mxu0
      %v6315 = vadd.f32 0.0, %v6314
      %v6316 = vpop.f32.mrb[0].mxu0
      %v6317 = vpop.f32.mrb[0].mxu0
      %v6318 = vadd.f32 0.0, %v6317
      %v6319 = vpop.f32.mrb[0].mxu0
      %6320 = vmatprep.mubr.bf16.mxu0 0
      %6321 = vmatmul.mubr.bf16.gmra.mrb[0].mxu0 %v6149
      %v6322 = vpop.f32.mrb[0].mxu0
      %v6323 = vadd.f32 0.0, %v6322
      %v6324 = vpop.f32.mrb[0].mxu0
      %v6325 = vpop.f32.mrb[0].mxu0
      %v6326 = vadd.f32 0.0, %v6325
      %v6327 = vpop.f32.mrb[0].mxu0
      %6328 = vmatprep.mubr.bf16.mxu0 0
      %6329 = vmatmul.mubr.bf16.gmra.mrb[0].mxu0 %v6152
      %v6330 = vpop.f32.mrb[0].mxu0
      %v6331 = vadd.f32 0.0, %v6330
      %v6332 = vpop.f32.mrb[0].mxu0
      %v6333 = vpop.f32.mrb[0].mxu0
      %v6334 = vadd.f32 0.0, %v6333
      %v6335 = vpop.f32.mrb[0].mxu0
      %6336 = vmatprep.mubr.bf16.mxu0 0
      %6337 = vmatmul.mubr.bf16.gmra.mrb[0].mxu0 %v6155
      %v6338 = vpop.f32.mrb[0].mxu0
      %v6339 = vadd.f32 0.0, %v6338
      %v6340 = vpop.f32.mrb[0].mxu0
      %v6341 = vpop.f32.mrb[0].mxu0
      %v6342 = vadd.f32 0.0, %v6341
      %v6343 = vpop.f32.mrb[0].mxu0
      %6344 = vmatprep.mubr.bf16.mxu0 0
      %6345 = vmatmul.mubr.bf16.gmra.mrb[0].mxu0 %v6158
      %v6346 = vpop.f32.mrb[0].mxu0
      %v6347 = vadd.f32 0.0, %v6346
      %v6348 = vpop.f32.mrb[0].mxu0
      %v6349 = vpop.f32.mrb[0].mxu0
      %v6350 = vadd.f32 0.0, %v6349
      %v6351 = vpop.f32.mrb[0].mxu0
      %6352 = vmatprep.mubr.bf16.mxu0 0
      %6353 = vmatmul.mubr.bf16.gmra.mrb[0].mxu0 %v6161
      %v6354 = vpop.f32.mrb[0].mxu0
      %v6355 = vadd.f32 0.0, %v6354
      %v6356 = vpop.f32.mrb[0].mxu0
      %v6357 = vpop.f32.mrb[0].mxu0
      %v6358 = vadd.f32 0.0, %v6357
      %v6359 = vpop.f32.mrb[0].mxu0
      %6360 = vmatprep.mubr.bf16.mxu0 0
      %6361 = vmatmul.mubr.bf16.gmra.mrb[0].mxu0 %v6164
      %v6362 = vpop.f32.mrb[0].mxu0
      %v6363 = vadd.f32 0.0, %v6362
      %v6364 = vpop.f32.mrb[0].mxu0
      %v6365 = vpop.f32.mrb[0].mxu0
      %v6366 = vadd.f32 0.0, %v6365
      %v6367 = vpop.f32.mrb[0].mxu0
      %6368 = vmatprep.mubr.bf16.mxu0 0
      %6369 = vmatmul.mubr.bf16.gmra.mrb[0].mxu0 %v6167
      %v6370 = vpop.f32.mrb[0].mxu0
      %v6371 = vadd.f32 0.0, %v6370
      %v6372 = vpop.f32.mrb[0].mxu0
      %v6373 = vpop.f32.mrb[0].mxu0
      %v6374 = vadd.f32 0.0, %v6373
      %v6375 = vpop.f32.mrb[0].mxu0
      %6376 = vmatprep.mubr.bf16.mxu0 0
      %6377 = vmatmul.mubr.bf16.gmra.mrb[0].mxu0 %v6170
      %v6378 = vpop.f32.mrb[0].mxu0
      %v6379 = vadd.f32 0.0, %v6378
      %v6380 = vpop.f32.mrb[0].mxu0
      %v6381 = vpop.f32.mrb[0].mxu0
      %v6382 = vadd.f32 0.0, %v6381
      %v6383 = vpop.f32.mrb[0].mxu0
      %6384 = vmatprep.mubr.bf16.mxu0 0
      %6385 = vmatmul.mubr.bf16.gmra.mrb[0].mxu0 %v6173
      %v6386 = vpop.f32.mrb[0].mxu0
      %v6387 = vadd.f32 0.0, %v6386
      %v6388 = vpop.f32.mrb[0].mxu0
      %v6389 = vpop.f32.mrb[0].mxu0
      %v6390 = vadd.f32 0.0, %v6389
      %v6391 = vpop.f32.mrb[0].mxu0
      %6392 = vmatprep.mubr.bf16.mxu0 0
      %6393 = vmatmul.mubr.bf16.gmra.mrb[0].mxu0 %v6176
      %v6394 = vpop.f32.mrb[0].mxu0
      %v6395 = vadd.f32 0.0, %v6394
      %v6396 = vpop.f32.mrb[0].mxu0
      %v6397 = vpop.f32.mrb[0].mxu0
      %v6398 = vadd.f32 0.0, %v6397
      %v6399 = vpop.f32.mrb[0].mxu0
      %6400 = vmatprep.mubr.bf16.mxu0 0
      %6401 = vmatmul.mubr.bf16.gmra.mrb[0].mxu0 %v6179
      %v6402 = vpop.f32.mrb[0].mxu0
      %v6403 = vadd.f32 0.0, %v6402
      %v6404 = vpop.f32.mrb[0].mxu0
      %v6405 = vpop.f32.mrb[0].mxu0
      %v6406 = vadd.f32 0.0, %v6405
      %v6407 = vpop.f32.mrb[0].mxu0
      %6408 = vmatprep.mubr.bf16.mxu0 0
      %6409 = vmatmul.mubr.bf16.gmra.mrb[0].mxu0 %v6182
      %v6410 = vpop.f32.mrb[0].mxu0
      %v6411 = vadd.f32 0.0, %v6410
      %v6412 = vpop.f32.mrb[0].mxu0
      %v6413 = vpop.f32.mrb[0].mxu0
      %v6414 = vadd.f32 0.0, %v6413
      %v6415 = vpop.f32.mrb[0].mxu0
      %6416 = vdwg.mxu0
      %v6417 = vadd.f32 %v5885, %v6219
      %v6418 = vadd.f32 %v5886, %v6222
      %v6419 = vadd.f32 %v5887, %v6227
      %v6420 = vadd.f32 %v5888, %v6230
      %v6421 = vadd.f32 %v5889, %v6235
      %v6422 = vadd.f32 %v5890, %v6238
      %v6423 = vadd.f32 %v5891, %v6243
      %v6424 = vadd.f32 %v5892, %v6246
      %v6425 = vadd.f32 %v5893, %v6251
      %v6426 = vadd.f32 %v5894, %v6254
      %v6427 = vadd.f32 %v5895, %v6259
      %v6428 = vadd.f32 %v5896, %v6262
      %v6429 = vadd.f32 %v5897, %v6267
      %v6430 = vadd.f32 %v5898, %v6270
      %v6431 = vadd.f32 %v5899, %v6275
      %v6432 = vadd.f32 %v5900, %v6278
      %v6433 = vadd.f32 %v5901, %v6283
      %v6434 = vadd.f32 %v5902, %v6286
      %v6435 = vadd.f32 %v5903, %v6291
      %v6436 = vadd.f32 %v5904, %v6294
      %v6437 = vadd.f32 %v5905, %v6299
      %v6438 = vadd.f32 %v5906, %v6302
      %v6439 = vadd.f32 %v5907, %v6307
      %v6440 = vadd.f32 %v5908, %v6310
      %v6441 = vadd.f32 %v5909, %v6315
      %v6442 = vadd.f32 %v5910, %v6318
      %v6443 = vadd.f32 %v5911, %v6323
      %v6444 = vadd.f32 %v5912, %v6326
      %v6445 = vadd.f32 %v5913, %v6331
      %v6446 = vadd.f32 %v5914, %v6334
      %v6447 = vadd.f32 %v5915, %v6339
      %v6448 = vadd.f32 %v5916, %v6342
      %v6449 = vadd.f32 %v5917, %v6347
      %v6450 = vadd.f32 %v5918, %v6350
      %v6451 = vadd.f32 %v5919, %v6355
      %v6452 = vadd.f32 %v5920, %v6358
      %v6453 = vadd.f32 %v5921, %v6363
      %v6454 = vadd.f32 %v5922, %v6366
      %v6455 = vadd.f32 %v5923, %v6371
      %v6456 = vadd.f32 %v5924, %v6374
      %v6457 = vadd.f32 %v5925, %v6379
      %v6458 = vadd.f32 %v5926, %v6382
      %v6459 = vadd.f32 %v5927, %v6387
      %v6460 = vadd.f32 %v5928, %v6390
      %v6461 = vadd.f32 %v5929, %v6395
      %v6462 = vadd.f32 %v5930, %v6398
      %v6463 = vadd.f32 %v5931, %v6403
      %v6464 = vadd.f32 %v5932, %v6406
      %v6465 = vadd.f32 %v5933, %v6411
      %v6466 = vadd.f32 %v5934, %v6414
      %v6467 = vrot.slane %v2347, 5
      %v6468 = vrot.slane %v2349, 5
      %v6469 = vsel %vm2344, %v6467, %v6468
      %v6470 = vrot.slane %v2351, 5
      %v6471 = vsel %vm2344, %v6468, %v6470
      %v6472 = vrot.slane %v2353, 5
      %v6473 = vsel %vm2344, %v6470, %v6472
      %v6474 = vrot.slane %v2355, 5
      %v6475 = vsel %vm2344, %v6472, %v6474
      %v6476 = vrot.slane %v2357, 5
      %v6477 = vsel %vm2344, %v6474, %v6476
      %v6478 = vrot.slane %v2359, 5
      %v6479 = vsel %vm2344, %v6476, %v6478
      %v6480 = vrot.slane %v2361, 5
      %v6481 = vsel %vm2344, %v6478, %v6480
      %v6482 = vrot.slane %v2363, 5
      %v6483 = vsel %vm2344, %v6480, %v6482
      %v6484 = vrot.slane %v2365, 5
      %v6485 = vsel %vm2344, %v6482, %v6484
      %v6486 = vrot.slane %v2367, 5
      %v6487 = vsel %vm2344, %v6484, %v6486
      %v6488 = vrot.slane %v2385, 5
      %v6489 = vsel %vm2344, %v6486, %v6488
      %v6490 = vsel %vm2344, %v6488, %v2923
      %v6491 = vsel %vm2344, %v2923, %v2923
      %v6505 = vrot.slane %v2402, 1
      %v6506 = vrot.slane %v2404, 1
      %v6507 = vsel %vm2384, %v6505, %v6506
      %v6508 = vrot.slane %v2406, 1
      %v6509 = vsel %vm2384, %v6506, %v6508
      %v6510 = vrot.slane %v2408, 1
      %v6511 = vsel %vm2384, %v6508, %v6510
      %v6512 = vrot.slane %v2410, 1
      %v6513 = vsel %vm2384, %v6510, %v6512
      %v6514 = vrot.slane %v2412, 1
      %v6515 = vsel %vm2384, %v6512, %v6514
      %v6516 = vrot.slane %v2414, 1
      %v6517 = vsel %vm2384, %v6514, %v6516
      %v6518 = vrot.slane %v2416, 1
      %v6519 = vsel %vm2384, %v6516, %v6518
      %v6520 = vrot.slane %v2418, 1
      %v6521 = vsel %vm2384, %v6518, %v6520
      %v6522 = vrot.slane %v2420, 1
      %v6523 = vsel %vm2384, %v6520, %v6522
      %v6524 = vrot.slane %v2422, 1
      %v6525 = vsel %vm2384, %v6522, %v6524
      %v6526 = vrot.slane %v2437, 1
      %v6527 = vsel %vm2384, %v6524, %v6526
      %v6528 = vsel %vm2384, %v6526, %v3083
      %v6541 = vsel %vm1234, %v6491, %v6507
      %v6542 = vpack.c.bf16 %v5027, %v5025
      %v6543 = vpack.c.bf16 %v5031, %v5029
      %v6544 = vpack.c.bf16 %v5035, %v5033
      %v6545 = vpack.c.bf16 %v5039, %v5037
      %v6546 = vpack.c.bf16 %v5043, %v5041
      %v6547 = vpack.c.bf16 %v5047, %v5045
      %v6548 = vpack.c.bf16 %v5064, %v5100
      %v6549 = vpack.c.bf16 %v5068, %v5066
      %v6550 = vpack.c.bf16 %v5072, %v5070
      %v6551 = vpack.c.bf16 %v5076, %v5074
      %v6552 = vpack.c.bf16 %v5080, %v5078
      %v6553 = vpack.c.bf16 %v5084, %v5082
      %v6554 = vpack.c.bf16 %v6469, %v5086
      %v6555 = vpack.c.bf16 %v6473, %v6471
      %v6556 = vpack.c.bf16 %v6477, %v6475
      %v6557 = vpack.c.bf16 %v6481, %v6479
      %v6558 = vpack.c.bf16 %v6485, %v6483
      %v6559 = vpack.c.bf16 %v6489, %v6487
      %v6560 = vpack.c.bf16 %v6541, %v6490
      %v6561 = vpack.c.bf16 %v6511, %v6509
      %v6562 = vpack.c.bf16 %v6515, %v6513
      %v6563 = vpack.c.bf16 %v6519, %v6517
      %v6564 = vpack.c.bf16 %v6523, %v6521
      %v6565 = vpack.c.bf16 %v6527, %v6525
      %v6566 = vpack.c.bf16 %v6061, %v6528
      %v6567 = vld [vmem:[%s3 + $0x38] sm:$0xf]
      %v6568 = vld [vmem:[%s3 + $0x3c] sm:$0xf]
      %v6571 = vunpack.c.l.b16 %v6567
      %v6572 = vunpack.c.l.b16 %v6568
      %v6573 = vpack.c.b16 %v6572, %v6571
      %v6576 = vsel %vm3271, %v6542, 0
      %v6579 = vsel %vm3271, %v6543, 0
      %v6582 = vsel %vm3271, %v6544, 0
      %v6585 = vsel %vm3271, %v6545, 0
      %v6588 = vsel %vm3271, %v6546, 0
      %v6591 = vsel %vm3271, %v6547, 0
      %v6594 = vsel %vm3271, %v6548, 0
      %v6597 = vsel %vm3271, %v6549, 0
      %v6600 = vsel %vm3271, %v6550, 0
      %v6603 = vsel %vm3271, %v6551, 0
      %v6606 = vsel %vm3271, %v6552, 0
      %v6609 = vsel %vm3271, %v6553, 0
      %v6612 = vsel %vm3271, %v6554, 0
      %v6615 = vsel %vm3271, %v6555, 0
      %v6618 = vsel %vm3271, %v6556, 0
      %v6621 = vsel %vm3271, %v6557, 0
      %v6624 = vsel %vm3271, %v6558, 0
      %v6627 = vsel %vm3271, %v6559, 0
      %v6630 = vsel %vm3271, %v6560, 0
      %v6633 = vsel %vm3271, %v6561, 0
      %v6636 = vsel %vm3271, %v6562, 0
      %v6639 = vsel %vm3271, %v6563, 0
      %v6642 = vsel %vm3271, %v6564, 0
      %v6645 = vsel %vm3271, %v6565, 0
      %v6648 = vsel %vm3271, %v6566, 0
      %6650 = vmatprep.subr.bf16.mxu0 0
      %6651 = vmatpush1.bf16.msra.mxu0 %v6573
      %6652 = vmatprep.subr.bf16.mxu0 0
      %6653 = vmatpush1.bf16.msra.mxu0 0
      %6654 = vmatprep.subr.bf16.mxu0 0
      %6655 = vmatpush1.bf16.msra.mxu0 0
      %6656 = vmatprep.subr.bf16.mxu0 0
      %6657 = vmatpush1.bf16.msra.mxu0 0
      %6658 = vmatprep.subr.bf16.mxu0 0
      %6659 = vmatpush1.bf16.msra.mxu0 0
      %6660 = vmatprep.subr.bf16.mxu0 0
      %6661 = vmatpush1.bf16.msra.mxu0 0
      %6662 = vmatprep.subr.bf16.mxu0 0
      %6663 = vmatpush1.bf16.msra.mxu0 0
      %6664 = vmatprep.subr.bf16.mxu0 0
      %6665 = vmatpush1.bf16.msra.mxu0 0
      %6666 = vmatprep.subr.bf16.mxu0 0
      %6667 = vmatpush1.bf16.msra.mxu0 0
      %6668 = vmatprep.subr.bf16.mxu0 0
      %6669 = vmatpush1.bf16.msra.mxu0 0
      %6670 = vmatprep.subr.bf16.mxu0 0
      %6671 = vmatpush1.bf16.msra.mxu0 0
      %6672 = vmatprep.subr.bf16.mxu0 0
      %6673 = vmatpush1.bf16.msra.mxu0 0
      %6674 = vmatprep.subr.bf16.mxu0 0
      %6675 = vmatpush1.bf16.msra.mxu0 0
      %6676 = vmatprep.subr.bf16.mxu0 0
      %6677 = vmatpush1.bf16.msra.mxu0 0
      %6678 = vmatprep.subr.bf16.mxu0 0
      %6679 = vmatpush1.bf16.msra.mxu0 0
      %6680 = vmatprep.subr.bf16.mxu0 0
      %6681 = vmatpush1.bf16.msra.mxu0 0
      %6682 = vmatprep.mubr.bf16.mxu0 0
      %6683 = vmatmul.mubr.bf16.gmra.mrb[0].mxu0 %v6576
      %v6684 = vpop.f32.mrb[0].mxu0
      %v6685 = vadd.f32 0.0, %v6684
      %v6686 = vpop.f32.mrb[0].mxu0
      %v6687 = vpop.f32.mrb[0].mxu0
      %v6688 = vadd.f32 0.0, %v6687
      %v6689 = vpop.f32.mrb[0].mxu0
      %6690 = vmatprep.mubr.bf16.mxu0 0
      %6691 = vmatmul.mubr.bf16.gmra.mrb[0].mxu0 %v6579
      %v6692 = vpop.f32.mrb[0].mxu0
      %v6693 = vadd.f32 0.0, %v6692
      %v6694 = vpop.f32.mrb[0].mxu0
      %v6695 = vpop.f32.mrb[0].mxu0
      %v6696 = vadd.f32 0.0, %v6695
      %v6697 = vpop.f32.mrb[0].mxu0
      %6698 = vmatprep.mubr.bf16.mxu0 0
      %6699 = vmatmul.mubr.bf16.gmra.mrb[0].mxu0 %v6582
      %v6700 = vpop.f32.mrb[0].mxu0
      %v6701 = vadd.f32 0.0, %v6700
      %v6702 = vpop.f32.mrb[0].mxu0
      %v6703 = vpop.f32.mrb[0].mxu0
      %v6704 = vadd.f32 0.0, %v6703
      %v6705 = vpop.f32.mrb[0].mxu0
      %6706 = vmatprep.mubr.bf16.mxu0 0
      %6707 = vmatmul.mubr.bf16.gmra.mrb[0].mxu0 %v6585
      %v6708 = vpop.f32.mrb[0].mxu0
      %v6709 = vadd.f32 0.0, %v6708
      %v6710 = vpop.f32.mrb[0].mxu0
      %v6711 = vpop.f32.mrb[0].mxu0
      %v6712 = vadd.f32 0.0, %v6711
      %v6713 = vpop.f32.mrb[0].mxu0
      %6714 = vmatprep.mubr.bf16.mxu0 0
      %6715 = vmatmul.mubr.bf16.gmra.mrb[0].mxu0 %v6588
      %v6716 = vpop.f32.mrb[0].mxu0
      %v6717 = vadd.f32 0.0, %v6716
      %v6718 = vpop.f32.mrb[0].mxu0
      %v6719 = vpop.f32.mrb[0].mxu0
      %v6720 = vadd.f32 0.0, %v6719
      %v6721 = vpop.f32.mrb[0].mxu0
      %6722 = vmatprep.mubr.bf16.mxu0 0
      %6723 = vmatmul.mubr.bf16.gmra.mrb[0].mxu0 %v6591
      %v6724 = vpop.f32.mrb[0].mxu0
      %v6725 = vadd.f32 0.0, %v6724
      %v6726 = vpop.f32.mrb[0].mxu0
      %v6727 = vpop.f32.mrb[0].mxu0
      %v6728 = vadd.f32 0.0, %v6727
      %v6729 = vpop.f32.mrb[0].mxu0
      %6730 = vmatprep.mubr.bf16.mxu0 0
      %6731 = vmatmul.mubr.bf16.gmra.mrb[0].mxu0 %v6594
      %v6732 = vpop.f32.mrb[0].mxu0
      %v6733 = vadd.f32 0.0, %v6732
      %v6734 = vpop.f32.mrb[0].mxu0
      %v6735 = vpop.f32.mrb[0].mxu0
      %v6736 = vadd.f32 0.0, %v6735
      %v6737 = vpop.f32.mrb[0].mxu0
      %6738 = vmatprep.mubr.bf16.mxu0 0
      %6739 = vmatmul.mubr.bf16.gmra.mrb[0].mxu0 %v6597
      %v6740 = vpop.f32.mrb[0].mxu0
      %v6741 = vadd.f32 0.0, %v6740
      %v6742 = vpop.f32.mrb[0].mxu0
      %v6743 = vpop.f32.mrb[0].mxu0
      %v6744 = vadd.f32 0.0, %v6743
      %v6745 = vpop.f32.mrb[0].mxu0
      %6746 = vmatprep.mubr.bf16.mxu0 0
      %6747 = vmatmul.mubr.bf16.gmra.mrb[0].mxu0 %v6600
      %v6748 = vpop.f32.mrb[0].mxu0
      %v6749 = vadd.f32 0.0, %v6748
      %v6750 = vpop.f32.mrb[0].mxu0
      %v6751 = vpop.f32.mrb[0].mxu0
      %v6752 = vadd.f32 0.0, %v6751
      %v6753 = vpop.f32.mrb[0].mxu0
      %6754 = vmatprep.mubr.bf16.mxu0 0
      %6755 = vmatmul.mubr.bf16.gmra.mrb[0].mxu0 %v6603
      %v6756 = vpop.f32.mrb[0].mxu0
      %v6757 = vadd.f32 0.0, %v6756
      %v6758 = vpop.f32.mrb[0].mxu0
      %v6759 = vpop.f32.mrb[0].mxu0
      %v6760 = vadd.f32 0.0, %v6759
      %v6761 = vpop.f32.mrb[0].mxu0
      %6762 = vmatprep.mubr.bf16.mxu0 0
      %6763 = vmatmul.mubr.bf16.gmra.mrb[0].mxu0 %v6606
      %v6764 = vpop.f32.mrb[0].mxu0
      %v6765 = vadd.f32 0.0, %v6764
      %v6766 = vpop.f32.mrb[0].mxu0
      %v6767 = vpop.f32.mrb[0].mxu0
      %v6768 = vadd.f32 0.0, %v6767
      %v6769 = vpop.f32.mrb[0].mxu0
      %6770 = vmatprep.mubr.bf16.mxu0 0
      %6771 = vmatmul.mubr.bf16.gmra.mrb[0].mxu0 %v6609
      %v6772 = vpop.f32.mrb[0].mxu0
      %v6773 = vadd.f32 0.0, %v6772
      %v6774 = vpop.f32.mrb[0].mxu0
      %v6775 = vpop.f32.mrb[0].mxu0
      %v6776 = vadd.f32 0.0, %v6775
      %v6777 = vpop.f32.mrb[0].mxu0
      %6778 = vmatprep.mubr.bf16.mxu0 0
      %6779 = vmatmul.mubr.bf16.gmra.mrb[0].mxu0 %v6612
      %v6780 = vpop.f32.mrb[0].mxu0
      %v6781 = vadd.f32 0.0, %v6780
      %v6782 = vpop.f32.mrb[0].mxu0
      %v6783 = vpop.f32.mrb[0].mxu0
      %v6784 = vadd.f32 0.0, %v6783
      %v6785 = vpop.f32.mrb[0].mxu0
      %6786 = vmatprep.mubr.bf16.mxu0 0
      %6787 = vmatmul.mubr.bf16.gmra.mrb[0].mxu0 %v6615
      %v6788 = vpop.f32.mrb[0].mxu0
      %v6789 = vadd.f32 0.0, %v6788
      %v6790 = vpop.f32.mrb[0].mxu0
      %v6791 = vpop.f32.mrb[0].mxu0
      %v6792 = vadd.f32 0.0, %v6791
      %v6793 = vpop.f32.mrb[0].mxu0
      %6794 = vmatprep.mubr.bf16.mxu0 0
      %6795 = vmatmul.mubr.bf16.gmra.mrb[0].mxu0 %v6618
      %v6796 = vpop.f32.mrb[0].mxu0
      %v6797 = vadd.f32 0.0, %v6796
      %v6798 = vpop.f32.mrb[0].mxu0
      %v6799 = vpop.f32.mrb[0].mxu0
      %v6800 = vadd.f32 0.0, %v6799
      %v6801 = vpop.f32.mrb[0].mxu0
      %6802 = vmatprep.mubr.bf16.mxu0 0
      %6803 = vmatmul.mubr.bf16.gmra.mrb[0].mxu0 %v6621
      %v6804 = vpop.f32.mrb[0].mxu0
      %v6805 = vadd.f32 0.0, %v6804
      %v6806 = vpop.f32.mrb[0].mxu0
      %v6807 = vpop.f32.mrb[0].mxu0
      %v6808 = vadd.f32 0.0, %v6807
      %v6809 = vpop.f32.mrb[0].mxu0
      %6810 = vmatprep.mubr.bf16.mxu0 0
      %6811 = vmatmul.mubr.bf16.gmra.mrb[0].mxu0 %v6624
      %v6812 = vpop.f32.mrb[0].mxu0
      %v6813 = vadd.f32 0.0, %v6812
      %v6814 = vpop.f32.mrb[0].mxu0
      %v6815 = vpop.f32.mrb[0].mxu0
      %v6816 = vadd.f32 0.0, %v6815
      %v6817 = vpop.f32.mrb[0].mxu0
      %6818 = vmatprep.mubr.bf16.mxu0 0
      %6819 = vmatmul.mubr.bf16.gmra.mrb[0].mxu0 %v6627
      %v6820 = vpop.f32.mrb[0].mxu0
      %v6821 = vadd.f32 0.0, %v6820
      %v6822 = vpop.f32.mrb[0].mxu0
      %v6823 = vpop.f32.mrb[0].mxu0
      %v6824 = vadd.f32 0.0, %v6823
      %v6825 = vpop.f32.mrb[0].mxu0
      %6826 = vmatprep.mubr.bf16.mxu0 0
      %6827 = vmatmul.mubr.bf16.gmra.mrb[0].mxu0 %v6630
      %v6828 = vpop.f32.mrb[0].mxu0
      %v6829 = vadd.f32 0.0, %v6828
      %v6830 = vpop.f32.mrb[0].mxu0
      %v6831 = vpop.f32.mrb[0].mxu0
      %v6832 = vadd.f32 0.0, %v6831
      %v6833 = vpop.f32.mrb[0].mxu0
      %6834 = vmatprep.mubr.bf16.mxu0 0
      %6835 = vmatmul.mubr.bf16.gmra.mrb[0].mxu0 %v6633
      %v6836 = vpop.f32.mrb[0].mxu0
      %v6837 = vadd.f32 0.0, %v6836
      %v6838 = vpop.f32.mrb[0].mxu0
      %v6839 = vpop.f32.mrb[0].mxu0
      %v6840 = vadd.f32 0.0, %v6839
      %v6841 = vpop.f32.mrb[0].mxu0
      %6842 = vmatprep.mubr.bf16.mxu0 0
      %6843 = vmatmul.mubr.bf16.gmra.mrb[0].mxu0 %v6636
      %v6844 = vpop.f32.mrb[0].mxu0
      %v6845 = vadd.f32 0.0, %v6844
      %v6846 = vpop.f32.mrb[0].mxu0
      %v6847 = vpop.f32.mrb[0].mxu0
      %v6848 = vadd.f32 0.0, %v6847
      %v6849 = vpop.f32.mrb[0].mxu0
      %6850 = vmatprep.mubr.bf16.mxu0 0
      %6851 = vmatmul.mubr.bf16.gmra.mrb[0].mxu0 %v6639
      %v6852 = vpop.f32.mrb[0].mxu0
      %v6853 = vadd.f32 0.0, %v6852
      %v6854 = vpop.f32.mrb[0].mxu0
      %v6855 = vpop.f32.mrb[0].mxu0
      %v6856 = vadd.f32 0.0, %v6855
      %v6857 = vpop.f32.mrb[0].mxu0
      %6858 = vmatprep.mubr.bf16.mxu0 0
      %6859 = vmatmul.mubr.bf16.gmra.mrb[0].mxu0 %v6642
      %v6860 = vpop.f32.mrb[0].mxu0
      %v6861 = vadd.f32 0.0, %v6860
      %v6862 = vpop.f32.mrb[0].mxu0
      %v6863 = vpop.f32.mrb[0].mxu0
      %v6864 = vadd.f32 0.0, %v6863
      %v6865 = vpop.f32.mrb[0].mxu0
      %6866 = vmatprep.mubr.bf16.mxu0 0
      %6867 = vmatmul.mubr.bf16.gmra.mrb[0].mxu0 %v6645
      %v6868 = vpop.f32.mrb[0].mxu0
      %v6869 = vadd.f32 0.0, %v6868
      %v6870 = vpop.f32.mrb[0].mxu0
      %v6871 = vpop.f32.mrb[0].mxu0
      %v6872 = vadd.f32 0.0, %v6871
      %v6873 = vpop.f32.mrb[0].mxu0
      %6874 = vmatprep.mubr.bf16.mxu0 0
      %6875 = vmatmul.mubr.bf16.gmra.mrb[0].mxu0 %v6648
      %v6876 = vpop.f32.mrb[0].mxu0
      %v6877 = vadd.f32 0.0, %v6876
      %v6878 = vpop.f32.mrb[0].mxu0
      %v6879 = vpop.f32.mrb[0].mxu0
      %v6880 = vadd.f32 0.0, %v6879
      %v6881 = vpop.f32.mrb[0].mxu0
      %6882 = vdwg.mxu0
      %v6883 = vadd.f32 %v6417, %v6685
      %v6884 = vadd.f32 %v6418, %v6688
      %v6885 = vadd.f32 %v6419, %v6693
      %v6886 = vadd.f32 %v6420, %v6696
      %v6887 = vadd.f32 %v6421, %v6701
      %v6888 = vadd.f32 %v6422, %v6704
      %v6889 = vadd.f32 %v6423, %v6709
      %v6890 = vadd.f32 %v6424, %v6712
      %v6891 = vadd.f32 %v6425, %v6717
      %v6892 = vadd.f32 %v6426, %v6720
      %v6893 = vadd.f32 %v6427, %v6725
      %v6894 = vadd.f32 %v6428, %v6728
      %v6895 = vadd.f32 %v6429, %v6733
      %v6896 = vadd.f32 %v6430, %v6736
      %v6897 = vadd.f32 %v6431, %v6741
      %v6898 = vadd.f32 %v6432, %v6744
      %v6899 = vadd.f32 %v6433, %v6749
      %v6900 = vadd.f32 %v6434, %v6752
      %v6901 = vadd.f32 %v6435, %v6757
      %v6902 = vadd.f32 %v6436, %v6760
      %v6903 = vadd.f32 %v6437, %v6765
      %v6904 = vadd.f32 %v6438, %v6768
      %v6905 = vadd.f32 %v6439, %v6773
      %v6906 = vadd.f32 %v6440, %v6776
      %v6907 = vadd.f32 %v6441, %v6781
      %v6908 = vadd.f32 %v6442, %v6784
      %v6909 = vadd.f32 %v6443, %v6789
      %v6910 = vadd.f32 %v6444, %v6792
      %v6911 = vadd.f32 %v6445, %v6797
      %v6912 = vadd.f32 %v6446, %v6800
      %v6913 = vadd.f32 %v6447, %v6805
      %v6914 = vadd.f32 %v6448, %v6808
      %v6915 = vadd.f32 %v6449, %v6813
      %v6916 = vadd.f32 %v6450, %v6816
      %v6917 = vadd.f32 %v6451, %v6821
      %v6918 = vadd.f32 %v6452, %v6824
      %v6919 = vadd.f32 %v6453, %v6829
      %v6920 = vadd.f32 %v6454, %v6832
      %v6921 = vadd.f32 %v6455, %v6837
      %v6922 = vadd.f32 %v6456, %v6840
      %v6923 = vadd.f32 %v6457, %v6845
      %v6924 = vadd.f32 %v6458, %v6848
      %v6925 = vadd.f32 %v6459, %v6853
      %v6926 = vadd.f32 %v6460, %v6856
      %v6927 = vadd.f32 %v6461, %v6861
      %v6928 = vadd.f32 %v6462, %v6864
      %v6929 = vadd.f32 %v6463, %v6869
      %v6930 = vadd.f32 %v6464, %v6872
      %v6931 = vadd.f32 %v6465, %v6877
      %v6932 = vadd.f32 %v6466, %v6880
      %v6933 = vrot.slane %v2830, 2
      %v6934 = vrot.slane %v2831, 2
      %v6935 = vsel %vm2974, %v6933, %v6934
      %v6936 = vrot.slane %v2832, 2
      %v6937 = vsel %vm2974, %v6934, %v6936
      %v6938 = vrot.slane %v2833, 2
      %v6939 = vsel %vm2974, %v6936, %v6938
      %v6940 = vrot.slane %v2834, 2
      %v6941 = vsel %vm2974, %v6938, %v6940
      %v6942 = vrot.slane %v2835, 2
      %v6943 = vsel %vm2974, %v6940, %v6942
      %v6944 = vrot.slane %v2836, 2
      %v6945 = vsel %vm2974, %v6942, %v6944
      %v6946 = vrot.slane %v2837, 2
      %v6947 = vsel %vm2974, %v6944, %v6946
      %v6948 = vrot.slane %v2838, 2
      %v6949 = vsel %vm2974, %v6946, %v6948
      %v6950 = vrot.slane %v2839, 2
      %v6951 = vsel %vm2974, %v6948, %v6950
      %v6952 = vrot.slane %v2840, 2
      %v6953 = vsel %vm2974, %v6950, %v6952
      %v6954 = vrot.slane %v2841, 2
      %v6955 = vsel %vm2974, %v6952, %v6954
      %v6956 = vrot.slane %v2842, 2
      %v6957 = vsel %vm2974, %v6954, %v6956
      %v6972 = vmul.f32 %v2347, %v6933
      %v6973 = vmul.f32 %v2349, %v6935
      %v6974 = vmul.f32 %v2351, %v6937
      %v6975 = vmul.f32 %v2353, %v6939
      %v6976 = vmul.f32 %v2355, %v6941
      %v6977 = vmul.f32 %v2357, %v6943
      %v6978 = vmul.f32 %v2359, %v6945
      %v6979 = vmul.f32 %v2361, %v6947
      %v6980 = vmul.f32 %v2363, %v6949
      %v6981 = vmul.f32 %v2365, %v6951
      %v6982 = vmul.f32 %v2367, %v6953
      %v6983 = vmul.f32 %v2385, %v6955
      %v6984 = vmul.f32 %v6957, 0.0
      %v6985 = vmul.f32 %v6956, 0.0
      %v6986 = vrot.slane %v2402, 5
      %v6987 = vrot.slane %v2404, 5
      %v6988 = vsel %vm2344, %v6986, %v6987
      %v6989 = vrot.slane %v2406, 5
      %v6990 = vsel %vm2344, %v6987, %v6989
      %v6991 = vrot.slane %v2408, 5
      %v6992 = vsel %vm2344, %v6989, %v6991
      %v6993 = vrot.slane %v2410, 5
      %v6994 = vsel %vm2344, %v6991, %v6993
      %v6995 = vrot.slane %v2412, 5
      %v6996 = vsel %vm2344, %v6993, %v6995
      %v6997 = vrot.slane %v2414, 5
      %v6998 = vsel %vm2344, %v6995, %v6997
      %v6999 = vrot.slane %v2416, 5
      %v7000 = vsel %vm2344, %v6997, %v6999
      %v7001 = vrot.slane %v2418, 5
      %v7002 = vsel %vm2344, %v6999, %v7001
      %v7003 = vrot.slane %v2420, 5
      %v7004 = vsel %vm2344, %v7001, %v7003
      %v7005 = vrot.slane %v2422, 5
      %v7006 = vsel %vm2344, %v7003, %v7005
      %v7007 = vrot.slane %v2437, 5
      %v7008 = vsel %vm2344, %v7005, %v7007
      %v7009 = vsel %vm2344, %v7007, %v2923
      %v7036 = vrot.slane %v6972, 2
      %v7037 = vrot.slane %v6973, 2
      %v7038 = vsel %vm2974, %v7036, %v7037
      %v7039 = vrot.slane %v6974, 2
      %v7040 = vsel %vm2974, %v7037, %v7039
      %v7041 = vrot.slane %v6975, 2
      %v7042 = vsel %vm2974, %v7039, %v7041
      %v7043 = vrot.slane %v6976, 2
      %v7044 = vsel %vm2974, %v7041, %v7043
      %v7045 = vrot.slane %v6977, 2
      %v7046 = vsel %vm2974, %v7043, %v7045
      %v7047 = vrot.slane %v6978, 2
      %v7048 = vsel %vm2974, %v7045, %v7047
      %v7049 = vrot.slane %v6979, 2
      %v7050 = vsel %vm2974, %v7047, %v7049
      %v7051 = vrot.slane %v6980, 2
      %v7052 = vsel %vm2974, %v7049, %v7051
      %v7053 = vrot.slane %v6981, 2
      %v7054 = vsel %vm2974, %v7051, %v7053
      %v7055 = vrot.slane %v6982, 2
      %v7056 = vsel %vm2974, %v7053, %v7055
      %v7057 = vrot.slane %v6983, 2
      %v7058 = vsel %vm2974, %v7055, %v7057
      %v7059 = vrot.slane %v6984, 2
      %v7060 = vsel %vm2974, %v7057, %v7059
      %v7061 = vrot.slane %v6985, 2
      %v7062 = vsel %vm2974, %v7059, %v7061
      %v7076 = vsel %vm1234, %v6491, %v7038
      %v7077 = vpack.c.bf16 %v5509, %v5507
      %v7078 = vpack.c.bf16 %v5513, %v5511
      %v7079 = vpack.c.bf16 %v5517, %v5515
      %v7080 = vpack.c.bf16 %v5521, %v5519
      %v7081 = vpack.c.bf16 %v5525, %v5523
      %v7082 = vpack.c.bf16 %v5529, %v5527
      %v7083 = vpack.c.bf16 %v5493, %v5543
      %v7084 = vpack.c.bf16 %v5495, %v5494
      %v7085 = vpack.c.bf16 %v5497, %v5496
      %v7086 = vpack.c.bf16 %v5499, %v5498
      %v7087 = vpack.c.bf16 %v5501, %v5500
      %v7088 = vpack.c.bf16 %v5503, %v5502
      %v7089 = vpack.c.bf16 %v6988, %v5504
      %v7090 = vpack.c.bf16 %v6992, %v6990
      %v7091 = vpack.c.bf16 %v6996, %v6994
      %v7092 = vpack.c.bf16 %v7000, %v6998
      %v7093 = vpack.c.bf16 %v7004, %v7002
      %v7094 = vpack.c.bf16 %v7008, %v7006
      %v7095 = vpack.c.bf16 %v7076, %v7009
      %v7096 = vpack.c.bf16 %v7042, %v7040
      %v7097 = vpack.c.bf16 %v7046, %v7044
      %v7098 = vpack.c.bf16 %v7050, %v7048
      %v7099 = vpack.c.bf16 %v7054, %v7052
      %v7100 = vpack.c.bf16 %v7058, %v7056
      %v7101 = vpack.c.bf16 %v7062, %v7060
      %v7102 = vld [vmem:[%s3 + $0x40] sm:$0xf]
      %v7103 = vld [vmem:[%s3 + $0x44] sm:$0xf]
      %v7106 = vunpack.c.l.b16 %v7102
      %v7107 = vunpack.c.l.b16 %v7103
      %v7108 = vpack.c.b16 %v7107, %v7106
      %v7111 = vsel %vm3271, %v7077, 0
      %v7114 = vsel %vm3271, %v7078, 0
      %v7117 = vsel %vm3271, %v7079, 0
      %v7120 = vsel %vm3271, %v7080, 0
      %v7123 = vsel %vm3271, %v7081, 0
      %v7126 = vsel %vm3271, %v7082, 0
      %v7129 = vsel %vm3271, %v7083, 0
      %v7132 = vsel %vm3271, %v7084, 0
      %v7135 = vsel %vm3271, %v7085, 0
      %v7138 = vsel %vm3271, %v7086, 0
      %v7141 = vsel %vm3271, %v7087, 0
      %v7144 = vsel %vm3271, %v7088, 0
      %v7147 = vsel %vm3271, %v7089, 0
      %v7150 = vsel %vm3271, %v7090, 0
      %v7153 = vsel %vm3271, %v7091, 0
      %v7156 = vsel %vm3271, %v7092, 0
      %v7159 = vsel %vm3271, %v7093, 0
      %v7162 = vsel %vm3271, %v7094, 0
      %v7165 = vsel %vm3271, %v7095, 0
      %v7168 = vsel %vm3271, %v7096, 0
      %v7171 = vsel %vm3271, %v7097, 0
      %v7174 = vsel %vm3271, %v7098, 0
      %v7177 = vsel %vm3271, %v7099, 0
      %v7180 = vsel %vm3271, %v7100, 0
      %v7183 = vsel %vm3271, %v7101, 0
      %7185 = vmatprep.subr.bf16.mxu0 0
      %7186 = vmatpush1.bf16.msra.mxu0 %v7108
      %7187 = vmatprep.subr.bf16.mxu0 0
      %7188 = vmatpush1.bf16.msra.mxu0 0
      %7189 = vmatprep.subr.bf16.mxu0 0
      %7190 = vmatpush1.bf16.msra.mxu0 0
      %7191 = vmatprep.subr.bf16.mxu0 0
      %7192 = vmatpush1.bf16.msra.mxu0 0
      %7193 = vmatprep.subr.bf16.mxu0 0
      %7194 = vmatpush1.bf16.msra.mxu0 0
      %7195 = vmatprep.subr.bf16.mxu0 0
      %7196 = vmatpush1.bf16.msra.mxu0 0
      %7197 = vmatprep.subr.bf16.mxu0 0
      %7198 = vmatpush1.bf16.msra.mxu0 0
      %7199 = vmatprep.subr.bf16.mxu0 0
      %7200 = vmatpush1.bf16.msra.mxu0 0
      %7201 = vmatprep.subr.bf16.mxu0 0
      %7202 = vmatpush1.bf16.msra.mxu0 0
      %7203 = vmatprep.subr.bf16.mxu0 0
      %7204 = vmatpush1.bf16.msra.mxu0 0
      %7205 = vmatprep.subr.bf16.mxu0 0
      %7206 = vmatpush1.bf16.msra.mxu0 0
      %7207 = vmatprep.subr.bf16.mxu0 0
      %7208 = vmatpush1.bf16.msra.mxu0 0
      %7209 = vmatprep.subr.bf16.mxu0 0
      %7210 = vmatpush1.bf16.msra.mxu0 0
      %7211 = vmatprep.subr.bf16.mxu0 0
      %7212 = vmatpush1.bf16.msra.mxu0 0
      %7213 = vmatprep.subr.bf16.mxu0 0
      %7214 = vmatpush1.bf16.msra.mxu0 0
      %7215 = vmatprep.subr.bf16.mxu0 0
      %7216 = vmatpush1.bf16.msra.mxu0 0
      %7217 = vmatprep.mubr.bf16.mxu0 0
      %7218 = vmatmul.mubr.bf16.gmra.mrb[0].mxu0 %v7111
      %v7219 = vpop.f32.mrb[0].mxu0
      %v7220 = vadd.f32 0.0, %v7219
      %v7221 = vpop.f32.mrb[0].mxu0
      %v7222 = vpop.f32.mrb[0].mxu0
      %v7223 = vadd.f32 0.0, %v7222
      %v7224 = vpop.f32.mrb[0].mxu0
      %7225 = vmatprep.mubr.bf16.mxu0 0
      %7226 = vmatmul.mubr.bf16.gmra.mrb[0].mxu0 %v7114
      %v7227 = vpop.f32.mrb[0].mxu0
      %v7228 = vadd.f32 0.0, %v7227
      %v7229 = vpop.f32.mrb[0].mxu0
      %v7230 = vpop.f32.mrb[0].mxu0
      %v7231 = vadd.f32 0.0, %v7230
      %v7232 = vpop.f32.mrb[0].mxu0
      %7233 = vmatprep.mubr.bf16.mxu0 0
      %7234 = vmatmul.mubr.bf16.gmra.mrb[0].mxu0 %v7117
      %v7235 = vpop.f32.mrb[0].mxu0
      %v7236 = vadd.f32 0.0, %v7235
      %v7237 = vpop.f32.mrb[0].mxu0
      %v7238 = vpop.f32.mrb[0].mxu0
      %v7239 = vadd.f32 0.0, %v7238
      %v7240 = vpop.f32.mrb[0].mxu0
      %7241 = vmatprep.mubr.bf16.mxu0 0
      %7242 = vmatmul.mubr.bf16.gmra.mrb[0].mxu0 %v7120
      %v7243 = vpop.f32.mrb[0].mxu0
      %v7244 = vadd.f32 0.0, %v7243
      %v7245 = vpop.f32.mrb[0].mxu0
      %v7246 = vpop.f32.mrb[0].mxu0
      %v7247 = vadd.f32 0.0, %v7246
      %v7248 = vpop.f32.mrb[0].mxu0
      %7249 = vmatprep.mubr.bf16.mxu0 0
      %7250 = vmatmul.mubr.bf16.gmra.mrb[0].mxu0 %v7123
      %v7251 = vpop.f32.mrb[0].mxu0
      %v7252 = vadd.f32 0.0, %v7251
      %v7253 = vpop.f32.mrb[0].mxu0
      %v7254 = vpop.f32.mrb[0].mxu0
      %v7255 = vadd.f32 0.0, %v7254
      %v7256 = vpop.f32.mrb[0].mxu0
      %7257 = vmatprep.mubr.bf16.mxu0 0
      %7258 = vmatmul.mubr.bf16.gmra.mrb[0].mxu0 %v7126
      %v7259 = vpop.f32.mrb[0].mxu0
      %v7260 = vadd.f32 0.0, %v7259
      %v7261 = vpop.f32.mrb[0].mxu0
      %v7262 = vpop.f32.mrb[0].mxu0
      %v7263 = vadd.f32 0.0, %v7262
      %v7264 = vpop.f32.mrb[0].mxu0
      %7265 = vmatprep.mubr.bf16.mxu0 0
      %7266 = vmatmul.mubr.bf16.gmra.mrb[0].mxu0 %v7129
      %v7267 = vpop.f32.mrb[0].mxu0
      %v7268 = vadd.f32 0.0, %v7267
      %v7269 = vpop.f32.mrb[0].mxu0
      %v7270 = vpop.f32.mrb[0].mxu0
      %v7271 = vadd.f32 0.0, %v7270
      %v7272 = vpop.f32.mrb[0].mxu0
      %7273 = vmatprep.mubr.bf16.mxu0 0
      %7274 = vmatmul.mubr.bf16.gmra.mrb[0].mxu0 %v7132
      %v7275 = vpop.f32.mrb[0].mxu0
      %v7276 = vadd.f32 0.0, %v7275
      %v7277 = vpop.f32.mrb[0].mxu0
      %v7278 = vpop.f32.mrb[0].mxu0
      %v7279 = vadd.f32 0.0, %v7278
      %v7280 = vpop.f32.mrb[0].mxu0
      %7281 = vmatprep.mubr.bf16.mxu0 0
      %7282 = vmatmul.mubr.bf16.gmra.mrb[0].mxu0 %v7135
      %v7283 = vpop.f32.mrb[0].mxu0
      %v7284 = vadd.f32 0.0, %v7283
      %v7285 = vpop.f32.mrb[0].mxu0
      %v7286 = vpop.f32.mrb[0].mxu0
      %v7287 = vadd.f32 0.0, %v7286
      %v7288 = vpop.f32.mrb[0].mxu0
      %7289 = vmatprep.mubr.bf16.mxu0 0
      %7290 = vmatmul.mubr.bf16.gmra.mrb[0].mxu0 %v7138
      %v7291 = vpop.f32.mrb[0].mxu0
      %v7292 = vadd.f32 0.0, %v7291
      %v7293 = vpop.f32.mrb[0].mxu0
      %v7294 = vpop.f32.mrb[0].mxu0
      %v7295 = vadd.f32 0.0, %v7294
      %v7296 = vpop.f32.mrb[0].mxu0
      %7297 = vmatprep.mubr.bf16.mxu0 0
      %7298 = vmatmul.mubr.bf16.gmra.mrb[0].mxu0 %v7141
      %v7299 = vpop.f32.mrb[0].mxu0
      %v7300 = vadd.f32 0.0, %v7299
      %v7301 = vpop.f32.mrb[0].mxu0
      %v7302 = vpop.f32.mrb[0].mxu0
      %v7303 = vadd.f32 0.0, %v7302
      %v7304 = vpop.f32.mrb[0].mxu0
      %7305 = vmatprep.mubr.bf16.mxu0 0
      %7306 = vmatmul.mubr.bf16.gmra.mrb[0].mxu0 %v7144
      %v7307 = vpop.f32.mrb[0].mxu0
      %v7308 = vadd.f32 0.0, %v7307
      %v7309 = vpop.f32.mrb[0].mxu0
      %v7310 = vpop.f32.mrb[0].mxu0
      %v7311 = vadd.f32 0.0, %v7310
      %v7312 = vpop.f32.mrb[0].mxu0
      %7313 = vmatprep.mubr.bf16.mxu0 0
      %7314 = vmatmul.mubr.bf16.gmra.mrb[0].mxu0 %v7147
      %v7315 = vpop.f32.mrb[0].mxu0
      %v7316 = vadd.f32 0.0, %v7315
      %v7317 = vpop.f32.mrb[0].mxu0
      %v7318 = vpop.f32.mrb[0].mxu0
      %v7319 = vadd.f32 0.0, %v7318
      %v7320 = vpop.f32.mrb[0].mxu0
      %7321 = vmatprep.mubr.bf16.mxu0 0
      %7322 = vmatmul.mubr.bf16.gmra.mrb[0].mxu0 %v7150
      %v7323 = vpop.f32.mrb[0].mxu0
      %v7324 = vadd.f32 0.0, %v7323
      %v7325 = vpop.f32.mrb[0].mxu0
      %v7326 = vpop.f32.mrb[0].mxu0
      %v7327 = vadd.f32 0.0, %v7326
      %v7328 = vpop.f32.mrb[0].mxu0
      %7329 = vmatprep.mubr.bf16.mxu0 0
      %7330 = vmatmul.mubr.bf16.gmra.mrb[0].mxu0 %v7153
      %v7331 = vpop.f32.mrb[0].mxu0
      %v7332 = vadd.f32 0.0, %v7331
      %v7333 = vpop.f32.mrb[0].mxu0
      %v7334 = vpop.f32.mrb[0].mxu0
      %v7335 = vadd.f32 0.0, %v7334
      %v7336 = vpop.f32.mrb[0].mxu0
      %7337 = vmatprep.mubr.bf16.mxu0 0
      %7338 = vmatmul.mubr.bf16.gmra.mrb[0].mxu0 %v7156
      %v7339 = vpop.f32.mrb[0].mxu0
      %v7340 = vadd.f32 0.0, %v7339
      %v7341 = vpop.f32.mrb[0].mxu0
      %v7342 = vpop.f32.mrb[0].mxu0
      %v7343 = vadd.f32 0.0, %v7342
      %v7344 = vpop.f32.mrb[0].mxu0
      %7345 = vmatprep.mubr.bf16.mxu0 0
      %7346 = vmatmul.mubr.bf16.gmra.mrb[0].mxu0 %v7159
      %v7347 = vpop.f32.mrb[0].mxu0
      %v7348 = vadd.f32 0.0, %v7347
      %v7349 = vpop.f32.mrb[0].mxu0
      %v7350 = vpop.f32.mrb[0].mxu0
      %v7351 = vadd.f32 0.0, %v7350
      %v7352 = vpop.f32.mrb[0].mxu0
      %7353 = vmatprep.mubr.bf16.mxu0 0
      %7354 = vmatmul.mubr.bf16.gmra.mrb[0].mxu0 %v7162
      %v7355 = vpop.f32.mrb[0].mxu0
      %v7356 = vadd.f32 0.0, %v7355
      %v7357 = vpop.f32.mrb[0].mxu0
      %v7358 = vpop.f32.mrb[0].mxu0
      %v7359 = vadd.f32 0.0, %v7358
      %v7360 = vpop.f32.mrb[0].mxu0
      %7361 = vmatprep.mubr.bf16.mxu0 0
      %7362 = vmatmul.mubr.bf16.gmra.mrb[0].mxu0 %v7165
      %v7363 = vpop.f32.mrb[0].mxu0
      %v7364 = vadd.f32 0.0, %v7363
      %v7365 = vpop.f32.mrb[0].mxu0
      %v7366 = vpop.f32.mrb[0].mxu0
      %v7367 = vadd.f32 0.0, %v7366
      %v7368 = vpop.f32.mrb[0].mxu0
      %7369 = vmatprep.mubr.bf16.mxu0 0
      %7370 = vmatmul.mubr.bf16.gmra.mrb[0].mxu0 %v7168
      %v7371 = vpop.f32.mrb[0].mxu0
      %v7372 = vadd.f32 0.0, %v7371
      %v7373 = vpop.f32.mrb[0].mxu0
      %v7374 = vpop.f32.mrb[0].mxu0
      %v7375 = vadd.f32 0.0, %v7374
      %v7376 = vpop.f32.mrb[0].mxu0
      %7377 = vmatprep.mubr.bf16.mxu0 0
      %7378 = vmatmul.mubr.bf16.gmra.mrb[0].mxu0 %v7171
      %v7379 = vpop.f32.mrb[0].mxu0
      %v7380 = vadd.f32 0.0, %v7379
      %v7381 = vpop.f32.mrb[0].mxu0
      %v7382 = vpop.f32.mrb[0].mxu0
      %v7383 = vadd.f32 0.0, %v7382
      %v7384 = vpop.f32.mrb[0].mxu0
      %7385 = vmatprep.mubr.bf16.mxu0 0
      %7386 = vmatmul.mubr.bf16.gmra.mrb[0].mxu0 %v7174
      %v7387 = vpop.f32.mrb[0].mxu0
      %v7388 = vadd.f32 0.0, %v7387
      %v7389 = vpop.f32.mrb[0].mxu0
      %v7390 = vpop.f32.mrb[0].mxu0
      %v7391 = vadd.f32 0.0, %v7390
      %v7392 = vpop.f32.mrb[0].mxu0
      %7393 = vmatprep.mubr.bf16.mxu0 0
      %7394 = vmatmul.mubr.bf16.gmra.mrb[0].mxu0 %v7177
      %v7395 = vpop.f32.mrb[0].mxu0
      %v7396 = vadd.f32 0.0, %v7395
      %v7397 = vpop.f32.mrb[0].mxu0
      %v7398 = vpop.f32.mrb[0].mxu0
      %v7399 = vadd.f32 0.0, %v7398
      %v7400 = vpop.f32.mrb[0].mxu0
      %7401 = vmatprep.mubr.bf16.mxu0 0
      %7402 = vmatmul.mubr.bf16.gmra.mrb[0].mxu0 %v7180
      %v7403 = vpop.f32.mrb[0].mxu0
      %v7404 = vadd.f32 0.0, %v7403
      %v7405 = vpop.f32.mrb[0].mxu0
      %v7406 = vpop.f32.mrb[0].mxu0
      %v7407 = vadd.f32 0.0, %v7406
      %v7408 = vpop.f32.mrb[0].mxu0
      %7409 = vmatprep.mubr.bf16.mxu0 0
      %7410 = vmatmul.mubr.bf16.gmra.mrb[0].mxu0 %v7183
      %v7411 = vpop.f32.mrb[0].mxu0
      %v7412 = vadd.f32 0.0, %v7411
      %v7413 = vpop.f32.mrb[0].mxu0
      %v7414 = vpop.f32.mrb[0].mxu0
      %v7415 = vadd.f32 0.0, %v7414
      %v7416 = vpop.f32.mrb[0].mxu0
      %7417 = vdwg.mxu0
      %v7418 = vadd.f32 %v6883, %v7220
      %v7419 = vadd.f32 %v6884, %v7223
      %v7420 = vadd.f32 %v6885, %v7228
      %v7421 = vadd.f32 %v6886, %v7231
      %v7422 = vadd.f32 %v6887, %v7236
      %v7423 = vadd.f32 %v6888, %v7239
      %v7424 = vadd.f32 %v6889, %v7244
      %v7425 = vadd.f32 %v6890, %v7247
      %v7426 = vadd.f32 %v6891, %v7252
      %v7427 = vadd.f32 %v6892, %v7255
      %v7428 = vadd.f32 %v6893, %v7260
      %v7429 = vadd.f32 %v6894, %v7263
      %v7430 = vadd.f32 %v6895, %v7268
      %v7431 = vadd.f32 %v6896, %v7271
      %v7432 = vadd.f32 %v6897, %v7276
      %v7433 = vadd.f32 %v6898, %v7279
      %v7434 = vadd.f32 %v6899, %v7284
      %v7435 = vadd.f32 %v6900, %v7287
      %v7436 = vadd.f32 %v6901, %v7292
      %v7437 = vadd.f32 %v6902, %v7295
      %v7438 = vadd.f32 %v6903, %v7300
      %v7439 = vadd.f32 %v6904, %v7303
      %v7440 = vadd.f32 %v6905, %v7308
      %v7441 = vadd.f32 %v6906, %v7311
      %v7442 = vadd.f32 %v6907, %v7316
      %v7443 = vadd.f32 %v6908, %v7319
      %v7444 = vadd.f32 %v6909, %v7324
      %v7445 = vadd.f32 %v6910, %v7327
      %v7446 = vadd.f32 %v6911, %v7332
      %v7447 = vadd.f32 %v6912, %v7335
      %v7448 = vadd.f32 %v6913, %v7340
      %v7449 = vadd.f32 %v6914, %v7343
      %v7450 = vadd.f32 %v6915, %v7348
      %v7451 = vadd.f32 %v6916, %v7351
      %v7452 = vadd.f32 %v6917, %v7356
      %v7453 = vadd.f32 %v6918, %v7359
      %v7454 = vadd.f32 %v6919, %v7364
      %v7455 = vadd.f32 %v6920, %v7367
      %v7456 = vadd.f32 %v6921, %v7372
      %v7457 = vadd.f32 %v6922, %v7375
      %v7458 = vadd.f32 %v6923, %v7380
      %v7459 = vadd.f32 %v6924, %v7383
      %v7460 = vadd.f32 %v6925, %v7388
      %v7461 = vadd.f32 %v6926, %v7391
      %v7462 = vadd.f32 %v6927, %v7396
      %v7463 = vadd.f32 %v6928, %v7399
      %v7464 = vadd.f32 %v6929, %v7404
      %v7465 = vadd.f32 %v6930, %v7407
      %v7466 = vadd.f32 %v6931, %v7412
      %v7467 = vadd.f32 %v6932, %v7415
      %v7481 = vrot.slane %v7430, 4
      %v7482 = vrot.slane %v7431, 4
      %v7483 = vsel %vm1234, %v7481, %v7482
      %v7484 = vrot.slane %v7432, 4
      %v7485 = vsel %vm1234, %v7482, %v7484
      %v7486 = vrot.slane %v7433, 4
      %v7487 = vsel %vm1234, %v7484, %v7486
      %v7488 = vrot.slane %v7434, 4
      %v7489 = vsel %vm1234, %v7486, %v7488
      %v7490 = vrot.slane %v7435, 4
      %v7491 = vsel %vm1234, %v7488, %v7490
      %v7492 = vrot.slane %v7436, 4
      %v7493 = vsel %vm1234, %v7490, %v7492
      %v7494 = vrot.slane %v7437, 4
      %v7495 = vsel %vm1234, %v7492, %v7494
      %v7496 = vrot.slane %v7438, 4
      %v7497 = vsel %vm1234, %v7494, %v7496
      %v7498 = vrot.slane %v7439, 4
      %v7499 = vsel %vm1234, %v7496, %v7498
      %v7500 = vrot.slane %v7440, 4
      %v7501 = vsel %vm1234, %v7498, %v7500
      %v7502 = vrot.slane %v7441, 4
      %v7503 = vsel %vm1234, %v7500, %v7502
      %v7504 = vrot.slane %v7442, 4
      %v7505 = vsel %vm1234, %v7502, %v7504
      %v7519 = vmax.f32 %v7418, %v7483
      %v7520 = vmax.f32 %v7419, %v7485
      %v7521 = vmax.f32 %v7420, %v7487
      %v7522 = vmax.f32 %v7421, %v7489
      %v7523 = vmax.f32 %v7422, %v7491
      %v7524 = vmax.f32 %v7423, %v7493
      %v7525 = vmax.f32 %v7424, %v7495
      %v7526 = vmax.f32 %v7425, %v7497
      %v7527 = vmax.f32 %v7426, %v7499
      %v7528 = vmax.f32 %v7427, %v7501
      %v7529 = vmax.f32 %v7428, %v7503
      %v7530 = vmax.f32 %v7429, %v7505
      %v7531 = vmax.f32 %v7430, %v7504
      %v7545 = vrot.slane %v7455, 4
      %v7546 = vrot.slane %v7456, 4
      %v7547 = vsel %vm1234, %v7545, %v7546
      %v7548 = vrot.slane %v7457, 4
      %v7549 = vsel %vm1234, %v7546, %v7548
      %v7550 = vrot.slane %v7458, 4
      %v7551 = vsel %vm1234, %v7548, %v7550
      %v7552 = vrot.slane %v7459, 4
      %v7553 = vsel %vm1234, %v7550, %v7552
      %v7554 = vrot.slane %v7460, 4
      %v7555 = vsel %vm1234, %v7552, %v7554
      %v7556 = vrot.slane %v7461, 4
      %v7557 = vsel %vm1234, %v7554, %v7556
      %v7558 = vrot.slane %v7462, 4
      %v7559 = vsel %vm1234, %v7556, %v7558
      %v7560 = vrot.slane %v7463, 4
      %v7561 = vsel %vm1234, %v7558, %v7560
      %v7562 = vrot.slane %v7464, 4
      %v7563 = vsel %vm1234, %v7560, %v7562
      %v7564 = vrot.slane %v7465, 4
      %v7565 = vsel %vm1234, %v7562, %v7564
      %v7566 = vrot.slane %v7466, 4
      %v7567 = vsel %vm1234, %v7564, %v7566
      %v7568 = vrot.slane %v7467, 4
      %v7569 = vsel %vm1234, %v7566, %v7568
      %v7583 = vmax.f32 %v7443, %v7547
      %v7584 = vmax.f32 %v7444, %v7549
      %v7585 = vmax.f32 %v7445, %v7551
      %v7586 = vmax.f32 %v7446, %v7553
      %v7587 = vmax.f32 %v7447, %v7555
      %v7588 = vmax.f32 %v7448, %v7557
      %v7589 = vmax.f32 %v7449, %v7559
      %v7590 = vmax.f32 %v7450, %v7561
      %v7591 = vmax.f32 %v7451, %v7563
      %v7592 = vmax.f32 %v7452, %v7565
      %v7593 = vmax.f32 %v7453, %v7567
      %v7594 = vmax.f32 %v7454, %v7569
      %v7595 = vmax.f32 %v7455, %v7568
      %v7596 = vmax.f32 %v7519, %v7583
      %v7597 = vmax.f32 %v7520, %v7584
      %v7598 = vmax.f32 %v7521, %v7585
      %v7599 = vmax.f32 %v7522, %v7586
      %v7600 = vmax.f32 %v7523, %v7587
      %v7601 = vmax.f32 %v7524, %v7588
      %v7602 = vmax.f32 %v7525, %v7589
      %v7603 = vmax.f32 %v7526, %v7590
      %v7604 = vmax.f32 %v7527, %v7591
      %v7605 = vmax.f32 %v7528, %v7592
      %v7606 = vmax.f32 %v7529, %v7593
      %v7607 = vmax.f32 %v7530, %v7594
      %v7608 = vmax.f32 %v7531, %v7595
      %v7609 = vld [vmem:[%s4] sm:$0x1]
      %v7611 = vlaneseq
      %v7612 = vshrl.u32 %v7611, 7
      %v7613 = vsub.s32 0, %v7612
      %v7614 = vrot.slane %v7609, %v7613
      %v7616 = vadd.f32 %v7596, %v7614
      %v7617 = vadd.f32 %v7597, %v7614
      %v7618 = vadd.f32 %v7598, %v7614
      %v7619 = vadd.f32 %v7599, %v7614
      %v7620 = vadd.f32 %v7600, %v7614
      %v7621 = vadd.f32 %v7601, %v7614
      %v7622 = vadd.f32 %v7602, %v7614
      %v7623 = vadd.f32 %v7603, %v7614
      %v7624 = vadd.f32 %v7604, %v7614
      %v7625 = vadd.f32 %v7605, %v7614
      %v7626 = vadd.f32 %v7606, %v7614
      %v7627 = vadd.f32 %v7607, %v7614
      %v7628 = vadd.f32 %v7608, %v7614
      %v7629 = vmax.f32 %v7616, 0.0
      %v7630 = vmax.f32 %v7617, 0.0
      %v7631 = vmax.f32 %v7618, 0.0
      %v7632 = vmax.f32 %v7619, 0.0
      %v7633 = vmax.f32 %v7620, 0.0
      %v7634 = vmax.f32 %v7621, 0.0
      %v7635 = vmax.f32 %v7622, 0.0
      %v7636 = vmax.f32 %v7623, 0.0
      %v7637 = vmax.f32 %v7624, 0.0
      %v7638 = vmax.f32 %v7625, 0.0
      %v7639 = vmax.f32 %v7626, 0.0
      %v7640 = vmax.f32 %v7627, 0.0
      %v7641 = vmax.f32 %v7628, 0.0
      %v7642 = vpack.c.bf16 %v7630, %v7629
      %v7643 = vpack.c.bf16 %v7632, %v7631
      %v7644 = vpack.c.bf16 %v7634, %v7633
      %v7645 = vpack.c.bf16 %v7636, %v7635
      %v7646 = vpack.c.bf16 %v7638, %v7637
      %v7647 = vpack.c.bf16 %v7640, %v7639
      %v7648 = vpack.c.bf16 %v7641, %v7641
      %v7656 = vunpack.c.l.b16 %v7642
      %v7657 = vunpack.c.h.b16 %v7642
      %v7658 = vunpack.c.l.b16 %v7643
      %v7659 = vunpack.c.h.b16 %v7643
      %v7660 = vunpack.c.l.b16 %v7644
      %v7661 = vunpack.c.h.b16 %v7644
      %v7662 = vunpack.c.l.b16 %v7645
      %v7663 = vunpack.c.h.b16 %v7645
      %v7664 = vunpack.c.l.b16 %v7646
      %v7665 = vunpack.c.h.b16 %v7646
      %v7666 = vunpack.c.l.b16 %v7647
      %v7667 = vunpack.c.h.b16 %v7647
      %v7668 = vunpack.c.l.b16 %v7648
      %v7669 = vpack.c.b16 %v7656, %v7656
      %v7670 = vpack.c.b16 %v7657, %v7657
      %v7671 = vpack.c.b16 %v7658, %v7658
      %v7672 = vpack.c.b16 %v7659, %v7659
      %v7673 = vpack.c.b16 %v7660, %v7660
      %v7674 = vpack.c.b16 %v7661, %v7661
      %v7675 = vpack.c.b16 %v7662, %v7662
      %v7676 = vpack.c.b16 %v7663, %v7663
      %v7677 = vpack.c.b16 %v7664, %v7664
      %v7678 = vpack.c.b16 %v7665, %v7665
      %v7679 = vpack.c.b16 %v7666, %v7666
      %v7680 = vpack.c.b16 %v7667, %v7667
      %v7681 = vpack.c.b16 %v7668, %v7668
      %vm7695 = vcmask 257024
      %7696 = vst.msk [vmem:[%s224] sm:$0xf] %vm7695, %v7669
      %7697 = vst.msk [vmem:[%s224 + $0x4] sm:$0xf] %vm7695, %v7670
      %7698 = vst.msk [vmem:[%s224 + $0x8] sm:$0xf] %vm7695, %v7671
      %7699 = vst.msk [vmem:[%s224 + $0xc] sm:$0xf] %vm7695, %v7672
      %7700 = vst.msk [vmem:[%s224 + $0x10] sm:$0xf] %vm7695, %v7673
      %7701 = vst.msk [vmem:[%s224 + $0x14] sm:$0xf] %vm7695, %v7674
      %7702 = vst.msk [vmem:[%s224 + $0x18] sm:$0xf] %vm7695, %v7675
      %7703 = vst.msk [vmem:[%s224 + $0x1c] sm:$0xf] %vm7695, %v7676
      %7704 = vst.msk [vmem:[%s224 + $0x20] sm:$0xf] %vm7695, %v7677
      %7705 = vst.msk [vmem:[%s224 + $0x24] sm:$0xf] %vm7695, %v7678
      %7706 = vst.msk [vmem:[%s224 + $0x28] sm:$0xf] %vm7695, %v7679
      %7707 = vst.msk [vmem:[%s224 + $0x2c] sm:$0xf] %vm7695, %v7680
      %vm7708 = vcmask 254976
      %7709 = vst.msk [vmem:[%s224 + $0x30] sm:$0x3] %vm7708, %v7681
      %p7710 = scmp.lt.s32.totalorder %s16, 1
      %s7711 = scalar_select %p7710, %s16, 1
      %s7712 = smul.addr %s7711, 13
      %s7713 = smul.addr %s7712, 4
      %s7714 = scalar_lea.vmem %s5, %s7713
      // Predicated region
      $region41: #{sub_char_cnn_forward.2} parent=39 // pred_check
        %p7715 = pneg %p144
      $region42: #{sub_char_cnn_forward.2} parent=39 // pred_check_branch
        %7717 = sbr.rel (%p7715) target = $region44
      $region43: #{sub_char_cnn_forward.2} parent=39 // pred_region
        _
      $region44: #{sub_char_cnn_forward.2} parent=39 // pred_fallthru
        _
    $region40: #{sub_char_cnn_forward.2} parent=5 // pred_fallthru
      _
    %p7718 = scmp.le.s32.totalorder 2, %s11
    // Predicated region
    $region45: #{sub_char_cnn_forward.2} parent=5 // pred_check
      %p7719 = pneg %p7718
    $region46: #{sub_char_cnn_forward.2} parent=5 // pred_check_branch
      %7721 = sbr.rel (%p7719) target = $region48
    $region47: #{sub_char_cnn_forward.2} parent=5 // pred_region
      %s7722 = ssub.s32 %s11, 2
      // Predicated region
      $region49: #{sub_char_cnn_forward.2} parent=47 // pred_check
        %p7723 = pneg %p150
      $region50: #{sub_char_cnn_forward.2} parent=47 // pred_check_branch
        %7725 = sbr.rel (%p7723) target = $region52
      $region51: #{sub_char_cnn_forward.2} parent=47 // pred_region
        %p7726 = scmp.lt.s32.totalorder %s17, 1
        %s7727 = scalar_select %p7726, %s17, 1
        %s7728 = smul.addr %s7727, 13
        %s7729 = smul.addr %s7728, 4
        %s7730 = scalar_lea.vmem %s5, %s7729
      $region52: #{sub_char_cnn_forward.2} parent=47 // pred_fallthru
        _
    $region48: #{sub_char_cnn_forward.2} parent=5 // pred_fallthru
      _
  $region6: #{sub_char_cnn_forward.2} parent=0 // loop_footer
    %s15 = sadd.s32 1, %s11
  $region7: #{sub_char_cnn_forward.2} parent=0 // loop_footer_branch
    %10 = sbr.rel target = $region3
  $region8: #{sub_char_cnn_forward.2} parent=0 // loop_exit
    _

</llo_original>
